<compile_context>
chip_gen: v7x
topology: tpu7x:2x2x1
jax: 0.10.0
libtpu: 0.0.40
codegen_flags: <defaults>
</compile_context>

<pallas_src>
import functools

import jax
import jax.numpy as jnp
from jax.experimental import pallas as pl
from jax.experimental.pallas import tpu as pltpu


NEG_SLOPE = 0.2   # forward uses F.leaky_relu(x, negative_slope=0.2)
BN_EPS = 1e-5


# ---------------------------------------------------------------------------
# Fused whole-decoder kernel (single invocation, everything VMEM-resident)
# ---------------------------------------------------------------------------
def _decoder_kernel(*refs, num_blocks, compute_dtype):
    x_ref = refs[0]
    blk_refs = refs[1:1 + 5 * num_blocks]           # per block: w1,w2,w3,vec,gather
    fc_w_ref = refs[1 + 5 * num_blocks]
    fc_vec_ref = refs[2 + 5 * num_blocks]
    out_ref = refs[-1]

    def mm(a, w_ref):
        w = w_ref[...]                               # stored in compute dtype already
        if compute_dtype is not None:
            a = a.astype(compute_dtype)
        return jnp.dot(a, w, preferred_element_type=jnp.float32)

    def bn(h, gamma, beta):
        # Training-mode BatchNorm1d: batch stats, biased variance.  Two-pass
        # (mean then centered second moment) via XLU cross-sublane reductions.
        inv_n = jnp.float32(1.0 / h.shape[0])
        mean = jnp.sum(h, axis=0, keepdims=True) * inv_n
        d = h - mean
        var = jnp.sum(d * d, axis=0, keepdims=True) * inv_n
        return d * (gamma * jax.lax.rsqrt(var + jnp.float32(BN_EPS))) + beta

    def lrelu(h):
        return jnp.where(h >= 0, h, jnp.float32(NEG_SLOPE) * h)

    h = x_ref[...].astype(jnp.float32)
    for b in range(num_blocks):
        w1_ref, w2_ref, w3_ref, vec_ref, gather_ref = blk_refs[5 * b:5 * b + 5]
        v = vec_ref[...]          # rows: [g1, b1, bias2, g2, b2, bias3, g3, b3]
        identity = h
        h = lrelu(bn(mm(h, w1_ref), v[0:1, :], v[1:2, :]))             # linear1 (no bias)
        h = lrelu(bn(mm(h, w2_ref) + v[2:3, :], v[3:4, :], v[4:5, :]))  # linear2
        h = bn(mm(h, w3_ref) + v[5:6, :], v[6:7, :], v[7:8, :])         # linear3
        # F.interpolate(identity, size=out_dim, mode='nearest') as an exact 0/1
        # gather-matrix matmul; kept in f32 so the residual add is exact even on
        # the bf16 weight path.
        h = h + jnp.dot(identity, gather_ref[...], preferred_element_type=jnp.float32)
        # TODO(synk): dropout on the trailing blocks is p=0.0 (identity) here.

    out = mm(h, fc_w_ref) + fc_vec_ref[...]
    out_ref[...] = out.astype(out_ref.dtype)


# ---------------------------------------------------------------------------
# Wrapper
# ---------------------------------------------------------------------------
def _vmem_limit_bytes(total_io_bytes):
    """Generation-aware VMEM budget with headroom (v7x physical VMEM is 64 MiB)."""
    try:
        cap = int(pltpu.get_tpu_info().vmem_capacity_bytes)
    except Exception:  # pragma: no cover - conservative fallback
        cap = 64 * 1024 * 1024
    want = 2 * int(total_io_bytes) + (16 << 20)      # weights/acts + intermediates
    return int(min(cap - (4 << 20), max(32 << 20, want)))


def fc_res_decoder(x, params):
    """x: (N, in_dim) float32.  params: see init_decoder_params.  One pallas_call."""
    blocks = params["blocks"]
    num_blocks = len(blocks)

    w_dtype = params["fc_w"].dtype
    compute_dtype = None if w_dtype == jnp.float32 else w_dtype

    inputs = [x]
    for blk in blocks:
        inputs += [blk["w1"], blk["w2"], blk["w3"], blk["vec"], blk["gather"]]
    inputs += [params["fc_w"], params["fc_vec"]]

    n = x.shape[0]
    out_dim = params["fc_w"].shape[1]

    total_io_bytes = sum(int(a.size) * a.dtype.itemsize for a in inputs)
    total_io_bytes += n * out_dim * 4

    vmem_spec = pl.BlockSpec(memory_space=pltpu.MemorySpace.VMEM)
    kernel = functools.partial(_decoder_kernel, num_blocks=num_blocks,
                               compute_dtype=compute_dtype)

    return pl.pallas_call(
        kernel,
        out_shape=jax.ShapeDtypeStruct((n, out_dim), jnp.float32),
        in_specs=[vmem_spec] * len(inputs),
        out_specs=vmem_spec,
        compiler_params=pltpu.CompilerParams(
            vmem_limit_bytes=_vmem_limit_bytes(total_io_bytes),
        ),
    )(*inputs)


# ---------------------------------------------------------------------------
# Parameter init (deterministic, synthetic; matches module parameter shapes)
# ---------------------------------------------------------------------------
def init_decoder_params(key, in_dim, layers, out_dim, compute_dtype=None):
    """Weights stored PRE-TRANSPOSED as (in, out), optionally in compute_dtype
    (e.g. bf16) to halve weight bytes; BN/bias vectors packed (8, F) per block."""
    gain = (2.0 / (1.0 + NEG_SLOPE ** 2)) ** 0.5      # kaiming_normal_(a=0.2, fan_in)
    wdt = jnp.float32 if compute_dtype is None else compute_dtype

    def kaiming(k, fan_in, fan_out):
        w = jax.random.normal(k, (fan_in, fan_out), jnp.float32) * (gain / fan_in ** 0.5)
        return w.astype(wdt)

    def lin_bias(k, fan_in, fan_out):
        bnd = 1.0 / fan_in ** 0.5
        return jax.random.uniform(k, (fan_out,), jnp.float32, -bnd, bnd)

    dims = [in_dim] + list(layers)
    keys = jax.random.split(key, len(layers) + 1)
    blocks = []
    for bi, (di, do) in enumerate(zip(dims[:-1], dims[1:])):
        bk = jax.random.split(keys[bi], 5)
        ones = jnp.ones((do,), jnp.float32)
        zeros = jnp.zeros((do,), jnp.float32)
        vec = jnp.stack([
            ones, zeros,                               # bn1 gamma / beta
            lin_bias(bk[3], do, do), ones, zeros,      # linear2 bias, bn2 gamma / beta
            lin_bias(bk[4], do, do), ones, zeros,      # linear3 bias, bn3 gamma / beta
        ], axis=0)
        # F.interpolate(identity, size=do, mode='nearest') as a static one-hot matrix.
        idx = jnp.clip(jnp.floor(jnp.arange(do, dtype=jnp.float32) * (di / do)),
                       0, di - 1).astype(jnp.int32)
        gather = (jnp.arange(di)[:, None] == idx[None, :]).astype(jnp.float32)
        blocks.append({
            "w1": kaiming(bk[0], di, do),              # Linear(di, do, bias=False)
            "w2": kaiming(bk[1], do, do),              # Linear(do, do)
            "w3": kaiming(bk[2], do, do),              # Linear(do, do)
            "vec": vec,
            "gather": gather,                          # kept f32 (exact residual)
        })
    fk = jax.random.split(keys[-1], 2)
    fc_vec = jnp.zeros((1, out_dim), jnp.float32).at[0].set(
        lin_bias(fk[1], layers[-1], out_dim))
    return {
        "blocks": blocks,
        "fc_w": kaiming(fk[0], layers[-1], out_dim),
        "fc_vec": fc_vec,
    }


# ---------------------------------------------------------------------------
# Pure-JAX reference (sanity check)
# ---------------------------------------------------------------------------
def _reference(x, params):
    def bn(h, g, b):
        m = jnp.mean(h, axis=0, keepdims=True)
        v = jnp.mean((h - m) ** 2, axis=0, keepdims=True)
        return (h - m) / jnp.sqrt(v + BN_EPS) * g + b

    def lrelu(h):
        return jnp.where(h >= 0, h, NEG_SLOPE * h)

    for blk in params["blocks"]:
        identity = x
        v = blk["vec"]
        h = lrelu(bn(x @ blk["w1"].astype(jnp.float32), v[0], v[1]))
        h = lrelu(bn(h @ blk["w2"].astype(jnp.float32) + v[2], v[3], v[4]))
        h = bn(h @ blk["w3"].astype(jnp.float32) + v[5], v[6], v[7])
        x = h + identity @ blk["gather"]
    return x @ params["fc_w"].astype(jnp.float32) + params["fc_vec"][0]


# ---------------------------------------------------------------------------
if __name__ == "__main__":
    # Lane-dense small shapes: batch and every feature dim are multiples of 128
    # so vreg lanes and the MXU M/N dims are fully occupied; (384, 256, 128)
    # exercises the x3 upsample and the strided-downsample residual paths.
    N, IN_DIM = 128, 128
    LAYERS = (384, 256, 128)
    OUT_DIM = 128

    key = jax.random.PRNGKey(0)
    kx, kp = jax.random.split(key)
    x = jax.random.normal(kx, (N, IN_DIM), jnp.float32)
    params = init_decoder_params(kp, IN_DIM, LAYERS, OUT_DIM)  # exact f32 path

    out = jax.jit(fc_res_decoder)(x, params)
    out = jax.block_until_ready(out)

    ref = _reference(x, params)
    assert out.shape == (N, OUT_DIM)
    err = float(jnp.max(jnp.abs(out - ref)))
    assert jnp.allclose(out, ref, atol=5e-3, rtol=5e-3), err

    print("KERNEL_OK")
</pallas_src>

<mosaic_0001>
module attributes {stable_mosaic.version = 11 : i64} {
  func.func @_decoder_kernel(%arg0: memref<128x128xf32, #tpu.memory_space<vmem>>, %arg1: memref<128x384xf32, #tpu.memory_space<vmem>>, %arg2: memref<384x384xf32, #tpu.memory_space<vmem>>, %arg3: memref<384x384xf32, #tpu.memory_space<vmem>>, %arg4: memref<8x384xf32, #tpu.memory_space<vmem>>, %arg5: memref<128x384xf32, #tpu.memory_space<vmem>>, %arg6: memref<384x256xf32, #tpu.memory_space<vmem>>, %arg7: memref<256x256xf32, #tpu.memory_space<vmem>>, %arg8: memref<256x256xf32, #tpu.memory_space<vmem>>, %arg9: memref<8x256xf32, #tpu.memory_space<vmem>>, %arg10: memref<384x256xf32, #tpu.memory_space<vmem>>, %arg11: memref<256x128xf32, #tpu.memory_space<vmem>>, %arg12: memref<128x128xf32, #tpu.memory_space<vmem>>, %arg13: memref<128x128xf32, #tpu.memory_space<vmem>>, %arg14: memref<8x128xf32, #tpu.memory_space<vmem>>, %arg15: memref<256x128xf32, #tpu.memory_space<vmem>>, %arg16: memref<128x128xf32, #tpu.memory_space<vmem>>, %arg17: memref<1x128xf32, #tpu.memory_space<vmem>>, %arg18: memref<128x128xf32, #tpu.memory_space<vmem>>) attributes {dimension_semantics = [], scalar_prefetch = 0 : i64, scratch_operands = 0 : i64, tpu.core_type = #tpu.core_type<tc>} {
    %c0 = arith.constant 0 : index
    %c0_0 = arith.constant 0 : index
    %0 = vector.load %arg0[%c0, %c0_0] : memref<128x128xf32, #tpu.memory_space<vmem>>, vector<128x128xf32>
    %c0_1 = arith.constant 0 : index
    %c0_2 = arith.constant 0 : index
    %1 = vector.load %arg4[%c0_1, %c0_2] : memref<8x384xf32, #tpu.memory_space<vmem>>, vector<8x384xf32>
    %c0_3 = arith.constant 0 : index
    %c0_4 = arith.constant 0 : index
    %2 = vector.load %arg1[%c0_3, %c0_4] : memref<128x384xf32, #tpu.memory_space<vmem>>, vector<128x384xf32>
    %cst = arith.constant dense<0.000000e+00> : vector<128x384xf32>
    %3 = tpu.matmul %0, %2, %cst {dimension_numbers = #tpu.dot_dimension_numbers<[1], [0], [0], [1], [0, 0, 1, 1], [], []>} : vector<128x128xf32>, vector<128x384xf32>, vector<128x384xf32> -> vector<128x384xf32>
    %4 = vector.extract_strided_slice %1 {offsets = [0, 0], sizes = [1, 384], strides = [1, 1]} : vector<8x384xf32> to vector<1x384xf32>
    %5 = vector.extract_strided_slice %1 {offsets = [1, 0], sizes = [1, 384], strides = [1, 1]} : vector<8x384xf32> to vector<1x384xf32>
    %cst_5 = arith.constant dense<0.000000e+00> : vector<384xf32>
    %6 = vector.multi_reduction <add>, %3, %cst_5 [0] : vector<128x384xf32> to vector<384xf32>
    %7 = vector.shape_cast %6 : vector<384xf32> to vector<1x384xf32>
    %cst_6 = arith.constant 7.812500e-03 : f32
    %8 = vector.broadcast %cst_6 : f32 to vector<1x384xf32>
    %9 = arith.mulf %7, %8 : vector<1x384xf32>
    %10 = vector.broadcast %9 : vector<1x384xf32> to vector<128x384xf32>
    %11 = arith.subf %3, %10 : vector<128x384xf32>
    %12 = arith.mulf %11, %11 : vector<128x384xf32>
    %cst_7 = arith.constant dense<0.000000e+00> : vector<384xf32>
    %13 = vector.multi_reduction <add>, %12, %cst_7 [0] : vector<128x384xf32> to vector<384xf32>
    %14 = vector.shape_cast %13 : vector<384xf32> to vector<1x384xf32>
    %cst_8 = arith.constant 7.812500e-03 : f32
    %15 = vector.broadcast %cst_8 : f32 to vector<1x384xf32>
    %16 = arith.mulf %14, %15 : vector<1x384xf32>
    %cst_9 = arith.constant 9.99999974E-6 : f32
    %17 = vector.broadcast %cst_9 : f32 to vector<1x384xf32>
    %18 = arith.addf %16, %17 : vector<1x384xf32>
    %19 = math.rsqrt %18 : vector<1x384xf32>
    %20 = arith.mulf %4, %19 : vector<1x384xf32>
    %21 = vector.broadcast %20 : vector<1x384xf32> to vector<128x384xf32>
    %22 = arith.mulf %11, %21 : vector<128x384xf32>
    %23 = vector.broadcast %5 : vector<1x384xf32> to vector<128x384xf32>
    %24 = arith.addf %22, %23 : vector<128x384xf32>
    %cst_10 = arith.constant 0.000000e+00 : f32
    %25 = vector.broadcast %cst_10 : f32 to vector<128x384xf32>
    %26 = arith.cmpf oge, %24, %25 : vector<128x384xf32>
    %cst_11 = arith.constant 2.000000e-01 : f32
    %27 = vector.broadcast %cst_11 : f32 to vector<128x384xf32>
    %28 = arith.mulf %27, %24 : vector<128x384xf32>
    %29 = arith.select %26, %24, %28 : vector<128x384xi1>, vector<128x384xf32>
    %c0_12 = arith.constant 0 : index
    %c0_13 = arith.constant 0 : index
    %30 = vector.load %arg2[%c0_12, %c0_13] : memref<384x384xf32, #tpu.memory_space<vmem>>, vector<384x384xf32>
    %cst_14 = arith.constant dense<0.000000e+00> : vector<128x384xf32>
    %31 = tpu.matmul %29, %30, %cst_14 {dimension_numbers = #tpu.dot_dimension_numbers<[1], [0], [0], [1], [0, 0, 1, 1], [], []>} : vector<128x384xf32>, vector<384x384xf32>, vector<128x384xf32> -> vector<128x384xf32>
    %32 = vector.extract_strided_slice %1 {offsets = [2, 0], sizes = [1, 384], strides = [1, 1]} : vector<8x384xf32> to vector<1x384xf32>
    %33 = vector.broadcast %32 : vector<1x384xf32> to vector<128x384xf32>
    %34 = arith.addf %31, %33 : vector<128x384xf32>
    %35 = vector.extract_strided_slice %1 {offsets = [3, 0], sizes = [1, 384], strides = [1, 1]} : vector<8x384xf32> to vector<1x384xf32>
    %36 = vector.extract_strided_slice %1 {offsets = [4, 0], sizes = [1, 384], strides = [1, 1]} : vector<8x384xf32> to vector<1x384xf32>
    %cst_15 = arith.constant dense<0.000000e+00> : vector<384xf32>
    %37 = vector.multi_reduction <add>, %34, %cst_15 [0] : vector<128x384xf32> to vector<384xf32>
    %38 = vector.shape_cast %37 : vector<384xf32> to vector<1x384xf32>
    %cst_16 = arith.constant 7.812500e-03 : f32
    %39 = vector.broadcast %cst_16 : f32 to vector<1x384xf32>
    %40 = arith.mulf %38, %39 : vector<1x384xf32>
    %41 = vector.broadcast %40 : vector<1x384xf32> to vector<128x384xf32>
    %42 = arith.subf %34, %41 : vector<128x384xf32>
    %43 = arith.mulf %42, %42 : vector<128x384xf32>
    %cst_17 = arith.constant dense<0.000000e+00> : vector<384xf32>
    %44 = vector.multi_reduction <add>, %43, %cst_17 [0] : vector<128x384xf32> to vector<384xf32>
    %45 = vector.shape_cast %44 : vector<384xf32> to vector<1x384xf32>
    %cst_18 = arith.constant 7.812500e-03 : f32
    %46 = vector.broadcast %cst_18 : f32 to vector<1x384xf32>
    %47 = arith.mulf %45, %46 : vector<1x384xf32>
    %cst_19 = arith.constant 9.99999974E-6 : f32
    %48 = vector.broadcast %cst_19 : f32 to vector<1x384xf32>
    %49 = arith.addf %47, %48 : vector<1x384xf32>
    %50 = math.rsqrt %49 : vector<1x384xf32>
    %51 = arith.mulf %35, %50 : vector<1x384xf32>
    %52 = vector.broadcast %51 : vector<1x384xf32> to vector<128x384xf32>
    %53 = arith.mulf %42, %52 : vector<128x384xf32>
    %54 = vector.broadcast %36 : vector<1x384xf32> to vector<128x384xf32>
    %55 = arith.addf %53, %54 : vector<128x384xf32>
    %cst_20 = arith.constant 0.000000e+00 : f32
    %56 = vector.broadcast %cst_20 : f32 to vector<128x384xf32>
    %57 = arith.cmpf oge, %55, %56 : vector<128x384xf32>
    %cst_21 = arith.constant 2.000000e-01 : f32
    %58 = vector.broadcast %cst_21 : f32 to vector<128x384xf32>
    %59 = arith.mulf %58, %55 : vector<128x384xf32>
    %60 = arith.select %57, %55, %59 : vector<128x384xi1>, vector<128x384xf32>
    %c0_22 = arith.constant 0 : index
    %c0_23 = arith.constant 0 : index
    %61 = vector.load %arg3[%c0_22, %c0_23] : memref<384x384xf32, #tpu.memory_space<vmem>>, vector<384x384xf32>
    %cst_24 = arith.constant dense<0.000000e+00> : vector<128x384xf32>
    %62 = tpu.matmul %60, %61, %cst_24 {dimension_numbers = #tpu.dot_dimension_numbers<[1], [0], [0], [1], [0, 0, 1, 1], [], []>} : vector<128x384xf32>, vector<384x384xf32>, vector<128x384xf32> -> vector<128x384xf32>
    %63 = vector.extract_strided_slice %1 {offsets = [5, 0], sizes = [1, 384], strides = [1, 1]} : vector<8x384xf32> to vector<1x384xf32>
    %64 = vector.broadcast %63 : vector<1x384xf32> to vector<128x384xf32>
    %65 = arith.addf %62, %64 : vector<128x384xf32>
    %66 = vector.extract_strided_slice %1 {offsets = [6, 0], sizes = [1, 384], strides = [1, 1]} : vector<8x384xf32> to vector<1x384xf32>
    %67 = vector.extract_strided_slice %1 {offsets = [7, 0], sizes = [1, 384], strides = [1, 1]} : vector<8x384xf32> to vector<1x384xf32>
    %cst_25 = arith.constant dense<0.000000e+00> : vector<384xf32>
    %68 = vector.multi_reduction <add>, %65, %cst_25 [0] : vector<128x384xf32> to vector<384xf32>
    %69 = vector.shape_cast %68 : vector<384xf32> to vector<1x384xf32>
    %cst_26 = arith.constant 7.812500e-03 : f32
    %70 = vector.broadcast %cst_26 : f32 to vector<1x384xf32>
    %71 = arith.mulf %69, %70 : vector<1x384xf32>
    %72 = vector.broadcast %71 : vector<1x384xf32> to vector<128x384xf32>
    %73 = arith.subf %65, %72 : vector<128x384xf32>
    %74 = arith.mulf %73, %73 : vector<128x384xf32>
    %cst_27 = arith.constant dense<0.000000e+00> : vector<384xf32>
    %75 = vector.multi_reduction <add>, %74, %cst_27 [0] : vector<128x384xf32> to vector<384xf32>
    %76 = vector.shape_cast %75 : vector<384xf32> to vector<1x384xf32>
    %cst_28 = arith.constant 7.812500e-03 : f32
    %77 = vector.broadcast %cst_28 : f32 to vector<1x384xf32>
    %78 = arith.mulf %76, %77 : vector<1x384xf32>
    %cst_29 = arith.constant 9.99999974E-6 : f32
    %79 = vector.broadcast %cst_29 : f32 to vector<1x384xf32>
    %80 = arith.addf %78, %79 : vector<1x384xf32>
    %81 = math.rsqrt %80 : vector<1x384xf32>
    %82 = arith.mulf %66, %81 : vector<1x384xf32>
    %83 = vector.broadcast %82 : vector<1x384xf32> to vector<128x384xf32>
    %84 = arith.mulf %73, %83 : vector<128x384xf32>
    %85 = vector.broadcast %67 : vector<1x384xf32> to vector<128x384xf32>
    %86 = arith.addf %84, %85 : vector<128x384xf32>
    %c0_30 = arith.constant 0 : index
    %c0_31 = arith.constant 0 : index
    %87 = vector.load %arg5[%c0_30, %c0_31] : memref<128x384xf32, #tpu.memory_space<vmem>>, vector<128x384xf32>
    %cst_32 = arith.constant dense<0.000000e+00> : vector<128x384xf32>
    %88 = tpu.matmul %0, %87, %cst_32 {dimension_numbers = #tpu.dot_dimension_numbers<[1], [0], [0], [1], [0, 0, 1, 1], [], []>} : vector<128x128xf32>, vector<128x384xf32>, vector<128x384xf32> -> vector<128x384xf32>
    %89 = arith.addf %86, %88 : vector<128x384xf32>
    %c0_33 = arith.constant 0 : index
    %c0_34 = arith.constant 0 : index
    %90 = vector.load %arg9[%c0_33, %c0_34] : memref<8x256xf32, #tpu.memory_space<vmem>>, vector<8x256xf32>
    %c0_35 = arith.constant 0 : index
    %c0_36 = arith.constant 0 : index
    %91 = vector.load %arg6[%c0_35, %c0_36] : memref<384x256xf32, #tpu.memory_space<vmem>>, vector<384x256xf32>
    %cst_37 = arith.constant dense<0.000000e+00> : vector<128x256xf32>
    %92 = tpu.matmul %89, %91, %cst_37 {dimension_numbers = #tpu.dot_dimension_numbers<[1], [0], [0], [1], [0, 0, 1, 1], [], []>} : vector<128x384xf32>, vector<384x256xf32>, vector<128x256xf32> -> vector<128x256xf32>
    %93 = vector.extract_strided_slice %90 {offsets = [0, 0], sizes = [1, 256], strides = [1, 1]} : vector<8x256xf32> to vector<1x256xf32>
    %94 = vector.extract_strided_slice %90 {offsets = [1, 0], sizes = [1, 256], strides = [1, 1]} : vector<8x256xf32> to vector<1x256xf32>
    %cst_38 = arith.constant dense<0.000000e+00> : vector<256xf32>
    %95 = vector.multi_reduction <add>, %92, %cst_38 [0] : vector<128x256xf32> to vector<256xf32>
    %96 = vector.shape_cast %95 : vector<256xf32> to vector<1x256xf32>
    %cst_39 = arith.constant 7.812500e-03 : f32
    %97 = vector.broadcast %cst_39 : f32 to vector<1x256xf32>
    %98 = arith.mulf %96, %97 : vector<1x256xf32>
    %99 = vector.broadcast %98 : vector<1x256xf32> to vector<128x256xf32>
    %100 = arith.subf %92, %99 : vector<128x256xf32>
    %101 = arith.mulf %100, %100 : vector<128x256xf32>
    %cst_40 = arith.constant dense<0.000000e+00> : vector<256xf32>
    %102 = vector.multi_reduction <add>, %101, %cst_40 [0] : vector<128x256xf32> to vector<256xf32>
    %103 = vector.shape_cast %102 : vector<256xf32> to vector<1x256xf32>
    %cst_41 = arith.constant 7.812500e-03 : f32
    %104 = vector.broadcast %cst_41 : f32 to vector<1x256xf32>
    %105 = arith.mulf %103, %104 : vector<1x256xf32>
    %cst_42 = arith.constant 9.99999974E-6 : f32
    %106 = vector.broadcast %cst_42 : f32 to vector<1x256xf32>
    %107 = arith.addf %105, %106 : vector<1x256xf32>
    %108 = math.rsqrt %107 : vector<1x256xf32>
    %109 = arith.mulf %93, %108 : vector<1x256xf32>
    %110 = vector.broadcast %109 : vector<1x256xf32> to vector<128x256xf32>
    %111 = arith.mulf %100, %110 : vector<128x256xf32>
    %112 = vector.broadcast %94 : vector<1x256xf32> to vector<128x256xf32>
    %113 = arith.addf %111, %112 : vector<128x256xf32>
    %cst_43 = arith.constant 0.000000e+00 : f32
    %114 = vector.broadcast %cst_43 : f32 to vector<128x256xf32>
    %115 = arith.cmpf oge, %113, %114 : vector<128x256xf32>
    %cst_44 = arith.constant 2.000000e-01 : f32
    %116 = vector.broadcast %cst_44 : f32 to vector<128x256xf32>
    %117 = arith.mulf %116, %113 : vector<128x256xf32>
    %118 = arith.select %115, %113, %117 : vector<128x256xi1>, vector<128x256xf32>
    %c0_45 = arith.constant 0 : index
    %c0_46 = arith.constant 0 : index
    %119 = vector.load %arg7[%c0_45, %c0_46] : memref<256x256xf32, #tpu.memory_space<vmem>>, vector<256x256xf32>
    %cst_47 = arith.constant dense<0.000000e+00> : vector<128x256xf32>
    %120 = tpu.matmul %118, %119, %cst_47 {dimension_numbers = #tpu.dot_dimension_numbers<[1], [0], [0], [1], [0, 0, 1, 1], [], []>} : vector<128x256xf32>, vector<256x256xf32>, vector<128x256xf32> -> vector<128x256xf32>
    %121 = vector.extract_strided_slice %90 {offsets = [2, 0], sizes = [1, 256], strides = [1, 1]} : vector<8x256xf32> to vector<1x256xf32>
    %122 = vector.broadcast %121 : vector<1x256xf32> to vector<128x256xf32>
    %123 = arith.addf %120, %122 : vector<128x256xf32>
    %124 = vector.extract_strided_slice %90 {offsets = [3, 0], sizes = [1, 256], strides = [1, 1]} : vector<8x256xf32> to vector<1x256xf32>
    %125 = vector.extract_strided_slice %90 {offsets = [4, 0], sizes = [1, 256], strides = [1, 1]} : vector<8x256xf32> to vector<1x256xf32>
    %cst_48 = arith.constant dense<0.000000e+00> : vector<256xf32>
    %126 = vector.multi_reduction <add>, %123, %cst_48 [0] : vector<128x256xf32> to vector<256xf32>
    %127 = vector.shape_cast %126 : vector<256xf32> to vector<1x256xf32>
    %cst_49 = arith.constant 7.812500e-03 : f32
    %128 = vector.broadcast %cst_49 : f32 to vector<1x256xf32>
    %129 = arith.mulf %127, %128 : vector<1x256xf32>
    %130 = vector.broadcast %129 : vector<1x256xf32> to vector<128x256xf32>
    %131 = arith.subf %123, %130 : vector<128x256xf32>
    %132 = arith.mulf %131, %131 : vector<128x256xf32>
    %cst_50 = arith.constant dense<0.000000e+00> : vector<256xf32>
    %133 = vector.multi_reduction <add>, %132, %cst_50 [0] : vector<128x256xf32> to vector<256xf32>
    %134 = vector.shape_cast %133 : vector<256xf32> to vector<1x256xf32>
    %cst_51 = arith.constant 7.812500e-03 : f32
    %135 = vector.broadcast %cst_51 : f32 to vector<1x256xf32>
    %136 = arith.mulf %134, %135 : vector<1x256xf32>
    %cst_52 = arith.constant 9.99999974E-6 : f32
    %137 = vector.broadcast %cst_52 : f32 to vector<1x256xf32>
    %138 = arith.addf %136, %137 : vector<1x256xf32>
    %139 = math.rsqrt %138 : vector<1x256xf32>
    %140 = arith.mulf %124, %139 : vector<1x256xf32>
    %141 = vector.broadcast %140 : vector<1x256xf32> to vector<128x256xf32>
    %142 = arith.mulf %131, %141 : vector<128x256xf32>
    %143 = vector.broadcast %125 : vector<1x256xf32> to vector<128x256xf32>
    %144 = arith.addf %142, %143 : vector<128x256xf32>
    %cst_53 = arith.constant 0.000000e+00 : f32
    %145 = vector.broadcast %cst_53 : f32 to vector<128x256xf32>
    %146 = arith.cmpf oge, %144, %145 : vector<128x256xf32>
    %cst_54 = arith.constant 2.000000e-01 : f32
    %147 = vector.broadcast %cst_54 : f32 to vector<128x256xf32>
    %148 = arith.mulf %147, %144 : vector<128x256xf32>
    %149 = arith.select %146, %144, %148 : vector<128x256xi1>, vector<128x256xf32>
    %c0_55 = arith.constant 0 : index
    %c0_56 = arith.constant 0 : index
    %150 = vector.load %arg8[%c0_55, %c0_56] : memref<256x256xf32, #tpu.memory_space<vmem>>, vector<256x256xf32>
    %cst_57 = arith.constant dense<0.000000e+00> : vector<128x256xf32>
    %151 = tpu.matmul %149, %150, %cst_57 {dimension_numbers = #tpu.dot_dimension_numbers<[1], [0], [0], [1], [0, 0, 1, 1], [], []>} : vector<128x256xf32>, vector<256x256xf32>, vector<128x256xf32> -> vector<128x256xf32>
    %152 = vector.extract_strided_slice %90 {offsets = [5, 0], sizes = [1, 256], strides = [1, 1]} : vector<8x256xf32> to vector<1x256xf32>
    %153 = vector.broadcast %152 : vector<1x256xf32> to vector<128x256xf32>
    %154 = arith.addf %151, %153 : vector<128x256xf32>
    %155 = vector.extract_strided_slice %90 {offsets = [6, 0], sizes = [1, 256], strides = [1, 1]} : vector<8x256xf32> to vector<1x256xf32>
    %156 = vector.extract_strided_slice %90 {offsets = [7, 0], sizes = [1, 256], strides = [1, 1]} : vector<8x256xf32> to vector<1x256xf32>
    %cst_58 = arith.constant dense<0.000000e+00> : vector<256xf32>
    %157 = vector.multi_reduction <add>, %154, %cst_58 [0] : vector<128x256xf32> to vector<256xf32>
    %158 = vector.shape_cast %157 : vector<256xf32> to vector<1x256xf32>
    %cst_59 = arith.constant 7.812500e-03 : f32
    %159 = vector.broadcast %cst_59 : f32 to vector<1x256xf32>
    %160 = arith.mulf %158, %159 : vector<1x256xf32>
    %161 = vector.broadcast %160 : vector<1x256xf32> to vector<128x256xf32>
    %162 = arith.subf %154, %161 : vector<128x256xf32>
    %163 = arith.mulf %162, %162 : vector<128x256xf32>
    %cst_60 = arith.constant dense<0.000000e+00> : vector<256xf32>
    %164 = vector.multi_reduction <add>, %163, %cst_60 [0] : vector<128x256xf32> to vector<256xf32>
    %165 = vector.shape_cast %164 : vector<256xf32> to vector<1x256xf32>
    %cst_61 = arith.constant 7.812500e-03 : f32
    %166 = vector.broadcast %cst_61 : f32 to vector<1x256xf32>
    %167 = arith.mulf %165, %166 : vector<1x256xf32>
    %cst_62 = arith.constant 9.99999974E-6 : f32
    %168 = vector.broadcast %cst_62 : f32 to vector<1x256xf32>
    %169 = arith.addf %167, %168 : vector<1x256xf32>
    %170 = math.rsqrt %169 : vector<1x256xf32>
    %171 = arith.mulf %155, %170 : vector<1x256xf32>
    %172 = vector.broadcast %171 : vector<1x256xf32> to vector<128x256xf32>
    %173 = arith.mulf %162, %172 : vector<128x256xf32>
    %174 = vector.broadcast %156 : vector<1x256xf32> to vector<128x256xf32>
    %175 = arith.addf %173, %174 : vector<128x256xf32>
    %c0_63 = arith.constant 0 : index
    %c0_64 = arith.constant 0 : index
    %176 = vector.load %arg10[%c0_63, %c0_64] : memref<384x256xf32, #tpu.memory_space<vmem>>, vector<384x256xf32>
    %cst_65 = arith.constant dense<0.000000e+00> : vector<128x256xf32>
    %177 = tpu.matmul %89, %176, %cst_65 {dimension_numbers = #tpu.dot_dimension_numbers<[1], [0], [0], [1], [0, 0, 1, 1], [], []>} : vector<128x384xf32>, vector<384x256xf32>, vector<128x256xf32> -> vector<128x256xf32>
    %178 = arith.addf %175, %177 : vector<128x256xf32>
    %c0_66 = arith.constant 0 : index
    %c0_67 = arith.constant 0 : index
    %179 = vector.load %arg14[%c0_66, %c0_67] : memref<8x128xf32, #tpu.memory_space<vmem>>, vector<8x128xf32>
    %c0_68 = arith.constant 0 : index
    %c0_69 = arith.constant 0 : index
    %180 = vector.load %arg11[%c0_68, %c0_69] : memref<256x128xf32, #tpu.memory_space<vmem>>, vector<256x128xf32>
    %cst_70 = arith.constant dense<0.000000e+00> : vector<128x128xf32>
    %181 = tpu.matmul %178, %180, %cst_70 {dimension_numbers = #tpu.dot_dimension_numbers<[1], [0], [0], [1], [0, 0, 1, 1], [], []>} : vector<128x256xf32>, vector<256x128xf32>, vector<128x128xf32> -> vector<128x128xf32>
    %182 = vector.extract_strided_slice %179 {offsets = [0, 0], sizes = [1, 128], strides = [1, 1]} : vector<8x128xf32> to vector<1x128xf32>
    %183 = vector.extract_strided_slice %179 {offsets = [1, 0], sizes = [1, 128], strides = [1, 1]} : vector<8x128xf32> to vector<1x128xf32>
    %cst_71 = arith.constant dense<0.000000e+00> : vector<128xf32>
    %184 = vector.multi_reduction <add>, %181, %cst_71 [0] : vector<128x128xf32> to vector<128xf32>
    %185 = vector.shape_cast %184 : vector<128xf32> to vector<1x128xf32>
    %cst_72 = arith.constant 7.812500e-03 : f32
    %186 = vector.broadcast %cst_72 : f32 to vector<1x128xf32>
    %187 = arith.mulf %185, %186 : vector<1x128xf32>
    %188 = vector.broadcast %187 : vector<1x128xf32> to vector<128x128xf32>
    %189 = arith.subf %181, %188 : vector<128x128xf32>
    %190 = arith.mulf %189, %189 : vector<128x128xf32>
    %cst_73 = arith.constant dense<0.000000e+00> : vector<128xf32>
    %191 = vector.multi_reduction <add>, %190, %cst_73 [0] : vector<128x128xf32> to vector<128xf32>
    %192 = vector.shape_cast %191 : vector<128xf32> to vector<1x128xf32>
    %cst_74 = arith.constant 7.812500e-03 : f32
    %193 = vector.broadcast %cst_74 : f32 to vector<1x128xf32>
    %194 = arith.mulf %192, %193 : vector<1x128xf32>
    %cst_75 = arith.constant 9.99999974E-6 : f32
    %195 = vector.broadcast %cst_75 : f32 to vector<1x128xf32>
    %196 = arith.addf %194, %195 : vector<1x128xf32>
    %197 = math.rsqrt %196 : vector<1x128xf32>
    %198 = arith.mulf %182, %197 : vector<1x128xf32>
    %199 = vector.broadcast %198 : vector<1x128xf32> to vector<128x128xf32>
    %200 = arith.mulf %189, %199 : vector<128x128xf32>
    %201 = vector.broadcast %183 : vector<1x128xf32> to vector<128x128xf32>
    %202 = arith.addf %200, %201 : vector<128x128xf32>
    %cst_76 = arith.constant 0.000000e+00 : f32
    %203 = vector.broadcast %cst_76 : f32 to vector<128x128xf32>
    %204 = arith.cmpf oge, %202, %203 : vector<128x128xf32>
    %cst_77 = arith.constant 2.000000e-01 : f32
    %205 = vector.broadcast %cst_77 : f32 to vector<128x128xf32>
    %206 = arith.mulf %205, %202 : vector<128x128xf32>
    %207 = arith.select %204, %202, %206 : vector<128x128xi1>, vector<128x128xf32>
    %c0_78 = arith.constant 0 : index
    %c0_79 = arith.constant 0 : index
    %208 = vector.load %arg12[%c0_78, %c0_79] : memref<128x128xf32, #tpu.memory_space<vmem>>, vector<128x128xf32>
    %cst_80 = arith.constant dense<0.000000e+00> : vector<128x128xf32>
    %209 = tpu.matmul %207, %208, %cst_80 {dimension_numbers = #tpu.dot_dimension_numbers<[1], [0], [0], [1], [0, 0, 1, 1], [], []>} : vector<128x128xf32>, vector<128x128xf32>, vector<128x128xf32> -> vector<128x128xf32>
    %210 = vector.extract_strided_slice %179 {offsets = [2, 0], sizes = [1, 128], strides = [1, 1]} : vector<8x128xf32> to vector<1x128xf32>
    %211 = vector.broadcast %210 : vector<1x128xf32> to vector<128x128xf32>
    %212 = arith.addf %209, %211 : vector<128x128xf32>
    %213 = vector.extract_strided_slice %179 {offsets = [3, 0], sizes = [1, 128], strides = [1, 1]} : vector<8x128xf32> to vector<1x128xf32>
    %214 = vector.extract_strided_slice %179 {offsets = [4, 0], sizes = [1, 128], strides = [1, 1]} : vector<8x128xf32> to vector<1x128xf32>
    %cst_81 = arith.constant dense<0.000000e+00> : vector<128xf32>
    %215 = vector.multi_reduction <add>, %212, %cst_81 [0] : vector<128x128xf32> to vector<128xf32>
    %216 = vector.shape_cast %215 : vector<128xf32> to vector<1x128xf32>
    %cst_82 = arith.constant 7.812500e-03 : f32
    %217 = vector.broadcast %cst_82 : f32 to vector<1x128xf32>
    %218 = arith.mulf %216, %217 : vector<1x128xf32>
    %219 = vector.broadcast %218 : vector<1x128xf32> to vector<128x128xf32>
    %220 = arith.subf %212, %219 : vector<128x128xf32>
    %221 = arith.mulf %220, %220 : vector<128x128xf32>
    %cst_83 = arith.constant dense<0.000000e+00> : vector<128xf32>
    %222 = vector.multi_reduction <add>, %221, %cst_83 [0] : vector<128x128xf32> to vector<128xf32>
    %223 = vector.shape_cast %222 : vector<128xf32> to vector<1x128xf32>
    %cst_84 = arith.constant 7.812500e-03 : f32
    %224 = vector.broadcast %cst_84 : f32 to vector<1x128xf32>
    %225 = arith.mulf %223, %224 : vector<1x128xf32>
    %cst_85 = arith.constant 9.99999974E-6 : f32
    %226 = vector.broadcast %cst_85 : f32 to vector<1x128xf32>
    %227 = arith.addf %225, %226 : vector<1x128xf32>
    %228 = math.rsqrt %227 : vector<1x128xf32>
    %229 = arith.mulf %213, %228 : vector<1x128xf32>
    %230 = vector.broadcast %229 : vector<1x128xf32> to vector<128x128xf32>
    %231 = arith.mulf %220, %230 : vector<128x128xf32>
    %232 = vector.broadcast %214 : vector<1x128xf32> to vector<128x128xf32>
    %233 = arith.addf %231, %232 : vector<128x128xf32>
    %cst_86 = arith.constant 0.000000e+00 : f32
    %234 = vector.broadcast %cst_86 : f32 to vector<128x128xf32>
    %235 = arith.cmpf oge, %233, %234 : vector<128x128xf32>
    %cst_87 = arith.constant 2.000000e-01 : f32
    %236 = vector.broadcast %cst_87 : f32 to vector<128x128xf32>
    %237 = arith.mulf %236, %233 : vector<128x128xf32>
    %238 = arith.select %235, %233, %237 : vector<128x128xi1>, vector<128x128xf32>
    %c0_88 = arith.constant 0 : index
    %c0_89 = arith.constant 0 : index
    %239 = vector.load %arg13[%c0_88, %c0_89] : memref<128x128xf32, #tpu.memory_space<vmem>>, vector<128x128xf32>
    %cst_90 = arith.constant dense<0.000000e+00> : vector<128x128xf32>
    %240 = tpu.matmul %238, %239, %cst_90 {dimension_numbers = #tpu.dot_dimension_numbers<[1], [0], [0], [1], [0, 0, 1, 1], [], []>} : vector<128x128xf32>, vector<128x128xf32>, vector<128x128xf32> -> vector<128x128xf32>
    %241 = vector.extract_strided_slice %179 {offsets = [5, 0], sizes = [1, 128], strides = [1, 1]} : vector<8x128xf32> to vector<1x128xf32>
    %242 = vector.broadcast %241 : vector<1x128xf32> to vector<128x128xf32>
    %243 = arith.addf %240, %242 : vector<128x128xf32>
    %244 = vector.extract_strided_slice %179 {offsets = [6, 0], sizes = [1, 128], strides = [1, 1]} : vector<8x128xf32> to vector<1x128xf32>
    %245 = vector.extract_strided_slice %179 {offsets = [7, 0], sizes = [1, 128], strides = [1, 1]} : vector<8x128xf32> to vector<1x128xf32>
    %cst_91 = arith.constant dense<0.000000e+00> : vector<128xf32>
    %246 = vector.multi_reduction <add>, %243, %cst_91 [0] : vector<128x128xf32> to vector<128xf32>
    %247 = vector.shape_cast %246 : vector<128xf32> to vector<1x128xf32>
    %cst_92 = arith.constant 7.812500e-03 : f32
    %248 = vector.broadcast %cst_92 : f32 to vector<1x128xf32>
    %249 = arith.mulf %247, %248 : vector<1x128xf32>
    %250 = vector.broadcast %249 : vector<1x128xf32> to vector<128x128xf32>
    %251 = arith.subf %243, %250 : vector<128x128xf32>
    %252 = arith.mulf %251, %251 : vector<128x128xf32>
    %cst_93 = arith.constant dense<0.000000e+00> : vector<128xf32>
    %253 = vector.multi_reduction <add>, %252, %cst_93 [0] : vector<128x128xf32> to vector<128xf32>
    %254 = vector.shape_cast %253 : vector<128xf32> to vector<1x128xf32>
    %cst_94 = arith.constant 7.812500e-03 : f32
    %255 = vector.broadcast %cst_94 : f32 to vector<1x128xf32>
    %256 = arith.mulf %254, %255 : vector<1x128xf32>
    %cst_95 = arith.constant 9.99999974E-6 : f32
    %257 = vector.broadcast %cst_95 : f32 to vector<1x128xf32>
    %258 = arith.addf %256, %257 : vector<1x128xf32>
    %259 = math.rsqrt %258 : vector<1x128xf32>
    %260 = arith.mulf %244, %259 : vector<1x128xf32>
    %261 = vector.broadcast %260 : vector<1x128xf32> to vector<128x128xf32>
    %262 = arith.mulf %251, %261 : vector<128x128xf32>
    %263 = vector.broadcast %245 : vector<1x128xf32> to vector<128x128xf32>
    %264 = arith.addf %262, %263 : vector<128x128xf32>
    %c0_96 = arith.constant 0 : index
    %c0_97 = arith.constant 0 : index
    %265 = vector.load %arg15[%c0_96, %c0_97] : memref<256x128xf32, #tpu.memory_space<vmem>>, vector<256x128xf32>
    %cst_98 = arith.constant dense<0.000000e+00> : vector<128x128xf32>
    %266 = tpu.matmul %178, %265, %cst_98 {dimension_numbers = #tpu.dot_dimension_numbers<[1], [0], [0], [1], [0, 0, 1, 1], [], []>} : vector<128x256xf32>, vector<256x128xf32>, vector<128x128xf32> -> vector<128x128xf32>
    %267 = arith.addf %264, %266 : vector<128x128xf32>
    %c0_99 = arith.constant 0 : index
    %c0_100 = arith.constant 0 : index
    %268 = vector.load %arg16[%c0_99, %c0_100] : memref<128x128xf32, #tpu.memory_space<vmem>>, vector<128x128xf32>
    %cst_101 = arith.constant dense<0.000000e+00> : vector<128x128xf32>
    %269 = tpu.matmul %267, %268, %cst_101 {dimension_numbers = #tpu.dot_dimension_numbers<[1], [0], [0], [1], [0, 0, 1, 1], [], []>} : vector<128x128xf32>, vector<128x128xf32>, vector<128x128xf32> -> vector<128x128xf32>
    %c0_102 = arith.constant 0 : index
    %c0_103 = arith.constant 0 : index
    %270 = vector.load %arg17[%c0_102, %c0_103] : memref<1x128xf32, #tpu.memory_space<vmem>>, vector<1x128xf32>
    %271 = vector.broadcast %270 : vector<1x128xf32> to vector<128x128xf32>
    %272 = arith.addf %269, %271 : vector<128x128xf32>
    %c0_104 = arith.constant 0 : index
    %c0_105 = arith.constant 0 : index
    %273 = vector.load %arg18[%c0_104, %c0_105] : memref<128x128xf32, #tpu.memory_space<vmem>>, vector<128x128xf32>
    tpu.vector_store %arg18[%c0_104, %c0_105], %272 {strides = array<i32>} : memref<128x128xf32, #tpu.memory_space<vmem>>, vector<128x128xf32>,
    return
  }
}

</mosaic_0001>

<llo_original>
// kernel: fc_res_decoder.1
$region0: #{fc_res_decoder.1}
  #allocation0 [shape = 'u32[]', space=smem, size = 0x4, offset = 0x4, fixed_abs, tag = 'smem constant byte address 0x4 - core index']
  #allocation1 [shape = 'u32[144,128]{1,0:T(1,128)}', space=vmem, size = 0x12000, scoped, tag = 'internal scratch']
  %s0 = inlined_call_operand.hbm [shape: f32[128,128], index: 0, kind: input, shape index: {}]
  %s1 = inlined_call_operand.hbm [shape: f32[128,384], index: 1, kind: input, shape index: {}]
  %s2 = inlined_call_operand.hbm [shape: f32[384,384], index: 2, kind: input, shape index: {}]
  %s3 = inlined_call_operand.hbm [shape: f32[384,384], index: 3, kind: input, shape index: {}]
  %s4 = inlined_call_operand.hbm [shape: f32[8,384], index: 4, kind: input, shape index: {}]
  %s5 = inlined_call_operand.hbm [shape: f32[128,384], index: 5, kind: input, shape index: {}]
  %s6 = inlined_call_operand.hbm [shape: f32[384,256], index: 6, kind: input, shape index: {}]
  %s7 = inlined_call_operand.hbm [shape: f32[256,256], index: 7, kind: input, shape index: {}]
  %s8 = inlined_call_operand.hbm [shape: f32[256,256], index: 8, kind: input, shape index: {}]
  %s9 = inlined_call_operand.vmem [shape: f32[8,256], index: 9, kind: input, shape index: {}]
  %s10 = inlined_call_operand.hbm [shape: f32[384,256], index: 10, kind: input, shape index: {}]
  %s11 = inlined_call_operand.hbm [shape: f32[256,128], index: 11, kind: input, shape index: {}]
  %s12 = inlined_call_operand.hbm [shape: f32[128,128], index: 12, kind: input, shape index: {}]
  %s13 = inlined_call_operand.hbm [shape: f32[128,128], index: 13, kind: input, shape index: {}]
  %s14 = inlined_call_operand.vmem [shape: f32[8,128], index: 14, kind: input, shape index: {}]
  %s15 = inlined_call_operand.hbm [shape: f32[256,128], index: 15, kind: input, shape index: {}]
  %s16 = inlined_call_operand.hbm [shape: f32[128,128], index: 16, kind: input, shape index: {}]
  %s17 = inlined_call_operand.vmem [shape: f32[1,128], index: 17, kind: input, shape index: {}]
  %s18 = inlined_call_operand.hbm [shape: f32[128,128], index: 18, kind: output, shape index: {}]
  %s19 = sld [smem:[#allocation0]]
  $region142: #{fc_res_decoder.1} parent=0
    _
  %s21 = ssub.s32 1, %s19
  %s22 = scalar_select 0, %s21, %s19
  $region1: #{fc_res_decoder.1} parent=0
    #allocation2 [shape = 'u8[65536]{0}', space=vmem, size = 0x10000, scoped, tag = 'input window, operand 0, single buffered']
    #allocation3 [shape = 's32[1]{0}', space=sflag, size = 0x4, scoped, tag = 'scoped memory for fc_res_decoder.1']
    #allocation4 [shape = 's32[1]{0}', space=sflag, size = 0x4, scoped, tag = 'scoped memory for fc_res_decoder.1']
    #allocation5 [shape = 'u8[196608]{0}', space=vmem, size = 0x30000, scoped, tag = 'input window, operand 1, single buffered']
    #allocation6 [shape = 's32[1]{0}', space=sflag, size = 0x4, scoped, tag = 'scoped memory for fc_res_decoder.1']
    #allocation7 [shape = 'u8[589824]{0}', space=vmem, size = 0x90000, scoped, tag = 'input window, operand 2, single buffered']
    #allocation8 [shape = 'u8[589824]{0}', space=vmem, size = 0x90000, scoped, tag = 'input window, operand 3, single buffered']
    #allocation9 [shape = 's32[1]{0}', space=sflag, size = 0x4, scoped, tag = 'scoped memory for fc_res_decoder.1']
    #allocation10 [shape = 'u8[12288]{0}', space=vmem, size = 0x3000, scoped, tag = 'input window, operand 4, single buffered']
    #allocation11 [shape = 'u8[196608]{0}', space=vmem, size = 0x30000, scoped, tag = 'input window, operand 5, single buffered']
    #allocation12 [shape = 's32[1]{0}', space=sflag, size = 0x4, scoped, tag = 'scoped memory for fc_res_decoder.1']
    #allocation13 [shape = 'u8[393216]{0}', space=vmem, size = 0x60000, scoped, tag = 'input window, operand 6, single buffered']
    #allocation14 [shape = 'u8[262144]{0}', space=vmem, size = 0x40000, scoped, tag = 'input window, operand 7, single buffered']
    #allocation15 [shape = 's32[1]{0}', space=sflag, size = 0x4, scoped, tag = 'scoped memory for fc_res_decoder.1']
    #allocation16 [shape = 'u8[262144]{0}', space=vmem, size = 0x40000, scoped, tag = 'input window, operand 8, single buffered']
    #allocation17 [shape = 'u8[393216]{0}', space=vmem, size = 0x60000, scoped, tag = 'input window, operand 10, single buffered']
    #allocation18 [shape = 's32[1]{0}', space=sflag, size = 0x4, scoped, tag = 'scoped memory for fc_res_decoder.1']
    #allocation19 [shape = 'u8[131072]{0}', space=vmem, size = 0x20000, scoped, tag = 'input window, operand 11, single buffered']
    #allocation20 [shape = 'u8[65536]{0}', space=vmem, size = 0x10000, scoped, tag = 'input window, operand 12, single buffered']
    #allocation21 [shape = 's32[1]{0}', space=sflag, size = 0x4, scoped, tag = 'scoped memory for fc_res_decoder.1']
    #allocation22 [shape = 'u8[65536]{0}', space=vmem, size = 0x10000, scoped, tag = 'input window, operand 13, single buffered']
    #allocation23 [shape = 'u8[131072]{0}', space=vmem, size = 0x20000, scoped, tag = 'input window, operand 15, single buffered']
    #allocation24 [shape = 's32[1]{0}', space=sflag, size = 0x4, scoped, tag = 'scoped memory for fc_res_decoder.1']
    #allocation25 [shape = 'u8[65536]{0}', space=vmem, size = 0x10000, scoped, tag = 'input window, operand 16, single buffered']
    #allocation26 [shape = 'u8[65536]{0}', space=vmem, size = 0x10000, scoped, tag = 'output window, operand 0, single buffered']
    %23 = vsyncpa [#allocation3], 0
    %24 = vsyncpa [#allocation6], 0
    %25 = vsyncpa [#allocation9], 0
    %26 = vsyncpa [#allocation12], 0
    %27 = vsyncpa [#allocation15], 0
    %28 = vsyncpa [#allocation18], 0
    %29 = vsyncpa [#allocation21], 0
    %30 = vsyncpa [#allocation24], 0
    %31 = vsyncpa [#allocation4], 0
    // Predicated region
    $region2: #{fc_res_decoder.1} parent=1 // pred_check
      _
    $region3: #{fc_res_decoder.1} parent=1 // pred_check_branch
      %33 = sbr.rel (0) target = $region5
    $region4: #{fc_res_decoder.1} parent=1 // pred_region
      %s35 = ssub.s32 2048, 2048
      %36 = vsyncadd [#allocation3], %s35
      %s37 = sshll.u32 [#allocation2], 4
      %s38 = int_to_ptr.vmem [resolvable:$true] %s37
      %43 = dma.hbm_to_vmem [thread:$0]  %s0, 2048, %s38, [#allocation3], 128, 128, 8
    $region5: #{fc_res_decoder.1} parent=1 // pred_fallthru
      _
    // Predicated region
    $region6: #{fc_res_decoder.1} parent=1 // pred_check
      _
    $region7: #{fc_res_decoder.1} parent=1 // pred_check_branch
      %45 = sbr.rel (0) target = $region9
    $region8: #{fc_res_decoder.1} parent=1 // pred_region
      %s47 = ssub.s32 6144, 6144
      %48 = vsyncadd [#allocation6], %s47
      %s49 = sshll.u32 [#allocation5], 4
      %s50 = int_to_ptr.vmem [resolvable:$true] %s49
      %55 = dma.hbm_to_vmem [thread:$0]  %s1, 6144, %s50, [#allocation6], 384, 384, 24
    $region9: #{fc_res_decoder.1} parent=1 // pred_fallthru
      _
    // Predicated region
    $region10: #{fc_res_decoder.1} parent=1 // pred_check
      _
    $region11: #{fc_res_decoder.1} parent=1 // pred_check_branch
      %57 = sbr.rel (0) target = $region13
    $region12: #{fc_res_decoder.1} parent=1 // pred_region
      %s59 = ssub.s32 18432, 18432
      %60 = vsyncadd [#allocation6], %s59
      %s61 = sshll.u32 [#allocation7], 4
      %s62 = int_to_ptr.vmem [resolvable:$true] %s61
      %67 = dma.hbm_to_vmem [thread:$0]  %s2, 18432, %s62, [#allocation6], 384, 384, 24
    $region13: #{fc_res_decoder.1} parent=1 // pred_fallthru
      _
    // Predicated region
    $region14: #{fc_res_decoder.1} parent=1 // pred_check
      _
    $region15: #{fc_res_decoder.1} parent=1 // pred_check_branch
      %69 = sbr.rel (0) target = $region17
    $region16: #{fc_res_decoder.1} parent=1 // pred_region
      %s71 = ssub.s32 18432, 18432
      %72 = vsyncadd [#allocation9], %s71
      %s73 = sshll.u32 [#allocation8], 4
      %s74 = int_to_ptr.vmem [resolvable:$true] %s73
      %79 = dma.hbm_to_vmem [thread:$0]  %s3, 18432, %s74, [#allocation9], 384, 384, 24
    $region17: #{fc_res_decoder.1} parent=1 // pred_fallthru
      _
    // Predicated region
    $region18: #{fc_res_decoder.1} parent=1 // pred_check
      _
    $region19: #{fc_res_decoder.1} parent=1 // pred_check_branch
      %81 = sbr.rel (0) target = $region21
    $region20: #{fc_res_decoder.1} parent=1 // pred_region
      %s83 = ssub.s32 384, 384
      %84 = vsyncadd [#allocation9], %s83
      %s86 = sshll.u32 [#allocation10], 4
      %s87 = int_to_ptr.vmem [resolvable:$true] %s86
      %89 = dma.hbm_to_vmem [thread:$0]  %s4, 384, %s87, [#allocation9]
    $region21: #{fc_res_decoder.1} parent=1 // pred_fallthru
      _
    // Predicated region
    $region22: #{fc_res_decoder.1} parent=1 // pred_check
      _
    $region23: #{fc_res_decoder.1} parent=1 // pred_check_branch
      %91 = sbr.rel (0) target = $region25
    $region24: #{fc_res_decoder.1} parent=1 // pred_region
      %s93 = ssub.s32 6144, 6144
      %94 = vsyncadd [#allocation12], %s93
      %s95 = sshll.u32 [#allocation11], 4
      %s96 = int_to_ptr.vmem [resolvable:$true] %s95
      %101 = dma.hbm_to_vmem [thread:$0]  %s5, 6144, %s96, [#allocation12], 384, 384, 24
    $region25: #{fc_res_decoder.1} parent=1 // pred_fallthru
      _
    // Predicated region
    $region26: #{fc_res_decoder.1} parent=1 // pred_check
      _
    $region27: #{fc_res_decoder.1} parent=1 // pred_check_branch
      %103 = sbr.rel (0) target = $region29
    $region28: #{fc_res_decoder.1} parent=1 // pred_region
      %s105 = ssub.s32 12288, 12288
      %106 = vsyncadd [#allocation12], %s105
      %s107 = sshll.u32 [#allocation13], 4
      %s108 = int_to_ptr.vmem [resolvable:$true] %s107
      %113 = dma.hbm_to_vmem [thread:$0]  %s6, 12288, %s108, [#allocation12], 256, 256, 16
    $region29: #{fc_res_decoder.1} parent=1 // pred_fallthru
      _
    // Predicated region
    $region30: #{fc_res_decoder.1} parent=1 // pred_check
      _
    $region31: #{fc_res_decoder.1} parent=1 // pred_check_branch
      %115 = sbr.rel (0) target = $region33
    $region32: #{fc_res_decoder.1} parent=1 // pred_region
      %s117 = ssub.s32 8192, 8192
      %118 = vsyncadd [#allocation15], %s117
      %s119 = sshll.u32 [#allocation14], 4
      %s120 = int_to_ptr.vmem [resolvable:$true] %s119
      %125 = dma.hbm_to_vmem [thread:$0]  %s7, 8192, %s120, [#allocation15], 256, 256, 16
    $region33: #{fc_res_decoder.1} parent=1 // pred_fallthru
      _
    // Predicated region
    $region34: #{fc_res_decoder.1} parent=1 // pred_check
      _
    $region35: #{fc_res_decoder.1} parent=1 // pred_check_branch
      %127 = sbr.rel (0) target = $region37
    $region36: #{fc_res_decoder.1} parent=1 // pred_region
      %s129 = ssub.s32 8192, 8192
      %130 = vsyncadd [#allocation15], %s129
      %s131 = sshll.u32 [#allocation16], 4
      %s132 = int_to_ptr.vmem [resolvable:$true] %s131
      %137 = dma.hbm_to_vmem [thread:$0]  %s8, 8192, %s132, [#allocation15], 256, 256, 16
    $region37: #{fc_res_decoder.1} parent=1 // pred_fallthru
      _
    // Predicated region
    $region38: #{fc_res_decoder.1} parent=1 // pred_check
      _
    $region39: #{fc_res_decoder.1} parent=1 // pred_check_branch
      %139 = sbr.rel (0) target = $region41
    $region40: #{fc_res_decoder.1} parent=1 // pred_region
      _
    $region41: #{fc_res_decoder.1} parent=1 // pred_fallthru
      _
    // Predicated region
    $region42: #{fc_res_decoder.1} parent=1 // pred_check
      _
    $region43: #{fc_res_decoder.1} parent=1 // pred_check_branch
      %141 = sbr.rel (0) target = $region45
    $region44: #{fc_res_decoder.1} parent=1 // pred_region
      %s143 = ssub.s32 12288, 12288
      %144 = vsyncadd [#allocation18], %s143
      %s145 = sshll.u32 [#allocation17], 4
      %s146 = int_to_ptr.vmem [resolvable:$true] %s145
      %151 = dma.hbm_to_vmem [thread:$0]  %s10, 12288, %s146, [#allocation18], 256, 256, 16
    $region45: #{fc_res_decoder.1} parent=1 // pred_fallthru
      _
    // Predicated region
    $region46: #{fc_res_decoder.1} parent=1 // pred_check
      _
    $region47: #{fc_res_decoder.1} parent=1 // pred_check_branch
      %153 = sbr.rel (0) target = $region49
    $region48: #{fc_res_decoder.1} parent=1 // pred_region
      %s155 = ssub.s32 4096, 4096
      %156 = vsyncadd [#allocation18], %s155
      %s157 = sshll.u32 [#allocation19], 4
      %s158 = int_to_ptr.vmem [resolvable:$true] %s157
      %163 = dma.hbm_to_vmem [thread:$0]  %s11, 4096, %s158, [#allocation18], 128, 128, 8
    $region49: #{fc_res_decoder.1} parent=1 // pred_fallthru
      _
    // Predicated region
    $region50: #{fc_res_decoder.1} parent=1 // pred_check
      _
    $region51: #{fc_res_decoder.1} parent=1 // pred_check_branch
      %165 = sbr.rel (0) target = $region53
    $region52: #{fc_res_decoder.1} parent=1 // pred_region
      %s167 = ssub.s32 2048, 2048
      %168 = vsyncadd [#allocation21], %s167
      %s169 = sshll.u32 [#allocation20], 4
      %s170 = int_to_ptr.vmem [resolvable:$true] %s169
      %175 = dma.hbm_to_vmem [thread:$0]  %s12, 2048, %s170, [#allocation21], 128, 128, 8
    $region53: #{fc_res_decoder.1} parent=1 // pred_fallthru
      _
    // Predicated region
    $region54: #{fc_res_decoder.1} parent=1 // pred_check
      _
    $region55: #{fc_res_decoder.1} parent=1 // pred_check_branch
      %177 = sbr.rel (0) target = $region57
    $region56: #{fc_res_decoder.1} parent=1 // pred_region
      %s179 = ssub.s32 2048, 2048
      %180 = vsyncadd [#allocation21], %s179
      %s181 = sshll.u32 [#allocation22], 4
      %s182 = int_to_ptr.vmem [resolvable:$true] %s181
      %187 = dma.hbm_to_vmem [thread:$0]  %s13, 2048, %s182, [#allocation21], 128, 128, 8
    $region57: #{fc_res_decoder.1} parent=1 // pred_fallthru
      _
    // Predicated region
    $region58: #{fc_res_decoder.1} parent=1 // pred_check
      _
    $region59: #{fc_res_decoder.1} parent=1 // pred_check_branch
      %189 = sbr.rel (0) target = $region61
    $region60: #{fc_res_decoder.1} parent=1 // pred_region
      _
    $region61: #{fc_res_decoder.1} parent=1 // pred_fallthru
      _
    // Predicated region
    $region62: #{fc_res_decoder.1} parent=1 // pred_check
      _
    $region63: #{fc_res_decoder.1} parent=1 // pred_check_branch
      %191 = sbr.rel (0) target = $region65
    $region64: #{fc_res_decoder.1} parent=1 // pred_region
      %s193 = ssub.s32 4096, 4096
      %194 = vsyncadd [#allocation24], %s193
      %s195 = sshll.u32 [#allocation23], 4
      %s196 = int_to_ptr.vmem [resolvable:$true] %s195
      %201 = dma.hbm_to_vmem [thread:$0]  %s15, 4096, %s196, [#allocation24], 128, 128, 8
    $region65: #{fc_res_decoder.1} parent=1 // pred_fallthru
      _
    // Predicated region
    $region66: #{fc_res_decoder.1} parent=1 // pred_check
      _
    $region67: #{fc_res_decoder.1} parent=1 // pred_check_branch
      %203 = sbr.rel (0) target = $region69
    $region68: #{fc_res_decoder.1} parent=1 // pred_region
      %s205 = ssub.s32 2048, 2048
      %206 = vsyncadd [#allocation24], %s205
      %s207 = sshll.u32 [#allocation25], 4
      %s208 = int_to_ptr.vmem [resolvable:$true] %s207
      %213 = dma.hbm_to_vmem [thread:$0]  %s16, 2048, %s208, [#allocation24], 128, 128, 8
    $region69: #{fc_res_decoder.1} parent=1 // pred_fallthru
      _
    // Predicated region
    $region70: #{fc_res_decoder.1} parent=1 // pred_check
      _
    $region71: #{fc_res_decoder.1} parent=1 // pred_check_branch
      %215 = sbr.rel (0) target = $region73
    $region72: #{fc_res_decoder.1} parent=1 // pred_region
      _
    $region73: #{fc_res_decoder.1} parent=1 // pred_fallthru
      _
    // Predicated region
    $region74: #{fc_res_decoder.1} parent=1 // pred_check
      _
    $region75: #{fc_res_decoder.1} parent=1 // pred_check_branch
      %217 = sbr.rel (0) target = $region77
    $region76: #{fc_res_decoder.1} parent=1 // pred_region
      %218 = dma.done [#allocation3], 2048
    $region77: #{fc_res_decoder.1} parent=1 // pred_fallthru
      _
    // Predicated region
    $region78: #{fc_res_decoder.1} parent=1 // pred_check
      _
    $region79: #{fc_res_decoder.1} parent=1 // pred_check_branch
      %220 = sbr.rel (0) target = $region81
    $region80: #{fc_res_decoder.1} parent=1 // pred_region
      %221 = dma.done [#allocation6], 6144
    $region81: #{fc_res_decoder.1} parent=1 // pred_fallthru
      _
    // Predicated region
    $region82: #{fc_res_decoder.1} parent=1 // pred_check
      _
    $region83: #{fc_res_decoder.1} parent=1 // pred_check_branch
      %223 = sbr.rel (0) target = $region85
    $region84: #{fc_res_decoder.1} parent=1 // pred_region
      %224 = dma.done [#allocation6], 18432
    $region85: #{fc_res_decoder.1} parent=1 // pred_fallthru
      _
    // Predicated region
    $region86: #{fc_res_decoder.1} parent=1 // pred_check
      _
    $region87: #{fc_res_decoder.1} parent=1 // pred_check_branch
      %226 = sbr.rel (0) target = $region89
    $region88: #{fc_res_decoder.1} parent=1 // pred_region
      %227 = dma.done [#allocation9], 18432
    $region89: #{fc_res_decoder.1} parent=1 // pred_fallthru
      _
    // Predicated region
    $region90: #{fc_res_decoder.1} parent=1 // pred_check
      _
    $region91: #{fc_res_decoder.1} parent=1 // pred_check_branch
      %229 = sbr.rel (0) target = $region93
    $region92: #{fc_res_decoder.1} parent=1 // pred_region
      %230 = dma.done [#allocation9], 384
    $region93: #{fc_res_decoder.1} parent=1 // pred_fallthru
      _
    // Predicated region
    $region94: #{fc_res_decoder.1} parent=1 // pred_check
      _
    $region95: #{fc_res_decoder.1} parent=1 // pred_check_branch
      %232 = sbr.rel (0) target = $region97
    $region96: #{fc_res_decoder.1} parent=1 // pred_region
      %233 = dma.done [#allocation12], 6144
    $region97: #{fc_res_decoder.1} parent=1 // pred_fallthru
      _
    // Predicated region
    $region98: #{fc_res_decoder.1} parent=1 // pred_check
      _
    $region99: #{fc_res_decoder.1} parent=1 // pred_check_branch
      %235 = sbr.rel (0) target = $region101
    $region100: #{fc_res_decoder.1} parent=1 // pred_region
      %236 = dma.done [#allocation12], 12288
    $region101: #{fc_res_decoder.1} parent=1 // pred_fallthru
      _
    // Predicated region
    $region102: #{fc_res_decoder.1} parent=1 // pred_check
      _
    $region103: #{fc_res_decoder.1} parent=1 // pred_check_branch
      %238 = sbr.rel (0) target = $region105
    $region104: #{fc_res_decoder.1} parent=1 // pred_region
      %239 = dma.done [#allocation15], 8192
    $region105: #{fc_res_decoder.1} parent=1 // pred_fallthru
      _
    // Predicated region
    $region106: #{fc_res_decoder.1} parent=1 // pred_check
      _
    $region107: #{fc_res_decoder.1} parent=1 // pred_check_branch
      %241 = sbr.rel (0) target = $region109
    $region108: #{fc_res_decoder.1} parent=1 // pred_region
      %242 = dma.done [#allocation15], 8192
    $region109: #{fc_res_decoder.1} parent=1 // pred_fallthru
      _
    // Predicated region
    $region110: #{fc_res_decoder.1} parent=1 // pred_check
      _
    $region111: #{fc_res_decoder.1} parent=1 // pred_check_branch
      %244 = sbr.rel (0) target = $region113
    $region112: #{fc_res_decoder.1} parent=1 // pred_region
      %245 = dma.done [#allocation18], 12288
    $region113: #{fc_res_decoder.1} parent=1 // pred_fallthru
      _
    // Predicated region
    $region114: #{fc_res_decoder.1} parent=1 // pred_check
      _
    $region115: #{fc_res_decoder.1} parent=1 // pred_check_branch
      %247 = sbr.rel (0) target = $region117
    $region116: #{fc_res_decoder.1} parent=1 // pred_region
      %248 = dma.done [#allocation18], 4096
    $region117: #{fc_res_decoder.1} parent=1 // pred_fallthru
      _
    // Predicated region
    $region118: #{fc_res_decoder.1} parent=1 // pred_check
      _
    $region119: #{fc_res_decoder.1} parent=1 // pred_check_branch
      %250 = sbr.rel (0) target = $region121
    $region120: #{fc_res_decoder.1} parent=1 // pred_region
      %251 = dma.done [#allocation21], 2048
    $region121: #{fc_res_decoder.1} parent=1 // pred_fallthru
      _
    // Predicated region
    $region122: #{fc_res_decoder.1} parent=1 // pred_check
      _
    $region123: #{fc_res_decoder.1} parent=1 // pred_check_branch
      %253 = sbr.rel (0) target = $region125
    $region124: #{fc_res_decoder.1} parent=1 // pred_region
      %254 = dma.done [#allocation21], 2048
    $region125: #{fc_res_decoder.1} parent=1 // pred_fallthru
      _
    // Predicated region
    $region126: #{fc_res_decoder.1} parent=1 // pred_check
      _
    $region127: #{fc_res_decoder.1} parent=1 // pred_check_branch
      %256 = sbr.rel (0) target = $region129
    $region128: #{fc_res_decoder.1} parent=1 // pred_region
      %257 = dma.done [#allocation24], 4096
    $region129: #{fc_res_decoder.1} parent=1 // pred_fallthru
      _
    // Predicated region
    $region130: #{fc_res_decoder.1} parent=1 // pred_check
      _
    $region131: #{fc_res_decoder.1} parent=1 // pred_check_branch
      %259 = sbr.rel (0) target = $region133
    $region132: #{fc_res_decoder.1} parent=1 // pred_region
      %260 = dma.done [#allocation24], 2048
    $region133: #{fc_res_decoder.1} parent=1 // pred_fallthru
      _
    %v261 = vld [vmem:[#allocation2] sm:$0xff]
    %v262 = vld [vmem:[#allocation2 + $0x8] sm:$0xff]
    %v263 = vld [vmem:[#allocation2 + $0x10] sm:$0xff]
    %v264 = vld [vmem:[#allocation2 + $0x18] sm:$0xff]
    %v265 = vld [vmem:[#allocation2 + $0x20] sm:$0xff]
    %v266 = vld [vmem:[#allocation2 + $0x28] sm:$0xff]
    %v267 = vld [vmem:[#allocation2 + $0x30] sm:$0xff]
    %v268 = vld [vmem:[#allocation2 + $0x38] sm:$0xff]
    %v269 = vld [vmem:[#allocation2 + $0x40] sm:$0xff]
    %v270 = vld [vmem:[#allocation2 + $0x48] sm:$0xff]
    %v271 = vld [vmem:[#allocation2 + $0x50] sm:$0xff]
    %v272 = vld [vmem:[#allocation2 + $0x58] sm:$0xff]
    %v273 = vld [vmem:[#allocation2 + $0x60] sm:$0xff]
    %v274 = vld [vmem:[#allocation2 + $0x68] sm:$0xff]
    %v275 = vld [vmem:[#allocation2 + $0x70] sm:$0xff]
    %v276 = vld [vmem:[#allocation2 + $0x78] sm:$0xff]
    %v277 = vld [vmem:[#allocation10] sm:$0xff]
    %v278 = vld [vmem:[#allocation10 + $0x8] sm:$0xff]
    %v279 = vld [vmem:[#allocation10 + $0x10] sm:$0xff]
    %v280 = vld [vmem:[#allocation5] sm:$0xff]
    %v281 = vld [vmem:[#allocation5 + $0x8] sm:$0xff]
    %v282 = vld [vmem:[#allocation5 + $0x10] sm:$0xff]
    %v283 = vld [vmem:[#allocation5 + $0x18] sm:$0xff]
    %v284 = vld [vmem:[#allocation5 + $0x20] sm:$0xff]
    %v285 = vld [vmem:[#allocation5 + $0x28] sm:$0xff]
    %v286 = vld [vmem:[#allocation5 + $0x30] sm:$0xff]
    %v287 = vld [vmem:[#allocation5 + $0x38] sm:$0xff]
    %v288 = vld [vmem:[#allocation5 + $0x40] sm:$0xff]
    %v289 = vld [vmem:[#allocation5 + $0x48] sm:$0xff]
    %v290 = vld [vmem:[#allocation5 + $0x50] sm:$0xff]
    %v291 = vld [vmem:[#allocation5 + $0x58] sm:$0xff]
    %v292 = vld [vmem:[#allocation5 + $0x60] sm:$0xff]
    %v293 = vld [vmem:[#allocation5 + $0x68] sm:$0xff]
    %v294 = vld [vmem:[#allocation5 + $0x70] sm:$0xff]
    %v295 = vld [vmem:[#allocation5 + $0x78] sm:$0xff]
    %v296 = vld [vmem:[#allocation5 + $0x80] sm:$0xff]
    %v297 = vld [vmem:[#allocation5 + $0x88] sm:$0xff]
    %v298 = vld [vmem:[#allocation5 + $0x90] sm:$0xff]
    %v299 = vld [vmem:[#allocation5 + $0x98] sm:$0xff]
    %v300 = vld [vmem:[#allocation5 + $0xa0] sm:$0xff]
    %v301 = vld [vmem:[#allocation5 + $0xa8] sm:$0xff]
    %v302 = vld [vmem:[#allocation5 + $0xb0] sm:$0xff]
    %v303 = vld [vmem:[#allocation5 + $0xb8] sm:$0xff]
    %v304 = vld [vmem:[#allocation5 + $0xc0] sm:$0xff]
    %v305 = vld [vmem:[#allocation5 + $0xc8] sm:$0xff]
    %v306 = vld [vmem:[#allocation5 + $0xd0] sm:$0xff]
    %v307 = vld [vmem:[#allocation5 + $0xd8] sm:$0xff]
    %v308 = vld [vmem:[#allocation5 + $0xe0] sm:$0xff]
    %v309 = vld [vmem:[#allocation5 + $0xe8] sm:$0xff]
    %v310 = vld [vmem:[#allocation5 + $0xf0] sm:$0xff]
    %v311 = vld [vmem:[#allocation5 + $0xf8] sm:$0xff]
    %v312 = vld [vmem:[#allocation5 + $0x100] sm:$0xff]
    %v313 = vld [vmem:[#allocation5 + $0x108] sm:$0xff]
    %v314 = vld [vmem:[#allocation5 + $0x110] sm:$0xff]
    %v315 = vld [vmem:[#allocation5 + $0x118] sm:$0xff]
    %v316 = vld [vmem:[#allocation5 + $0x120] sm:$0xff]
    %v317 = vld [vmem:[#allocation5 + $0x128] sm:$0xff]
    %v318 = vld [vmem:[#allocation5 + $0x130] sm:$0xff]
    %v319 = vld [vmem:[#allocation5 + $0x138] sm:$0xff]
    %v320 = vld [vmem:[#allocation5 + $0x140] sm:$0xff]
    %v321 = vld [vmem:[#allocation5 + $0x148] sm:$0xff]
    %v322 = vld [vmem:[#allocation5 + $0x150] sm:$0xff]
    %v323 = vld [vmem:[#allocation5 + $0x158] sm:$0xff]
    %v324 = vld [vmem:[#allocation5 + $0x160] sm:$0xff]
    %v325 = vld [vmem:[#allocation5 + $0x168] sm:$0xff]
    %v326 = vld [vmem:[#allocation5 + $0x170] sm:$0xff]
    %v327 = vld [vmem:[#allocation5 + $0x178] sm:$0xff]
    %328 = vmatprep.subr.mxu0 %v281
    %329 = vmatpush1.msra.mxu0 %v280
    %330 = vmatprep.subr.mxu0 %v284
    %331 = vmatpush1.msra.mxu0 %v283
    %332 = vmatprep.subr.mxu0 %v287
    %333 = vmatpush1.msra.mxu0 %v286
    %334 = vmatprep.subr.mxu0 %v290
    %335 = vmatpush1.msra.mxu0 %v289
    %336 = vmatprep.subr.mxu0 %v293
    %337 = vmatpush1.msra.mxu0 %v292
    %338 = vmatprep.subr.mxu0 %v296
    %339 = vmatpush1.msra.mxu0 %v295
    %340 = vmatprep.subr.mxu0 %v299
    %341 = vmatpush1.msra.mxu0 %v298
    %342 = vmatprep.subr.mxu0 %v302
    %343 = vmatpush1.msra.mxu0 %v301
    %344 = vmatprep.subr.mxu0 %v305
    %345 = vmatpush1.msra.mxu0 %v304
    %346 = vmatprep.subr.mxu0 %v308
    %347 = vmatpush1.msra.mxu0 %v307
    %348 = vmatprep.subr.mxu0 %v311
    %349 = vmatpush1.msra.mxu0 %v310
    %350 = vmatprep.subr.mxu0 %v314
    %351 = vmatpush1.msra.mxu0 %v313
    %352 = vmatprep.subr.mxu0 %v317
    %353 = vmatpush1.msra.mxu0 %v316
    %354 = vmatprep.subr.mxu0 %v320
    %355 = vmatpush1.msra.mxu0 %v319
    %356 = vmatprep.subr.mxu0 %v323
    %357 = vmatpush1.msra.mxu0 %v322
    %358 = vmatprep.subr.mxu0 %v326
    %359 = vmatpush1.msra.mxu0 %v325
    %360 = vmatprep.subr.mxu0 0.0
    %361 = vmatpush1.msra.mxu0 0.0
    %362 = vmatprep.subr.mxu0 0.0
    %363 = vmatpush1.msra.mxu0 0.0
    %364 = vmatprep.subr.mxu0 0.0
    %365 = vmatpush1.msra.mxu0 0.0
    %366 = vmatprep.subr.mxu0 0.0
    %367 = vmatpush1.msra.mxu0 0.0
    %368 = vmatprep.subr.mxu0 0.0
    %369 = vmatpush1.msra.mxu0 0.0
    %370 = vmatprep.subr.mxu0 0.0
    %371 = vmatpush1.msra.mxu0 0.0
    %372 = vmatprep.subr.mxu0 0.0
    %373 = vmatpush1.msra.mxu0 0.0
    %374 = vmatprep.subr.mxu0 0.0
    %375 = vmatpush1.msra.mxu0 0.0
    %376 = vmatprep.subr.mxu0 0.0
    %377 = vmatpush1.msra.mxu0 0.0
    %378 = vmatprep.subr.mxu0 0.0
    %379 = vmatpush1.msra.mxu0 0.0
    %380 = vmatprep.subr.mxu0 0.0
    %381 = vmatpush1.msra.mxu0 0.0
    %382 = vmatprep.subr.mxu0 0.0
    %383 = vmatpush1.msra.mxu0 0.0
    %384 = vmatprep.subr.mxu0 0.0
    %385 = vmatpush1.msra.mxu0 0.0
    %386 = vmatprep.subr.mxu0 0.0
    %387 = vmatpush1.msra.mxu0 0.0
    %388 = vmatprep.subr.mxu0 0.0
    %389 = vmatpush1.msra.mxu0 0.0
    %390 = vmatprep.subr.mxu0 0.0
    %391 = vmatpush1.msra.mxu0 0.0
    %392 = vmatprep.mubr.f32.mxu0 0.0
    %393 = vmatmul.mubr.f32.gmra.mrb[0].mxu0 %v261
    %v394 = vpop.f32.mrb[0].mxu0
    %v395 = vadd.f32 0.0, %v394
    %v396 = vpop.f32.mrb[0].mxu0
    %v397 = vadd.f32 0.0, %v396
    %398 = vmatprep.mubr.f32.mxu0 0.0
    %399 = vmatmul.mubr.f32.gmra.mrb[0].mxu0 %v262
    %v400 = vpop.f32.mrb[0].mxu0
    %v401 = vadd.f32 0.0, %v400
    %v402 = vpop.f32.mrb[0].mxu0
    %v403 = vadd.f32 0.0, %v402
    %404 = vmatprep.mubr.f32.mxu0 0.0
    %405 = vmatmul.mubr.f32.gmra.mrb[0].mxu0 %v263
    %v406 = vpop.f32.mrb[0].mxu0
    %v407 = vadd.f32 0.0, %v406
    %v408 = vpop.f32.mrb[0].mxu0
    %v409 = vadd.f32 0.0, %v408
    %410 = vmatprep.mubr.f32.mxu0 0.0
    %411 = vmatmul.mubr.f32.gmra.mrb[0].mxu0 %v264
    %v412 = vpop.f32.mrb[0].mxu0
    %v413 = vadd.f32 0.0, %v412
    %v414 = vpop.f32.mrb[0].mxu0
    %v415 = vadd.f32 0.0, %v414
    %416 = vmatprep.mubr.f32.mxu0 0.0
    %417 = vmatmul.mubr.f32.gmra.mrb[0].mxu0 %v265
    %v418 = vpop.f32.mrb[0].mxu0
    %v419 = vadd.f32 0.0, %v418
    %v420 = vpop.f32.mrb[0].mxu0
    %v421 = vadd.f32 0.0, %v420
    %422 = vmatprep.mubr.f32.mxu0 0.0
    %423 = vmatmul.mubr.f32.gmra.mrb[0].mxu0 %v266
    %v424 = vpop.f32.mrb[0].mxu0
    %v425 = vadd.f32 0.0, %v424
    %v426 = vpop.f32.mrb[0].mxu0
    %v427 = vadd.f32 0.0, %v426
    %428 = vmatprep.mubr.f32.mxu0 0.0
    %429 = vmatmul.mubr.f32.gmra.mrb[0].mxu0 %v267
    %v430 = vpop.f32.mrb[0].mxu0
    %v431 = vadd.f32 0.0, %v430
    %v432 = vpop.f32.mrb[0].mxu0
    %v433 = vadd.f32 0.0, %v432
    %434 = vmatprep.mubr.f32.mxu0 0.0
    %435 = vmatmul.mubr.f32.gmra.mrb[0].mxu0 %v268
    %v436 = vpop.f32.mrb[0].mxu0
    %v437 = vadd.f32 0.0, %v436
    %v438 = vpop.f32.mrb[0].mxu0
    %v439 = vadd.f32 0.0, %v438
    %440 = vmatprep.mubr.f32.mxu0 0.0
    %441 = vmatmul.mubr.f32.gmra.mrb[0].mxu0 %v269
    %v442 = vpop.f32.mrb[0].mxu0
    %v443 = vadd.f32 0.0, %v442
    %v444 = vpop.f32.mrb[0].mxu0
    %v445 = vadd.f32 0.0, %v444
    %446 = vmatprep.mubr.f32.mxu0 0.0
    %447 = vmatmul.mubr.f32.gmra.mrb[0].mxu0 %v270
    %v448 = vpop.f32.mrb[0].mxu0
    %v449 = vadd.f32 0.0, %v448
    %v450 = vpop.f32.mrb[0].mxu0
    %v451 = vadd.f32 0.0, %v450
    %452 = vmatprep.mubr.f32.mxu0 0.0
    %453 = vmatmul.mubr.f32.gmra.mrb[0].mxu0 %v271
    %v454 = vpop.f32.mrb[0].mxu0
    %v455 = vadd.f32 0.0, %v454
    %v456 = vpop.f32.mrb[0].mxu0
    %v457 = vadd.f32 0.0, %v456
    %458 = vmatprep.mubr.f32.mxu0 0.0
    %459 = vmatmul.mubr.f32.gmra.mrb[0].mxu0 %v272
    %v460 = vpop.f32.mrb[0].mxu0
    %v461 = vadd.f32 0.0, %v460
    %v462 = vpop.f32.mrb[0].mxu0
    %v463 = vadd.f32 0.0, %v462
    %464 = vmatprep.mubr.f32.mxu0 0.0
    %465 = vmatmul.mubr.f32.gmra.mrb[0].mxu0 %v273
    %v466 = vpop.f32.mrb[0].mxu0
    %v467 = vadd.f32 0.0, %v466
    %v468 = vpop.f32.mrb[0].mxu0
    %v469 = vadd.f32 0.0, %v468
    %470 = vmatprep.mubr.f32.mxu0 0.0
    %471 = vmatmul.mubr.f32.gmra.mrb[0].mxu0 %v274
    %v472 = vpop.f32.mrb[0].mxu0
    %v473 = vadd.f32 0.0, %v472
    %v474 = vpop.f32.mrb[0].mxu0
    %v475 = vadd.f32 0.0, %v474
    %476 = vmatprep.mubr.f32.mxu0 0.0
    %477 = vmatmul.mubr.f32.gmra.mrb[0].mxu0 %v275
    %v478 = vpop.f32.mrb[0].mxu0
    %v479 = vadd.f32 0.0, %v478
    %v480 = vpop.f32.mrb[0].mxu0
    %v481 = vadd.f32 0.0, %v480
    %482 = vmatprep.mubr.f32.mxu0 0.0
    %483 = vmatmul.mubr.f32.gmra.mrb[0].mxu0 %v276
    %v484 = vpop.f32.mrb[0].mxu0
    %v485 = vadd.f32 0.0, %v484
    %v486 = vpop.f32.mrb[0].mxu0
    %v487 = vadd.f32 0.0, %v486
    %488 = vdwg.mxu0
    %489 = vmatprep.subr.mxu0 0.0
    %490 = vmatpush1.msra.mxu0 %v282
    %491 = vmatprep.subr.mxu0 0.0
    %492 = vmatpush1.msra.mxu0 %v285
    %493 = vmatprep.subr.mxu0 0.0
    %494 = vmatpush1.msra.mxu0 %v288
    %495 = vmatprep.subr.mxu0 0.0
    %496 = vmatpush1.msra.mxu0 %v291
    %497 = vmatprep.subr.mxu0 0.0
    %498 = vmatpush1.msra.mxu0 %v294
    %499 = vmatprep.subr.mxu0 0.0
    %500 = vmatpush1.msra.mxu0 %v297
    %501 = vmatprep.subr.mxu0 0.0
    %502 = vmatpush1.msra.mxu0 %v300
    %503 = vmatprep.subr.mxu0 0.0
    %504 = vmatpush1.msra.mxu0 %v303
    %505 = vmatprep.subr.mxu0 0.0
    %506 = vmatpush1.msra.mxu0 %v306
    %507 = vmatprep.subr.mxu0 0.0
    %508 = vmatpush1.msra.mxu0 %v309
    %509 = vmatprep.subr.mxu0 0.0
    %510 = vmatpush1.msra.mxu0 %v312
    %511 = vmatprep.subr.mxu0 0.0
    %512 = vmatpush1.msra.mxu0 %v315
    %513 = vmatprep.subr.mxu0 0.0
    %514 = vmatpush1.msra.mxu0 %v318
    %515 = vmatprep.subr.mxu0 0.0
    %516 = vmatpush1.msra.mxu0 %v321
    %517 = vmatprep.subr.mxu0 0.0
    %518 = vmatpush1.msra.mxu0 %v324
    %519 = vmatprep.subr.mxu0 0.0
    %520 = vmatpush1.msra.mxu0 %v327
    %521 = vmatprep.subr.mxu0 0.0
    %522 = vmatpush1.msra.mxu0 0.0
    %523 = vmatprep.subr.mxu0 0.0
    %524 = vmatpush1.msra.mxu0 0.0
    %525 = vmatprep.subr.mxu0 0.0
    %526 = vmatpush1.msra.mxu0 0.0
    %527 = vmatprep.subr.mxu0 0.0
    %528 = vmatpush1.msra.mxu0 0.0
    %529 = vmatprep.subr.mxu0 0.0
    %530 = vmatpush1.msra.mxu0 0.0
    %531 = vmatprep.subr.mxu0 0.0
    %532 = vmatpush1.msra.mxu0 0.0
    %533 = vmatprep.subr.mxu0 0.0
    %534 = vmatpush1.msra.mxu0 0.0
    %535 = vmatprep.subr.mxu0 0.0
    %536 = vmatpush1.msra.mxu0 0.0
    %537 = vmatprep.subr.mxu0 0.0
    %538 = vmatpush1.msra.mxu0 0.0
    %539 = vmatprep.subr.mxu0 0.0
    %540 = vmatpush1.msra.mxu0 0.0
    %541 = vmatprep.subr.mxu0 0.0
    %542 = vmatpush1.msra.mxu0 0.0
    %543 = vmatprep.subr.mxu0 0.0
    %544 = vmatpush1.msra.mxu0 0.0
    %545 = vmatprep.subr.mxu0 0.0
    %546 = vmatpush1.msra.mxu0 0.0
    %547 = vmatprep.subr.mxu0 0.0
    %548 = vmatpush1.msra.mxu0 0.0
    %549 = vmatprep.subr.mxu0 0.0
    %550 = vmatpush1.msra.mxu0 0.0
    %551 = vmatprep.subr.mxu0 0.0
    %552 = vmatpush1.msra.mxu0 0.0
    %553 = vmatprep.mubr.f32.mxu0 0.0
    %554 = vmatmul.mubr.f32.gmra.mrb[0].mxu0 %v261
    %v555 = vpop.f32.mrb[0].mxu0
    %v556 = vadd.f32 0.0, %v555
    %v557 = vpop.f32.mrb[0].mxu0
    %558 = vmatprep.mubr.f32.mxu0 0.0
    %559 = vmatmul.mubr.f32.gmra.mrb[0].mxu0 %v262
    %v560 = vpop.f32.mrb[0].mxu0
    %v561 = vadd.f32 0.0, %v560
    %v562 = vpop.f32.mrb[0].mxu0
    %563 = vmatprep.mubr.f32.mxu0 0.0
    %564 = vmatmul.mubr.f32.gmra.mrb[0].mxu0 %v263
    %v565 = vpop.f32.mrb[0].mxu0
    %v566 = vadd.f32 0.0, %v565
    %v567 = vpop.f32.mrb[0].mxu0
    %568 = vmatprep.mubr.f32.mxu0 0.0
    %569 = vmatmul.mubr.f32.gmra.mrb[0].mxu0 %v264
    %v570 = vpop.f32.mrb[0].mxu0
    %v571 = vadd.f32 0.0, %v570
    %v572 = vpop.f32.mrb[0].mxu0
    %573 = vmatprep.mubr.f32.mxu0 0.0
    %574 = vmatmul.mubr.f32.gmra.mrb[0].mxu0 %v265
    %v575 = vpop.f32.mrb[0].mxu0
    %v576 = vadd.f32 0.0, %v575
    %v577 = vpop.f32.mrb[0].mxu0
    %578 = vmatprep.mubr.f32.mxu0 0.0
    %579 = vmatmul.mubr.f32.gmra.mrb[0].mxu0 %v266
    %v580 = vpop.f32.mrb[0].mxu0
    %v581 = vadd.f32 0.0, %v580
    %v582 = vpop.f32.mrb[0].mxu0
    %583 = vmatprep.mubr.f32.mxu0 0.0
    %584 = vmatmul.mubr.f32.gmra.mrb[0].mxu0 %v267
    %v585 = vpop.f32.mrb[0].mxu0
    %v586 = vadd.f32 0.0, %v585
    %v587 = vpop.f32.mrb[0].mxu0
    %588 = vmatprep.mubr.f32.mxu0 0.0
    %589 = vmatmul.mubr.f32.gmra.mrb[0].mxu0 %v268
    %v590 = vpop.f32.mrb[0].mxu0
    %v591 = vadd.f32 0.0, %v590
    %v592 = vpop.f32.mrb[0].mxu0
    %593 = vmatprep.mubr.f32.mxu0 0.0
    %594 = vmatmul.mubr.f32.gmra.mrb[0].mxu0 %v269
    %v595 = vpop.f32.mrb[0].mxu0
    %v596 = vadd.f32 0.0, %v595
    %v597 = vpop.f32.mrb[0].mxu0
    %598 = vmatprep.mubr.f32.mxu0 0.0
    %599 = vmatmul.mubr.f32.gmra.mrb[0].mxu0 %v270
    %v600 = vpop.f32.mrb[0].mxu0
    %v601 = vadd.f32 0.0, %v600
    %v602 = vpop.f32.mrb[0].mxu0
    %603 = vmatprep.mubr.f32.mxu0 0.0
    %604 = vmatmul.mubr.f32.gmra.mrb[0].mxu0 %v271
    %v605 = vpop.f32.mrb[0].mxu0
    %v606 = vadd.f32 0.0, %v605
    %v607 = vpop.f32.mrb[0].mxu0
    %608 = vmatprep.mubr.f32.mxu0 0.0
    %609 = vmatmul.mubr.f32.gmra.mrb[0].mxu0 %v272
    %v610 = vpop.f32.mrb[0].mxu0
    %v611 = vadd.f32 0.0, %v610
    %v612 = vpop.f32.mrb[0].mxu0
    %613 = vmatprep.mubr.f32.mxu0 0.0
    %614 = vmatmul.mubr.f32.gmra.mrb[0].mxu0 %v273
    %v615 = vpop.f32.mrb[0].mxu0
    %v616 = vadd.f32 0.0, %v615
    %v617 = vpop.f32.mrb[0].mxu0
    %618 = vmatprep.mubr.f32.mxu0 0.0
    %619 = vmatmul.mubr.f32.gmra.mrb[0].mxu0 %v274
    %v620 = vpop.f32.mrb[0].mxu0
    %v621 = vadd.f32 0.0, %v620
    %v622 = vpop.f32.mrb[0].mxu0
    %623 = vmatprep.mubr.f32.mxu0 0.0
    %624 = vmatmul.mubr.f32.gmra.mrb[0].mxu0 %v275
    %v625 = vpop.f32.mrb[0].mxu0
    %v626 = vadd.f32 0.0, %v625
    %v627 = vpop.f32.mrb[0].mxu0
    %628 = vmatprep.mubr.f32.mxu0 0.0
    %629 = vmatmul.mubr.f32.gmra.mrb[0].mxu0 %v276
    %v630 = vpop.f32.mrb[0].mxu0
    %v631 = vadd.f32 0.0, %v630
    %v632 = vpop.f32.mrb[0].mxu0
    %633 = vdwg.mxu0
    %v634 = vadd.f32 %v395, %v401
    %v635 = vadd.f32 %v634, %v407
    %v636 = vadd.f32 %v635, %v413
    %v637 = vadd.f32 %v636, %v419
    %v638 = vadd.f32 %v637, %v425
    %v639 = vadd.f32 %v638, %v431
    %v640 = vadd.f32 %v639, %v437
    %v641 = vadd.f32 %v640, %v443
    %v642 = vadd.f32 %v641, %v449
    %v643 = vadd.f32 %v642, %v455
    %v644 = vadd.f32 %v643, %v461
    %v645 = vadd.f32 %v644, %v467
    %v646 = vadd.f32 %v645, %v473
    %v647 = vadd.f32 %v646, %v479
    %v648 = vadd.f32 %v647, %v485
    %v649 = vrot.slane %v648, 4
    %v650 = vadd.f32 %v648, %v649
    %v651 = vrot.slane %v650, 2
    %v652 = vadd.f32 %v650, %v651
    %v653 = vrot.slane %v652, 1
    %v654 = vadd.f32 %v652, %v653
    %v655 = vadd.f32 %v397, %v403
    %v656 = vadd.f32 %v655, %v409
    %v657 = vadd.f32 %v656, %v415
    %v658 = vadd.f32 %v657, %v421
    %v659 = vadd.f32 %v658, %v427
    %v660 = vadd.f32 %v659, %v433
    %v661 = vadd.f32 %v660, %v439
    %v662 = vadd.f32 %v661, %v445
    %v663 = vadd.f32 %v662, %v451
    %v664 = vadd.f32 %v663, %v457
    %v665 = vadd.f32 %v664, %v463
    %v666 = vadd.f32 %v665, %v469
    %v667 = vadd.f32 %v666, %v475
    %v668 = vadd.f32 %v667, %v481
    %v669 = vadd.f32 %v668, %v487
    %v670 = vrot.slane %v669, 4
    %v671 = vadd.f32 %v669, %v670
    %v672 = vrot.slane %v671, 2
    %v673 = vadd.f32 %v671, %v672
    %v674 = vrot.slane %v673, 1
    %v675 = vadd.f32 %v673, %v674
    %v676 = vadd.f32 %v556, %v561
    %v677 = vadd.f32 %v676, %v566
    %v678 = vadd.f32 %v677, %v571
    %v679 = vadd.f32 %v678, %v576
    %v680 = vadd.f32 %v679, %v581
    %v681 = vadd.f32 %v680, %v586
    %v682 = vadd.f32 %v681, %v591
    %v683 = vadd.f32 %v682, %v596
    %v684 = vadd.f32 %v683, %v601
    %v685 = vadd.f32 %v684, %v606
    %v686 = vadd.f32 %v685, %v611
    %v687 = vadd.f32 %v686, %v616
    %v688 = vadd.f32 %v687, %v621
    %v689 = vadd.f32 %v688, %v626
    %v690 = vadd.f32 %v689, %v631
    %v691 = vrot.slane %v690, 4
    %v692 = vadd.f32 %v690, %v691
    %v693 = vrot.slane %v692, 2
    %v694 = vadd.f32 %v692, %v693
    %v695 = vrot.slane %v694, 1
    %v696 = vadd.f32 %v694, %v695
    %v697 = vmul.f32 %v654, 0.0078125
    %v698 = vmul.f32 %v675, 0.0078125
    %v699 = vmul.f32 %v696, 0.0078125
    %v700 = vsub.f32 %v395, %v697
    %v701 = vsub.f32 %v397, %v698
    %v702 = vsub.f32 %v556, %v699
    %v703 = vsub.f32 %v401, %v697
    %v704 = vsub.f32 %v403, %v698
    %v705 = vsub.f32 %v561, %v699
    %v706 = vsub.f32 %v407, %v697
    %v707 = vsub.f32 %v409, %v698
    %v708 = vsub.f32 %v566, %v699
    %v709 = vsub.f32 %v413, %v697
    %v710 = vsub.f32 %v415, %v698
    %v711 = vsub.f32 %v571, %v699
    %v712 = vsub.f32 %v419, %v697
    %v713 = vsub.f32 %v421, %v698
    %v714 = vsub.f32 %v576, %v699
    %v715 = vsub.f32 %v425, %v697
    %v716 = vsub.f32 %v427, %v698
    %v717 = vsub.f32 %v581, %v699
    %v718 = vsub.f32 %v431, %v697
    %v719 = vsub.f32 %v433, %v698
    %v720 = vsub.f32 %v586, %v699
    %v721 = vsub.f32 %v437, %v697
    %v722 = vsub.f32 %v439, %v698
    %v723 = vsub.f32 %v591, %v699
    %v724 = vsub.f32 %v443, %v697
    %v725 = vsub.f32 %v445, %v698
    %v726 = vsub.f32 %v596, %v699
    %v727 = vsub.f32 %v449, %v697
    %v728 = vsub.f32 %v451, %v698
    %v729 = vsub.f32 %v601, %v699
    %v730 = vsub.f32 %v455, %v697
    %v731 = vsub.f32 %v457, %v698
    %v732 = vsub.f32 %v606, %v699
    %v733 = vsub.f32 %v461, %v697
    %v734 = vsub.f32 %v463, %v698
    %v735 = vsub.f32 %v611, %v699
    %v736 = vsub.f32 %v467, %v697
    %v737 = vsub.f32 %v469, %v698
    %v738 = vsub.f32 %v616, %v699
    %v739 = vsub.f32 %v473, %v697
    %v740 = vsub.f32 %v475, %v698
    %v741 = vsub.f32 %v621, %v699
    %v742 = vsub.f32 %v479, %v697
    %v743 = vsub.f32 %v481, %v698
    %v744 = vsub.f32 %v626, %v699
    %v745 = vsub.f32 %v485, %v697
    %v746 = vsub.f32 %v487, %v698
    %v747 = vsub.f32 %v631, %v699
    %v748 = vmul.f32 %v700, %v700
    %v749 = vmul.f32 %v701, %v701
    %v750 = vmul.f32 %v702, %v702
    %v751 = vmul.f32 %v703, %v703
    %v752 = vmul.f32 %v704, %v704
    %v753 = vmul.f32 %v705, %v705
    %v754 = vmul.f32 %v706, %v706
    %v755 = vmul.f32 %v707, %v707
    %v756 = vmul.f32 %v708, %v708
    %v757 = vmul.f32 %v709, %v709
    %v758 = vmul.f32 %v710, %v710
    %v759 = vmul.f32 %v711, %v711
    %v760 = vmul.f32 %v712, %v712
    %v761 = vmul.f32 %v713, %v713
    %v762 = vmul.f32 %v714, %v714
    %v763 = vmul.f32 %v715, %v715
    %v764 = vmul.f32 %v716, %v716
    %v765 = vmul.f32 %v717, %v717
    %v766 = vmul.f32 %v718, %v718
    %v767 = vmul.f32 %v719, %v719
    %v768 = vmul.f32 %v720, %v720
    %v769 = vmul.f32 %v721, %v721
    %v770 = vmul.f32 %v722, %v722
    %v771 = vmul.f32 %v723, %v723
    %v772 = vmul.f32 %v724, %v724
    %v773 = vmul.f32 %v725, %v725
    %v774 = vmul.f32 %v726, %v726
    %v775 = vmul.f32 %v727, %v727
    %v776 = vmul.f32 %v728, %v728
    %v777 = vmul.f32 %v729, %v729
    %v778 = vmul.f32 %v730, %v730
    %v779 = vmul.f32 %v731, %v731
    %v780 = vmul.f32 %v732, %v732
    %v781 = vmul.f32 %v733, %v733
    %v782 = vmul.f32 %v734, %v734
    %v783 = vmul.f32 %v735, %v735
    %v784 = vmul.f32 %v736, %v736
    %v785 = vmul.f32 %v737, %v737
    %v786 = vmul.f32 %v738, %v738
    %v787 = vmul.f32 %v739, %v739
    %v788 = vmul.f32 %v740, %v740
    %v789 = vmul.f32 %v741, %v741
    %v790 = vmul.f32 %v742, %v742
    %v791 = vmul.f32 %v743, %v743
    %v792 = vmul.f32 %v744, %v744
    %v793 = vmul.f32 %v745, %v745
    %v794 = vmul.f32 %v746, %v746
    %v795 = vmul.f32 %v747, %v747
    %v796 = vadd.f32 %v748, %v751
    %v797 = vadd.f32 %v796, %v754
    %v798 = vadd.f32 %v797, %v757
    %v799 = vadd.f32 %v798, %v760
    %v800 = vadd.f32 %v799, %v763
    %v801 = vadd.f32 %v800, %v766
    %v802 = vadd.f32 %v801, %v769
    %v803 = vadd.f32 %v802, %v772
    %v804 = vadd.f32 %v803, %v775
    %v805 = vadd.f32 %v804, %v778
    %v806 = vadd.f32 %v805, %v781
    %v807 = vadd.f32 %v806, %v784
    %v808 = vadd.f32 %v807, %v787
    %v809 = vadd.f32 %v808, %v790
    %v810 = vadd.f32 %v809, %v793
    %v811 = vrot.slane %v810, 4
    %v812 = vadd.f32 %v810, %v811
    %v813 = vrot.slane %v812, 2
    %v814 = vadd.f32 %v812, %v813
    %v815 = vrot.slane %v814, 1
    %v816 = vadd.f32 %v814, %v815
    %v817 = vadd.f32 %v749, %v752
    %v818 = vadd.f32 %v817, %v755
    %v819 = vadd.f32 %v818, %v758
    %v820 = vadd.f32 %v819, %v761
    %v821 = vadd.f32 %v820, %v764
    %v822 = vadd.f32 %v821, %v767
    %v823 = vadd.f32 %v822, %v770
    %v824 = vadd.f32 %v823, %v773
    %v825 = vadd.f32 %v824, %v776
    %v826 = vadd.f32 %v825, %v779
    %v827 = vadd.f32 %v826, %v782
    %v828 = vadd.f32 %v827, %v785
    %v829 = vadd.f32 %v828, %v788
    %v830 = vadd.f32 %v829, %v791
    %v831 = vadd.f32 %v830, %v794
    %v832 = vrot.slane %v831, 4
    %v833 = vadd.f32 %v831, %v832
    %v834 = vrot.slane %v833, 2
    %v835 = vadd.f32 %v833, %v834
    %v836 = vrot.slane %v835, 1
    %v837 = vadd.f32 %v835, %v836
    %v838 = vadd.f32 %v750, %v753
    %v839 = vadd.f32 %v838, %v756
    %v840 = vadd.f32 %v839, %v759
    %v841 = vadd.f32 %v840, %v762
    %v842 = vadd.f32 %v841, %v765
    %v843 = vadd.f32 %v842, %v768
    %v844 = vadd.f32 %v843, %v771
    %v845 = vadd.f32 %v844, %v774
    %v846 = vadd.f32 %v845, %v777
    %v847 = vadd.f32 %v846, %v780
    %v848 = vadd.f32 %v847, %v783
    %v849 = vadd.f32 %v848, %v786
    %v850 = vadd.f32 %v849, %v789
    %v851 = vadd.f32 %v850, %v792
    %v852 = vadd.f32 %v851, %v795
    %v853 = vrot.slane %v852, 4
    %v854 = vadd.f32 %v852, %v853
    %v855 = vrot.slane %v854, 2
    %v856 = vadd.f32 %v854, %v855
    %v857 = vrot.slane %v856, 1
    %v858 = vadd.f32 %v856, %v857
    %v859 = vmul.f32 %v816, 0.0078125
    %v860 = vmul.f32 %v837, 0.0078125
    %v861 = vmul.f32 %v858, 0.0078125
    %v862 = vadd.f32 %v859, 1e-05
    %v863 = vadd.f32 %v860, 1e-05
    %v864 = vadd.f32 %v861, 1e-05
    %v865 = vrsqrt.pop %v862
    %v866 = vrsqrt.pop %v863
    %v867 = vrsqrt.pop %v864
    %v868 = vmul.f32 %v277, %v865
    %v869 = vmul.f32 %v278, %v866
    %v870 = vmul.f32 %v279, %v867
    %v871 = vlaneseq
    %v872 = vshrl.u32 %v871, 7
    %v873 = vsub.s32 0, %v872
    %v874 = vrot.slane %v868, %v873
    %v875 = vlaneseq
    %v876 = vshrl.u32 %v875, 7
    %v877 = vsub.s32 0, %v876
    %v878 = vrot.slane %v869, %v877
    %v879 = vlaneseq
    %v880 = vshrl.u32 %v879, 7
    %v881 = vsub.s32 0, %v880
    %v882 = vrot.slane %v870, %v881
    %v883 = vmul.f32 %v700, %v874
    %v884 = vmul.f32 %v701, %v878
    %v885 = vmul.f32 %v702, %v882
    %v886 = vmul.f32 %v703, %v874
    %v887 = vmul.f32 %v704, %v878
    %v888 = vmul.f32 %v705, %v882
    %v889 = vmul.f32 %v706, %v874
    %v890 = vmul.f32 %v707, %v878
    %v891 = vmul.f32 %v708, %v882
    %v892 = vmul.f32 %v709, %v874
    %v893 = vmul.f32 %v710, %v878
    %v894 = vmul.f32 %v711, %v882
    %v895 = vmul.f32 %v712, %v874
    %v896 = vmul.f32 %v713, %v878
    %v897 = vmul.f32 %v714, %v882
    %v898 = vmul.f32 %v715, %v874
    %v899 = vmul.f32 %v716, %v878
    %v900 = vmul.f32 %v717, %v882
    %v901 = vmul.f32 %v718, %v874
    %v902 = vmul.f32 %v719, %v878
    %v903 = vmul.f32 %v720, %v882
    %v904 = vmul.f32 %v721, %v874
    %v905 = vmul.f32 %v722, %v878
    %v906 = vmul.f32 %v723, %v882
    %v907 = vmul.f32 %v724, %v874
    %v908 = vmul.f32 %v725, %v878
    %v909 = vmul.f32 %v726, %v882
    %v910 = vmul.f32 %v727, %v874
    %v911 = vmul.f32 %v728, %v878
    %v912 = vmul.f32 %v729, %v882
    %v913 = vmul.f32 %v730, %v874
    %v914 = vmul.f32 %v731, %v878
    %v915 = vmul.f32 %v732, %v882
    %v916 = vmul.f32 %v733, %v874
    %v917 = vmul.f32 %v734, %v878
    %v918 = vmul.f32 %v735, %v882
    %v919 = vmul.f32 %v736, %v874
    %v920 = vmul.f32 %v737, %v878
    %v921 = vmul.f32 %v738, %v882
    %v922 = vmul.f32 %v739, %v874
    %v923 = vmul.f32 %v740, %v878
    %v924 = vmul.f32 %v741, %v882
    %v925 = vmul.f32 %v742, %v874
    %v926 = vmul.f32 %v743, %v878
    %v927 = vmul.f32 %v744, %v882
    %v928 = vmul.f32 %v745, %v874
    %v929 = vmul.f32 %v746, %v878
    %v930 = vmul.f32 %v747, %v882
    %v931 = vlaneseq
    %v932 = vshrl.u32 %v931, 7
    %v933 = vsub.s32 1, %v932
    %v934 = vrot.slane %v277, %v933
    %v935 = vlaneseq
    %v936 = vshrl.u32 %v935, 7
    %v937 = vsub.s32 1, %v936
    %v938 = vrot.slane %v278, %v937
    %v939 = vlaneseq
    %v940 = vshrl.u32 %v939, 7
    %v941 = vsub.s32 1, %v940
    %v942 = vrot.slane %v279, %v941
    %v943 = vadd.f32 %v883, %v934
    %v944 = vadd.f32 %v884, %v938
    %v945 = vadd.f32 %v885, %v942
    %v946 = vadd.f32 %v886, %v934
    %v947 = vadd.f32 %v887, %v938
    %v948 = vadd.f32 %v888, %v942
    %v949 = vadd.f32 %v889, %v934
    %v950 = vadd.f32 %v890, %v938
    %v951 = vadd.f32 %v891, %v942
    %v952 = vadd.f32 %v892, %v934
    %v953 = vadd.f32 %v893, %v938
    %v954 = vadd.f32 %v894, %v942
    %v955 = vadd.f32 %v895, %v934
    %v956 = vadd.f32 %v896, %v938
    %v957 = vadd.f32 %v897, %v942
    %v958 = vadd.f32 %v898, %v934
    %v959 = vadd.f32 %v899, %v938
    %v960 = vadd.f32 %v900, %v942
    %v961 = vadd.f32 %v901, %v934
    %v962 = vadd.f32 %v902, %v938
    %v963 = vadd.f32 %v903, %v942
    %v964 = vadd.f32 %v904, %v934
    %v965 = vadd.f32 %v905, %v938
    %v966 = vadd.f32 %v906, %v942
    %v967 = vadd.f32 %v907, %v934
    %v968 = vadd.f32 %v908, %v938
    %v969 = vadd.f32 %v909, %v942
    %v970 = vadd.f32 %v910, %v934
    %v971 = vadd.f32 %v911, %v938
    %v972 = vadd.f32 %v912, %v942
    %v973 = vadd.f32 %v913, %v934
    %v974 = vadd.f32 %v914, %v938
    %v975 = vadd.f32 %v915, %v942
    %v976 = vadd.f32 %v916, %v934
    %v977 = vadd.f32 %v917, %v938
    %v978 = vadd.f32 %v918, %v942
    %v979 = vadd.f32 %v919, %v934
    %v980 = vadd.f32 %v920, %v938
    %v981 = vadd.f32 %v921, %v942
    %v982 = vadd.f32 %v922, %v934
    %v983 = vadd.f32 %v923, %v938
    %v984 = vadd.f32 %v924, %v942
    %v985 = vadd.f32 %v925, %v934
    %v986 = vadd.f32 %v926, %v938
    %v987 = vadd.f32 %v927, %v942
    %v988 = vadd.f32 %v928, %v934
    %v989 = vadd.f32 %v929, %v938
    %v990 = vadd.f32 %v930, %v942
    %vm991 = vcmp.ge.f32.partialorder %v943, 0.0
    %vm992 = vcmp.ge.f32.partialorder %v944, 0.0
    %vm993 = vcmp.ge.f32.partialorder %v945, 0.0
    %vm994 = vcmp.ge.f32.partialorder %v946, 0.0
    %vm995 = vcmp.ge.f32.partialorder %v947, 0.0
    %vm996 = vcmp.ge.f32.partialorder %v948, 0.0
    %vm997 = vcmp.ge.f32.partialorder %v949, 0.0
    %vm998 = vcmp.ge.f32.partialorder %v950, 0.0
    %vm999 = vcmp.ge.f32.partialorder %v951, 0.0
    %vm1000 = vcmp.ge.f32.partialorder %v952, 0.0
    %vm1001 = vcmp.ge.f32.partialorder %v953, 0.0
    %vm1002 = vcmp.ge.f32.partialorder %v954, 0.0
    %vm1003 = vcmp.ge.f32.partialorder %v955, 0.0
    %vm1004 = vcmp.ge.f32.partialorder %v956, 0.0
    %vm1005 = vcmp.ge.f32.partialorder %v957, 0.0
    %vm1006 = vcmp.ge.f32.partialorder %v958, 0.0
    %vm1007 = vcmp.ge.f32.partialorder %v959, 0.0
    %vm1008 = vcmp.ge.f32.partialorder %v960, 0.0
    %vm1009 = vcmp.ge.f32.partialorder %v961, 0.0
    %vm1010 = vcmp.ge.f32.partialorder %v962, 0.0
    %vm1011 = vcmp.ge.f32.partialorder %v963, 0.0
    %vm1012 = vcmp.ge.f32.partialorder %v964, 0.0
    %vm1013 = vcmp.ge.f32.partialorder %v965, 0.0
    %vm1014 = vcmp.ge.f32.partialorder %v966, 0.0
    %vm1015 = vcmp.ge.f32.partialorder %v967, 0.0
    %vm1016 = vcmp.ge.f32.partialorder %v968, 0.0
    %vm1017 = vcmp.ge.f32.partialorder %v969, 0.0
    %vm1018 = vcmp.ge.f32.partialorder %v970, 0.0
    %vm1019 = vcmp.ge.f32.partialorder %v971, 0.0
    %vm1020 = vcmp.ge.f32.partialorder %v972, 0.0
    %vm1021 = vcmp.ge.f32.partialorder %v973, 0.0
    %vm1022 = vcmp.ge.f32.partialorder %v974, 0.0
    %vm1023 = vcmp.ge.f32.partialorder %v975, 0.0
    %vm1024 = vcmp.ge.f32.partialorder %v976, 0.0
    %vm1025 = vcmp.ge.f32.partialorder %v977, 0.0
    %vm1026 = vcmp.ge.f32.partialorder %v978, 0.0
    %vm1027 = vcmp.ge.f32.partialorder %v979, 0.0
    %vm1028 = vcmp.ge.f32.partialorder %v980, 0.0
    %vm1029 = vcmp.ge.f32.partialorder %v981, 0.0
    %vm1030 = vcmp.ge.f32.partialorder %v982, 0.0
    %vm1031 = vcmp.ge.f32.partialorder %v983, 0.0
    %vm1032 = vcmp.ge.f32.partialorder %v984, 0.0
    %vm1033 = vcmp.ge.f32.partialorder %v985, 0.0
    %vm1034 = vcmp.ge.f32.partialorder %v986, 0.0
    %vm1035 = vcmp.ge.f32.partialorder %v987, 0.0
    %vm1036 = vcmp.ge.f32.partialorder %v988, 0.0
    %vm1037 = vcmp.ge.f32.partialorder %v989, 0.0
    %vm1038 = vcmp.ge.f32.partialorder %v990, 0.0
    %v1039 = vmul.f32 %v943, 0.2
    %v1040 = vmul.f32 %v944, 0.2
    %v1041 = vmul.f32 %v945, 0.2
    %v1042 = vmul.f32 %v946, 0.2
    %v1043 = vmul.f32 %v947, 0.2
    %v1044 = vmul.f32 %v948, 0.2
    %v1045 = vmul.f32 %v949, 0.2
    %v1046 = vmul.f32 %v950, 0.2
    %v1047 = vmul.f32 %v951, 0.2
    %v1048 = vmul.f32 %v952, 0.2
    %v1049 = vmul.f32 %v953, 0.2
    %v1050 = vmul.f32 %v954, 0.2
    %v1051 = vmul.f32 %v955, 0.2
    %v1052 = vmul.f32 %v956, 0.2
    %v1053 = vmul.f32 %v957, 0.2
    %v1054 = vmul.f32 %v958, 0.2
    %v1055 = vmul.f32 %v959, 0.2
    %v1056 = vmul.f32 %v960, 0.2
    %v1057 = vmul.f32 %v961, 0.2
    %v1058 = vmul.f32 %v962, 0.2
    %v1059 = vmul.f32 %v963, 0.2
    %v1060 = vmul.f32 %v964, 0.2
    %v1061 = vmul.f32 %v965, 0.2
    %v1062 = vmul.f32 %v966, 0.2
    %v1063 = vmul.f32 %v967, 0.2
    %v1064 = vmul.f32 %v968, 0.2
    %v1065 = vmul.f32 %v969, 0.2
    %v1066 = vmul.f32 %v970, 0.2
    %v1067 = vmul.f32 %v971, 0.2
    %v1068 = vmul.f32 %v972, 0.2
    %v1069 = vmul.f32 %v973, 0.2
    %v1070 = vmul.f32 %v974, 0.2
    %v1071 = vmul.f32 %v975, 0.2
    %v1072 = vmul.f32 %v976, 0.2
    %v1073 = vmul.f32 %v977, 0.2
    %v1074 = vmul.f32 %v978, 0.2
    %v1075 = vmul.f32 %v979, 0.2
    %v1076 = vmul.f32 %v980, 0.2
    %v1077 = vmul.f32 %v981, 0.2
    %v1078 = vmul.f32 %v982, 0.2
    %v1079 = vmul.f32 %v983, 0.2
    %v1080 = vmul.f32 %v984, 0.2
    %v1081 = vmul.f32 %v985, 0.2
    %v1082 = vmul.f32 %v986, 0.2
    %v1083 = vmul.f32 %v987, 0.2
    %v1084 = vmul.f32 %v988, 0.2
    %v1085 = vmul.f32 %v989, 0.2
    %v1086 = vmul.f32 %v990, 0.2
    %v1087 = vsel %vm991, %v943, %v1039
    %v1088 = vsel %vm992, %v944, %v1040
    %v1089 = vsel %vm993, %v945, %v1041
    %v1090 = vsel %vm994, %v946, %v1042
    %v1091 = vsel %vm995, %v947, %v1043
    %v1092 = vsel %vm996, %v948, %v1044
    %v1093 = vsel %vm997, %v949, %v1045
    %v1094 = vsel %vm998, %v950, %v1046
    %v1095 = vsel %vm999, %v951, %v1047
    %v1096 = vsel %vm1000, %v952, %v1048
    %v1097 = vsel %vm1001, %v953, %v1049
    %v1098 = vsel %vm1002, %v954, %v1050
    %v1099 = vsel %vm1003, %v955, %v1051
    %v1100 = vsel %vm1004, %v956, %v1052
    %v1101 = vsel %vm1005, %v957, %v1053
    %v1102 = vsel %vm1006, %v958, %v1054
    %v1103 = vsel %vm1007, %v959, %v1055
    %v1104 = vsel %vm1008, %v960, %v1056
    %v1105 = vsel %vm1009, %v961, %v1057
    %v1106 = vsel %vm1010, %v962, %v1058
    %v1107 = vsel %vm1011, %v963, %v1059
    %v1108 = vsel %vm1012, %v964, %v1060
    %v1109 = vsel %vm1013, %v965, %v1061
    %v1110 = vsel %vm1014, %v966, %v1062
    %v1111 = vsel %vm1015, %v967, %v1063
    %v1112 = vsel %vm1016, %v968, %v1064
    %v1113 = vsel %vm1017, %v969, %v1065
    %v1114 = vsel %vm1018, %v970, %v1066
    %v1115 = vsel %vm1019, %v971, %v1067
    %v1116 = vsel %vm1020, %v972, %v1068
    %v1117 = vsel %vm1021, %v973, %v1069
    %v1118 = vsel %vm1022, %v974, %v1070
    %v1119 = vsel %vm1023, %v975, %v1071
    %v1120 = vsel %vm1024, %v976, %v1072
    %v1121 = vsel %vm1025, %v977, %v1073
    %v1122 = vsel %vm1026, %v978, %v1074
    %v1123 = vsel %vm1027, %v979, %v1075
    %v1124 = vsel %vm1028, %v980, %v1076
    %v1125 = vsel %vm1029, %v981, %v1077
    %v1126 = vsel %vm1030, %v982, %v1078
    %v1127 = vsel %vm1031, %v983, %v1079
    %v1128 = vsel %vm1032, %v984, %v1080
    %v1129 = vsel %vm1033, %v985, %v1081
    %v1130 = vsel %vm1034, %v986, %v1082
    %v1131 = vsel %vm1035, %v987, %v1083
    %v1132 = vsel %vm1036, %v988, %v1084
    %v1133 = vsel %vm1037, %v989, %v1085
    %v1134 = vsel %vm1038, %v990, %v1086
    %v1135 = vld [vmem:[#allocation7] sm:$0xff]
    %v1136 = vld [vmem:[#allocation7 + $0x8] sm:$0xff]
    %v1137 = vld [vmem:[#allocation7 + $0x10] sm:$0xff]
    %v1138 = vld [vmem:[#allocation7 + $0x18] sm:$0xff]
    %v1139 = vld [vmem:[#allocation7 + $0x20] sm:$0xff]
    %v1140 = vld [vmem:[#allocation7 + $0x28] sm:$0xff]
    %v1141 = vld [vmem:[#allocation7 + $0x30] sm:$0xff]
    %v1142 = vld [vmem:[#allocation7 + $0x38] sm:$0xff]
    %v1143 = vld [vmem:[#allocation7 + $0x40] sm:$0xff]
    %v1144 = vld [vmem:[#allocation7 + $0x48] sm:$0xff]
    %v1145 = vld [vmem:[#allocation7 + $0x50] sm:$0xff]
    %v1146 = vld [vmem:[#allocation7 + $0x58] sm:$0xff]
    %v1147 = vld [vmem:[#allocation7 + $0x60] sm:$0xff]
    %v1148 = vld [vmem:[#allocation7 + $0x68] sm:$0xff]
    %v1149 = vld [vmem:[#allocation7 + $0x70] sm:$0xff]
    %v1150 = vld [vmem:[#allocation7 + $0x78] sm:$0xff]
    %v1151 = vld [vmem:[#allocation7 + $0x80] sm:$0xff]
    %v1152 = vld [vmem:[#allocation7 + $0x88] sm:$0xff]
    %v1153 = vld [vmem:[#allocation7 + $0x90] sm:$0xff]
    %v1154 = vld [vmem:[#allocation7 + $0x98] sm:$0xff]
    %v1155 = vld [vmem:[#allocation7 + $0xa0] sm:$0xff]
    %v1156 = vld [vmem:[#allocation7 + $0xa8] sm:$0xff]
    %v1157 = vld [vmem:[#allocation7 + $0xb0] sm:$0xff]
    %v1158 = vld [vmem:[#allocation7 + $0xb8] sm:$0xff]
    %v1159 = vld [vmem:[#allocation7 + $0xc0] sm:$0xff]
    %v1160 = vld [vmem:[#allocation7 + $0xc8] sm:$0xff]
    %v1161 = vld [vmem:[#allocation7 + $0xd0] sm:$0xff]
    %v1162 = vld [vmem:[#allocation7 + $0xd8] sm:$0xff]
    %v1163 = vld [vmem:[#allocation7 + $0xe0] sm:$0xff]
    %v1164 = vld [vmem:[#allocation7 + $0xe8] sm:$0xff]
    %v1165 = vld [vmem:[#allocation7 + $0xf0] sm:$0xff]
    %v1166 = vld [vmem:[#allocation7 + $0xf8] sm:$0xff]
    %v1167 = vld [vmem:[#allocation7 + $0x100] sm:$0xff]
    %v1168 = vld [vmem:[#allocation7 + $0x108] sm:$0xff]
    %v1169 = vld [vmem:[#allocation7 + $0x110] sm:$0xff]
    %v1170 = vld [vmem:[#allocation7 + $0x118] sm:$0xff]
    %v1171 = vld [vmem:[#allocation7 + $0x120] sm:$0xff]
    %v1172 = vld [vmem:[#allocation7 + $0x128] sm:$0xff]
    %v1173 = vld [vmem:[#allocation7 + $0x130] sm:$0xff]
    %v1174 = vld [vmem:[#allocation7 + $0x138] sm:$0xff]
    %v1175 = vld [vmem:[#allocation7 + $0x140] sm:$0xff]
    %v1176 = vld [vmem:[#allocation7 + $0x148] sm:$0xff]
    %v1177 = vld [vmem:[#allocation7 + $0x150] sm:$0xff]
    %v1178 = vld [vmem:[#allocation7 + $0x158] sm:$0xff]
    %v1179 = vld [vmem:[#allocation7 + $0x160] sm:$0xff]
    %v1180 = vld [vmem:[#allocation7 + $0x168] sm:$0xff]
    %v1181 = vld [vmem:[#allocation7 + $0x170] sm:$0xff]
    %v1182 = vld [vmem:[#allocation7 + $0x178] sm:$0xff]
    %v1183 = vld [vmem:[#allocation7 + $0x180] sm:$0xff]
    %v1184 = vld [vmem:[#allocation7 + $0x188] sm:$0xff]
    %v1185 = vld [vmem:[#allocation7 + $0x190] sm:$0xff]
    %v1186 = vld [vmem:[#allocation7 + $0x198] sm:$0xff]
    %v1187 = vld [vmem:[#allocation7 + $0x1a0] sm:$0xff]
    %v1188 = vld [vmem:[#allocation7 + $0x1a8] sm:$0xff]
    %v1189 = vld [vmem:[#allocation7 + $0x1b0] sm:$0xff]
    %v1190 = vld [vmem:[#allocation7 + $0x1b8] sm:$0xff]
    %v1191 = vld [vmem:[#allocation7 + $0x1c0] sm:$0xff]
    %v1192 = vld [vmem:[#allocation7 + $0x1c8] sm:$0xff]
    %v1193 = vld [vmem:[#allocation7 + $0x1d0] sm:$0xff]
    %v1194 = vld [vmem:[#allocation7 + $0x1d8] sm:$0xff]
    %v1195 = vld [vmem:[#allocation7 + $0x1e0] sm:$0xff]
    %v1196 = vld [vmem:[#allocation7 + $0x1e8] sm:$0xff]
    %v1197 = vld [vmem:[#allocation7 + $0x1f0] sm:$0xff]
    %v1198 = vld [vmem:[#allocation7 + $0x1f8] sm:$0xff]
    %v1199 = vld [vmem:[#allocation7 + $0x200] sm:$0xff]
    %v1200 = vld [vmem:[#allocation7 + $0x208] sm:$0xff]
    %v1201 = vld [vmem:[#allocation7 + $0x210] sm:$0xff]
    %v1202 = vld [vmem:[#allocation7 + $0x218] sm:$0xff]
    %v1203 = vld [vmem:[#allocation7 + $0x220] sm:$0xff]
    %v1204 = vld [vmem:[#allocation7 + $0x228] sm:$0xff]
    %v1205 = vld [vmem:[#allocation7 + $0x230] sm:$0xff]
    %v1206 = vld [vmem:[#allocation7 + $0x238] sm:$0xff]
    %v1207 = vld [vmem:[#allocation7 + $0x240] sm:$0xff]
    %v1208 = vld [vmem:[#allocation7 + $0x248] sm:$0xff]
    %v1209 = vld [vmem:[#allocation7 + $0x250] sm:$0xff]
    %v1210 = vld [vmem:[#allocation7 + $0x258] sm:$0xff]
    %v1211 = vld [vmem:[#allocation7 + $0x260] sm:$0xff]
    %v1212 = vld [vmem:[#allocation7 + $0x268] sm:$0xff]
    %v1213 = vld [vmem:[#allocation7 + $0x270] sm:$0xff]
    %v1214 = vld [vmem:[#allocation7 + $0x278] sm:$0xff]
    %v1215 = vld [vmem:[#allocation7 + $0x280] sm:$0xff]
    %v1216 = vld [vmem:[#allocation7 + $0x288] sm:$0xff]
    %v1217 = vld [vmem:[#allocation7 + $0x290] sm:$0xff]
    %v1218 = vld [vmem:[#allocation7 + $0x298] sm:$0xff]
    %v1219 = vld [vmem:[#allocation7 + $0x2a0] sm:$0xff]
    %v1220 = vld [vmem:[#allocation7 + $0x2a8] sm:$0xff]
    %v1221 = vld [vmem:[#allocation7 + $0x2b0] sm:$0xff]
    %v1222 = vld [vmem:[#allocation7 + $0x2b8] sm:$0xff]
    %v1223 = vld [vmem:[#allocation7 + $0x2c0] sm:$0xff]
    %v1224 = vld [vmem:[#allocation7 + $0x2c8] sm:$0xff]
    %v1225 = vld [vmem:[#allocation7 + $0x2d0] sm:$0xff]
    %v1226 = vld [vmem:[#allocation7 + $0x2d8] sm:$0xff]
    %v1227 = vld [vmem:[#allocation7 + $0x2e0] sm:$0xff]
    %v1228 = vld [vmem:[#allocation7 + $0x2e8] sm:$0xff]
    %v1229 = vld [vmem:[#allocation7 + $0x2f0] sm:$0xff]
    %v1230 = vld [vmem:[#allocation7 + $0x2f8] sm:$0xff]
    %v1231 = vld [vmem:[#allocation7 + $0x300] sm:$0xff]
    %v1232 = vld [vmem:[#allocation7 + $0x308] sm:$0xff]
    %v1233 = vld [vmem:[#allocation7 + $0x310] sm:$0xff]
    %v1234 = vld [vmem:[#allocation7 + $0x318] sm:$0xff]
    %v1235 = vld [vmem:[#allocation7 + $0x320] sm:$0xff]
    %v1236 = vld [vmem:[#allocation7 + $0x328] sm:$0xff]
    %v1237 = vld [vmem:[#allocation7 + $0x330] sm:$0xff]
    %v1238 = vld [vmem:[#allocation7 + $0x338] sm:$0xff]
    %v1239 = vld [vmem:[#allocation7 + $0x340] sm:$0xff]
    %v1240 = vld [vmem:[#allocation7 + $0x348] sm:$0xff]
    %v1241 = vld [vmem:[#allocation7 + $0x350] sm:$0xff]
    %v1242 = vld [vmem:[#allocation7 + $0x358] sm:$0xff]
    %v1243 = vld [vmem:[#allocation7 + $0x360] sm:$0xff]
    %v1244 = vld [vmem:[#allocation7 + $0x368] sm:$0xff]
    %v1245 = vld [vmem:[#allocation7 + $0x370] sm:$0xff]
    %v1246 = vld [vmem:[#allocation7 + $0x378] sm:$0xff]
    %v1247 = vld [vmem:[#allocation7 + $0x380] sm:$0xff]
    %v1248 = vld [vmem:[#allocation7 + $0x388] sm:$0xff]
    %v1249 = vld [vmem:[#allocation7 + $0x390] sm:$0xff]
    %v1250 = vld [vmem:[#allocation7 + $0x398] sm:$0xff]
    %v1251 = vld [vmem:[#allocation7 + $0x3a0] sm:$0xff]
    %v1252 = vld [vmem:[#allocation7 + $0x3a8] sm:$0xff]
    %v1253 = vld [vmem:[#allocation7 + $0x3b0] sm:$0xff]
    %v1254 = vld [vmem:[#allocation7 + $0x3b8] sm:$0xff]
    %v1255 = vld [vmem:[#allocation7 + $0x3c0] sm:$0xff]
    %v1256 = vld [vmem:[#allocation7 + $0x3c8] sm:$0xff]
    %v1257 = vld [vmem:[#allocation7 + $0x3d0] sm:$0xff]
    %v1258 = vld [vmem:[#allocation7 + $0x3d8] sm:$0xff]
    %v1259 = vld [vmem:[#allocation7 + $0x3e0] sm:$0xff]
    %v1260 = vld [vmem:[#allocation7 + $0x3e8] sm:$0xff]
    %v1261 = vld [vmem:[#allocation7 + $0x3f0] sm:$0xff]
    %v1262 = vld [vmem:[#allocation7 + $0x3f8] sm:$0xff]
    %v1263 = vld [vmem:[#allocation7 + $0x400] sm:$0xff]
    %v1264 = vld [vmem:[#allocation7 + $0x408] sm:$0xff]
    %v1265 = vld [vmem:[#allocation7 + $0x410] sm:$0xff]
    %v1266 = vld [vmem:[#allocation7 + $0x418] sm:$0xff]
    %v1267 = vld [vmem:[#allocation7 + $0x420] sm:$0xff]
    %v1268 = vld [vmem:[#allocation7 + $0x428] sm:$0xff]
    %v1269 = vld [vmem:[#allocation7 + $0x430] sm:$0xff]
    %v1270 = vld [vmem:[#allocation7 + $0x438] sm:$0xff]
    %v1271 = vld [vmem:[#allocation7 + $0x440] sm:$0xff]
    %v1272 = vld [vmem:[#allocation7 + $0x448] sm:$0xff]
    %v1273 = vld [vmem:[#allocation7 + $0x450] sm:$0xff]
    %v1274 = vld [vmem:[#allocation7 + $0x458] sm:$0xff]
    %v1275 = vld [vmem:[#allocation7 + $0x460] sm:$0xff]
    %v1276 = vld [vmem:[#allocation7 + $0x468] sm:$0xff]
    %v1277 = vld [vmem:[#allocation7 + $0x470] sm:$0xff]
    %v1278 = vld [vmem:[#allocation7 + $0x478] sm:$0xff]
    %v1279 = vlaneseq
    %v1280 = vshrl.u32 %v1279, 7
    %v1281 = vsub.s32 2, %v1280
    %v1282 = vrot.slane %v277, %v1281
    %v1283 = vlaneseq
    %v1284 = vshrl.u32 %v1283, 7
    %v1285 = vsub.s32 2, %v1284
    %v1286 = vrot.slane %v278, %v1285
    %v1287 = vlaneseq
    %v1288 = vshrl.u32 %v1287, 7
    %v1289 = vsub.s32 2, %v1288
    %v1290 = vrot.slane %v279, %v1289
    %1291 = vmatprep.subr.mxu0 %v1136
    %1292 = vmatpush1.msra.mxu0 %v1135
    %1293 = vmatprep.subr.mxu0 %v1139
    %1294 = vmatpush1.msra.mxu0 %v1138
    %1295 = vmatprep.subr.mxu0 %v1142
    %1296 = vmatpush1.msra.mxu0 %v1141
    %1297 = vmatprep.subr.mxu0 %v1145
    %1298 = vmatpush1.msra.mxu0 %v1144
    %1299 = vmatprep.subr.mxu0 %v1148
    %1300 = vmatpush1.msra.mxu0 %v1147
    %1301 = vmatprep.subr.mxu0 %v1151
    %1302 = vmatpush1.msra.mxu0 %v1150
    %1303 = vmatprep.subr.mxu0 %v1154
    %1304 = vmatpush1.msra.mxu0 %v1153
    %1305 = vmatprep.subr.mxu0 %v1157
    %1306 = vmatpush1.msra.mxu0 %v1156
    %1307 = vmatprep.subr.mxu0 %v1160
    %1308 = vmatpush1.msra.mxu0 %v1159
    %1309 = vmatprep.subr.mxu0 %v1163
    %1310 = vmatpush1.msra.mxu0 %v1162
    %1311 = vmatprep.subr.mxu0 %v1166
    %1312 = vmatpush1.msra.mxu0 %v1165
    %1313 = vmatprep.subr.mxu0 %v1169
    %1314 = vmatpush1.msra.mxu0 %v1168
    %1315 = vmatprep.subr.mxu0 %v1172
    %1316 = vmatpush1.msra.mxu0 %v1171
    %1317 = vmatprep.subr.mxu0 %v1175
    %1318 = vmatpush1.msra.mxu0 %v1174
    %1319 = vmatprep.subr.mxu0 %v1178
    %1320 = vmatpush1.msra.mxu0 %v1177
    %1321 = vmatprep.subr.mxu0 %v1181
    %1322 = vmatpush1.msra.mxu0 %v1180
    %1323 = vmatprep.subr.mxu0 %v1184
    %1324 = vmatpush1.msra.mxu0 %v1183
    %1325 = vmatprep.subr.mxu0 %v1187
    %1326 = vmatpush1.msra.mxu0 %v1186
    %1327 = vmatprep.subr.mxu0 %v1190
    %1328 = vmatpush1.msra.mxu0 %v1189
    %1329 = vmatprep.subr.mxu0 %v1193
    %1330 = vmatpush1.msra.mxu0 %v1192
    %1331 = vmatprep.subr.mxu0 %v1196
    %1332 = vmatpush1.msra.mxu0 %v1195
    %1333 = vmatprep.subr.mxu0 %v1199
    %1334 = vmatpush1.msra.mxu0 %v1198
    %1335 = vmatprep.subr.mxu0 %v1202
    %1336 = vmatpush1.msra.mxu0 %v1201
    %1337 = vmatprep.subr.mxu0 %v1205
    %1338 = vmatpush1.msra.mxu0 %v1204
    %1339 = vmatprep.subr.mxu0 %v1208
    %1340 = vmatpush1.msra.mxu0 %v1207
    %1341 = vmatprep.subr.mxu0 %v1211
    %1342 = vmatpush1.msra.mxu0 %v1210
    %1343 = vmatprep.subr.mxu0 %v1214
    %1344 = vmatpush1.msra.mxu0 %v1213
    %1345 = vmatprep.subr.mxu0 %v1217
    %1346 = vmatpush1.msra.mxu0 %v1216
    %1347 = vmatprep.subr.mxu0 %v1220
    %1348 = vmatpush1.msra.mxu0 %v1219
    %1349 = vmatprep.subr.mxu0 %v1223
    %1350 = vmatpush1.msra.mxu0 %v1222
    %1351 = vmatprep.subr.mxu0 %v1226
    %1352 = vmatpush1.msra.mxu0 %v1225
    %1353 = vmatprep.subr.mxu0 %v1229
    %1354 = vmatpush1.msra.mxu0 %v1228
    %1355 = vmatprep.mubr.f32.mxu0 %v1088
    %1356 = vmatmul.mubr.f32.gmra.mrb[0].mxu0 %v1087
    %v1357 = vpop.f32.mrb[0].mxu0
    %v1358 = vadd.f32 %v1282, %v1357
    %v1359 = vpop.f32.mrb[0].mxu0
    %v1360 = vadd.f32 %v1286, %v1359
    %1361 = vmatprep.mubr.f32.mxu0 %v1091
    %1362 = vmatmul.mubr.f32.gmra.mrb[0].mxu0 %v1090
    %v1363 = vpop.f32.mrb[0].mxu0
    %v1364 = vadd.f32 %v1282, %v1363
    %v1365 = vpop.f32.mrb[0].mxu0
    %v1366 = vadd.f32 %v1286, %v1365
    %1367 = vmatprep.mubr.f32.mxu0 %v1094
    %1368 = vmatmul.mubr.f32.gmra.mrb[0].mxu0 %v1093
    %v1369 = vpop.f32.mrb[0].mxu0
    %v1370 = vadd.f32 %v1282, %v1369
    %v1371 = vpop.f32.mrb[0].mxu0
    %v1372 = vadd.f32 %v1286, %v1371
    %1373 = vmatprep.mubr.f32.mxu0 %v1097
    %1374 = vmatmul.mubr.f32.gmra.mrb[0].mxu0 %v1096
    %v1375 = vpop.f32.mrb[0].mxu0
    %v1376 = vadd.f32 %v1282, %v1375
    %v1377 = vpop.f32.mrb[0].mxu0
    %v1378 = vadd.f32 %v1286, %v1377
    %1379 = vmatprep.mubr.f32.mxu0 %v1100
    %1380 = vmatmul.mubr.f32.gmra.mrb[0].mxu0 %v1099
    %v1381 = vpop.f32.mrb[0].mxu0
    %v1382 = vadd.f32 %v1282, %v1381
    %v1383 = vpop.f32.mrb[0].mxu0
    %v1384 = vadd.f32 %v1286, %v1383
    %1385 = vmatprep.mubr.f32.mxu0 %v1103
    %1386 = vmatmul.mubr.f32.gmra.mrb[0].mxu0 %v1102
    %v1387 = vpop.f32.mrb[0].mxu0
    %v1388 = vadd.f32 %v1282, %v1387
    %v1389 = vpop.f32.mrb[0].mxu0
    %v1390 = vadd.f32 %v1286, %v1389
    %1391 = vmatprep.mubr.f32.mxu0 %v1106
    %1392 = vmatmul.mubr.f32.gmra.mrb[0].mxu0 %v1105
    %v1393 = vpop.f32.mrb[0].mxu0
    %v1394 = vadd.f32 %v1282, %v1393
    %v1395 = vpop.f32.mrb[0].mxu0
    %v1396 = vadd.f32 %v1286, %v1395
    %1397 = vmatprep.mubr.f32.mxu0 %v1109
    %1398 = vmatmul.mubr.f32.gmra.mrb[0].mxu0 %v1108
    %v1399 = vpop.f32.mrb[0].mxu0
    %v1400 = vadd.f32 %v1282, %v1399
    %v1401 = vpop.f32.mrb[0].mxu0
    %v1402 = vadd.f32 %v1286, %v1401
    %1403 = vmatprep.mubr.f32.mxu0 %v1112
    %1404 = vmatmul.mubr.f32.gmra.mrb[0].mxu0 %v1111
    %v1405 = vpop.f32.mrb[0].mxu0
    %v1406 = vadd.f32 %v1282, %v1405
    %v1407 = vpop.f32.mrb[0].mxu0
    %v1408 = vadd.f32 %v1286, %v1407
    %1409 = vmatprep.mubr.f32.mxu0 %v1115
    %1410 = vmatmul.mubr.f32.gmra.mrb[0].mxu0 %v1114
    %v1411 = vpop.f32.mrb[0].mxu0
    %v1412 = vadd.f32 %v1282, %v1411
    %v1413 = vpop.f32.mrb[0].mxu0
    %v1414 = vadd.f32 %v1286, %v1413
    %1415 = vmatprep.mubr.f32.mxu0 %v1118
    %1416 = vmatmul.mubr.f32.gmra.mrb[0].mxu0 %v1117
    %v1417 = vpop.f32.mrb[0].mxu0
    %v1418 = vadd.f32 %v1282, %v1417
    %v1419 = vpop.f32.mrb[0].mxu0
    %v1420 = vadd.f32 %v1286, %v1419
    %1421 = vmatprep.mubr.f32.mxu0 %v1121
    %1422 = vmatmul.mubr.f32.gmra.mrb[0].mxu0 %v1120
    %v1423 = vpop.f32.mrb[0].mxu0
    %v1424 = vadd.f32 %v1282, %v1423
    %v1425 = vpop.f32.mrb[0].mxu0
    %v1426 = vadd.f32 %v1286, %v1425
    %1427 = vmatprep.mubr.f32.mxu0 %v1124
    %1428 = vmatmul.mubr.f32.gmra.mrb[0].mxu0 %v1123
    %v1429 = vpop.f32.mrb[0].mxu0
    %v1430 = vadd.f32 %v1282, %v1429
    %v1431 = vpop.f32.mrb[0].mxu0
    %v1432 = vadd.f32 %v1286, %v1431
    %1433 = vmatprep.mubr.f32.mxu0 %v1127
    %1434 = vmatmul.mubr.f32.gmra.mrb[0].mxu0 %v1126
    %v1435 = vpop.f32.mrb[0].mxu0
    %v1436 = vadd.f32 %v1282, %v1435
    %v1437 = vpop.f32.mrb[0].mxu0
    %v1438 = vadd.f32 %v1286, %v1437
    %1439 = vmatprep.mubr.f32.mxu0 %v1130
    %1440 = vmatmul.mubr.f32.gmra.mrb[0].mxu0 %v1129
    %v1441 = vpop.f32.mrb[0].mxu0
    %v1442 = vadd.f32 %v1282, %v1441
    %v1443 = vpop.f32.mrb[0].mxu0
    %v1444 = vadd.f32 %v1286, %v1443
    %1445 = vmatprep.mubr.f32.mxu0 %v1133
    %1446 = vmatmul.mubr.f32.gmra.mrb[0].mxu0 %v1132
    %v1447 = vpop.f32.mrb[0].mxu0
    %v1448 = vadd.f32 %v1282, %v1447
    %v1449 = vpop.f32.mrb[0].mxu0
    %v1450 = vadd.f32 %v1286, %v1449
    %1451 = vdwg.mxu0
    %1452 = vmatprep.subr.mxu0 %v1232
    %1453 = vmatpush1.msra.mxu0 %v1231
    %1454 = vmatprep.subr.mxu0 %v1235
    %1455 = vmatpush1.msra.mxu0 %v1234
    %1456 = vmatprep.subr.mxu0 %v1238
    %1457 = vmatpush1.msra.mxu0 %v1237
    %1458 = vmatprep.subr.mxu0 %v1241
    %1459 = vmatpush1.msra.mxu0 %v1240
    %1460 = vmatprep.subr.mxu0 %v1244
    %1461 = vmatpush1.msra.mxu0 %v1243
    %1462 = vmatprep.subr.mxu0 %v1247
    %1463 = vmatpush1.msra.mxu0 %v1246
    %1464 = vmatprep.subr.mxu0 %v1250
    %1465 = vmatpush1.msra.mxu0 %v1249
    %1466 = vmatprep.subr.mxu0 %v1253
    %1467 = vmatpush1.msra.mxu0 %v1252
    %1468 = vmatprep.subr.mxu0 %v1256
    %1469 = vmatpush1.msra.mxu0 %v1255
    %1470 = vmatprep.subr.mxu0 %v1259
    %1471 = vmatpush1.msra.mxu0 %v1258
    %1472 = vmatprep.subr.mxu0 %v1262
    %1473 = vmatpush1.msra.mxu0 %v1261
    %1474 = vmatprep.subr.mxu0 %v1265
    %1475 = vmatpush1.msra.mxu0 %v1264
    %1476 = vmatprep.subr.mxu0 %v1268
    %1477 = vmatpush1.msra.mxu0 %v1267
    %1478 = vmatprep.subr.mxu0 %v1271
    %1479 = vmatpush1.msra.mxu0 %v1270
    %1480 = vmatprep.subr.mxu0 %v1274
    %1481 = vmatpush1.msra.mxu0 %v1273
    %1482 = vmatprep.subr.mxu0 %v1277
    %1483 = vmatpush1.msra.mxu0 %v1276
    %1484 = vmatprep.subr.mxu0 0.0
    %1485 = vmatpush1.msra.mxu0 0.0
    %1486 = vmatprep.subr.mxu0 0.0
    %1487 = vmatpush1.msra.mxu0 0.0
    %1488 = vmatprep.subr.mxu0 0.0
    %1489 = vmatpush1.msra.mxu0 0.0
    %1490 = vmatprep.subr.mxu0 0.0
    %1491 = vmatpush1.msra.mxu0 0.0
    %1492 = vmatprep.subr.mxu0 0.0
    %1493 = vmatpush1.msra.mxu0 0.0
    %1494 = vmatprep.subr.mxu0 0.0
    %1495 = vmatpush1.msra.mxu0 0.0
    %1496 = vmatprep.subr.mxu0 0.0
    %1497 = vmatpush1.msra.mxu0 0.0
    %1498 = vmatprep.subr.mxu0 0.0
    %1499 = vmatpush1.msra.mxu0 0.0
    %1500 = vmatprep.subr.mxu0 0.0
    %1501 = vmatpush1.msra.mxu0 0.0
    %1502 = vmatprep.subr.mxu0 0.0
    %1503 = vmatpush1.msra.mxu0 0.0
    %1504 = vmatprep.subr.mxu0 0.0
    %1505 = vmatpush1.msra.mxu0 0.0
    %1506 = vmatprep.subr.mxu0 0.0
    %1507 = vmatpush1.msra.mxu0 0.0
    %1508 = vmatprep.subr.mxu0 0.0
    %1509 = vmatpush1.msra.mxu0 0.0
    %1510 = vmatprep.subr.mxu0 0.0
    %1511 = vmatpush1.msra.mxu0 0.0
    %1512 = vmatprep.subr.mxu0 0.0
    %1513 = vmatpush1.msra.mxu0 0.0
    %1514 = vmatprep.subr.mxu0 0.0
    %1515 = vmatpush1.msra.mxu0 0.0
    %1516 = vmatprep.mubr.f32.mxu0 0.0
    %1517 = vmatmul.mubr.f32.gmra.mrb[0].mxu0 %v1089
    %v1518 = vpop.f32.mrb[0].mxu0
    %v1519 = vadd.f32 %v1358, %v1518
    %v1520 = vpop.f32.mrb[0].mxu0
    %v1521 = vadd.f32 %v1360, %v1520
    %1522 = vmatprep.mubr.f32.mxu0 0.0
    %1523 = vmatmul.mubr.f32.gmra.mrb[0].mxu0 %v1092
    %v1524 = vpop.f32.mrb[0].mxu0
    %v1525 = vadd.f32 %v1364, %v1524
    %v1526 = vpop.f32.mrb[0].mxu0
    %v1527 = vadd.f32 %v1366, %v1526
    %1528 = vmatprep.mubr.f32.mxu0 0.0
    %1529 = vmatmul.mubr.f32.gmra.mrb[0].mxu0 %v1095
    %v1530 = vpop.f32.mrb[0].mxu0
    %v1531 = vadd.f32 %v1370, %v1530
    %v1532 = vpop.f32.mrb[0].mxu0
    %v1533 = vadd.f32 %v1372, %v1532
    %1534 = vmatprep.mubr.f32.mxu0 0.0
    %1535 = vmatmul.mubr.f32.gmra.mrb[0].mxu0 %v1098
    %v1536 = vpop.f32.mrb[0].mxu0
    %v1537 = vadd.f32 %v1376, %v1536
    %v1538 = vpop.f32.mrb[0].mxu0
    %v1539 = vadd.f32 %v1378, %v1538
    %1540 = vmatprep.mubr.f32.mxu0 0.0
    %1541 = vmatmul.mubr.f32.gmra.mrb[0].mxu0 %v1101
    %v1542 = vpop.f32.mrb[0].mxu0
    %v1543 = vadd.f32 %v1382, %v1542
    %v1544 = vpop.f32.mrb[0].mxu0
    %v1545 = vadd.f32 %v1384, %v1544
    %1546 = vmatprep.mubr.f32.mxu0 0.0
    %1547 = vmatmul.mubr.f32.gmra.mrb[0].mxu0 %v1104
    %v1548 = vpop.f32.mrb[0].mxu0
    %v1549 = vadd.f32 %v1388, %v1548
    %v1550 = vpop.f32.mrb[0].mxu0
    %v1551 = vadd.f32 %v1390, %v1550
    %1552 = vmatprep.mubr.f32.mxu0 0.0
    %1553 = vmatmul.mubr.f32.gmra.mrb[0].mxu0 %v1107
    %v1554 = vpop.f32.mrb[0].mxu0
    %v1555 = vadd.f32 %v1394, %v1554
    %v1556 = vpop.f32.mrb[0].mxu0
    %v1557 = vadd.f32 %v1396, %v1556
    %1558 = vmatprep.mubr.f32.mxu0 0.0
    %1559 = vmatmul.mubr.f32.gmra.mrb[0].mxu0 %v1110
    %v1560 = vpop.f32.mrb[0].mxu0
    %v1561 = vadd.f32 %v1400, %v1560
    %v1562 = vpop.f32.mrb[0].mxu0
    %v1563 = vadd.f32 %v1402, %v1562
    %1564 = vmatprep.mubr.f32.mxu0 0.0
    %1565 = vmatmul.mubr.f32.gmra.mrb[0].mxu0 %v1113
    %v1566 = vpop.f32.mrb[0].mxu0
    %v1567 = vadd.f32 %v1406, %v1566
    %v1568 = vpop.f32.mrb[0].mxu0
    %v1569 = vadd.f32 %v1408, %v1568
    %1570 = vmatprep.mubr.f32.mxu0 0.0
    %1571 = vmatmul.mubr.f32.gmra.mrb[0].mxu0 %v1116
    %v1572 = vpop.f32.mrb[0].mxu0
    %v1573 = vadd.f32 %v1412, %v1572
    %v1574 = vpop.f32.mrb[0].mxu0
    %v1575 = vadd.f32 %v1414, %v1574
    %1576 = vmatprep.mubr.f32.mxu0 0.0
    %1577 = vmatmul.mubr.f32.gmra.mrb[0].mxu0 %v1119
    %v1578 = vpop.f32.mrb[0].mxu0
    %v1579 = vadd.f32 %v1418, %v1578
    %v1580 = vpop.f32.mrb[0].mxu0
    %v1581 = vadd.f32 %v1420, %v1580
    %1582 = vmatprep.mubr.f32.mxu0 0.0
    %1583 = vmatmul.mubr.f32.gmra.mrb[0].mxu0 %v1122
    %v1584 = vpop.f32.mrb[0].mxu0
    %v1585 = vadd.f32 %v1424, %v1584
    %v1586 = vpop.f32.mrb[0].mxu0
    %v1587 = vadd.f32 %v1426, %v1586
    %1588 = vmatprep.mubr.f32.mxu0 0.0
    %1589 = vmatmul.mubr.f32.gmra.mrb[0].mxu0 %v1125
    %v1590 = vpop.f32.mrb[0].mxu0
    %v1591 = vadd.f32 %v1430, %v1590
    %v1592 = vpop.f32.mrb[0].mxu0
    %v1593 = vadd.f32 %v1432, %v1592
    %1594 = vmatprep.mubr.f32.mxu0 0.0
    %1595 = vmatmul.mubr.f32.gmra.mrb[0].mxu0 %v1128
    %v1596 = vpop.f32.mrb[0].mxu0
    %v1597 = vadd.f32 %v1436, %v1596
    %v1598 = vpop.f32.mrb[0].mxu0
    %v1599 = vadd.f32 %v1438, %v1598
    %1600 = vmatprep.mubr.f32.mxu0 0.0
    %1601 = vmatmul.mubr.f32.gmra.mrb[0].mxu0 %v1131
    %v1602 = vpop.f32.mrb[0].mxu0
    %v1603 = vadd.f32 %v1442, %v1602
    %v1604 = vpop.f32.mrb[0].mxu0
    %v1605 = vadd.f32 %v1444, %v1604
    %1606 = vmatprep.mubr.f32.mxu0 0.0
    %1607 = vmatmul.mubr.f32.gmra.mrb[0].mxu0 %v1134
    %v1608 = vpop.f32.mrb[0].mxu0
    %v1609 = vadd.f32 %v1448, %v1608
    %v1610 = vpop.f32.mrb[0].mxu0
    %v1611 = vadd.f32 %v1450, %v1610
    %1612 = vdwg.mxu0
    %1613 = vmatprep.subr.mxu0 0.0
    %1614 = vmatpush1.msra.mxu0 %v1137
    %1615 = vmatprep.subr.mxu0 0.0
    %1616 = vmatpush1.msra.mxu0 %v1140
    %1617 = vmatprep.subr.mxu0 0.0
    %1618 = vmatpush1.msra.mxu0 %v1143
    %1619 = vmatprep.subr.mxu0 0.0
    %1620 = vmatpush1.msra.mxu0 %v1146
    %1621 = vmatprep.subr.mxu0 0.0
    %1622 = vmatpush1.msra.mxu0 %v1149
    %1623 = vmatprep.subr.mxu0 0.0
    %1624 = vmatpush1.msra.mxu0 %v1152
    %1625 = vmatprep.subr.mxu0 0.0
    %1626 = vmatpush1.msra.mxu0 %v1155
    %1627 = vmatprep.subr.mxu0 0.0
    %1628 = vmatpush1.msra.mxu0 %v1158
    %1629 = vmatprep.subr.mxu0 0.0
    %1630 = vmatpush1.msra.mxu0 %v1161
    %1631 = vmatprep.subr.mxu0 0.0
    %1632 = vmatpush1.msra.mxu0 %v1164
    %1633 = vmatprep.subr.mxu0 0.0
    %1634 = vmatpush1.msra.mxu0 %v1167
    %1635 = vmatprep.subr.mxu0 0.0
    %1636 = vmatpush1.msra.mxu0 %v1170
    %1637 = vmatprep.subr.mxu0 0.0
    %1638 = vmatpush1.msra.mxu0 %v1173
    %1639 = vmatprep.subr.mxu0 0.0
    %1640 = vmatpush1.msra.mxu0 %v1176
    %1641 = vmatprep.subr.mxu0 0.0
    %1642 = vmatpush1.msra.mxu0 %v1179
    %1643 = vmatprep.subr.mxu0 0.0
    %1644 = vmatpush1.msra.mxu0 %v1182
    %1645 = vmatprep.subr.mxu0 0.0
    %1646 = vmatpush1.msra.mxu0 %v1185
    %1647 = vmatprep.subr.mxu0 0.0
    %1648 = vmatpush1.msra.mxu0 %v1188
    %1649 = vmatprep.subr.mxu0 0.0
    %1650 = vmatpush1.msra.mxu0 %v1191
    %1651 = vmatprep.subr.mxu0 0.0
    %1652 = vmatpush1.msra.mxu0 %v1194
    %1653 = vmatprep.subr.mxu0 0.0
    %1654 = vmatpush1.msra.mxu0 %v1197
    %1655 = vmatprep.subr.mxu0 0.0
    %1656 = vmatpush1.msra.mxu0 %v1200
    %1657 = vmatprep.subr.mxu0 0.0
    %1658 = vmatpush1.msra.mxu0 %v1203
    %1659 = vmatprep.subr.mxu0 0.0
    %1660 = vmatpush1.msra.mxu0 %v1206
    %1661 = vmatprep.subr.mxu0 0.0
    %1662 = vmatpush1.msra.mxu0 %v1209
    %1663 = vmatprep.subr.mxu0 0.0
    %1664 = vmatpush1.msra.mxu0 %v1212
    %1665 = vmatprep.subr.mxu0 0.0
    %1666 = vmatpush1.msra.mxu0 %v1215
    %1667 = vmatprep.subr.mxu0 0.0
    %1668 = vmatpush1.msra.mxu0 %v1218
    %1669 = vmatprep.subr.mxu0 0.0
    %1670 = vmatpush1.msra.mxu0 %v1221
    %1671 = vmatprep.subr.mxu0 0.0
    %1672 = vmatpush1.msra.mxu0 %v1224
    %1673 = vmatprep.subr.mxu0 0.0
    %1674 = vmatpush1.msra.mxu0 %v1227
    %1675 = vmatprep.subr.mxu0 0.0
    %1676 = vmatpush1.msra.mxu0 %v1230
    %1677 = vmatprep.mubr.f32.mxu0 %v1088
    %1678 = vmatmul.mubr.f32.gmra.mrb[0].mxu0 %v1087
    %v1679 = vpop.f32.mrb[0].mxu0
    %v1680 = vadd.f32 %v1290, %v1679
    %v1681 = vpop.f32.mrb[0].mxu0
    %1682 = vmatprep.mubr.f32.mxu0 %v1091
    %1683 = vmatmul.mubr.f32.gmra.mrb[0].mxu0 %v1090
    %v1684 = vpop.f32.mrb[0].mxu0
    %v1685 = vadd.f32 %v1290, %v1684
    %v1686 = vpop.f32.mrb[0].mxu0
    %1687 = vmatprep.mubr.f32.mxu0 %v1094
    %1688 = vmatmul.mubr.f32.gmra.mrb[0].mxu0 %v1093
    %v1689 = vpop.f32.mrb[0].mxu0
    %v1690 = vadd.f32 %v1290, %v1689
    %v1691 = vpop.f32.mrb[0].mxu0
    %1692 = vmatprep.mubr.f32.mxu0 %v1097
    %1693 = vmatmul.mubr.f32.gmra.mrb[0].mxu0 %v1096
    %v1694 = vpop.f32.mrb[0].mxu0
    %v1695 = vadd.f32 %v1290, %v1694
    %v1696 = vpop.f32.mrb[0].mxu0
    %1697 = vmatprep.mubr.f32.mxu0 %v1100
    %1698 = vmatmul.mubr.f32.gmra.mrb[0].mxu0 %v1099
    %v1699 = vpop.f32.mrb[0].mxu0
    %v1700 = vadd.f32 %v1290, %v1699
    %v1701 = vpop.f32.mrb[0].mxu0
    %1702 = vmatprep.mubr.f32.mxu0 %v1103
    %1703 = vmatmul.mubr.f32.gmra.mrb[0].mxu0 %v1102
    %v1704 = vpop.f32.mrb[0].mxu0
    %v1705 = vadd.f32 %v1290, %v1704
    %v1706 = vpop.f32.mrb[0].mxu0
    %1707 = vmatprep.mubr.f32.mxu0 %v1106
    %1708 = vmatmul.mubr.f32.gmra.mrb[0].mxu0 %v1105
    %v1709 = vpop.f32.mrb[0].mxu0
    %v1710 = vadd.f32 %v1290, %v1709
    %v1711 = vpop.f32.mrb[0].mxu0
    %1712 = vmatprep.mubr.f32.mxu0 %v1109
    %1713 = vmatmul.mubr.f32.gmra.mrb[0].mxu0 %v1108
    %v1714 = vpop.f32.mrb[0].mxu0
    %v1715 = vadd.f32 %v1290, %v1714
    %v1716 = vpop.f32.mrb[0].mxu0
    %1717 = vmatprep.mubr.f32.mxu0 %v1112
    %1718 = vmatmul.mubr.f32.gmra.mrb[0].mxu0 %v1111
    %v1719 = vpop.f32.mrb[0].mxu0
    %v1720 = vadd.f32 %v1290, %v1719
    %v1721 = vpop.f32.mrb[0].mxu0
    %1722 = vmatprep.mubr.f32.mxu0 %v1115
    %1723 = vmatmul.mubr.f32.gmra.mrb[0].mxu0 %v1114
    %v1724 = vpop.f32.mrb[0].mxu0
    %v1725 = vadd.f32 %v1290, %v1724
    %v1726 = vpop.f32.mrb[0].mxu0
    %1727 = vmatprep.mubr.f32.mxu0 %v1118
    %1728 = vmatmul.mubr.f32.gmra.mrb[0].mxu0 %v1117
    %v1729 = vpop.f32.mrb[0].mxu0
    %v1730 = vadd.f32 %v1290, %v1729
    %v1731 = vpop.f32.mrb[0].mxu0
    %1732 = vmatprep.mubr.f32.mxu0 %v1121
    %1733 = vmatmul.mubr.f32.gmra.mrb[0].mxu0 %v1120
    %v1734 = vpop.f32.mrb[0].mxu0
    %v1735 = vadd.f32 %v1290, %v1734
    %v1736 = vpop.f32.mrb[0].mxu0
    %1737 = vmatprep.mubr.f32.mxu0 %v1124
    %1738 = vmatmul.mubr.f32.gmra.mrb[0].mxu0 %v1123
    %v1739 = vpop.f32.mrb[0].mxu0
    %v1740 = vadd.f32 %v1290, %v1739
    %v1741 = vpop.f32.mrb[0].mxu0
    %1742 = vmatprep.mubr.f32.mxu0 %v1127
    %1743 = vmatmul.mubr.f32.gmra.mrb[0].mxu0 %v1126
    %v1744 = vpop.f32.mrb[0].mxu0
    %v1745 = vadd.f32 %v1290, %v1744
    %v1746 = vpop.f32.mrb[0].mxu0
    %1747 = vmatprep.mubr.f32.mxu0 %v1130
    %1748 = vmatmul.mubr.f32.gmra.mrb[0].mxu0 %v1129
    %v1749 = vpop.f32.mrb[0].mxu0
    %v1750 = vadd.f32 %v1290, %v1749
    %v1751 = vpop.f32.mrb[0].mxu0
    %1752 = vmatprep.mubr.f32.mxu0 %v1133
    %1753 = vmatmul.mubr.f32.gmra.mrb[0].mxu0 %v1132
    %v1754 = vpop.f32.mrb[0].mxu0
    %v1755 = vadd.f32 %v1290, %v1754
    %v1756 = vpop.f32.mrb[0].mxu0
    %1757 = vdwg.mxu0
    %1758 = vmatprep.subr.mxu0 0.0
    %1759 = vmatpush1.msra.mxu0 %v1233
    %1760 = vmatprep.subr.mxu0 0.0
    %1761 = vmatpush1.msra.mxu0 %v1236
    %1762 = vmatprep.subr.mxu0 0.0
    %1763 = vmatpush1.msra.mxu0 %v1239
    %1764 = vmatprep.subr.mxu0 0.0
    %1765 = vmatpush1.msra.mxu0 %v1242
    %1766 = vmatprep.subr.mxu0 0.0
    %1767 = vmatpush1.msra.mxu0 %v1245
    %1768 = vmatprep.subr.mxu0 0.0
    %1769 = vmatpush1.msra.mxu0 %v1248
    %1770 = vmatprep.subr.mxu0 0.0
    %1771 = vmatpush1.msra.mxu0 %v1251
    %1772 = vmatprep.subr.mxu0 0.0
    %1773 = vmatpush1.msra.mxu0 %v1254
    %1774 = vmatprep.subr.mxu0 0.0
    %1775 = vmatpush1.msra.mxu0 %v1257
    %1776 = vmatprep.subr.mxu0 0.0
    %1777 = vmatpush1.msra.mxu0 %v1260
    %1778 = vmatprep.subr.mxu0 0.0
    %1779 = vmatpush1.msra.mxu0 %v1263
    %1780 = vmatprep.subr.mxu0 0.0
    %1781 = vmatpush1.msra.mxu0 %v1266
    %1782 = vmatprep.subr.mxu0 0.0
    %1783 = vmatpush1.msra.mxu0 %v1269
    %1784 = vmatprep.subr.mxu0 0.0
    %1785 = vmatpush1.msra.mxu0 %v1272
    %1786 = vmatprep.subr.mxu0 0.0
    %1787 = vmatpush1.msra.mxu0 %v1275
    %1788 = vmatprep.subr.mxu0 0.0
    %1789 = vmatpush1.msra.mxu0 %v1278
    %1790 = vmatprep.subr.mxu0 0.0
    %1791 = vmatpush1.msra.mxu0 0.0
    %1792 = vmatprep.subr.mxu0 0.0
    %1793 = vmatpush1.msra.mxu0 0.0
    %1794 = vmatprep.subr.mxu0 0.0
    %1795 = vmatpush1.msra.mxu0 0.0
    %1796 = vmatprep.subr.mxu0 0.0
    %1797 = vmatpush1.msra.mxu0 0.0
    %1798 = vmatprep.subr.mxu0 0.0
    %1799 = vmatpush1.msra.mxu0 0.0
    %1800 = vmatprep.subr.mxu0 0.0
    %1801 = vmatpush1.msra.mxu0 0.0
    %1802 = vmatprep.subr.mxu0 0.0
    %1803 = vmatpush1.msra.mxu0 0.0
    %1804 = vmatprep.subr.mxu0 0.0
    %1805 = vmatpush1.msra.mxu0 0.0
    %1806 = vmatprep.subr.mxu0 0.0
    %1807 = vmatpush1.msra.mxu0 0.0
    %1808 = vmatprep.subr.mxu0 0.0
    %1809 = vmatpush1.msra.mxu0 0.0
    %1810 = vmatprep.subr.mxu0 0.0
    %1811 = vmatpush1.msra.mxu0 0.0
    %1812 = vmatprep.subr.mxu0 0.0
    %1813 = vmatpush1.msra.mxu0 0.0
    %1814 = vmatprep.subr.mxu0 0.0
    %1815 = vmatpush1.msra.mxu0 0.0
    %1816 = vmatprep.subr.mxu0 0.0
    %1817 = vmatpush1.msra.mxu0 0.0
    %1818 = vmatprep.subr.mxu0 0.0
    %1819 = vmatpush1.msra.mxu0 0.0
    %1820 = vmatprep.subr.mxu0 0.0
    %1821 = vmatpush1.msra.mxu0 0.0
    %1822 = vmatprep.mubr.f32.mxu0 0.0
    %1823 = vmatmul.mubr.f32.gmra.mrb[0].mxu0 %v1089
    %v1824 = vpop.f32.mrb[0].mxu0
    %v1825 = vadd.f32 %v1680, %v1824
    %v1826 = vpop.f32.mrb[0].mxu0
    %1827 = vmatprep.mubr.f32.mxu0 0.0
    %1828 = vmatmul.mubr.f32.gmra.mrb[0].mxu0 %v1092
    %v1829 = vpop.f32.mrb[0].mxu0
    %v1830 = vadd.f32 %v1685, %v1829
    %v1831 = vpop.f32.mrb[0].mxu0
    %1832 = vmatprep.mubr.f32.mxu0 0.0
    %1833 = vmatmul.mubr.f32.gmra.mrb[0].mxu0 %v1095
    %v1834 = vpop.f32.mrb[0].mxu0
    %v1835 = vadd.f32 %v1690, %v1834
    %v1836 = vpop.f32.mrb[0].mxu0
    %1837 = vmatprep.mubr.f32.mxu0 0.0
    %1838 = vmatmul.mubr.f32.gmra.mrb[0].mxu0 %v1098
    %v1839 = vpop.f32.mrb[0].mxu0
    %v1840 = vadd.f32 %v1695, %v1839
    %v1841 = vpop.f32.mrb[0].mxu0
    %1842 = vmatprep.mubr.f32.mxu0 0.0
    %1843 = vmatmul.mubr.f32.gmra.mrb[0].mxu0 %v1101
    %v1844 = vpop.f32.mrb[0].mxu0
    %v1845 = vadd.f32 %v1700, %v1844
    %v1846 = vpop.f32.mrb[0].mxu0
    %1847 = vmatprep.mubr.f32.mxu0 0.0
    %1848 = vmatmul.mubr.f32.gmra.mrb[0].mxu0 %v1104
    %v1849 = vpop.f32.mrb[0].mxu0
    %v1850 = vadd.f32 %v1705, %v1849
    %v1851 = vpop.f32.mrb[0].mxu0
    %1852 = vmatprep.mubr.f32.mxu0 0.0
    %1853 = vmatmul.mubr.f32.gmra.mrb[0].mxu0 %v1107
    %v1854 = vpop.f32.mrb[0].mxu0
    %v1855 = vadd.f32 %v1710, %v1854
    %v1856 = vpop.f32.mrb[0].mxu0
    %1857 = vmatprep.mubr.f32.mxu0 0.0
    %1858 = vmatmul.mubr.f32.gmra.mrb[0].mxu0 %v1110
    %v1859 = vpop.f32.mrb[0].mxu0
    %v1860 = vadd.f32 %v1715, %v1859
    %v1861 = vpop.f32.mrb[0].mxu0
    %1862 = vmatprep.mubr.f32.mxu0 0.0
    %1863 = vmatmul.mubr.f32.gmra.mrb[0].mxu0 %v1113
    %v1864 = vpop.f32.mrb[0].mxu0
    %v1865 = vadd.f32 %v1720, %v1864
    %v1866 = vpop.f32.mrb[0].mxu0
    %1867 = vmatprep.mubr.f32.mxu0 0.0
    %1868 = vmatmul.mubr.f32.gmra.mrb[0].mxu0 %v1116
    %v1869 = vpop.f32.mrb[0].mxu0
    %v1870 = vadd.f32 %v1725, %v1869
    %v1871 = vpop.f32.mrb[0].mxu0
    %1872 = vmatprep.mubr.f32.mxu0 0.0
    %1873 = vmatmul.mubr.f32.gmra.mrb[0].mxu0 %v1119
    %v1874 = vpop.f32.mrb[0].mxu0
    %v1875 = vadd.f32 %v1730, %v1874
    %v1876 = vpop.f32.mrb[0].mxu0
    %1877 = vmatprep.mubr.f32.mxu0 0.0
    %1878 = vmatmul.mubr.f32.gmra.mrb[0].mxu0 %v1122
    %v1879 = vpop.f32.mrb[0].mxu0
    %v1880 = vadd.f32 %v1735, %v1879
    %v1881 = vpop.f32.mrb[0].mxu0
    %1882 = vmatprep.mubr.f32.mxu0 0.0
    %1883 = vmatmul.mubr.f32.gmra.mrb[0].mxu0 %v1125
    %v1884 = vpop.f32.mrb[0].mxu0
    %v1885 = vadd.f32 %v1740, %v1884
    %v1886 = vpop.f32.mrb[0].mxu0
    %1887 = vmatprep.mubr.f32.mxu0 0.0
    %1888 = vmatmul.mubr.f32.gmra.mrb[0].mxu0 %v1128
    %v1889 = vpop.f32.mrb[0].mxu0
    %v1890 = vadd.f32 %v1745, %v1889
    %v1891 = vpop.f32.mrb[0].mxu0
    %1892 = vmatprep.mubr.f32.mxu0 0.0
    %1893 = vmatmul.mubr.f32.gmra.mrb[0].mxu0 %v1131
    %v1894 = vpop.f32.mrb[0].mxu0
    %v1895 = vadd.f32 %v1750, %v1894
    %v1896 = vpop.f32.mrb[0].mxu0
    %1897 = vmatprep.mubr.f32.mxu0 0.0
    %1898 = vmatmul.mubr.f32.gmra.mrb[0].mxu0 %v1134
    %v1899 = vpop.f32.mrb[0].mxu0
    %v1900 = vadd.f32 %v1755, %v1899
    %v1901 = vpop.f32.mrb[0].mxu0
    %1902 = vdwg.mxu0
    %v1903 = vadd.f32 %v1519, %v1525
    %v1904 = vadd.f32 %v1903, %v1531
    %v1905 = vadd.f32 %v1904, %v1537
    %v1906 = vadd.f32 %v1905, %v1543
    %v1907 = vadd.f32 %v1906, %v1549
    %v1908 = vadd.f32 %v1907, %v1555
    %v1909 = vadd.f32 %v1908, %v1561
    %v1910 = vadd.f32 %v1909, %v1567
    %v1911 = vadd.f32 %v1910, %v1573
    %v1912 = vadd.f32 %v1911, %v1579
    %v1913 = vadd.f32 %v1912, %v1585
    %v1914 = vadd.f32 %v1913, %v1591
    %v1915 = vadd.f32 %v1914, %v1597
    %v1916 = vadd.f32 %v1915, %v1603
    %v1917 = vadd.f32 %v1916, %v1609
    %v1918 = vrot.slane %v1917, 4
    %v1919 = vadd.f32 %v1917, %v1918
    %v1920 = vrot.slane %v1919, 2
    %v1921 = vadd.f32 %v1919, %v1920
    %v1922 = vrot.slane %v1921, 1
    %v1923 = vadd.f32 %v1921, %v1922
    %v1924 = vadd.f32 %v1521, %v1527
    %v1925 = vadd.f32 %v1924, %v1533
    %v1926 = vadd.f32 %v1925, %v1539
    %v1927 = vadd.f32 %v1926, %v1545
    %v1928 = vadd.f32 %v1927, %v1551
    %v1929 = vadd.f32 %v1928, %v1557
    %v1930 = vadd.f32 %v1929, %v1563
    %v1931 = vadd.f32 %v1930, %v1569
    %v1932 = vadd.f32 %v1931, %v1575
    %v1933 = vadd.f32 %v1932, %v1581
    %v1934 = vadd.f32 %v1933, %v1587
    %v1935 = vadd.f32 %v1934, %v1593
    %v1936 = vadd.f32 %v1935, %v1599
    %v1937 = vadd.f32 %v1936, %v1605
    %v1938 = vadd.f32 %v1937, %v1611
    %v1939 = vrot.slane %v1938, 4
    %v1940 = vadd.f32 %v1938, %v1939
    %v1941 = vrot.slane %v1940, 2
    %v1942 = vadd.f32 %v1940, %v1941
    %v1943 = vrot.slane %v1942, 1
    %v1944 = vadd.f32 %v1942, %v1943
    %v1945 = vadd.f32 %v1825, %v1830
    %v1946 = vadd.f32 %v1945, %v1835
    %v1947 = vadd.f32 %v1946, %v1840
    %v1948 = vadd.f32 %v1947, %v1845
    %v1949 = vadd.f32 %v1948, %v1850
    %v1950 = vadd.f32 %v1949, %v1855
    %v1951 = vadd.f32 %v1950, %v1860
    %v1952 = vadd.f32 %v1951, %v1865
    %v1953 = vadd.f32 %v1952, %v1870
    %v1954 = vadd.f32 %v1953, %v1875
    %v1955 = vadd.f32 %v1954, %v1880
    %v1956 = vadd.f32 %v1955, %v1885
    %v1957 = vadd.f32 %v1956, %v1890
    %v1958 = vadd.f32 %v1957, %v1895
    %v1959 = vadd.f32 %v1958, %v1900
    %v1960 = vrot.slane %v1959, 4
    %v1961 = vadd.f32 %v1959, %v1960
    %v1962 = vrot.slane %v1961, 2
    %v1963 = vadd.f32 %v1961, %v1962
    %v1964 = vrot.slane %v1963, 1
    %v1965 = vadd.f32 %v1963, %v1964
    %v1966 = vmul.f32 %v1923, 0.0078125
    %v1967 = vmul.f32 %v1944, 0.0078125
    %v1968 = vmul.f32 %v1965, 0.0078125
    %v1969 = vsub.f32 %v1519, %v1966
    %v1970 = vsub.f32 %v1521, %v1967
    %v1971 = vsub.f32 %v1825, %v1968
    %v1972 = vsub.f32 %v1525, %v1966
    %v1973 = vsub.f32 %v1527, %v1967
    %v1974 = vsub.f32 %v1830, %v1968
    %v1975 = vsub.f32 %v1531, %v1966
    %v1976 = vsub.f32 %v1533, %v1967
    %v1977 = vsub.f32 %v1835, %v1968
    %v1978 = vsub.f32 %v1537, %v1966
    %v1979 = vsub.f32 %v1539, %v1967
    %v1980 = vsub.f32 %v1840, %v1968
    %v1981 = vsub.f32 %v1543, %v1966
    %v1982 = vsub.f32 %v1545, %v1967
    %v1983 = vsub.f32 %v1845, %v1968
    %v1984 = vsub.f32 %v1549, %v1966
    %v1985 = vsub.f32 %v1551, %v1967
    %v1986 = vsub.f32 %v1850, %v1968
    %v1987 = vsub.f32 %v1555, %v1966
    %v1988 = vsub.f32 %v1557, %v1967
    %v1989 = vsub.f32 %v1855, %v1968
    %v1990 = vsub.f32 %v1561, %v1966
    %v1991 = vsub.f32 %v1563, %v1967
    %v1992 = vsub.f32 %v1860, %v1968
    %v1993 = vsub.f32 %v1567, %v1966
    %v1994 = vsub.f32 %v1569, %v1967
    %v1995 = vsub.f32 %v1865, %v1968
    %v1996 = vsub.f32 %v1573, %v1966
    %v1997 = vsub.f32 %v1575, %v1967
    %v1998 = vsub.f32 %v1870, %v1968
    %v1999 = vsub.f32 %v1579, %v1966
    %v2000 = vsub.f32 %v1581, %v1967
    %v2001 = vsub.f32 %v1875, %v1968
    %v2002 = vsub.f32 %v1585, %v1966
    %v2003 = vsub.f32 %v1587, %v1967
    %v2004 = vsub.f32 %v1880, %v1968
    %v2005 = vsub.f32 %v1591, %v1966
    %v2006 = vsub.f32 %v1593, %v1967
    %v2007 = vsub.f32 %v1885, %v1968
    %v2008 = vsub.f32 %v1597, %v1966
    %v2009 = vsub.f32 %v1599, %v1967
    %v2010 = vsub.f32 %v1890, %v1968
    %v2011 = vsub.f32 %v1603, %v1966
    %v2012 = vsub.f32 %v1605, %v1967
    %v2013 = vsub.f32 %v1895, %v1968
    %v2014 = vsub.f32 %v1609, %v1966
    %v2015 = vsub.f32 %v1611, %v1967
    %v2016 = vsub.f32 %v1900, %v1968
    %v2017 = vmul.f32 %v1969, %v1969
    %v2018 = vmul.f32 %v1970, %v1970
    %v2019 = vmul.f32 %v1971, %v1971
    %v2020 = vmul.f32 %v1972, %v1972
    %v2021 = vmul.f32 %v1973, %v1973
    %v2022 = vmul.f32 %v1974, %v1974
    %v2023 = vmul.f32 %v1975, %v1975
    %v2024 = vmul.f32 %v1976, %v1976
    %v2025 = vmul.f32 %v1977, %v1977
    %v2026 = vmul.f32 %v1978, %v1978
    %v2027 = vmul.f32 %v1979, %v1979
    %v2028 = vmul.f32 %v1980, %v1980
    %v2029 = vmul.f32 %v1981, %v1981
    %v2030 = vmul.f32 %v1982, %v1982
    %v2031 = vmul.f32 %v1983, %v1983
    %v2032 = vmul.f32 %v1984, %v1984
    %v2033 = vmul.f32 %v1985, %v1985
    %v2034 = vmul.f32 %v1986, %v1986
    %v2035 = vmul.f32 %v1987, %v1987
    %v2036 = vmul.f32 %v1988, %v1988
    %v2037 = vmul.f32 %v1989, %v1989
    %v2038 = vmul.f32 %v1990, %v1990
    %v2039 = vmul.f32 %v1991, %v1991
    %v2040 = vmul.f32 %v1992, %v1992
    %v2041 = vmul.f32 %v1993, %v1993
    %v2042 = vmul.f32 %v1994, %v1994
    %v2043 = vmul.f32 %v1995, %v1995
    %v2044 = vmul.f32 %v1996, %v1996
    %v2045 = vmul.f32 %v1997, %v1997
    %v2046 = vmul.f32 %v1998, %v1998
    %v2047 = vmul.f32 %v1999, %v1999
    %v2048 = vmul.f32 %v2000, %v2000
    %v2049 = vmul.f32 %v2001, %v2001
    %v2050 = vmul.f32 %v2002, %v2002
    %v2051 = vmul.f32 %v2003, %v2003
    %v2052 = vmul.f32 %v2004, %v2004
    %v2053 = vmul.f32 %v2005, %v2005
    %v2054 = vmul.f32 %v2006, %v2006
    %v2055 = vmul.f32 %v2007, %v2007
    %v2056 = vmul.f32 %v2008, %v2008
    %v2057 = vmul.f32 %v2009, %v2009
    %v2058 = vmul.f32 %v2010, %v2010
    %v2059 = vmul.f32 %v2011, %v2011
    %v2060 = vmul.f32 %v2012, %v2012
    %v2061 = vmul.f32 %v2013, %v2013
    %v2062 = vmul.f32 %v2014, %v2014
    %v2063 = vmul.f32 %v2015, %v2015
    %v2064 = vmul.f32 %v2016, %v2016
    %v2065 = vadd.f32 %v2017, %v2020
    %v2066 = vadd.f32 %v2065, %v2023
    %v2067 = vadd.f32 %v2066, %v2026
    %v2068 = vadd.f32 %v2067, %v2029
    %v2069 = vadd.f32 %v2068, %v2032
    %v2070 = vadd.f32 %v2069, %v2035
    %v2071 = vadd.f32 %v2070, %v2038
    %v2072 = vadd.f32 %v2071, %v2041
    %v2073 = vadd.f32 %v2072, %v2044
    %v2074 = vadd.f32 %v2073, %v2047
    %v2075 = vadd.f32 %v2074, %v2050
    %v2076 = vadd.f32 %v2075, %v2053
    %v2077 = vadd.f32 %v2076, %v2056
    %v2078 = vadd.f32 %v2077, %v2059
    %v2079 = vadd.f32 %v2078, %v2062
    %v2080 = vrot.slane %v2079, 4
    %v2081 = vadd.f32 %v2079, %v2080
    %v2082 = vrot.slane %v2081, 2
    %v2083 = vadd.f32 %v2081, %v2082
    %v2084 = vrot.slane %v2083, 1
    %v2085 = vadd.f32 %v2083, %v2084
    %v2086 = vadd.f32 %v2018, %v2021
    %v2087 = vadd.f32 %v2086, %v2024
    %v2088 = vadd.f32 %v2087, %v2027
    %v2089 = vadd.f32 %v2088, %v2030
    %v2090 = vadd.f32 %v2089, %v2033
    %v2091 = vadd.f32 %v2090, %v2036
    %v2092 = vadd.f32 %v2091, %v2039
    %v2093 = vadd.f32 %v2092, %v2042
    %v2094 = vadd.f32 %v2093, %v2045
    %v2095 = vadd.f32 %v2094, %v2048
    %v2096 = vadd.f32 %v2095, %v2051
    %v2097 = vadd.f32 %v2096, %v2054
    %v2098 = vadd.f32 %v2097, %v2057
    %v2099 = vadd.f32 %v2098, %v2060
    %v2100 = vadd.f32 %v2099, %v2063
    %v2101 = vrot.slane %v2100, 4
    %v2102 = vadd.f32 %v2100, %v2101
    %v2103 = vrot.slane %v2102, 2
    %v2104 = vadd.f32 %v2102, %v2103
    %v2105 = vrot.slane %v2104, 1
    %v2106 = vadd.f32 %v2104, %v2105
    %v2107 = vadd.f32 %v2019, %v2022
    %v2108 = vadd.f32 %v2107, %v2025
    %v2109 = vadd.f32 %v2108, %v2028
    %v2110 = vadd.f32 %v2109, %v2031
    %v2111 = vadd.f32 %v2110, %v2034
    %v2112 = vadd.f32 %v2111, %v2037
    %v2113 = vadd.f32 %v2112, %v2040
    %v2114 = vadd.f32 %v2113, %v2043
    %v2115 = vadd.f32 %v2114, %v2046
    %v2116 = vadd.f32 %v2115, %v2049
    %v2117 = vadd.f32 %v2116, %v2052
    %v2118 = vadd.f32 %v2117, %v2055
    %v2119 = vadd.f32 %v2118, %v2058
    %v2120 = vadd.f32 %v2119, %v2061
    %v2121 = vadd.f32 %v2120, %v2064
    %v2122 = vrot.slane %v2121, 4
    %v2123 = vadd.f32 %v2121, %v2122
    %v2124 = vrot.slane %v2123, 2
    %v2125 = vadd.f32 %v2123, %v2124
    %v2126 = vrot.slane %v2125, 1
    %v2127 = vadd.f32 %v2125, %v2126
    %v2128 = vmul.f32 %v2085, 0.0078125
    %v2129 = vmul.f32 %v2106, 0.0078125
    %v2130 = vmul.f32 %v2127, 0.0078125
    %v2131 = vadd.f32 %v2128, 1e-05
    %v2132 = vadd.f32 %v2129, 1e-05
    %v2133 = vadd.f32 %v2130, 1e-05
    %v2134 = vrsqrt.pop %v2131
    %v2135 = vrsqrt.pop %v2132
    %v2136 = vrsqrt.pop %v2133
    %v2137 = vmul.f32 %v277, %v2134
    %v2138 = vmul.f32 %v278, %v2135
    %v2139 = vmul.f32 %v279, %v2136
    %v2140 = vlaneseq
    %v2141 = vshrl.u32 %v2140, 7
    %v2142 = vsub.s32 3, %v2141
    %v2143 = vrot.slane %v2137, %v2142
    %v2144 = vlaneseq
    %v2145 = vshrl.u32 %v2144, 7
    %v2146 = vsub.s32 3, %v2145
    %v2147 = vrot.slane %v2138, %v2146
    %v2148 = vlaneseq
    %v2149 = vshrl.u32 %v2148, 7
    %v2150 = vsub.s32 3, %v2149
    %v2151 = vrot.slane %v2139, %v2150
    %v2152 = vmul.f32 %v1969, %v2143
    %v2153 = vmul.f32 %v1970, %v2147
    %v2154 = vmul.f32 %v1971, %v2151
    %v2155 = vmul.f32 %v1972, %v2143
    %v2156 = vmul.f32 %v1973, %v2147
    %v2157 = vmul.f32 %v1974, %v2151
    %v2158 = vmul.f32 %v1975, %v2143
    %v2159 = vmul.f32 %v1976, %v2147
    %v2160 = vmul.f32 %v1977, %v2151
    %v2161 = vmul.f32 %v1978, %v2143
    %v2162 = vmul.f32 %v1979, %v2147
    %v2163 = vmul.f32 %v1980, %v2151
    %v2164 = vmul.f32 %v1981, %v2143
    %v2165 = vmul.f32 %v1982, %v2147
    %v2166 = vmul.f32 %v1983, %v2151
    %v2167 = vmul.f32 %v1984, %v2143
    %v2168 = vmul.f32 %v1985, %v2147
    %v2169 = vmul.f32 %v1986, %v2151
    %v2170 = vmul.f32 %v1987, %v2143
    %v2171 = vmul.f32 %v1988, %v2147
    %v2172 = vmul.f32 %v1989, %v2151
    %v2173 = vmul.f32 %v1990, %v2143
    %v2174 = vmul.f32 %v1991, %v2147
    %v2175 = vmul.f32 %v1992, %v2151
    %v2176 = vmul.f32 %v1993, %v2143
    %v2177 = vmul.f32 %v1994, %v2147
    %v2178 = vmul.f32 %v1995, %v2151
    %v2179 = vmul.f32 %v1996, %v2143
    %v2180 = vmul.f32 %v1997, %v2147
    %v2181 = vmul.f32 %v1998, %v2151
    %v2182 = vmul.f32 %v1999, %v2143
    %v2183 = vmul.f32 %v2000, %v2147
    %v2184 = vmul.f32 %v2001, %v2151
    %v2185 = vmul.f32 %v2002, %v2143
    %v2186 = vmul.f32 %v2003, %v2147
    %v2187 = vmul.f32 %v2004, %v2151
    %v2188 = vmul.f32 %v2005, %v2143
    %v2189 = vmul.f32 %v2006, %v2147
    %v2190 = vmul.f32 %v2007, %v2151
    %v2191 = vmul.f32 %v2008, %v2143
    %v2192 = vmul.f32 %v2009, %v2147
    %v2193 = vmul.f32 %v2010, %v2151
    %v2194 = vmul.f32 %v2011, %v2143
    %v2195 = vmul.f32 %v2012, %v2147
    %v2196 = vmul.f32 %v2013, %v2151
    %v2197 = vmul.f32 %v2014, %v2143
    %v2198 = vmul.f32 %v2015, %v2147
    %v2199 = vmul.f32 %v2016, %v2151
    %v2200 = vlaneseq
    %v2201 = vshrl.u32 %v2200, 7
    %v2202 = vsub.s32 4, %v2201
    %v2203 = vrot.slane %v277, %v2202
    %v2204 = vlaneseq
    %v2205 = vshrl.u32 %v2204, 7
    %v2206 = vsub.s32 4, %v2205
    %v2207 = vrot.slane %v278, %v2206
    %v2208 = vlaneseq
    %v2209 = vshrl.u32 %v2208, 7
    %v2210 = vsub.s32 4, %v2209
    %v2211 = vrot.slane %v279, %v2210
    %v2212 = vadd.f32 %v2152, %v2203
    %v2213 = vadd.f32 %v2153, %v2207
    %v2214 = vadd.f32 %v2154, %v2211
    %v2215 = vadd.f32 %v2155, %v2203
    %v2216 = vadd.f32 %v2156, %v2207
    %v2217 = vadd.f32 %v2157, %v2211
    %v2218 = vadd.f32 %v2158, %v2203
    %v2219 = vadd.f32 %v2159, %v2207
    %v2220 = vadd.f32 %v2160, %v2211
    %v2221 = vadd.f32 %v2161, %v2203
    %v2222 = vadd.f32 %v2162, %v2207
    %v2223 = vadd.f32 %v2163, %v2211
    %v2224 = vadd.f32 %v2164, %v2203
    %v2225 = vadd.f32 %v2165, %v2207
    %v2226 = vadd.f32 %v2166, %v2211
    %v2227 = vadd.f32 %v2167, %v2203
    %v2228 = vadd.f32 %v2168, %v2207
    %v2229 = vadd.f32 %v2169, %v2211
    %v2230 = vadd.f32 %v2170, %v2203
    %v2231 = vadd.f32 %v2171, %v2207
    %v2232 = vadd.f32 %v2172, %v2211
    %v2233 = vadd.f32 %v2173, %v2203
    %v2234 = vadd.f32 %v2174, %v2207
    %v2235 = vadd.f32 %v2175, %v2211
    %v2236 = vadd.f32 %v2176, %v2203
    %v2237 = vadd.f32 %v2177, %v2207
    %v2238 = vadd.f32 %v2178, %v2211
    %v2239 = vadd.f32 %v2179, %v2203
    %v2240 = vadd.f32 %v2180, %v2207
    %v2241 = vadd.f32 %v2181, %v2211
    %v2242 = vadd.f32 %v2182, %v2203
    %v2243 = vadd.f32 %v2183, %v2207
    %v2244 = vadd.f32 %v2184, %v2211
    %v2245 = vadd.f32 %v2185, %v2203
    %v2246 = vadd.f32 %v2186, %v2207
    %v2247 = vadd.f32 %v2187, %v2211
    %v2248 = vadd.f32 %v2188, %v2203
    %v2249 = vadd.f32 %v2189, %v2207
    %v2250 = vadd.f32 %v2190, %v2211
    %v2251 = vadd.f32 %v2191, %v2203
    %v2252 = vadd.f32 %v2192, %v2207
    %v2253 = vadd.f32 %v2193, %v2211
    %v2254 = vadd.f32 %v2194, %v2203
    %v2255 = vadd.f32 %v2195, %v2207
    %v2256 = vadd.f32 %v2196, %v2211
    %v2257 = vadd.f32 %v2197, %v2203
    %v2258 = vadd.f32 %v2198, %v2207
    %v2259 = vadd.f32 %v2199, %v2211
    %vm2260 = vcmp.ge.f32.partialorder %v2212, 0.0
    %vm2261 = vcmp.ge.f32.partialorder %v2213, 0.0
    %vm2262 = vcmp.ge.f32.partialorder %v2214, 0.0
    %vm2263 = vcmp.ge.f32.partialorder %v2215, 0.0
    %vm2264 = vcmp.ge.f32.partialorder %v2216, 0.0
    %vm2265 = vcmp.ge.f32.partialorder %v2217, 0.0
    %vm2266 = vcmp.ge.f32.partialorder %v2218, 0.0
    %vm2267 = vcmp.ge.f32.partialorder %v2219, 0.0
    %vm2268 = vcmp.ge.f32.partialorder %v2220, 0.0
    %vm2269 = vcmp.ge.f32.partialorder %v2221, 0.0
    %vm2270 = vcmp.ge.f32.partialorder %v2222, 0.0
    %vm2271 = vcmp.ge.f32.partialorder %v2223, 0.0
    %vm2272 = vcmp.ge.f32.partialorder %v2224, 0.0
    %vm2273 = vcmp.ge.f32.partialorder %v2225, 0.0
    %vm2274 = vcmp.ge.f32.partialorder %v2226, 0.0
    %vm2275 = vcmp.ge.f32.partialorder %v2227, 0.0
    %vm2276 = vcmp.ge.f32.partialorder %v2228, 0.0
    %vm2277 = vcmp.ge.f32.partialorder %v2229, 0.0
    %vm2278 = vcmp.ge.f32.partialorder %v2230, 0.0
    %vm2279 = vcmp.ge.f32.partialorder %v2231, 0.0
    %vm2280 = vcmp.ge.f32.partialorder %v2232, 0.0
    %vm2281 = vcmp.ge.f32.partialorder %v2233, 0.0
    %vm2282 = vcmp.ge.f32.partialorder %v2234, 0.0
    %vm2283 = vcmp.ge.f32.partialorder %v2235, 0.0
    %vm2284 = vcmp.ge.f32.partialorder %v2236, 0.0
    %vm2285 = vcmp.ge.f32.partialorder %v2237, 0.0
    %vm2286 = vcmp.ge.f32.partialorder %v2238, 0.0
    %vm2287 = vcmp.ge.f32.partialorder %v2239, 0.0
    %vm2288 = vcmp.ge.f32.partialorder %v2240, 0.0
    %vm2289 = vcmp.ge.f32.partialorder %v2241, 0.0
    %vm2290 = vcmp.ge.f32.partialorder %v2242, 0.0
    %vm2291 = vcmp.ge.f32.partialorder %v2243, 0.0
    %vm2292 = vcmp.ge.f32.partialorder %v2244, 0.0
    %vm2293 = vcmp.ge.f32.partialorder %v2245, 0.0
    %vm2294 = vcmp.ge.f32.partialorder %v2246, 0.0
    %vm2295 = vcmp.ge.f32.partialorder %v2247, 0.0
    %vm2296 = vcmp.ge.f32.partialorder %v2248, 0.0
    %vm2297 = vcmp.ge.f32.partialorder %v2249, 0.0
    %vm2298 = vcmp.ge.f32.partialorder %v2250, 0.0
    %vm2299 = vcmp.ge.f32.partialorder %v2251, 0.0
    %vm2300 = vcmp.ge.f32.partialorder %v2252, 0.0
    %vm2301 = vcmp.ge.f32.partialorder %v2253, 0.0
    %vm2302 = vcmp.ge.f32.partialorder %v2254, 0.0
    %vm2303 = vcmp.ge.f32.partialorder %v2255, 0.0
    %vm2304 = vcmp.ge.f32.partialorder %v2256, 0.0
    %vm2305 = vcmp.ge.f32.partialorder %v2257, 0.0
    %vm2306 = vcmp.ge.f32.partialorder %v2258, 0.0
    %vm2307 = vcmp.ge.f32.partialorder %v2259, 0.0
    %v2308 = vmul.f32 %v2212, 0.2
    %v2309 = vmul.f32 %v2213, 0.2
    %v2310 = vmul.f32 %v2214, 0.2
    %v2311 = vmul.f32 %v2215, 0.2
    %v2312 = vmul.f32 %v2216, 0.2
    %v2313 = vmul.f32 %v2217, 0.2
    %v2314 = vmul.f32 %v2218, 0.2
    %v2315 = vmul.f32 %v2219, 0.2
    %v2316 = vmul.f32 %v2220, 0.2
    %v2317 = vmul.f32 %v2221, 0.2
    %v2318 = vmul.f32 %v2222, 0.2
    %v2319 = vmul.f32 %v2223, 0.2
    %v2320 = vmul.f32 %v2224, 0.2
    %v2321 = vmul.f32 %v2225, 0.2
    %v2322 = vmul.f32 %v2226, 0.2
    %v2323 = vmul.f32 %v2227, 0.2
    %v2324 = vmul.f32 %v2228, 0.2
    %v2325 = vmul.f32 %v2229, 0.2
    %v2326 = vmul.f32 %v2230, 0.2
    %v2327 = vmul.f32 %v2231, 0.2
    %v2328 = vmul.f32 %v2232, 0.2
    %v2329 = vmul.f32 %v2233, 0.2
    %v2330 = vmul.f32 %v2234, 0.2
    %v2331 = vmul.f32 %v2235, 0.2
    %v2332 = vmul.f32 %v2236, 0.2
    %v2333 = vmul.f32 %v2237, 0.2
    %v2334 = vmul.f32 %v2238, 0.2
    %v2335 = vmul.f32 %v2239, 0.2
    %v2336 = vmul.f32 %v2240, 0.2
    %v2337 = vmul.f32 %v2241, 0.2
    %v2338 = vmul.f32 %v2242, 0.2
    %v2339 = vmul.f32 %v2243, 0.2
    %v2340 = vmul.f32 %v2244, 0.2
    %v2341 = vmul.f32 %v2245, 0.2
    %v2342 = vmul.f32 %v2246, 0.2
    %v2343 = vmul.f32 %v2247, 0.2
    %v2344 = vmul.f32 %v2248, 0.2
    %v2345 = vmul.f32 %v2249, 0.2
    %v2346 = vmul.f32 %v2250, 0.2
    %v2347 = vmul.f32 %v2251, 0.2
    %v2348 = vmul.f32 %v2252, 0.2
    %v2349 = vmul.f32 %v2253, 0.2
    %v2350 = vmul.f32 %v2254, 0.2
    %v2351 = vmul.f32 %v2255, 0.2
    %v2352 = vmul.f32 %v2256, 0.2
    %v2353 = vmul.f32 %v2257, 0.2
    %v2354 = vmul.f32 %v2258, 0.2
    %v2355 = vmul.f32 %v2259, 0.2
    %v2356 = vsel %vm2260, %v2212, %v2308
    %v2357 = vsel %vm2261, %v2213, %v2309
    %v2358 = vsel %vm2262, %v2214, %v2310
    %v2359 = vsel %vm2263, %v2215, %v2311
    %v2360 = vsel %vm2264, %v2216, %v2312
    %v2361 = vsel %vm2265, %v2217, %v2313
    %v2362 = vsel %vm2266, %v2218, %v2314
    %v2363 = vsel %vm2267, %v2219, %v2315
    %v2364 = vsel %vm2268, %v2220, %v2316
    %v2365 = vsel %vm2269, %v2221, %v2317
    %v2366 = vsel %vm2270, %v2222, %v2318
    %v2367 = vsel %vm2271, %v2223, %v2319
    %v2368 = vsel %vm2272, %v2224, %v2320
    %v2369 = vsel %vm2273, %v2225, %v2321
    %v2370 = vsel %vm2274, %v2226, %v2322
    %v2371 = vsel %vm2275, %v2227, %v2323
    %v2372 = vsel %vm2276, %v2228, %v2324
    %v2373 = vsel %vm2277, %v2229, %v2325
    %v2374 = vsel %vm2278, %v2230, %v2326
    %v2375 = vsel %vm2279, %v2231, %v2327
    %v2376 = vsel %vm2280, %v2232, %v2328
    %v2377 = vsel %vm2281, %v2233, %v2329
    %v2378 = vsel %vm2282, %v2234, %v2330
    %v2379 = vsel %vm2283, %v2235, %v2331
    %v2380 = vsel %vm2284, %v2236, %v2332
    %v2381 = vsel %vm2285, %v2237, %v2333
    %v2382 = vsel %vm2286, %v2238, %v2334
    %v2383 = vsel %vm2287, %v2239, %v2335
    %v2384 = vsel %vm2288, %v2240, %v2336
    %v2385 = vsel %vm2289, %v2241, %v2337
    %v2386 = vsel %vm2290, %v2242, %v2338
    %v2387 = vsel %vm2291, %v2243, %v2339
    %v2388 = vsel %vm2292, %v2244, %v2340
    %v2389 = vsel %vm2293, %v2245, %v2341
    %v2390 = vsel %vm2294, %v2246, %v2342
    %v2391 = vsel %vm2295, %v2247, %v2343
    %v2392 = vsel %vm2296, %v2248, %v2344
    %v2393 = vsel %vm2297, %v2249, %v2345
    %v2394 = vsel %vm2298, %v2250, %v2346
    %v2395 = vsel %vm2299, %v2251, %v2347
    %v2396 = vsel %vm2300, %v2252, %v2348
    %v2397 = vsel %vm2301, %v2253, %v2349
    %v2398 = vsel %vm2302, %v2254, %v2350
    %v2399 = vsel %vm2303, %v2255, %v2351
    %v2400 = vsel %vm2304, %v2256, %v2352
    %v2401 = vsel %vm2305, %v2257, %v2353
    %v2402 = vsel %vm2306, %v2258, %v2354
    %v2403 = vsel %vm2307, %v2259, %v2355
    %v2404 = vld [vmem:[#allocation8] sm:$0xff]
    %v2405 = vld [vmem:[#allocation8 + $0x8] sm:$0xff]
    %v2406 = vld [vmem:[#allocation8 + $0x10] sm:$0xff]
    %v2407 = vld [vmem:[#allocation8 + $0x18] sm:$0xff]
    %v2408 = vld [vmem:[#allocation8 + $0x20] sm:$0xff]
    %v2409 = vld [vmem:[#allocation8 + $0x28] sm:$0xff]
    %v2410 = vld [vmem:[#allocation8 + $0x30] sm:$0xff]
    %v2411 = vld [vmem:[#allocation8 + $0x38] sm:$0xff]
    %v2412 = vld [vmem:[#allocation8 + $0x40] sm:$0xff]
    %v2413 = vld [vmem:[#allocation8 + $0x48] sm:$0xff]
    %v2414 = vld [vmem:[#allocation8 + $0x50] sm:$0xff]
    %v2415 = vld [vmem:[#allocation8 + $0x58] sm:$0xff]
    %v2416 = vld [vmem:[#allocation8 + $0x60] sm:$0xff]
    %v2417 = vld [vmem:[#allocation8 + $0x68] sm:$0xff]
    %v2418 = vld [vmem:[#allocation8 + $0x70] sm:$0xff]
    %v2419 = vld [vmem:[#allocation8 + $0x78] sm:$0xff]
    %v2420 = vld [vmem:[#allocation8 + $0x80] sm:$0xff]
    %v2421 = vld [vmem:[#allocation8 + $0x88] sm:$0xff]
    %v2422 = vld [vmem:[#allocation8 + $0x90] sm:$0xff]
    %v2423 = vld [vmem:[#allocation8 + $0x98] sm:$0xff]
    %v2424 = vld [vmem:[#allocation8 + $0xa0] sm:$0xff]
    %v2425 = vld [vmem:[#allocation8 + $0xa8] sm:$0xff]
    %v2426 = vld [vmem:[#allocation8 + $0xb0] sm:$0xff]
    %v2427 = vld [vmem:[#allocation8 + $0xb8] sm:$0xff]
    %v2428 = vld [vmem:[#allocation8 + $0xc0] sm:$0xff]
    %v2429 = vld [vmem:[#allocation8 + $0xc8] sm:$0xff]
    %v2430 = vld [vmem:[#allocation8 + $0xd0] sm:$0xff]
    %v2431 = vld [vmem:[#allocation8 + $0xd8] sm:$0xff]
    %v2432 = vld [vmem:[#allocation8 + $0xe0] sm:$0xff]
    %v2433 = vld [vmem:[#allocation8 + $0xe8] sm:$0xff]
    %v2434 = vld [vmem:[#allocation8 + $0xf0] sm:$0xff]
    %v2435 = vld [vmem:[#allocation8 + $0xf8] sm:$0xff]
    %v2436 = vld [vmem:[#allocation8 + $0x100] sm:$0xff]
    %v2437 = vld [vmem:[#allocation8 + $0x108] sm:$0xff]
    %v2438 = vld [vmem:[#allocation8 + $0x110] sm:$0xff]
    %v2439 = vld [vmem:[#allocation8 + $0x118] sm:$0xff]
    %v2440 = vld [vmem:[#allocation8 + $0x120] sm:$0xff]
    %v2441 = vld [vmem:[#allocation8 + $0x128] sm:$0xff]
    %v2442 = vld [vmem:[#allocation8 + $0x130] sm:$0xff]
    %v2443 = vld [vmem:[#allocation8 + $0x138] sm:$0xff]
    %v2444 = vld [vmem:[#allocation8 + $0x140] sm:$0xff]
    %v2445 = vld [vmem:[#allocation8 + $0x148] sm:$0xff]
    %v2446 = vld [vmem:[#allocation8 + $0x150] sm:$0xff]
    %v2447 = vld [vmem:[#allocation8 + $0x158] sm:$0xff]
    %v2448 = vld [vmem:[#allocation8 + $0x160] sm:$0xff]
    %v2449 = vld [vmem:[#allocation8 + $0x168] sm:$0xff]
    %v2450 = vld [vmem:[#allocation8 + $0x170] sm:$0xff]
    %v2451 = vld [vmem:[#allocation8 + $0x178] sm:$0xff]
    %v2452 = vld [vmem:[#allocation8 + $0x180] sm:$0xff]
    %v2453 = vld [vmem:[#allocation8 + $0x188] sm:$0xff]
    %v2454 = vld [vmem:[#allocation8 + $0x190] sm:$0xff]
    %v2455 = vld [vmem:[#allocation8 + $0x198] sm:$0xff]
    %v2456 = vld [vmem:[#allocation8 + $0x1a0] sm:$0xff]
    %v2457 = vld [vmem:[#allocation8 + $0x1a8] sm:$0xff]
    %v2458 = vld [vmem:[#allocation8 + $0x1b0] sm:$0xff]
    %v2459 = vld [vmem:[#allocation8 + $0x1b8] sm:$0xff]
    %v2460 = vld [vmem:[#allocation8 + $0x1c0] sm:$0xff]
    %v2461 = vld [vmem:[#allocation8 + $0x1c8] sm:$0xff]
    %v2462 = vld [vmem:[#allocation8 + $0x1d0] sm:$0xff]
    %v2463 = vld [vmem:[#allocation8 + $0x1d8] sm:$0xff]
    %v2464 = vld [vmem:[#allocation8 + $0x1e0] sm:$0xff]
    %v2465 = vld [vmem:[#allocation8 + $0x1e8] sm:$0xff]
    %v2466 = vld [vmem:[#allocation8 + $0x1f0] sm:$0xff]
    %v2467 = vld [vmem:[#allocation8 + $0x1f8] sm:$0xff]
    %v2468 = vld [vmem:[#allocation8 + $0x200] sm:$0xff]
    %v2469 = vld [vmem:[#allocation8 + $0x208] sm:$0xff]
    %v2470 = vld [vmem:[#allocation8 + $0x210] sm:$0xff]
    %v2471 = vld [vmem:[#allocation8 + $0x218] sm:$0xff]
    %v2472 = vld [vmem:[#allocation8 + $0x220] sm:$0xff]
    %v2473 = vld [vmem:[#allocation8 + $0x228] sm:$0xff]
    %v2474 = vld [vmem:[#allocation8 + $0x230] sm:$0xff]
    %v2475 = vld [vmem:[#allocation8 + $0x238] sm:$0xff]
    %v2476 = vld [vmem:[#allocation8 + $0x240] sm:$0xff]
    %v2477 = vld [vmem:[#allocation8 + $0x248] sm:$0xff]
    %v2478 = vld [vmem:[#allocation8 + $0x250] sm:$0xff]
    %v2479 = vld [vmem:[#allocation8 + $0x258] sm:$0xff]
    %v2480 = vld [vmem:[#allocation8 + $0x260] sm:$0xff]
    %v2481 = vld [vmem:[#allocation8 + $0x268] sm:$0xff]
    %v2482 = vld [vmem:[#allocation8 + $0x270] sm:$0xff]
    %v2483 = vld [vmem:[#allocation8 + $0x278] sm:$0xff]
    %v2484 = vld [vmem:[#allocation8 + $0x280] sm:$0xff]
    %v2485 = vld [vmem:[#allocation8 + $0x288] sm:$0xff]
    %v2486 = vld [vmem:[#allocation8 + $0x290] sm:$0xff]
    %v2487 = vld [vmem:[#allocation8 + $0x298] sm:$0xff]
    %v2488 = vld [vmem:[#allocation8 + $0x2a0] sm:$0xff]
    %v2489 = vld [vmem:[#allocation8 + $0x2a8] sm:$0xff]
    %v2490 = vld [vmem:[#allocation8 + $0x2b0] sm:$0xff]
    %v2491 = vld [vmem:[#allocation8 + $0x2b8] sm:$0xff]
    %v2492 = vld [vmem:[#allocation8 + $0x2c0] sm:$0xff]
    %v2493 = vld [vmem:[#allocation8 + $0x2c8] sm:$0xff]
    %v2494 = vld [vmem:[#allocation8 + $0x2d0] sm:$0xff]
    %v2495 = vld [vmem:[#allocation8 + $0x2d8] sm:$0xff]
    %v2496 = vld [vmem:[#allocation8 + $0x2e0] sm:$0xff]
    %v2497 = vld [vmem:[#allocation8 + $0x2e8] sm:$0xff]
    %v2498 = vld [vmem:[#allocation8 + $0x2f0] sm:$0xff]
    %v2499 = vld [vmem:[#allocation8 + $0x2f8] sm:$0xff]
    %v2500 = vld [vmem:[#allocation8 + $0x300] sm:$0xff]
    %v2501 = vld [vmem:[#allocation8 + $0x308] sm:$0xff]
    %v2502 = vld [vmem:[#allocation8 + $0x310] sm:$0xff]
    %v2503 = vld [vmem:[#allocation8 + $0x318] sm:$0xff]
    %v2504 = vld [vmem:[#allocation8 + $0x320] sm:$0xff]
    %v2505 = vld [vmem:[#allocation8 + $0x328] sm:$0xff]
    %v2506 = vld [vmem:[#allocation8 + $0x330] sm:$0xff]
    %v2507 = vld [vmem:[#allocation8 + $0x338] sm:$0xff]
    %v2508 = vld [vmem:[#allocation8 + $0x340] sm:$0xff]
    %v2509 = vld [vmem:[#allocation8 + $0x348] sm:$0xff]
    %v2510 = vld [vmem:[#allocation8 + $0x350] sm:$0xff]
    %v2511 = vld [vmem:[#allocation8 + $0x358] sm:$0xff]
    %v2512 = vld [vmem:[#allocation8 + $0x360] sm:$0xff]
    %v2513 = vld [vmem:[#allocation8 + $0x368] sm:$0xff]
    %v2514 = vld [vmem:[#allocation8 + $0x370] sm:$0xff]
    %v2515 = vld [vmem:[#allocation8 + $0x378] sm:$0xff]
    %v2516 = vld [vmem:[#allocation8 + $0x380] sm:$0xff]
    %v2517 = vld [vmem:[#allocation8 + $0x388] sm:$0xff]
    %v2518 = vld [vmem:[#allocation8 + $0x390] sm:$0xff]
    %v2519 = vld [vmem:[#allocation8 + $0x398] sm:$0xff]
    %v2520 = vld [vmem:[#allocation8 + $0x3a0] sm:$0xff]
    %v2521 = vld [vmem:[#allocation8 + $0x3a8] sm:$0xff]
    %v2522 = vld [vmem:[#allocation8 + $0x3b0] sm:$0xff]
    %v2523 = vld [vmem:[#allocation8 + $0x3b8] sm:$0xff]
    %v2524 = vld [vmem:[#allocation8 + $0x3c0] sm:$0xff]
    %v2525 = vld [vmem:[#allocation8 + $0x3c8] sm:$0xff]
    %v2526 = vld [vmem:[#allocation8 + $0x3d0] sm:$0xff]
    %v2527 = vld [vmem:[#allocation8 + $0x3d8] sm:$0xff]
    %v2528 = vld [vmem:[#allocation8 + $0x3e0] sm:$0xff]
    %v2529 = vld [vmem:[#allocation8 + $0x3e8] sm:$0xff]
    %v2530 = vld [vmem:[#allocation8 + $0x3f0] sm:$0xff]
    %v2531 = vld [vmem:[#allocation8 + $0x3f8] sm:$0xff]
    %v2532 = vld [vmem:[#allocation8 + $0x400] sm:$0xff]
    %v2533 = vld [vmem:[#allocation8 + $0x408] sm:$0xff]
    %v2534 = vld [vmem:[#allocation8 + $0x410] sm:$0xff]
    %v2535 = vld [vmem:[#allocation8 + $0x418] sm:$0xff]
    %v2536 = vld [vmem:[#allocation8 + $0x420] sm:$0xff]
    %v2537 = vld [vmem:[#allocation8 + $0x428] sm:$0xff]
    %v2538 = vld [vmem:[#allocation8 + $0x430] sm:$0xff]
    %v2539 = vld [vmem:[#allocation8 + $0x438] sm:$0xff]
    %v2540 = vld [vmem:[#allocation8 + $0x440] sm:$0xff]
    %v2541 = vld [vmem:[#allocation8 + $0x448] sm:$0xff]
    %v2542 = vld [vmem:[#allocation8 + $0x450] sm:$0xff]
    %v2543 = vld [vmem:[#allocation8 + $0x458] sm:$0xff]
    %v2544 = vld [vmem:[#allocation8 + $0x460] sm:$0xff]
    %v2545 = vld [vmem:[#allocation8 + $0x468] sm:$0xff]
    %v2546 = vld [vmem:[#allocation8 + $0x470] sm:$0xff]
    %v2547 = vld [vmem:[#allocation8 + $0x478] sm:$0xff]
    %v2548 = vlaneseq
    %v2549 = vshrl.u32 %v2548, 7
    %v2550 = vsub.s32 5, %v2549
    %v2551 = vrot.slane %v277, %v2550
    %v2552 = vlaneseq
    %v2553 = vshrl.u32 %v2552, 7
    %v2554 = vsub.s32 5, %v2553
    %v2555 = vrot.slane %v278, %v2554
    %v2556 = vlaneseq
    %v2557 = vshrl.u32 %v2556, 7
    %v2558 = vsub.s32 5, %v2557
    %v2559 = vrot.slane %v279, %v2558
    %2560 = vmatprep.subr.mxu0 %v2405
    %2561 = vmatpush1.msra.mxu0 %v2404
    %2562 = vmatprep.subr.mxu0 %v2408
    %2563 = vmatpush1.msra.mxu0 %v2407
    %2564 = vmatprep.subr.mxu0 %v2411
    %2565 = vmatpush1.msra.mxu0 %v2410
    %2566 = vmatprep.subr.mxu0 %v2414
    %2567 = vmatpush1.msra.mxu0 %v2413
    %2568 = vmatprep.subr.mxu0 %v2417
    %2569 = vmatpush1.msra.mxu0 %v2416
    %2570 = vmatprep.subr.mxu0 %v2420
    %2571 = vmatpush1.msra.mxu0 %v2419
    %2572 = vmatprep.subr.mxu0 %v2423
    %2573 = vmatpush1.msra.mxu0 %v2422
    %2574 = vmatprep.subr.mxu0 %v2426
    %2575 = vmatpush1.msra.mxu0 %v2425
    %2576 = vmatprep.subr.mxu0 %v2429
    %2577 = vmatpush1.msra.mxu0 %v2428
    %2578 = vmatprep.subr.mxu0 %v2432
    %2579 = vmatpush1.msra.mxu0 %v2431
    %2580 = vmatprep.subr.mxu0 %v2435
    %2581 = vmatpush1.msra.mxu0 %v2434
    %2582 = vmatprep.subr.mxu0 %v2438
    %2583 = vmatpush1.msra.mxu0 %v2437
    %2584 = vmatprep.subr.mxu0 %v2441
    %2585 = vmatpush1.msra.mxu0 %v2440
    %2586 = vmatprep.subr.mxu0 %v2444
    %2587 = vmatpush1.msra.mxu0 %v2443
    %2588 = vmatprep.subr.mxu0 %v2447
    %2589 = vmatpush1.msra.mxu0 %v2446
    %2590 = vmatprep.subr.mxu0 %v2450
    %2591 = vmatpush1.msra.mxu0 %v2449
    %2592 = vmatprep.subr.mxu0 %v2453
    %2593 = vmatpush1.msra.mxu0 %v2452
    %2594 = vmatprep.subr.mxu0 %v2456
    %2595 = vmatpush1.msra.mxu0 %v2455
    %2596 = vmatprep.subr.mxu0 %v2459
    %2597 = vmatpush1.msra.mxu0 %v2458
    %2598 = vmatprep.subr.mxu0 %v2462
    %2599 = vmatpush1.msra.mxu0 %v2461
    %2600 = vmatprep.subr.mxu0 %v2465
    %2601 = vmatpush1.msra.mxu0 %v2464
    %2602 = vmatprep.subr.mxu0 %v2468
    %2603 = vmatpush1.msra.mxu0 %v2467
    %2604 = vmatprep.subr.mxu0 %v2471
    %2605 = vmatpush1.msra.mxu0 %v2470
    %2606 = vmatprep.subr.mxu0 %v2474
    %2607 = vmatpush1.msra.mxu0 %v2473
    %2608 = vmatprep.subr.mxu0 %v2477
    %2609 = vmatpush1.msra.mxu0 %v2476
    %2610 = vmatprep.subr.mxu0 %v2480
    %2611 = vmatpush1.msra.mxu0 %v2479
    %2612 = vmatprep.subr.mxu0 %v2483
    %2613 = vmatpush1.msra.mxu0 %v2482
    %2614 = vmatprep.subr.mxu0 %v2486
    %2615 = vmatpush1.msra.mxu0 %v2485
    %2616 = vmatprep.subr.mxu0 %v2489
    %2617 = vmatpush1.msra.mxu0 %v2488
    %2618 = vmatprep.subr.mxu0 %v2492
    %2619 = vmatpush1.msra.mxu0 %v2491
    %2620 = vmatprep.subr.mxu0 %v2495
    %2621 = vmatpush1.msra.mxu0 %v2494
    %2622 = vmatprep.subr.mxu0 %v2498
    %2623 = vmatpush1.msra.mxu0 %v2497
    %2624 = vmatprep.mubr.f32.mxu0 %v2357
    %2625 = vmatmul.mubr.f32.gmra.mrb[0].mxu0 %v2356
    %v2626 = vpop.f32.mrb[0].mxu0
    %v2627 = vadd.f32 %v2551, %v2626
    %v2628 = vpop.f32.mrb[0].mxu0
    %v2629 = vadd.f32 %v2555, %v2628
    %2630 = vmatprep.mubr.f32.mxu0 %v2360
    %2631 = vmatmul.mubr.f32.gmra.mrb[0].mxu0 %v2359
    %v2632 = vpop.f32.mrb[0].mxu0
    %v2633 = vadd.f32 %v2551, %v2632
    %v2634 = vpop.f32.mrb[0].mxu0
    %v2635 = vadd.f32 %v2555, %v2634
    %2636 = vmatprep.mubr.f32.mxu0 %v2363
    %2637 = vmatmul.mubr.f32.gmra.mrb[0].mxu0 %v2362
    %v2638 = vpop.f32.mrb[0].mxu0
    %v2639 = vadd.f32 %v2551, %v2638
    %v2640 = vpop.f32.mrb[0].mxu0
    %v2641 = vadd.f32 %v2555, %v2640
    %2642 = vmatprep.mubr.f32.mxu0 %v2366
    %2643 = vmatmul.mubr.f32.gmra.mrb[0].mxu0 %v2365
    %v2644 = vpop.f32.mrb[0].mxu0
    %v2645 = vadd.f32 %v2551, %v2644
    %v2646 = vpop.f32.mrb[0].mxu0
    %v2647 = vadd.f32 %v2555, %v2646
    %2648 = vmatprep.mubr.f32.mxu0 %v2369
    %2649 = vmatmul.mubr.f32.gmra.mrb[0].mxu0 %v2368
    %v2650 = vpop.f32.mrb[0].mxu0
    %v2651 = vadd.f32 %v2551, %v2650
    %v2652 = vpop.f32.mrb[0].mxu0
    %v2653 = vadd.f32 %v2555, %v2652
    %2654 = vmatprep.mubr.f32.mxu0 %v2372
    %2655 = vmatmul.mubr.f32.gmra.mrb[0].mxu0 %v2371
    %v2656 = vpop.f32.mrb[0].mxu0
    %v2657 = vadd.f32 %v2551, %v2656
    %v2658 = vpop.f32.mrb[0].mxu0
    %v2659 = vadd.f32 %v2555, %v2658
    %2660 = vmatprep.mubr.f32.mxu0 %v2375
    %2661 = vmatmul.mubr.f32.gmra.mrb[0].mxu0 %v2374
    %v2662 = vpop.f32.mrb[0].mxu0
    %v2663 = vadd.f32 %v2551, %v2662
    %v2664 = vpop.f32.mrb[0].mxu0
    %v2665 = vadd.f32 %v2555, %v2664
    %2666 = vmatprep.mubr.f32.mxu0 %v2378
    %2667 = vmatmul.mubr.f32.gmra.mrb[0].mxu0 %v2377
    %v2668 = vpop.f32.mrb[0].mxu0
    %v2669 = vadd.f32 %v2551, %v2668
    %v2670 = vpop.f32.mrb[0].mxu0
    %v2671 = vadd.f32 %v2555, %v2670
    %2672 = vmatprep.mubr.f32.mxu0 %v2381
    %2673 = vmatmul.mubr.f32.gmra.mrb[0].mxu0 %v2380
    %v2674 = vpop.f32.mrb[0].mxu0
    %v2675 = vadd.f32 %v2551, %v2674
    %v2676 = vpop.f32.mrb[0].mxu0
    %v2677 = vadd.f32 %v2555, %v2676
    %2678 = vmatprep.mubr.f32.mxu0 %v2384
    %2679 = vmatmul.mubr.f32.gmra.mrb[0].mxu0 %v2383
    %v2680 = vpop.f32.mrb[0].mxu0
    %v2681 = vadd.f32 %v2551, %v2680
    %v2682 = vpop.f32.mrb[0].mxu0
    %v2683 = vadd.f32 %v2555, %v2682
    %2684 = vmatprep.mubr.f32.mxu0 %v2387
    %2685 = vmatmul.mubr.f32.gmra.mrb[0].mxu0 %v2386
    %v2686 = vpop.f32.mrb[0].mxu0
    %v2687 = vadd.f32 %v2551, %v2686
    %v2688 = vpop.f32.mrb[0].mxu0
    %v2689 = vadd.f32 %v2555, %v2688
    %2690 = vmatprep.mubr.f32.mxu0 %v2390
    %2691 = vmatmul.mubr.f32.gmra.mrb[0].mxu0 %v2389
    %v2692 = vpop.f32.mrb[0].mxu0
    %v2693 = vadd.f32 %v2551, %v2692
    %v2694 = vpop.f32.mrb[0].mxu0
    %v2695 = vadd.f32 %v2555, %v2694
    %2696 = vmatprep.mubr.f32.mxu0 %v2393
    %2697 = vmatmul.mubr.f32.gmra.mrb[0].mxu0 %v2392
    %v2698 = vpop.f32.mrb[0].mxu0
    %v2699 = vadd.f32 %v2551, %v2698
    %v2700 = vpop.f32.mrb[0].mxu0
    %v2701 = vadd.f32 %v2555, %v2700
    %2702 = vmatprep.mubr.f32.mxu0 %v2396
    %2703 = vmatmul.mubr.f32.gmra.mrb[0].mxu0 %v2395
    %v2704 = vpop.f32.mrb[0].mxu0
    %v2705 = vadd.f32 %v2551, %v2704
    %v2706 = vpop.f32.mrb[0].mxu0
    %v2707 = vadd.f32 %v2555, %v2706
    %2708 = vmatprep.mubr.f32.mxu0 %v2399
    %2709 = vmatmul.mubr.f32.gmra.mrb[0].mxu0 %v2398
    %v2710 = vpop.f32.mrb[0].mxu0
    %v2711 = vadd.f32 %v2551, %v2710
    %v2712 = vpop.f32.mrb[0].mxu0
    %v2713 = vadd.f32 %v2555, %v2712
    %2714 = vmatprep.mubr.f32.mxu0 %v2402
    %2715 = vmatmul.mubr.f32.gmra.mrb[0].mxu0 %v2401
    %v2716 = vpop.f32.mrb[0].mxu0
    %v2717 = vadd.f32 %v2551, %v2716
    %v2718 = vpop.f32.mrb[0].mxu0
    %v2719 = vadd.f32 %v2555, %v2718
    %2720 = vdwg.mxu0
    %2721 = vmatprep.subr.mxu0 %v2501
    %2722 = vmatpush1.msra.mxu0 %v2500
    %2723 = vmatprep.subr.mxu0 %v2504
    %2724 = vmatpush1.msra.mxu0 %v2503
    %2725 = vmatprep.subr.mxu0 %v2507
    %2726 = vmatpush1.msra.mxu0 %v2506
    %2727 = vmatprep.subr.mxu0 %v2510
    %2728 = vmatpush1.msra.mxu0 %v2509
    %2729 = vmatprep.subr.mxu0 %v2513
    %2730 = vmatpush1.msra.mxu0 %v2512
    %2731 = vmatprep.subr.mxu0 %v2516
    %2732 = vmatpush1.msra.mxu0 %v2515
    %2733 = vmatprep.subr.mxu0 %v2519
    %2734 = vmatpush1.msra.mxu0 %v2518
    %2735 = vmatprep.subr.mxu0 %v2522
    %2736 = vmatpush1.msra.mxu0 %v2521
    %2737 = vmatprep.subr.mxu0 %v2525
    %2738 = vmatpush1.msra.mxu0 %v2524
    %2739 = vmatprep.subr.mxu0 %v2528
    %2740 = vmatpush1.msra.mxu0 %v2527
    %2741 = vmatprep.subr.mxu0 %v2531
    %2742 = vmatpush1.msra.mxu0 %v2530
    %2743 = vmatprep.subr.mxu0 %v2534
    %2744 = vmatpush1.msra.mxu0 %v2533
    %2745 = vmatprep.subr.mxu0 %v2537
    %2746 = vmatpush1.msra.mxu0 %v2536
    %2747 = vmatprep.subr.mxu0 %v2540
    %2748 = vmatpush1.msra.mxu0 %v2539
    %2749 = vmatprep.subr.mxu0 %v2543
    %2750 = vmatpush1.msra.mxu0 %v2542
    %2751 = vmatprep.subr.mxu0 %v2546
    %2752 = vmatpush1.msra.mxu0 %v2545
    %2753 = vmatprep.subr.mxu0 0.0
    %2754 = vmatpush1.msra.mxu0 0.0
    %2755 = vmatprep.subr.mxu0 0.0
    %2756 = vmatpush1.msra.mxu0 0.0
    %2757 = vmatprep.subr.mxu0 0.0
    %2758 = vmatpush1.msra.mxu0 0.0
    %2759 = vmatprep.subr.mxu0 0.0
    %2760 = vmatpush1.msra.mxu0 0.0
    %2761 = vmatprep.subr.mxu0 0.0
    %2762 = vmatpush1.msra.mxu0 0.0
    %2763 = vmatprep.subr.mxu0 0.0
    %2764 = vmatpush1.msra.mxu0 0.0
    %2765 = vmatprep.subr.mxu0 0.0
    %2766 = vmatpush1.msra.mxu0 0.0
    %2767 = vmatprep.subr.mxu0 0.0
    %2768 = vmatpush1.msra.mxu0 0.0
    %2769 = vmatprep.subr.mxu0 0.0
    %2770 = vmatpush1.msra.mxu0 0.0
    %2771 = vmatprep.subr.mxu0 0.0
    %2772 = vmatpush1.msra.mxu0 0.0
    %2773 = vmatprep.subr.mxu0 0.0
    %2774 = vmatpush1.msra.mxu0 0.0
    %2775 = vmatprep.subr.mxu0 0.0
    %2776 = vmatpush1.msra.mxu0 0.0
    %2777 = vmatprep.subr.mxu0 0.0
    %2778 = vmatpush1.msra.mxu0 0.0
    %2779 = vmatprep.subr.mxu0 0.0
    %2780 = vmatpush1.msra.mxu0 0.0
    %2781 = vmatprep.subr.mxu0 0.0
    %2782 = vmatpush1.msra.mxu0 0.0
    %2783 = vmatprep.subr.mxu0 0.0
    %2784 = vmatpush1.msra.mxu0 0.0
    %2785 = vmatprep.mubr.f32.mxu0 0.0
    %2786 = vmatmul.mubr.f32.gmra.mrb[0].mxu0 %v2358
    %v2787 = vpop.f32.mrb[0].mxu0
    %v2788 = vadd.f32 %v2627, %v2787
    %v2789 = vpop.f32.mrb[0].mxu0
    %v2790 = vadd.f32 %v2629, %v2789
    %2791 = vmatprep.mubr.f32.mxu0 0.0
    %2792 = vmatmul.mubr.f32.gmra.mrb[0].mxu0 %v2361
    %v2793 = vpop.f32.mrb[0].mxu0
    %v2794 = vadd.f32 %v2633, %v2793
    %v2795 = vpop.f32.mrb[0].mxu0
    %v2796 = vadd.f32 %v2635, %v2795
    %2797 = vmatprep.mubr.f32.mxu0 0.0
    %2798 = vmatmul.mubr.f32.gmra.mrb[0].mxu0 %v2364
    %v2799 = vpop.f32.mrb[0].mxu0
    %v2800 = vadd.f32 %v2639, %v2799
    %v2801 = vpop.f32.mrb[0].mxu0
    %v2802 = vadd.f32 %v2641, %v2801
    %2803 = vmatprep.mubr.f32.mxu0 0.0
    %2804 = vmatmul.mubr.f32.gmra.mrb[0].mxu0 %v2367
    %v2805 = vpop.f32.mrb[0].mxu0
    %v2806 = vadd.f32 %v2645, %v2805
    %v2807 = vpop.f32.mrb[0].mxu0
    %v2808 = vadd.f32 %v2647, %v2807
    %2809 = vmatprep.mubr.f32.mxu0 0.0
    %2810 = vmatmul.mubr.f32.gmra.mrb[0].mxu0 %v2370
    %v2811 = vpop.f32.mrb[0].mxu0
    %v2812 = vadd.f32 %v2651, %v2811
    %v2813 = vpop.f32.mrb[0].mxu0
    %v2814 = vadd.f32 %v2653, %v2813
    %2815 = vmatprep.mubr.f32.mxu0 0.0
    %2816 = vmatmul.mubr.f32.gmra.mrb[0].mxu0 %v2373
    %v2817 = vpop.f32.mrb[0].mxu0
    %v2818 = vadd.f32 %v2657, %v2817
    %v2819 = vpop.f32.mrb[0].mxu0
    %v2820 = vadd.f32 %v2659, %v2819
    %2821 = vmatprep.mubr.f32.mxu0 0.0
    %2822 = vmatmul.mubr.f32.gmra.mrb[0].mxu0 %v2376
    %v2823 = vpop.f32.mrb[0].mxu0
    %v2824 = vadd.f32 %v2663, %v2823
    %v2825 = vpop.f32.mrb[0].mxu0
    %v2826 = vadd.f32 %v2665, %v2825
    %2827 = vmatprep.mubr.f32.mxu0 0.0
    %2828 = vmatmul.mubr.f32.gmra.mrb[0].mxu0 %v2379
    %v2829 = vpop.f32.mrb[0].mxu0
    %v2830 = vadd.f32 %v2669, %v2829
    %v2831 = vpop.f32.mrb[0].mxu0
    %v2832 = vadd.f32 %v2671, %v2831
    %2833 = vmatprep.mubr.f32.mxu0 0.0
    %2834 = vmatmul.mubr.f32.gmra.mrb[0].mxu0 %v2382
    %v2835 = vpop.f32.mrb[0].mxu0
    %v2836 = vadd.f32 %v2675, %v2835
    %v2837 = vpop.f32.mrb[0].mxu0
    %v2838 = vadd.f32 %v2677, %v2837
    %2839 = vmatprep.mubr.f32.mxu0 0.0
    %2840 = vmatmul.mubr.f32.gmra.mrb[0].mxu0 %v2385
    %v2841 = vpop.f32.mrb[0].mxu0
    %v2842 = vadd.f32 %v2681, %v2841
    %v2843 = vpop.f32.mrb[0].mxu0
    %v2844 = vadd.f32 %v2683, %v2843
    %2845 = vmatprep.mubr.f32.mxu0 0.0
    %2846 = vmatmul.mubr.f32.gmra.mrb[0].mxu0 %v2388
    %v2847 = vpop.f32.mrb[0].mxu0
    %v2848 = vadd.f32 %v2687, %v2847
    %v2849 = vpop.f32.mrb[0].mxu0
    %v2850 = vadd.f32 %v2689, %v2849
    %2851 = vmatprep.mubr.f32.mxu0 0.0
    %2852 = vmatmul.mubr.f32.gmra.mrb[0].mxu0 %v2391
    %v2853 = vpop.f32.mrb[0].mxu0
    %v2854 = vadd.f32 %v2693, %v2853
    %v2855 = vpop.f32.mrb[0].mxu0
    %v2856 = vadd.f32 %v2695, %v2855
    %2857 = vmatprep.mubr.f32.mxu0 0.0
    %2858 = vmatmul.mubr.f32.gmra.mrb[0].mxu0 %v2394
    %v2859 = vpop.f32.mrb[0].mxu0
    %v2860 = vadd.f32 %v2699, %v2859
    %v2861 = vpop.f32.mrb[0].mxu0
    %v2862 = vadd.f32 %v2701, %v2861
    %2863 = vmatprep.mubr.f32.mxu0 0.0
    %2864 = vmatmul.mubr.f32.gmra.mrb[0].mxu0 %v2397
    %v2865 = vpop.f32.mrb[0].mxu0
    %v2866 = vadd.f32 %v2705, %v2865
    %v2867 = vpop.f32.mrb[0].mxu0
    %v2868 = vadd.f32 %v2707, %v2867
    %2869 = vmatprep.mubr.f32.mxu0 0.0
    %2870 = vmatmul.mubr.f32.gmra.mrb[0].mxu0 %v2400
    %v2871 = vpop.f32.mrb[0].mxu0
    %v2872 = vadd.f32 %v2711, %v2871
    %v2873 = vpop.f32.mrb[0].mxu0
    %v2874 = vadd.f32 %v2713, %v2873
    %2875 = vmatprep.mubr.f32.mxu0 0.0
    %2876 = vmatmul.mubr.f32.gmra.mrb[0].mxu0 %v2403
    %v2877 = vpop.f32.mrb[0].mxu0
    %v2878 = vadd.f32 %v2717, %v2877
    %v2879 = vpop.f32.mrb[0].mxu0
    %v2880 = vadd.f32 %v2719, %v2879
    %2881 = vdwg.mxu0
    %2882 = vmatprep.subr.mxu0 0.0
    %2883 = vmatpush1.msra.mxu0 %v2406
    %2884 = vmatprep.subr.mxu0 0.0
    %2885 = vmatpush1.msra.mxu0 %v2409
    %2886 = vmatprep.subr.mxu0 0.0
    %2887 = vmatpush1.msra.mxu0 %v2412
    %2888 = vmatprep.subr.mxu0 0.0
    %2889 = vmatpush1.msra.mxu0 %v2415
    %2890 = vmatprep.subr.mxu0 0.0
    %2891 = vmatpush1.msra.mxu0 %v2418
    %2892 = vmatprep.subr.mxu0 0.0
    %2893 = vmatpush1.msra.mxu0 %v2421
    %2894 = vmatprep.subr.mxu0 0.0
    %2895 = vmatpush1.msra.mxu0 %v2424
    %2896 = vmatprep.subr.mxu0 0.0
    %2897 = vmatpush1.msra.mxu0 %v2427
    %2898 = vmatprep.subr.mxu0 0.0
    %2899 = vmatpush1.msra.mxu0 %v2430
    %2900 = vmatprep.subr.mxu0 0.0
    %2901 = vmatpush1.msra.mxu0 %v2433
    %2902 = vmatprep.subr.mxu0 0.0
    %2903 = vmatpush1.msra.mxu0 %v2436
    %2904 = vmatprep.subr.mxu0 0.0
    %2905 = vmatpush1.msra.mxu0 %v2439
    %2906 = vmatprep.subr.mxu0 0.0
    %2907 = vmatpush1.msra.mxu0 %v2442
    %2908 = vmatprep.subr.mxu0 0.0
    %2909 = vmatpush1.msra.mxu0 %v2445
    %2910 = vmatprep.subr.mxu0 0.0
    %2911 = vmatpush1.msra.mxu0 %v2448
    %2912 = vmatprep.subr.mxu0 0.0
    %2913 = vmatpush1.msra.mxu0 %v2451
    %2914 = vmatprep.subr.mxu0 0.0
    %2915 = vmatpush1.msra.mxu0 %v2454
    %2916 = vmatprep.subr.mxu0 0.0
    %2917 = vmatpush1.msra.mxu0 %v2457
    %2918 = vmatprep.subr.mxu0 0.0
    %2919 = vmatpush1.msra.mxu0 %v2460
    %2920 = vmatprep.subr.mxu0 0.0
    %2921 = vmatpush1.msra.mxu0 %v2463
    %2922 = vmatprep.subr.mxu0 0.0
    %2923 = vmatpush1.msra.mxu0 %v2466
    %2924 = vmatprep.subr.mxu0 0.0
    %2925 = vmatpush1.msra.mxu0 %v2469
    %2926 = vmatprep.subr.mxu0 0.0
    %2927 = vmatpush1.msra.mxu0 %v2472
    %2928 = vmatprep.subr.mxu0 0.0
    %2929 = vmatpush1.msra.mxu0 %v2475
    %2930 = vmatprep.subr.mxu0 0.0
    %2931 = vmatpush1.msra.mxu0 %v2478
    %2932 = vmatprep.subr.mxu0 0.0
    %2933 = vmatpush1.msra.mxu0 %v2481
    %2934 = vmatprep.subr.mxu0 0.0
    %2935 = vmatpush1.msra.mxu0 %v2484
    %2936 = vmatprep.subr.mxu0 0.0
    %2937 = vmatpush1.msra.mxu0 %v2487
    %2938 = vmatprep.subr.mxu0 0.0
    %2939 = vmatpush1.msra.mxu0 %v2490
    %2940 = vmatprep.subr.mxu0 0.0
    %2941 = vmatpush1.msra.mxu0 %v2493
    %2942 = vmatprep.subr.mxu0 0.0
    %2943 = vmatpush1.msra.mxu0 %v2496
    %2944 = vmatprep.subr.mxu0 0.0
    %2945 = vmatpush1.msra.mxu0 %v2499
    %2946 = vmatprep.mubr.f32.mxu0 %v2357
    %2947 = vmatmul.mubr.f32.gmra.mrb[0].mxu0 %v2356
    %v2948 = vpop.f32.mrb[0].mxu0
    %v2949 = vadd.f32 %v2559, %v2948
    %v2950 = vpop.f32.mrb[0].mxu0
    %2951 = vmatprep.mubr.f32.mxu0 %v2360
    %2952 = vmatmul.mubr.f32.gmra.mrb[0].mxu0 %v2359
    %v2953 = vpop.f32.mrb[0].mxu0
    %v2954 = vadd.f32 %v2559, %v2953
    %v2955 = vpop.f32.mrb[0].mxu0
    %2956 = vmatprep.mubr.f32.mxu0 %v2363
    %2957 = vmatmul.mubr.f32.gmra.mrb[0].mxu0 %v2362
    %v2958 = vpop.f32.mrb[0].mxu0
    %v2959 = vadd.f32 %v2559, %v2958
    %v2960 = vpop.f32.mrb[0].mxu0
    %2961 = vmatprep.mubr.f32.mxu0 %v2366
    %2962 = vmatmul.mubr.f32.gmra.mrb[0].mxu0 %v2365
    %v2963 = vpop.f32.mrb[0].mxu0
    %v2964 = vadd.f32 %v2559, %v2963
    %v2965 = vpop.f32.mrb[0].mxu0
    %2966 = vmatprep.mubr.f32.mxu0 %v2369
    %2967 = vmatmul.mubr.f32.gmra.mrb[0].mxu0 %v2368
    %v2968 = vpop.f32.mrb[0].mxu0
    %v2969 = vadd.f32 %v2559, %v2968
    %v2970 = vpop.f32.mrb[0].mxu0
    %2971 = vmatprep.mubr.f32.mxu0 %v2372
    %2972 = vmatmul.mubr.f32.gmra.mrb[0].mxu0 %v2371
    %v2973 = vpop.f32.mrb[0].mxu0
    %v2974 = vadd.f32 %v2559, %v2973
    %v2975 = vpop.f32.mrb[0].mxu0
    %2976 = vmatprep.mubr.f32.mxu0 %v2375
    %2977 = vmatmul.mubr.f32.gmra.mrb[0].mxu0 %v2374
    %v2978 = vpop.f32.mrb[0].mxu0
    %v2979 = vadd.f32 %v2559, %v2978
    %v2980 = vpop.f32.mrb[0].mxu0
    %2981 = vmatprep.mubr.f32.mxu0 %v2378
    %2982 = vmatmul.mubr.f32.gmra.mrb[0].mxu0 %v2377
    %v2983 = vpop.f32.mrb[0].mxu0
    %v2984 = vadd.f32 %v2559, %v2983
    %v2985 = vpop.f32.mrb[0].mxu0
    %2986 = vmatprep.mubr.f32.mxu0 %v2381
    %2987 = vmatmul.mubr.f32.gmra.mrb[0].mxu0 %v2380
    %v2988 = vpop.f32.mrb[0].mxu0
    %v2989 = vadd.f32 %v2559, %v2988
    %v2990 = vpop.f32.mrb[0].mxu0
    %2991 = vmatprep.mubr.f32.mxu0 %v2384
    %2992 = vmatmul.mubr.f32.gmra.mrb[0].mxu0 %v2383
    %v2993 = vpop.f32.mrb[0].mxu0
    %v2994 = vadd.f32 %v2559, %v2993
    %v2995 = vpop.f32.mrb[0].mxu0
    %2996 = vmatprep.mubr.f32.mxu0 %v2387
    %2997 = vmatmul.mubr.f32.gmra.mrb[0].mxu0 %v2386
    %v2998 = vpop.f32.mrb[0].mxu0
    %v2999 = vadd.f32 %v2559, %v2998
    %v3000 = vpop.f32.mrb[0].mxu0
    %3001 = vmatprep.mubr.f32.mxu0 %v2390
    %3002 = vmatmul.mubr.f32.gmra.mrb[0].mxu0 %v2389
    %v3003 = vpop.f32.mrb[0].mxu0
    %v3004 = vadd.f32 %v2559, %v3003
    %v3005 = vpop.f32.mrb[0].mxu0
    %3006 = vmatprep.mubr.f32.mxu0 %v2393
    %3007 = vmatmul.mubr.f32.gmra.mrb[0].mxu0 %v2392
    %v3008 = vpop.f32.mrb[0].mxu0
    %v3009 = vadd.f32 %v2559, %v3008
    %v3010 = vpop.f32.mrb[0].mxu0
    %3011 = vmatprep.mubr.f32.mxu0 %v2396
    %3012 = vmatmul.mubr.f32.gmra.mrb[0].mxu0 %v2395
    %v3013 = vpop.f32.mrb[0].mxu0
    %v3014 = vadd.f32 %v2559, %v3013
    %v3015 = vpop.f32.mrb[0].mxu0
    %3016 = vmatprep.mubr.f32.mxu0 %v2399
    %3017 = vmatmul.mubr.f32.gmra.mrb[0].mxu0 %v2398
    %v3018 = vpop.f32.mrb[0].mxu0
    %v3019 = vadd.f32 %v2559, %v3018
    %v3020 = vpop.f32.mrb[0].mxu0
    %3021 = vmatprep.mubr.f32.mxu0 %v2402
    %3022 = vmatmul.mubr.f32.gmra.mrb[0].mxu0 %v2401
    %v3023 = vpop.f32.mrb[0].mxu0
    %v3024 = vadd.f32 %v2559, %v3023
    %v3025 = vpop.f32.mrb[0].mxu0
    %3026 = vdwg.mxu0
    %3027 = vmatprep.subr.mxu0 0.0
    %3028 = vmatpush1.msra.mxu0 %v2502
    %3029 = vmatprep.subr.mxu0 0.0
    %3030 = vmatpush1.msra.mxu0 %v2505
    %3031 = vmatprep.subr.mxu0 0.0
    %3032 = vmatpush1.msra.mxu0 %v2508
    %3033 = vmatprep.subr.mxu0 0.0
    %3034 = vmatpush1.msra.mxu0 %v2511
    %3035 = vmatprep.subr.mxu0 0.0
    %3036 = vmatpush1.msra.mxu0 %v2514
    %3037 = vmatprep.subr.mxu0 0.0
    %3038 = vmatpush1.msra.mxu0 %v2517
    %3039 = vmatprep.subr.mxu0 0.0
    %3040 = vmatpush1.msra.mxu0 %v2520
    %3041 = vmatprep.subr.mxu0 0.0
    %3042 = vmatpush1.msra.mxu0 %v2523
    %3043 = vmatprep.subr.mxu0 0.0
    %3044 = vmatpush1.msra.mxu0 %v2526
    %3045 = vmatprep.subr.mxu0 0.0
    %3046 = vmatpush1.msra.mxu0 %v2529
    %3047 = vmatprep.subr.mxu0 0.0
    %3048 = vmatpush1.msra.mxu0 %v2532
    %3049 = vmatprep.subr.mxu0 0.0
    %3050 = vmatpush1.msra.mxu0 %v2535
    %3051 = vmatprep.subr.mxu0 0.0
    %3052 = vmatpush1.msra.mxu0 %v2538
    %3053 = vmatprep.subr.mxu0 0.0
    %3054 = vmatpush1.msra.mxu0 %v2541
    %3055 = vmatprep.subr.mxu0 0.0
    %3056 = vmatpush1.msra.mxu0 %v2544
    %3057 = vmatprep.subr.mxu0 0.0
    %3058 = vmatpush1.msra.mxu0 %v2547
    %3059 = vmatprep.subr.mxu0 0.0
    %3060 = vmatpush1.msra.mxu0 0.0
    %3061 = vmatprep.subr.mxu0 0.0
    %3062 = vmatpush1.msra.mxu0 0.0
    %3063 = vmatprep.subr.mxu0 0.0
    %3064 = vmatpush1.msra.mxu0 0.0
    %3065 = vmatprep.subr.mxu0 0.0
    %3066 = vmatpush1.msra.mxu0 0.0
    %3067 = vmatprep.subr.mxu0 0.0
    %3068 = vmatpush1.msra.mxu0 0.0
    %3069 = vmatprep.subr.mxu0 0.0
    %3070 = vmatpush1.msra.mxu0 0.0
    %3071 = vmatprep.subr.mxu0 0.0
    %3072 = vmatpush1.msra.mxu0 0.0
    %3073 = vmatprep.subr.mxu0 0.0
    %3074 = vmatpush1.msra.mxu0 0.0
    %3075 = vmatprep.subr.mxu0 0.0
    %3076 = vmatpush1.msra.mxu0 0.0
    %3077 = vmatprep.subr.mxu0 0.0
    %3078 = vmatpush1.msra.mxu0 0.0
    %3079 = vmatprep.subr.mxu0 0.0
    %3080 = vmatpush1.msra.mxu0 0.0
    %3081 = vmatprep.subr.mxu0 0.0
    %3082 = vmatpush1.msra.mxu0 0.0
    %3083 = vmatprep.subr.mxu0 0.0
    %3084 = vmatpush1.msra.mxu0 0.0
    %3085 = vmatprep.subr.mxu0 0.0
    %3086 = vmatpush1.msra.mxu0 0.0
    %3087 = vmatprep.subr.mxu0 0.0
    %3088 = vmatpush1.msra.mxu0 0.0
    %3089 = vmatprep.subr.mxu0 0.0
    %3090 = vmatpush1.msra.mxu0 0.0
    %3091 = vmatprep.mubr.f32.mxu0 0.0
    %3092 = vmatmul.mubr.f32.gmra.mrb[0].mxu0 %v2358
    %v3093 = vpop.f32.mrb[0].mxu0
    %v3094 = vadd.f32 %v2949, %v3093
    %v3095 = vpop.f32.mrb[0].mxu0
    %3096 = vmatprep.mubr.f32.mxu0 0.0
    %3097 = vmatmul.mubr.f32.gmra.mrb[0].mxu0 %v2361
    %v3098 = vpop.f32.mrb[0].mxu0
    %v3099 = vadd.f32 %v2954, %v3098
    %v3100 = vpop.f32.mrb[0].mxu0
    %3101 = vmatprep.mubr.f32.mxu0 0.0
    %3102 = vmatmul.mubr.f32.gmra.mrb[0].mxu0 %v2364
    %v3103 = vpop.f32.mrb[0].mxu0
    %v3104 = vadd.f32 %v2959, %v3103
    %v3105 = vpop.f32.mrb[0].mxu0
    %3106 = vmatprep.mubr.f32.mxu0 0.0
    %3107 = vmatmul.mubr.f32.gmra.mrb[0].mxu0 %v2367
    %v3108 = vpop.f32.mrb[0].mxu0
    %v3109 = vadd.f32 %v2964, %v3108
    %v3110 = vpop.f32.mrb[0].mxu0
    %3111 = vmatprep.mubr.f32.mxu0 0.0
    %3112 = vmatmul.mubr.f32.gmra.mrb[0].mxu0 %v2370
    %v3113 = vpop.f32.mrb[0].mxu0
    %v3114 = vadd.f32 %v2969, %v3113
    %v3115 = vpop.f32.mrb[0].mxu0
    %3116 = vmatprep.mubr.f32.mxu0 0.0
    %3117 = vmatmul.mubr.f32.gmra.mrb[0].mxu0 %v2373
    %v3118 = vpop.f32.mrb[0].mxu0
    %v3119 = vadd.f32 %v2974, %v3118
    %v3120 = vpop.f32.mrb[0].mxu0
    %3121 = vmatprep.mubr.f32.mxu0 0.0
    %3122 = vmatmul.mubr.f32.gmra.mrb[0].mxu0 %v2376
    %v3123 = vpop.f32.mrb[0].mxu0
    %v3124 = vadd.f32 %v2979, %v3123
    %v3125 = vpop.f32.mrb[0].mxu0
    %3126 = vmatprep.mubr.f32.mxu0 0.0
    %3127 = vmatmul.mubr.f32.gmra.mrb[0].mxu0 %v2379
    %v3128 = vpop.f32.mrb[0].mxu0
    %v3129 = vadd.f32 %v2984, %v3128
    %v3130 = vpop.f32.mrb[0].mxu0
    %3131 = vmatprep.mubr.f32.mxu0 0.0
    %3132 = vmatmul.mubr.f32.gmra.mrb[0].mxu0 %v2382
    %v3133 = vpop.f32.mrb[0].mxu0
    %v3134 = vadd.f32 %v2989, %v3133
    %v3135 = vpop.f32.mrb[0].mxu0
    %3136 = vmatprep.mubr.f32.mxu0 0.0
    %3137 = vmatmul.mubr.f32.gmra.mrb[0].mxu0 %v2385
    %v3138 = vpop.f32.mrb[0].mxu0
    %v3139 = vadd.f32 %v2994, %v3138
    %v3140 = vpop.f32.mrb[0].mxu0
    %3141 = vmatprep.mubr.f32.mxu0 0.0
    %3142 = vmatmul.mubr.f32.gmra.mrb[0].mxu0 %v2388
    %v3143 = vpop.f32.mrb[0].mxu0
    %v3144 = vadd.f32 %v2999, %v3143
    %v3145 = vpop.f32.mrb[0].mxu0
    %3146 = vmatprep.mubr.f32.mxu0 0.0
    %3147 = vmatmul.mubr.f32.gmra.mrb[0].mxu0 %v2391
    %v3148 = vpop.f32.mrb[0].mxu0
    %v3149 = vadd.f32 %v3004, %v3148
    %v3150 = vpop.f32.mrb[0].mxu0
    %3151 = vmatprep.mubr.f32.mxu0 0.0
    %3152 = vmatmul.mubr.f32.gmra.mrb[0].mxu0 %v2394
    %v3153 = vpop.f32.mrb[0].mxu0
    %v3154 = vadd.f32 %v3009, %v3153
    %v3155 = vpop.f32.mrb[0].mxu0
    %3156 = vmatprep.mubr.f32.mxu0 0.0
    %3157 = vmatmul.mubr.f32.gmra.mrb[0].mxu0 %v2397
    %v3158 = vpop.f32.mrb[0].mxu0
    %v3159 = vadd.f32 %v3014, %v3158
    %v3160 = vpop.f32.mrb[0].mxu0
    %3161 = vmatprep.mubr.f32.mxu0 0.0
    %3162 = vmatmul.mubr.f32.gmra.mrb[0].mxu0 %v2400
    %v3163 = vpop.f32.mrb[0].mxu0
    %v3164 = vadd.f32 %v3019, %v3163
    %v3165 = vpop.f32.mrb[0].mxu0
    %3166 = vmatprep.mubr.f32.mxu0 0.0
    %3167 = vmatmul.mubr.f32.gmra.mrb[0].mxu0 %v2403
    %v3168 = vpop.f32.mrb[0].mxu0
    %v3169 = vadd.f32 %v3024, %v3168
    %v3170 = vpop.f32.mrb[0].mxu0
    %3171 = vdwg.mxu0
    %v3172 = vadd.f32 %v2788, %v2794
    %v3173 = vadd.f32 %v3172, %v2800
    %v3174 = vadd.f32 %v3173, %v2806
    %v3175 = vadd.f32 %v3174, %v2812
    %v3176 = vadd.f32 %v3175, %v2818
    %v3177 = vadd.f32 %v3176, %v2824
    %v3178 = vadd.f32 %v3177, %v2830
    %v3179 = vadd.f32 %v3178, %v2836
    %v3180 = vadd.f32 %v3179, %v2842
    %v3181 = vadd.f32 %v3180, %v2848
    %v3182 = vadd.f32 %v3181, %v2854
    %v3183 = vadd.f32 %v3182, %v2860
    %v3184 = vadd.f32 %v3183, %v2866
    %v3185 = vadd.f32 %v3184, %v2872
    %v3186 = vadd.f32 %v3185, %v2878
    %v3187 = vrot.slane %v3186, 4
    %v3188 = vadd.f32 %v3186, %v3187
    %v3189 = vrot.slane %v3188, 2
    %v3190 = vadd.f32 %v3188, %v3189
    %v3191 = vrot.slane %v3190, 1
    %v3192 = vadd.f32 %v3190, %v3191
    %v3193 = vadd.f32 %v2790, %v2796
    %v3194 = vadd.f32 %v3193, %v2802
    %v3195 = vadd.f32 %v3194, %v2808
    %v3196 = vadd.f32 %v3195, %v2814
    %v3197 = vadd.f32 %v3196, %v2820
    %v3198 = vadd.f32 %v3197, %v2826
    %v3199 = vadd.f32 %v3198, %v2832
    %v3200 = vadd.f32 %v3199, %v2838
    %v3201 = vadd.f32 %v3200, %v2844
    %v3202 = vadd.f32 %v3201, %v2850
    %v3203 = vadd.f32 %v3202, %v2856
    %v3204 = vadd.f32 %v3203, %v2862
    %v3205 = vadd.f32 %v3204, %v2868
    %v3206 = vadd.f32 %v3205, %v2874
    %v3207 = vadd.f32 %v3206, %v2880
    %v3208 = vrot.slane %v3207, 4
    %v3209 = vadd.f32 %v3207, %v3208
    %v3210 = vrot.slane %v3209, 2
    %v3211 = vadd.f32 %v3209, %v3210
    %v3212 = vrot.slane %v3211, 1
    %v3213 = vadd.f32 %v3211, %v3212
    %v3214 = vadd.f32 %v3094, %v3099
    %v3215 = vadd.f32 %v3214, %v3104
    %v3216 = vadd.f32 %v3215, %v3109
    %v3217 = vadd.f32 %v3216, %v3114
    %v3218 = vadd.f32 %v3217, %v3119
    %v3219 = vadd.f32 %v3218, %v3124
    %v3220 = vadd.f32 %v3219, %v3129
    %v3221 = vadd.f32 %v3220, %v3134
    %v3222 = vadd.f32 %v3221, %v3139
    %v3223 = vadd.f32 %v3222, %v3144
    %v3224 = vadd.f32 %v3223, %v3149
    %v3225 = vadd.f32 %v3224, %v3154
    %v3226 = vadd.f32 %v3225, %v3159
    %v3227 = vadd.f32 %v3226, %v3164
    %v3228 = vadd.f32 %v3227, %v3169
    %v3229 = vrot.slane %v3228, 4
    %v3230 = vadd.f32 %v3228, %v3229
    %v3231 = vrot.slane %v3230, 2
    %v3232 = vadd.f32 %v3230, %v3231
    %v3233 = vrot.slane %v3232, 1
    %v3234 = vadd.f32 %v3232, %v3233
    %v3235 = vmul.f32 %v3192, 0.0078125
    %v3236 = vmul.f32 %v3213, 0.0078125
    %v3237 = vmul.f32 %v3234, 0.0078125
    %v3238 = vsub.f32 %v2788, %v3235
    %v3239 = vsub.f32 %v2790, %v3236
    %v3240 = vsub.f32 %v3094, %v3237
    %v3241 = vsub.f32 %v2794, %v3235
    %v3242 = vsub.f32 %v2796, %v3236
    %v3243 = vsub.f32 %v3099, %v3237
    %v3244 = vsub.f32 %v2800, %v3235
    %v3245 = vsub.f32 %v2802, %v3236
    %v3246 = vsub.f32 %v3104, %v3237
    %v3247 = vsub.f32 %v2806, %v3235
    %v3248 = vsub.f32 %v2808, %v3236
    %v3249 = vsub.f32 %v3109, %v3237
    %v3250 = vsub.f32 %v2812, %v3235
    %v3251 = vsub.f32 %v2814, %v3236
    %v3252 = vsub.f32 %v3114, %v3237
    %v3253 = vsub.f32 %v2818, %v3235
    %v3254 = vsub.f32 %v2820, %v3236
    %v3255 = vsub.f32 %v3119, %v3237
    %v3256 = vsub.f32 %v2824, %v3235
    %v3257 = vsub.f32 %v2826, %v3236
    %v3258 = vsub.f32 %v3124, %v3237
    %v3259 = vsub.f32 %v2830, %v3235
    %v3260 = vsub.f32 %v2832, %v3236
    %v3261 = vsub.f32 %v3129, %v3237
    %v3262 = vsub.f32 %v2836, %v3235
    %v3263 = vsub.f32 %v2838, %v3236
    %v3264 = vsub.f32 %v3134, %v3237
    %v3265 = vsub.f32 %v2842, %v3235
    %v3266 = vsub.f32 %v2844, %v3236
    %v3267 = vsub.f32 %v3139, %v3237
    %v3268 = vsub.f32 %v2848, %v3235
    %v3269 = vsub.f32 %v2850, %v3236
    %v3270 = vsub.f32 %v3144, %v3237
    %v3271 = vsub.f32 %v2854, %v3235
    %v3272 = vsub.f32 %v2856, %v3236
    %v3273 = vsub.f32 %v3149, %v3237
    %v3274 = vsub.f32 %v2860, %v3235
    %v3275 = vsub.f32 %v2862, %v3236
    %v3276 = vsub.f32 %v3154, %v3237
    %v3277 = vsub.f32 %v2866, %v3235
    %v3278 = vsub.f32 %v2868, %v3236
    %v3279 = vsub.f32 %v3159, %v3237
    %v3280 = vsub.f32 %v2872, %v3235
    %v3281 = vsub.f32 %v2874, %v3236
    %v3282 = vsub.f32 %v3164, %v3237
    %v3283 = vsub.f32 %v2878, %v3235
    %v3284 = vsub.f32 %v2880, %v3236
    %v3285 = vsub.f32 %v3169, %v3237
    %v3286 = vmul.f32 %v3238, %v3238
    %v3287 = vmul.f32 %v3239, %v3239
    %v3288 = vmul.f32 %v3240, %v3240
    %v3289 = vmul.f32 %v3241, %v3241
    %v3290 = vmul.f32 %v3242, %v3242
    %v3291 = vmul.f32 %v3243, %v3243
    %v3292 = vmul.f32 %v3244, %v3244
    %v3293 = vmul.f32 %v3245, %v3245
    %v3294 = vmul.f32 %v3246, %v3246
    %v3295 = vmul.f32 %v3247, %v3247
    %v3296 = vmul.f32 %v3248, %v3248
    %v3297 = vmul.f32 %v3249, %v3249
    %v3298 = vmul.f32 %v3250, %v3250
    %v3299 = vmul.f32 %v3251, %v3251
    %v3300 = vmul.f32 %v3252, %v3252
    %v3301 = vmul.f32 %v3253, %v3253
    %v3302 = vmul.f32 %v3254, %v3254
    %v3303 = vmul.f32 %v3255, %v3255
    %v3304 = vmul.f32 %v3256, %v3256
    %v3305 = vmul.f32 %v3257, %v3257
    %v3306 = vmul.f32 %v3258, %v3258
    %v3307 = vmul.f32 %v3259, %v3259
    %v3308 = vmul.f32 %v3260, %v3260
    %v3309 = vmul.f32 %v3261, %v3261
    %v3310 = vmul.f32 %v3262, %v3262
    %v3311 = vmul.f32 %v3263, %v3263
    %v3312 = vmul.f32 %v3264, %v3264
    %v3313 = vmul.f32 %v3265, %v3265
    %v3314 = vmul.f32 %v3266, %v3266
    %v3315 = vmul.f32 %v3267, %v3267
    %v3316 = vmul.f32 %v3268, %v3268
    %v3317 = vmul.f32 %v3269, %v3269
    %v3318 = vmul.f32 %v3270, %v3270
    %v3319 = vmul.f32 %v3271, %v3271
    %v3320 = vmul.f32 %v3272, %v3272
    %v3321 = vmul.f32 %v3273, %v3273
    %v3322 = vmul.f32 %v3274, %v3274
    %v3323 = vmul.f32 %v3275, %v3275
    %v3324 = vmul.f32 %v3276, %v3276
    %v3325 = vmul.f32 %v3277, %v3277
    %v3326 = vmul.f32 %v3278, %v3278
    %v3327 = vmul.f32 %v3279, %v3279
    %v3328 = vmul.f32 %v3280, %v3280
    %v3329 = vmul.f32 %v3281, %v3281
    %v3330 = vmul.f32 %v3282, %v3282
    %v3331 = vmul.f32 %v3283, %v3283
    %v3332 = vmul.f32 %v3284, %v3284
    %v3333 = vmul.f32 %v3285, %v3285
    %v3334 = vadd.f32 %v3286, %v3289
    %v3335 = vadd.f32 %v3334, %v3292
    %v3336 = vadd.f32 %v3335, %v3295
    %v3337 = vadd.f32 %v3336, %v3298
    %v3338 = vadd.f32 %v3337, %v3301
    %v3339 = vadd.f32 %v3338, %v3304
    %v3340 = vadd.f32 %v3339, %v3307
    %v3341 = vadd.f32 %v3340, %v3310
    %v3342 = vadd.f32 %v3341, %v3313
    %v3343 = vadd.f32 %v3342, %v3316
    %v3344 = vadd.f32 %v3343, %v3319
    %v3345 = vadd.f32 %v3344, %v3322
    %v3346 = vadd.f32 %v3345, %v3325
    %v3347 = vadd.f32 %v3346, %v3328
    %v3348 = vadd.f32 %v3347, %v3331
    %v3349 = vrot.slane %v3348, 4
    %v3350 = vadd.f32 %v3348, %v3349
    %v3351 = vrot.slane %v3350, 2
    %v3352 = vadd.f32 %v3350, %v3351
    %v3353 = vrot.slane %v3352, 1
    %v3354 = vadd.f32 %v3352, %v3353
    %v3355 = vadd.f32 %v3287, %v3290
    %v3356 = vadd.f32 %v3355, %v3293
    %v3357 = vadd.f32 %v3356, %v3296
    %v3358 = vadd.f32 %v3357, %v3299
    %v3359 = vadd.f32 %v3358, %v3302
    %v3360 = vadd.f32 %v3359, %v3305
    %v3361 = vadd.f32 %v3360, %v3308
    %v3362 = vadd.f32 %v3361, %v3311
    %v3363 = vadd.f32 %v3362, %v3314
    %v3364 = vadd.f32 %v3363, %v3317
    %v3365 = vadd.f32 %v3364, %v3320
    %v3366 = vadd.f32 %v3365, %v3323
    %v3367 = vadd.f32 %v3366, %v3326
    %v3368 = vadd.f32 %v3367, %v3329
    %v3369 = vadd.f32 %v3368, %v3332
    %v3370 = vrot.slane %v3369, 4
    %v3371 = vadd.f32 %v3369, %v3370
    %v3372 = vrot.slane %v3371, 2
    %v3373 = vadd.f32 %v3371, %v3372
    %v3374 = vrot.slane %v3373, 1
    %v3375 = vadd.f32 %v3373, %v3374
    %v3376 = vadd.f32 %v3288, %v3291
    %v3377 = vadd.f32 %v3376, %v3294
    %v3378 = vadd.f32 %v3377, %v3297
    %v3379 = vadd.f32 %v3378, %v3300
    %v3380 = vadd.f32 %v3379, %v3303
    %v3381 = vadd.f32 %v3380, %v3306
    %v3382 = vadd.f32 %v3381, %v3309
    %v3383 = vadd.f32 %v3382, %v3312
    %v3384 = vadd.f32 %v3383, %v3315
    %v3385 = vadd.f32 %v3384, %v3318
    %v3386 = vadd.f32 %v3385, %v3321
    %v3387 = vadd.f32 %v3386, %v3324
    %v3388 = vadd.f32 %v3387, %v3327
    %v3389 = vadd.f32 %v3388, %v3330
    %v3390 = vadd.f32 %v3389, %v3333
    %v3391 = vrot.slane %v3390, 4
    %v3392 = vadd.f32 %v3390, %v3391
    %v3393 = vrot.slane %v3392, 2
    %v3394 = vadd.f32 %v3392, %v3393
    %v3395 = vrot.slane %v3394, 1
    %v3396 = vadd.f32 %v3394, %v3395
    %v3397 = vmul.f32 %v3354, 0.0078125
    %v3398 = vmul.f32 %v3375, 0.0078125
    %v3399 = vmul.f32 %v3396, 0.0078125
    %v3400 = vadd.f32 %v3397, 1e-05
    %v3401 = vadd.f32 %v3398, 1e-05
    %v3402 = vadd.f32 %v3399, 1e-05
    %v3403 = vrsqrt.pop %v3400
    %v3404 = vrsqrt.pop %v3401
    %v3405 = vrsqrt.pop %v3402
    %v3406 = vmul.f32 %v277, %v3403
    %v3407 = vmul.f32 %v278, %v3404
    %v3408 = vmul.f32 %v279, %v3405
    %v3409 = vlaneseq
    %v3410 = vshrl.u32 %v3409, 7
    %v3411 = vsub.s32 6, %v3410
    %v3412 = vrot.slane %v3406, %v3411
    %v3413 = vlaneseq
    %v3414 = vshrl.u32 %v3413, 7
    %v3415 = vsub.s32 6, %v3414
    %v3416 = vrot.slane %v3407, %v3415
    %v3417 = vlaneseq
    %v3418 = vshrl.u32 %v3417, 7
    %v3419 = vsub.s32 6, %v3418
    %v3420 = vrot.slane %v3408, %v3419
    %v3421 = vmul.f32 %v3238, %v3412
    %v3422 = vmul.f32 %v3239, %v3416
    %v3423 = vmul.f32 %v3240, %v3420
    %v3424 = vmul.f32 %v3241, %v3412
    %v3425 = vmul.f32 %v3242, %v3416
    %v3426 = vmul.f32 %v3243, %v3420
    %v3427 = vmul.f32 %v3244, %v3412
    %v3428 = vmul.f32 %v3245, %v3416
    %v3429 = vmul.f32 %v3246, %v3420
    %v3430 = vmul.f32 %v3247, %v3412
    %v3431 = vmul.f32 %v3248, %v3416
    %v3432 = vmul.f32 %v3249, %v3420
    %v3433 = vmul.f32 %v3250, %v3412
    %v3434 = vmul.f32 %v3251, %v3416
    %v3435 = vmul.f32 %v3252, %v3420
    %v3436 = vmul.f32 %v3253, %v3412
    %v3437 = vmul.f32 %v3254, %v3416
    %v3438 = vmul.f32 %v3255, %v3420
    %v3439 = vmul.f32 %v3256, %v3412
    %v3440 = vmul.f32 %v3257, %v3416
    %v3441 = vmul.f32 %v3258, %v3420
    %v3442 = vmul.f32 %v3259, %v3412
    %v3443 = vmul.f32 %v3260, %v3416
    %v3444 = vmul.f32 %v3261, %v3420
    %v3445 = vmul.f32 %v3262, %v3412
    %v3446 = vmul.f32 %v3263, %v3416
    %v3447 = vmul.f32 %v3264, %v3420
    %v3448 = vmul.f32 %v3265, %v3412
    %v3449 = vmul.f32 %v3266, %v3416
    %v3450 = vmul.f32 %v3267, %v3420
    %v3451 = vmul.f32 %v3268, %v3412
    %v3452 = vmul.f32 %v3269, %v3416
    %v3453 = vmul.f32 %v3270, %v3420
    %v3454 = vmul.f32 %v3271, %v3412
    %v3455 = vmul.f32 %v3272, %v3416
    %v3456 = vmul.f32 %v3273, %v3420
    %v3457 = vmul.f32 %v3274, %v3412
    %v3458 = vmul.f32 %v3275, %v3416
    %v3459 = vmul.f32 %v3276, %v3420
    %v3460 = vmul.f32 %v3277, %v3412
    %v3461 = vmul.f32 %v3278, %v3416
    %v3462 = vmul.f32 %v3279, %v3420
    %v3463 = vmul.f32 %v3280, %v3412
    %v3464 = vmul.f32 %v3281, %v3416
    %v3465 = vmul.f32 %v3282, %v3420
    %v3466 = vmul.f32 %v3283, %v3412
    %v3467 = vmul.f32 %v3284, %v3416
    %v3468 = vmul.f32 %v3285, %v3420
    %v3469 = vlaneseq
    %v3470 = vshrl.u32 %v3469, 7
    %v3471 = vsub.s32 7, %v3470
    %v3472 = vrot.slane %v277, %v3471
    %v3473 = vlaneseq
    %v3474 = vshrl.u32 %v3473, 7
    %v3475 = vsub.s32 7, %v3474
    %v3476 = vrot.slane %v278, %v3475
    %v3477 = vlaneseq
    %v3478 = vshrl.u32 %v3477, 7
    %v3479 = vsub.s32 7, %v3478
    %v3480 = vrot.slane %v279, %v3479
    %v3481 = vadd.f32 %v3421, %v3472
    %v3482 = vadd.f32 %v3422, %v3476
    %v3483 = vadd.f32 %v3423, %v3480
    %v3484 = vadd.f32 %v3424, %v3472
    %v3485 = vadd.f32 %v3425, %v3476
    %v3486 = vadd.f32 %v3426, %v3480
    %v3487 = vadd.f32 %v3427, %v3472
    %v3488 = vadd.f32 %v3428, %v3476
    %v3489 = vadd.f32 %v3429, %v3480
    %v3490 = vadd.f32 %v3430, %v3472
    %v3491 = vadd.f32 %v3431, %v3476
    %v3492 = vadd.f32 %v3432, %v3480
    %v3493 = vadd.f32 %v3433, %v3472
    %v3494 = vadd.f32 %v3434, %v3476
    %v3495 = vadd.f32 %v3435, %v3480
    %v3496 = vadd.f32 %v3436, %v3472
    %v3497 = vadd.f32 %v3437, %v3476
    %v3498 = vadd.f32 %v3438, %v3480
    %v3499 = vadd.f32 %v3439, %v3472
    %v3500 = vadd.f32 %v3440, %v3476
    %v3501 = vadd.f32 %v3441, %v3480
    %v3502 = vadd.f32 %v3442, %v3472
    %v3503 = vadd.f32 %v3443, %v3476
    %v3504 = vadd.f32 %v3444, %v3480
    %v3505 = vadd.f32 %v3445, %v3472
    %v3506 = vadd.f32 %v3446, %v3476
    %v3507 = vadd.f32 %v3447, %v3480
    %v3508 = vadd.f32 %v3448, %v3472
    %v3509 = vadd.f32 %v3449, %v3476
    %v3510 = vadd.f32 %v3450, %v3480
    %v3511 = vadd.f32 %v3451, %v3472
    %v3512 = vadd.f32 %v3452, %v3476
    %v3513 = vadd.f32 %v3453, %v3480
    %v3514 = vadd.f32 %v3454, %v3472
    %v3515 = vadd.f32 %v3455, %v3476
    %v3516 = vadd.f32 %v3456, %v3480
    %v3517 = vadd.f32 %v3457, %v3472
    %v3518 = vadd.f32 %v3458, %v3476
    %v3519 = vadd.f32 %v3459, %v3480
    %v3520 = vadd.f32 %v3460, %v3472
    %v3521 = vadd.f32 %v3461, %v3476
    %v3522 = vadd.f32 %v3462, %v3480
    %v3523 = vadd.f32 %v3463, %v3472
    %v3524 = vadd.f32 %v3464, %v3476
    %v3525 = vadd.f32 %v3465, %v3480
    %v3526 = vadd.f32 %v3466, %v3472
    %v3527 = vadd.f32 %v3467, %v3476
    %v3528 = vadd.f32 %v3468, %v3480
    %v3529 = vld [vmem:[#allocation11] sm:$0xff]
    %v3530 = vld [vmem:[#allocation11 + $0x8] sm:$0xff]
    %v3531 = vld [vmem:[#allocation11 + $0x10] sm:$0xff]
    %v3532 = vld [vmem:[#allocation11 + $0x18] sm:$0xff]
    %v3533 = vld [vmem:[#allocation11 + $0x20] sm:$0xff]
    %v3534 = vld [vmem:[#allocation11 + $0x28] sm:$0xff]
    %v3535 = vld [vmem:[#allocation11 + $0x30] sm:$0xff]
    %v3536 = vld [vmem:[#allocation11 + $0x38] sm:$0xff]
    %v3537 = vld [vmem:[#allocation11 + $0x40] sm:$0xff]
    %v3538 = vld [vmem:[#allocation11 + $0x48] sm:$0xff]
    %v3539 = vld [vmem:[#allocation11 + $0x50] sm:$0xff]
    %v3540 = vld [vmem:[#allocation11 + $0x58] sm:$0xff]
    %v3541 = vld [vmem:[#allocation11 + $0x60] sm:$0xff]
    %v3542 = vld [vmem:[#allocation11 + $0x68] sm:$0xff]
    %v3543 = vld [vmem:[#allocation11 + $0x70] sm:$0xff]
    %v3544 = vld [vmem:[#allocation11 + $0x78] sm:$0xff]
    %v3545 = vld [vmem:[#allocation11 + $0x80] sm:$0xff]
    %v3546 = vld [vmem:[#allocation11 + $0x88] sm:$0xff]
    %v3547 = vld [vmem:[#allocation11 + $0x90] sm:$0xff]
    %v3548 = vld [vmem:[#allocation11 + $0x98] sm:$0xff]
    %v3549 = vld [vmem:[#allocation11 + $0xa0] sm:$0xff]
    %v3550 = vld [vmem:[#allocation11 + $0xa8] sm:$0xff]
    %v3551 = vld [vmem:[#allocation11 + $0xb0] sm:$0xff]
    %v3552 = vld [vmem:[#allocation11 + $0xb8] sm:$0xff]
    %v3553 = vld [vmem:[#allocation11 + $0xc0] sm:$0xff]
    %v3554 = vld [vmem:[#allocation11 + $0xc8] sm:$0xff]
    %v3555 = vld [vmem:[#allocation11 + $0xd0] sm:$0xff]
    %v3556 = vld [vmem:[#allocation11 + $0xd8] sm:$0xff]
    %v3557 = vld [vmem:[#allocation11 + $0xe0] sm:$0xff]
    %v3558 = vld [vmem:[#allocation11 + $0xe8] sm:$0xff]
    %v3559 = vld [vmem:[#allocation11 + $0xf0] sm:$0xff]
    %v3560 = vld [vmem:[#allocation11 + $0xf8] sm:$0xff]
    %v3561 = vld [vmem:[#allocation11 + $0x100] sm:$0xff]
    %v3562 = vld [vmem:[#allocation11 + $0x108] sm:$0xff]
    %v3563 = vld [vmem:[#allocation11 + $0x110] sm:$0xff]
    %v3564 = vld [vmem:[#allocation11 + $0x118] sm:$0xff]
    %v3565 = vld [vmem:[#allocation11 + $0x120] sm:$0xff]
    %v3566 = vld [vmem:[#allocation11 + $0x128] sm:$0xff]
    %v3567 = vld [vmem:[#allocation11 + $0x130] sm:$0xff]
    %v3568 = vld [vmem:[#allocation11 + $0x138] sm:$0xff]
    %v3569 = vld [vmem:[#allocation11 + $0x140] sm:$0xff]
    %v3570 = vld [vmem:[#allocation11 + $0x148] sm:$0xff]
    %v3571 = vld [vmem:[#allocation11 + $0x150] sm:$0xff]
    %v3572 = vld [vmem:[#allocation11 + $0x158] sm:$0xff]
    %v3573 = vld [vmem:[#allocation11 + $0x160] sm:$0xff]
    %v3574 = vld [vmem:[#allocation11 + $0x168] sm:$0xff]
    %v3575 = vld [vmem:[#allocation11 + $0x170] sm:$0xff]
    %v3576 = vld [vmem:[#allocation11 + $0x178] sm:$0xff]
    %3577 = vmatprep.subr.mxu0 %v3530
    %3578 = vmatpush1.msra.mxu0 %v3529
    %3579 = vmatprep.subr.mxu0 %v3533
    %3580 = vmatpush1.msra.mxu0 %v3532
    %3581 = vmatprep.subr.mxu0 %v3536
    %3582 = vmatpush1.msra.mxu0 %v3535
    %3583 = vmatprep.subr.mxu0 %v3539
    %3584 = vmatpush1.msra.mxu0 %v3538
    %3585 = vmatprep.subr.mxu0 %v3542
    %3586 = vmatpush1.msra.mxu0 %v3541
    %3587 = vmatprep.subr.mxu0 %v3545
    %3588 = vmatpush1.msra.mxu0 %v3544
    %3589 = vmatprep.subr.mxu0 %v3548
    %3590 = vmatpush1.msra.mxu0 %v3547
    %3591 = vmatprep.subr.mxu0 %v3551
    %3592 = vmatpush1.msra.mxu0 %v3550
    %3593 = vmatprep.subr.mxu0 %v3554
    %3594 = vmatpush1.msra.mxu0 %v3553
    %3595 = vmatprep.subr.mxu0 %v3557
    %3596 = vmatpush1.msra.mxu0 %v3556
    %3597 = vmatprep.subr.mxu0 %v3560
    %3598 = vmatpush1.msra.mxu0 %v3559
    %3599 = vmatprep.subr.mxu0 %v3563
    %3600 = vmatpush1.msra.mxu0 %v3562
    %3601 = vmatprep.subr.mxu0 %v3566
    %3602 = vmatpush1.msra.mxu0 %v3565
    %3603 = vmatprep.subr.mxu0 %v3569
    %3604 = vmatpush1.msra.mxu0 %v3568
    %3605 = vmatprep.subr.mxu0 %v3572
    %3606 = vmatpush1.msra.mxu0 %v3571
    %3607 = vmatprep.subr.mxu0 %v3575
    %3608 = vmatpush1.msra.mxu0 %v3574
    %3609 = vmatprep.subr.mxu0 0.0
    %3610 = vmatpush1.msra.mxu0 0.0
    %3611 = vmatprep.subr.mxu0 0.0
    %3612 = vmatpush1.msra.mxu0 0.0
    %3613 = vmatprep.subr.mxu0 0.0
    %3614 = vmatpush1.msra.mxu0 0.0
    %3615 = vmatprep.subr.mxu0 0.0
    %3616 = vmatpush1.msra.mxu0 0.0
    %3617 = vmatprep.subr.mxu0 0.0
    %3618 = vmatpush1.msra.mxu0 0.0
    %3619 = vmatprep.subr.mxu0 0.0
    %3620 = vmatpush1.msra.mxu0 0.0
    %3621 = vmatprep.subr.mxu0 0.0
    %3622 = vmatpush1.msra.mxu0 0.0
    %3623 = vmatprep.subr.mxu0 0.0
    %3624 = vmatpush1.msra.mxu0 0.0
    %3625 = vmatprep.subr.mxu0 0.0
    %3626 = vmatpush1.msra.mxu0 0.0
    %3627 = vmatprep.subr.mxu0 0.0
    %3628 = vmatpush1.msra.mxu0 0.0
    %3629 = vmatprep.subr.mxu0 0.0
    %3630 = vmatpush1.msra.mxu0 0.0
    %3631 = vmatprep.subr.mxu0 0.0
    %3632 = vmatpush1.msra.mxu0 0.0
    %3633 = vmatprep.subr.mxu0 0.0
    %3634 = vmatpush1.msra.mxu0 0.0
    %3635 = vmatprep.subr.mxu0 0.0
    %3636 = vmatpush1.msra.mxu0 0.0
    %3637 = vmatprep.subr.mxu0 0.0
    %3638 = vmatpush1.msra.mxu0 0.0
    %3639 = vmatprep.subr.mxu0 0.0
    %3640 = vmatpush1.msra.mxu0 0.0
    %3641 = vmatprep.mubr.f32.mxu0 0.0
    %3642 = vmatmul.mubr.f32.gmra.mrb[0].mxu0 %v261
    %v3643 = vpop.f32.mrb[0].mxu0
    %v3644 = vadd.f32 0.0, %v3643
    %v3645 = vpop.f32.mrb[0].mxu0
    %v3646 = vadd.f32 0.0, %v3645
    %3647 = vmatprep.mubr.f32.mxu0 0.0
    %3648 = vmatmul.mubr.f32.gmra.mrb[0].mxu0 %v262
    %v3649 = vpop.f32.mrb[0].mxu0
    %v3650 = vadd.f32 0.0, %v3649
    %v3651 = vpop.f32.mrb[0].mxu0
    %v3652 = vadd.f32 0.0, %v3651
    %3653 = vmatprep.mubr.f32.mxu0 0.0
    %3654 = vmatmul.mubr.f32.gmra.mrb[0].mxu0 %v263
    %v3655 = vpop.f32.mrb[0].mxu0
    %v3656 = vadd.f32 0.0, %v3655
    %v3657 = vpop.f32.mrb[0].mxu0
    %v3658 = vadd.f32 0.0, %v3657
    %3659 = vmatprep.mubr.f32.mxu0 0.0
    %3660 = vmatmul.mubr.f32.gmra.mrb[0].mxu0 %v264
    %v3661 = vpop.f32.mrb[0].mxu0
    %v3662 = vadd.f32 0.0, %v3661
    %v3663 = vpop.f32.mrb[0].mxu0
    %v3664 = vadd.f32 0.0, %v3663
    %3665 = vmatprep.mubr.f32.mxu0 0.0
    %3666 = vmatmul.mubr.f32.gmra.mrb[0].mxu0 %v265
    %v3667 = vpop.f32.mrb[0].mxu0
    %v3668 = vadd.f32 0.0, %v3667
    %v3669 = vpop.f32.mrb[0].mxu0
    %v3670 = vadd.f32 0.0, %v3669
    %3671 = vmatprep.mubr.f32.mxu0 0.0
    %3672 = vmatmul.mubr.f32.gmra.mrb[0].mxu0 %v266
    %v3673 = vpop.f32.mrb[0].mxu0
    %v3674 = vadd.f32 0.0, %v3673
    %v3675 = vpop.f32.mrb[0].mxu0
    %v3676 = vadd.f32 0.0, %v3675
    %3677 = vmatprep.mubr.f32.mxu0 0.0
    %3678 = vmatmul.mubr.f32.gmra.mrb[0].mxu0 %v267
    %v3679 = vpop.f32.mrb[0].mxu0
    %v3680 = vadd.f32 0.0, %v3679
    %v3681 = vpop.f32.mrb[0].mxu0
    %v3682 = vadd.f32 0.0, %v3681
    %3683 = vmatprep.mubr.f32.mxu0 0.0
    %3684 = vmatmul.mubr.f32.gmra.mrb[0].mxu0 %v268
    %v3685 = vpop.f32.mrb[0].mxu0
    %v3686 = vadd.f32 0.0, %v3685
    %v3687 = vpop.f32.mrb[0].mxu0
    %v3688 = vadd.f32 0.0, %v3687
    %3689 = vmatprep.mubr.f32.mxu0 0.0
    %3690 = vmatmul.mubr.f32.gmra.mrb[0].mxu0 %v269
    %v3691 = vpop.f32.mrb[0].mxu0
    %v3692 = vadd.f32 0.0, %v3691
    %v3693 = vpop.f32.mrb[0].mxu0
    %v3694 = vadd.f32 0.0, %v3693
    %3695 = vmatprep.mubr.f32.mxu0 0.0
    %3696 = vmatmul.mubr.f32.gmra.mrb[0].mxu0 %v270
    %v3697 = vpop.f32.mrb[0].mxu0
    %v3698 = vadd.f32 0.0, %v3697
    %v3699 = vpop.f32.mrb[0].mxu0
    %v3700 = vadd.f32 0.0, %v3699
    %3701 = vmatprep.mubr.f32.mxu0 0.0
    %3702 = vmatmul.mubr.f32.gmra.mrb[0].mxu0 %v271
    %v3703 = vpop.f32.mrb[0].mxu0
    %v3704 = vadd.f32 0.0, %v3703
    %v3705 = vpop.f32.mrb[0].mxu0
    %v3706 = vadd.f32 0.0, %v3705
    %3707 = vmatprep.mubr.f32.mxu0 0.0
    %3708 = vmatmul.mubr.f32.gmra.mrb[0].mxu0 %v272
    %v3709 = vpop.f32.mrb[0].mxu0
    %v3710 = vadd.f32 0.0, %v3709
    %v3711 = vpop.f32.mrb[0].mxu0
    %v3712 = vadd.f32 0.0, %v3711
    %3713 = vmatprep.mubr.f32.mxu0 0.0
    %3714 = vmatmul.mubr.f32.gmra.mrb[0].mxu0 %v273
    %v3715 = vpop.f32.mrb[0].mxu0
    %v3716 = vadd.f32 0.0, %v3715
    %v3717 = vpop.f32.mrb[0].mxu0
    %v3718 = vadd.f32 0.0, %v3717
    %3719 = vmatprep.mubr.f32.mxu0 0.0
    %3720 = vmatmul.mubr.f32.gmra.mrb[0].mxu0 %v274
    %v3721 = vpop.f32.mrb[0].mxu0
    %v3722 = vadd.f32 0.0, %v3721
    %v3723 = vpop.f32.mrb[0].mxu0
    %v3724 = vadd.f32 0.0, %v3723
    %3725 = vmatprep.mubr.f32.mxu0 0.0
    %3726 = vmatmul.mubr.f32.gmra.mrb[0].mxu0 %v275
    %v3727 = vpop.f32.mrb[0].mxu0
    %v3728 = vadd.f32 0.0, %v3727
    %v3729 = vpop.f32.mrb[0].mxu0
    %v3730 = vadd.f32 0.0, %v3729
    %3731 = vmatprep.mubr.f32.mxu0 0.0
    %3732 = vmatmul.mubr.f32.gmra.mrb[0].mxu0 %v276
    %v3733 = vpop.f32.mrb[0].mxu0
    %v3734 = vadd.f32 0.0, %v3733
    %v3735 = vpop.f32.mrb[0].mxu0
    %v3736 = vadd.f32 0.0, %v3735
    %3737 = vdwg.mxu0
    %3738 = vmatprep.subr.mxu0 0.0
    %3739 = vmatpush1.msra.mxu0 %v3531
    %3740 = vmatprep.subr.mxu0 0.0
    %3741 = vmatpush1.msra.mxu0 %v3534
    %3742 = vmatprep.subr.mxu0 0.0
    %3743 = vmatpush1.msra.mxu0 %v3537
    %3744 = vmatprep.subr.mxu0 0.0
    %3745 = vmatpush1.msra.mxu0 %v3540
    %3746 = vmatprep.subr.mxu0 0.0
    %3747 = vmatpush1.msra.mxu0 %v3543
    %3748 = vmatprep.subr.mxu0 0.0
    %3749 = vmatpush1.msra.mxu0 %v3546
    %3750 = vmatprep.subr.mxu0 0.0
    %3751 = vmatpush1.msra.mxu0 %v3549
    %3752 = vmatprep.subr.mxu0 0.0
    %3753 = vmatpush1.msra.mxu0 %v3552
    %3754 = vmatprep.subr.mxu0 0.0
    %3755 = vmatpush1.msra.mxu0 %v3555
    %3756 = vmatprep.subr.mxu0 0.0
    %3757 = vmatpush1.msra.mxu0 %v3558
    %3758 = vmatprep.subr.mxu0 0.0
    %3759 = vmatpush1.msra.mxu0 %v3561
    %3760 = vmatprep.subr.mxu0 0.0
    %3761 = vmatpush1.msra.mxu0 %v3564
    %3762 = vmatprep.subr.mxu0 0.0
    %3763 = vmatpush1.msra.mxu0 %v3567
    %3764 = vmatprep.subr.mxu0 0.0
    %3765 = vmatpush1.msra.mxu0 %v3570
    %3766 = vmatprep.subr.mxu0 0.0
    %3767 = vmatpush1.msra.mxu0 %v3573
    %3768 = vmatprep.subr.mxu0 0.0
    %3769 = vmatpush1.msra.mxu0 %v3576
    %3770 = vmatprep.subr.mxu0 0.0
    %3771 = vmatpush1.msra.mxu0 0.0
    %3772 = vmatprep.subr.mxu0 0.0
    %3773 = vmatpush1.msra.mxu0 0.0
    %3774 = vmatprep.subr.mxu0 0.0
    %3775 = vmatpush1.msra.mxu0 0.0
    %3776 = vmatprep.subr.mxu0 0.0
    %3777 = vmatpush1.msra.mxu0 0.0
    %3778 = vmatprep.subr.mxu0 0.0
    %3779 = vmatpush1.msra.mxu0 0.0
    %3780 = vmatprep.subr.mxu0 0.0
    %3781 = vmatpush1.msra.mxu0 0.0
    %3782 = vmatprep.subr.mxu0 0.0
    %3783 = vmatpush1.msra.mxu0 0.0
    %3784 = vmatprep.subr.mxu0 0.0
    %3785 = vmatpush1.msra.mxu0 0.0
    %3786 = vmatprep.subr.mxu0 0.0
    %3787 = vmatpush1.msra.mxu0 0.0
    %3788 = vmatprep.subr.mxu0 0.0
    %3789 = vmatpush1.msra.mxu0 0.0
    %3790 = vmatprep.subr.mxu0 0.0
    %3791 = vmatpush1.msra.mxu0 0.0
    %3792 = vmatprep.subr.mxu0 0.0
    %3793 = vmatpush1.msra.mxu0 0.0
    %3794 = vmatprep.subr.mxu0 0.0
    %3795 = vmatpush1.msra.mxu0 0.0
    %3796 = vmatprep.subr.mxu0 0.0
    %3797 = vmatpush1.msra.mxu0 0.0
    %3798 = vmatprep.subr.mxu0 0.0
    %3799 = vmatpush1.msra.mxu0 0.0
    %3800 = vmatprep.subr.mxu0 0.0
    %3801 = vmatpush1.msra.mxu0 0.0
    %3802 = vmatprep.mubr.f32.mxu0 0.0
    %3803 = vmatmul.mubr.f32.gmra.mrb[0].mxu0 %v261
    %v3804 = vpop.f32.mrb[0].mxu0
    %v3805 = vadd.f32 0.0, %v3804
    %v3806 = vpop.f32.mrb[0].mxu0
    %3807 = vmatprep.mubr.f32.mxu0 0.0
    %3808 = vmatmul.mubr.f32.gmra.mrb[0].mxu0 %v262
    %v3809 = vpop.f32.mrb[0].mxu0
    %v3810 = vadd.f32 0.0, %v3809
    %v3811 = vpop.f32.mrb[0].mxu0
    %3812 = vmatprep.mubr.f32.mxu0 0.0
    %3813 = vmatmul.mubr.f32.gmra.mrb[0].mxu0 %v263
    %v3814 = vpop.f32.mrb[0].mxu0
    %v3815 = vadd.f32 0.0, %v3814
    %v3816 = vpop.f32.mrb[0].mxu0
    %3817 = vmatprep.mubr.f32.mxu0 0.0
    %3818 = vmatmul.mubr.f32.gmra.mrb[0].mxu0 %v264
    %v3819 = vpop.f32.mrb[0].mxu0
    %v3820 = vadd.f32 0.0, %v3819
    %v3821 = vpop.f32.mrb[0].mxu0
    %3822 = vmatprep.mubr.f32.mxu0 0.0
    %3823 = vmatmul.mubr.f32.gmra.mrb[0].mxu0 %v265
    %v3824 = vpop.f32.mrb[0].mxu0
    %v3825 = vadd.f32 0.0, %v3824
    %v3826 = vpop.f32.mrb[0].mxu0
    %3827 = vmatprep.mubr.f32.mxu0 0.0
    %3828 = vmatmul.mubr.f32.gmra.mrb[0].mxu0 %v266
    %v3829 = vpop.f32.mrb[0].mxu0
    %v3830 = vadd.f32 0.0, %v3829
    %v3831 = vpop.f32.mrb[0].mxu0
    %3832 = vmatprep.mubr.f32.mxu0 0.0
    %3833 = vmatmul.mubr.f32.gmra.mrb[0].mxu0 %v267
    %v3834 = vpop.f32.mrb[0].mxu0
    %v3835 = vadd.f32 0.0, %v3834
    %v3836 = vpop.f32.mrb[0].mxu0
    %3837 = vmatprep.mubr.f32.mxu0 0.0
    %3838 = vmatmul.mubr.f32.gmra.mrb[0].mxu0 %v268
    %v3839 = vpop.f32.mrb[0].mxu0
    %v3840 = vadd.f32 0.0, %v3839
    %v3841 = vpop.f32.mrb[0].mxu0
    %3842 = vmatprep.mubr.f32.mxu0 0.0
    %3843 = vmatmul.mubr.f32.gmra.mrb[0].mxu0 %v269
    %v3844 = vpop.f32.mrb[0].mxu0
    %v3845 = vadd.f32 0.0, %v3844
    %v3846 = vpop.f32.mrb[0].mxu0
    %3847 = vmatprep.mubr.f32.mxu0 0.0
    %3848 = vmatmul.mubr.f32.gmra.mrb[0].mxu0 %v270
    %v3849 = vpop.f32.mrb[0].mxu0
    %v3850 = vadd.f32 0.0, %v3849
    %v3851 = vpop.f32.mrb[0].mxu0
    %3852 = vmatprep.mubr.f32.mxu0 0.0
    %3853 = vmatmul.mubr.f32.gmra.mrb[0].mxu0 %v271
    %v3854 = vpop.f32.mrb[0].mxu0
    %v3855 = vadd.f32 0.0, %v3854
    %v3856 = vpop.f32.mrb[0].mxu0
    %3857 = vmatprep.mubr.f32.mxu0 0.0
    %3858 = vmatmul.mubr.f32.gmra.mrb[0].mxu0 %v272
    %v3859 = vpop.f32.mrb[0].mxu0
    %v3860 = vadd.f32 0.0, %v3859
    %v3861 = vpop.f32.mrb[0].mxu0
    %3862 = vmatprep.mubr.f32.mxu0 0.0
    %3863 = vmatmul.mubr.f32.gmra.mrb[0].mxu0 %v273
    %v3864 = vpop.f32.mrb[0].mxu0
    %v3865 = vadd.f32 0.0, %v3864
    %v3866 = vpop.f32.mrb[0].mxu0
    %3867 = vmatprep.mubr.f32.mxu0 0.0
    %3868 = vmatmul.mubr.f32.gmra.mrb[0].mxu0 %v274
    %v3869 = vpop.f32.mrb[0].mxu0
    %v3870 = vadd.f32 0.0, %v3869
    %v3871 = vpop.f32.mrb[0].mxu0
    %3872 = vmatprep.mubr.f32.mxu0 0.0
    %3873 = vmatmul.mubr.f32.gmra.mrb[0].mxu0 %v275
    %v3874 = vpop.f32.mrb[0].mxu0
    %v3875 = vadd.f32 0.0, %v3874
    %v3876 = vpop.f32.mrb[0].mxu0
    %3877 = vmatprep.mubr.f32.mxu0 0.0
    %3878 = vmatmul.mubr.f32.gmra.mrb[0].mxu0 %v276
    %v3879 = vpop.f32.mrb[0].mxu0
    %v3880 = vadd.f32 0.0, %v3879
    %v3881 = vpop.f32.mrb[0].mxu0
    %3882 = vdwg.mxu0
    %v3883 = vadd.f32 %v3481, %v3644
    %v3884 = vadd.f32 %v3482, %v3646
    %v3885 = vadd.f32 %v3483, %v3805
    %v3886 = vadd.f32 %v3484, %v3650
    %v3887 = vadd.f32 %v3485, %v3652
    %v3888 = vadd.f32 %v3486, %v3810
    %v3889 = vadd.f32 %v3487, %v3656
    %v3890 = vadd.f32 %v3488, %v3658
    %v3891 = vadd.f32 %v3489, %v3815
    %v3892 = vadd.f32 %v3490, %v3662
    %v3893 = vadd.f32 %v3491, %v3664
    %v3894 = vadd.f32 %v3492, %v3820
    %v3895 = vadd.f32 %v3493, %v3668
    %v3896 = vadd.f32 %v3494, %v3670
    %v3897 = vadd.f32 %v3495, %v3825
    %v3898 = vadd.f32 %v3496, %v3674
    %v3899 = vadd.f32 %v3497, %v3676
    %v3900 = vadd.f32 %v3498, %v3830
    %v3901 = vadd.f32 %v3499, %v3680
    %v3902 = vadd.f32 %v3500, %v3682
    %v3903 = vadd.f32 %v3501, %v3835
    %v3904 = vadd.f32 %v3502, %v3686
    %v3905 = vadd.f32 %v3503, %v3688
    %v3906 = vadd.f32 %v3504, %v3840
    %v3907 = vadd.f32 %v3505, %v3692
    %v3908 = vadd.f32 %v3506, %v3694
    %v3909 = vadd.f32 %v3507, %v3845
    %v3910 = vadd.f32 %v3508, %v3698
    %v3911 = vadd.f32 %v3509, %v3700
    %v3912 = vadd.f32 %v3510, %v3850
    %v3913 = vadd.f32 %v3511, %v3704
    %v3914 = vadd.f32 %v3512, %v3706
    %v3915 = vadd.f32 %v3513, %v3855
    %v3916 = vadd.f32 %v3514, %v3710
    %v3917 = vadd.f32 %v3515, %v3712
    %v3918 = vadd.f32 %v3516, %v3860
    %v3919 = vadd.f32 %v3517, %v3716
    %v3920 = vadd.f32 %v3518, %v3718
    %v3921 = vadd.f32 %v3519, %v3865
    %v3922 = vadd.f32 %v3520, %v3722
    %v3923 = vadd.f32 %v3521, %v3724
    %v3924 = vadd.f32 %v3522, %v3870
    %v3925 = vadd.f32 %v3523, %v3728
    %v3926 = vadd.f32 %v3524, %v3730
    %v3927 = vadd.f32 %v3525, %v3875
    %v3928 = vadd.f32 %v3526, %v3734
    %v3929 = vadd.f32 %v3527, %v3736
    %v3930 = vadd.f32 %v3528, %v3880
    %v3931 = vld [vmem:[%s9] sm:$0xff]
    %v3932 = vld [vmem:[%s9 + $0x8] sm:$0xff]
    %v3933 = vld [vmem:[#allocation13] sm:$0xff]
    %v3934 = vld [vmem:[#allocation13 + $0x8] sm:$0xff]
    %v3935 = vld [vmem:[#allocation13 + $0x10] sm:$0xff]
    %v3936 = vld [vmem:[#allocation13 + $0x18] sm:$0xff]
    %v3937 = vld [vmem:[#allocation13 + $0x20] sm:$0xff]
    %v3938 = vld [vmem:[#allocation13 + $0x28] sm:$0xff]
    %v3939 = vld [vmem:[#allocation13 + $0x30] sm:$0xff]
    %v3940 = vld [vmem:[#allocation13 + $0x38] sm:$0xff]
    %v3941 = vld [vmem:[#allocation13 + $0x40] sm:$0xff]
    %v3942 = vld [vmem:[#allocation13 + $0x48] sm:$0xff]
    %v3943 = vld [vmem:[#allocation13 + $0x50] sm:$0xff]
    %v3944 = vld [vmem:[#allocation13 + $0x58] sm:$0xff]
    %v3945 = vld [vmem:[#allocation13 + $0x60] sm:$0xff]
    %v3946 = vld [vmem:[#allocation13 + $0x68] sm:$0xff]
    %v3947 = vld [vmem:[#allocation13 + $0x70] sm:$0xff]
    %v3948 = vld [vmem:[#allocation13 + $0x78] sm:$0xff]
    %v3949 = vld [vmem:[#allocation13 + $0x80] sm:$0xff]
    %v3950 = vld [vmem:[#allocation13 + $0x88] sm:$0xff]
    %v3951 = vld [vmem:[#allocation13 + $0x90] sm:$0xff]
    %v3952 = vld [vmem:[#allocation13 + $0x98] sm:$0xff]
    %v3953 = vld [vmem:[#allocation13 + $0xa0] sm:$0xff]
    %v3954 = vld [vmem:[#allocation13 + $0xa8] sm:$0xff]
    %v3955 = vld [vmem:[#allocation13 + $0xb0] sm:$0xff]
    %v3956 = vld [vmem:[#allocation13 + $0xb8] sm:$0xff]
    %v3957 = vld [vmem:[#allocation13 + $0xc0] sm:$0xff]
    %v3958 = vld [vmem:[#allocation13 + $0xc8] sm:$0xff]
    %v3959 = vld [vmem:[#allocation13 + $0xd0] sm:$0xff]
    %v3960 = vld [vmem:[#allocation13 + $0xd8] sm:$0xff]
    %v3961 = vld [vmem:[#allocation13 + $0xe0] sm:$0xff]
    %v3962 = vld [vmem:[#allocation13 + $0xe8] sm:$0xff]
    %v3963 = vld [vmem:[#allocation13 + $0xf0] sm:$0xff]
    %v3964 = vld [vmem:[#allocation13 + $0xf8] sm:$0xff]
    %v3965 = vld [vmem:[#allocation13 + $0x100] sm:$0xff]
    %v3966 = vld [vmem:[#allocation13 + $0x108] sm:$0xff]
    %v3967 = vld [vmem:[#allocation13 + $0x110] sm:$0xff]
    %v3968 = vld [vmem:[#allocation13 + $0x118] sm:$0xff]
    %v3969 = vld [vmem:[#allocation13 + $0x120] sm:$0xff]
    %v3970 = vld [vmem:[#allocation13 + $0x128] sm:$0xff]
    %v3971 = vld [vmem:[#allocation13 + $0x130] sm:$0xff]
    %v3972 = vld [vmem:[#allocation13 + $0x138] sm:$0xff]
    %v3973 = vld [vmem:[#allocation13 + $0x140] sm:$0xff]
    %v3974 = vld [vmem:[#allocation13 + $0x148] sm:$0xff]
    %v3975 = vld [vmem:[#allocation13 + $0x150] sm:$0xff]
    %v3976 = vld [vmem:[#allocation13 + $0x158] sm:$0xff]
    %v3977 = vld [vmem:[#allocation13 + $0x160] sm:$0xff]
    %v3978 = vld [vmem:[#allocation13 + $0x168] sm:$0xff]
    %v3979 = vld [vmem:[#allocation13 + $0x170] sm:$0xff]
    %v3980 = vld [vmem:[#allocation13 + $0x178] sm:$0xff]
    %v3981 = vld [vmem:[#allocation13 + $0x180] sm:$0xff]
    %v3982 = vld [vmem:[#allocation13 + $0x188] sm:$0xff]
    %v3983 = vld [vmem:[#allocation13 + $0x190] sm:$0xff]
    %v3984 = vld [vmem:[#allocation13 + $0x198] sm:$0xff]
    %v3985 = vld [vmem:[#allocation13 + $0x1a0] sm:$0xff]
    %v3986 = vld [vmem:[#allocation13 + $0x1a8] sm:$0xff]
    %v3987 = vld [vmem:[#allocation13 + $0x1b0] sm:$0xff]
    %v3988 = vld [vmem:[#allocation13 + $0x1b8] sm:$0xff]
    %v3989 = vld [vmem:[#allocation13 + $0x1c0] sm:$0xff]
    %v3990 = vld [vmem:[#allocation13 + $0x1c8] sm:$0xff]
    %v3991 = vld [vmem:[#allocation13 + $0x1d0] sm:$0xff]
    %v3992 = vld [vmem:[#allocation13 + $0x1d8] sm:$0xff]
    %v3993 = vld [vmem:[#allocation13 + $0x1e0] sm:$0xff]
    %v3994 = vld [vmem:[#allocation13 + $0x1e8] sm:$0xff]
    %v3995 = vld [vmem:[#allocation13 + $0x1f0] sm:$0xff]
    %v3996 = vld [vmem:[#allocation13 + $0x1f8] sm:$0xff]
    %v3997 = vld [vmem:[#allocation13 + $0x200] sm:$0xff]
    %v3998 = vld [vmem:[#allocation13 + $0x208] sm:$0xff]
    %v3999 = vld [vmem:[#allocation13 + $0x210] sm:$0xff]
    %v4000 = vld [vmem:[#allocation13 + $0x218] sm:$0xff]
    %v4001 = vld [vmem:[#allocation13 + $0x220] sm:$0xff]
    %v4002 = vld [vmem:[#allocation13 + $0x228] sm:$0xff]
    %v4003 = vld [vmem:[#allocation13 + $0x230] sm:$0xff]
    %v4004 = vld [vmem:[#allocation13 + $0x238] sm:$0xff]
    %v4005 = vld [vmem:[#allocation13 + $0x240] sm:$0xff]
    %v4006 = vld [vmem:[#allocation13 + $0x248] sm:$0xff]
    %v4007 = vld [vmem:[#allocation13 + $0x250] sm:$0xff]
    %v4008 = vld [vmem:[#allocation13 + $0x258] sm:$0xff]
    %v4009 = vld [vmem:[#allocation13 + $0x260] sm:$0xff]
    %v4010 = vld [vmem:[#allocation13 + $0x268] sm:$0xff]
    %v4011 = vld [vmem:[#allocation13 + $0x270] sm:$0xff]
    %v4012 = vld [vmem:[#allocation13 + $0x278] sm:$0xff]
    %v4013 = vld [vmem:[#allocation13 + $0x280] sm:$0xff]
    %v4014 = vld [vmem:[#allocation13 + $0x288] sm:$0xff]
    %v4015 = vld [vmem:[#allocation13 + $0x290] sm:$0xff]
    %v4016 = vld [vmem:[#allocation13 + $0x298] sm:$0xff]
    %v4017 = vld [vmem:[#allocation13 + $0x2a0] sm:$0xff]
    %v4018 = vld [vmem:[#allocation13 + $0x2a8] sm:$0xff]
    %v4019 = vld [vmem:[#allocation13 + $0x2b0] sm:$0xff]
    %v4020 = vld [vmem:[#allocation13 + $0x2b8] sm:$0xff]
    %v4021 = vld [vmem:[#allocation13 + $0x2c0] sm:$0xff]
    %v4022 = vld [vmem:[#allocation13 + $0x2c8] sm:$0xff]
    %v4023 = vld [vmem:[#allocation13 + $0x2d0] sm:$0xff]
    %v4024 = vld [vmem:[#allocation13 + $0x2d8] sm:$0xff]
    %v4025 = vld [vmem:[#allocation13 + $0x2e0] sm:$0xff]
    %v4026 = vld [vmem:[#allocation13 + $0x2e8] sm:$0xff]
    %v4027 = vld [vmem:[#allocation13 + $0x2f0] sm:$0xff]
    %v4028 = vld [vmem:[#allocation13 + $0x2f8] sm:$0xff]
    %4029 = vmatprep.subr.mxu0 %v3934
    %4030 = vmatpush1.msra.mxu0 %v3933
    %4031 = vmatprep.subr.mxu0 %v3936
    %4032 = vmatpush1.msra.mxu0 %v3935
    %4033 = vmatprep.subr.mxu0 %v3938
    %4034 = vmatpush1.msra.mxu0 %v3937
    %4035 = vmatprep.subr.mxu0 %v3940
    %4036 = vmatpush1.msra.mxu0 %v3939
    %4037 = vmatprep.subr.mxu0 %v3942
    %4038 = vmatpush1.msra.mxu0 %v3941
    %4039 = vmatprep.subr.mxu0 %v3944
    %4040 = vmatpush1.msra.mxu0 %v3943
    %4041 = vmatprep.subr.mxu0 %v3946
    %4042 = vmatpush1.msra.mxu0 %v3945
    %4043 = vmatprep.subr.mxu0 %v3948
    %4044 = vmatpush1.msra.mxu0 %v3947
    %4045 = vmatprep.subr.mxu0 %v3950
    %4046 = vmatpush1.msra.mxu0 %v3949
    %4047 = vmatprep.subr.mxu0 %v3952
    %4048 = vmatpush1.msra.mxu0 %v3951
    %4049 = vmatprep.subr.mxu0 %v3954
    %4050 = vmatpush1.msra.mxu0 %v3953
    %4051 = vmatprep.subr.mxu0 %v3956
    %4052 = vmatpush1.msra.mxu0 %v3955
    %4053 = vmatprep.subr.mxu0 %v3958
    %4054 = vmatpush1.msra.mxu0 %v3957
    %4055 = vmatprep.subr.mxu0 %v3960
    %4056 = vmatpush1.msra.mxu0 %v3959
    %4057 = vmatprep.subr.mxu0 %v3962
    %4058 = vmatpush1.msra.mxu0 %v3961
    %4059 = vmatprep.subr.mxu0 %v3964
    %4060 = vmatpush1.msra.mxu0 %v3963
    %4061 = vmatprep.subr.mxu0 %v3966
    %4062 = vmatpush1.msra.mxu0 %v3965
    %4063 = vmatprep.subr.mxu0 %v3968
    %4064 = vmatpush1.msra.mxu0 %v3967
    %4065 = vmatprep.subr.mxu0 %v3970
    %4066 = vmatpush1.msra.mxu0 %v3969
    %4067 = vmatprep.subr.mxu0 %v3972
    %4068 = vmatpush1.msra.mxu0 %v3971
    %4069 = vmatprep.subr.mxu0 %v3974
    %4070 = vmatpush1.msra.mxu0 %v3973
    %4071 = vmatprep.subr.mxu0 %v3976
    %4072 = vmatpush1.msra.mxu0 %v3975
    %4073 = vmatprep.subr.mxu0 %v3978
    %4074 = vmatpush1.msra.mxu0 %v3977
    %4075 = vmatprep.subr.mxu0 %v3980
    %4076 = vmatpush1.msra.mxu0 %v3979
    %4077 = vmatprep.subr.mxu0 %v3982
    %4078 = vmatpush1.msra.mxu0 %v3981
    %4079 = vmatprep.subr.mxu0 %v3984
    %4080 = vmatpush1.msra.mxu0 %v3983
    %4081 = vmatprep.subr.mxu0 %v3986
    %4082 = vmatpush1.msra.mxu0 %v3985
    %4083 = vmatprep.subr.mxu0 %v3988
    %4084 = vmatpush1.msra.mxu0 %v3987
    %4085 = vmatprep.subr.mxu0 %v3990
    %4086 = vmatpush1.msra.mxu0 %v3989
    %4087 = vmatprep.subr.mxu0 %v3992
    %4088 = vmatpush1.msra.mxu0 %v3991
    %4089 = vmatprep.subr.mxu0 %v3994
    %4090 = vmatpush1.msra.mxu0 %v3993
    %4091 = vmatprep.subr.mxu0 %v3996
    %4092 = vmatpush1.msra.mxu0 %v3995
    %4093 = vmatprep.mubr.f32.mxu0 %v3884
    %4094 = vmatmul.mubr.f32.gmra.mrb[0].mxu0 %v3883
    %v4095 = vpop.f32.mrb[0].mxu0
    %v4096 = vadd.f32 0.0, %v4095
    %v4097 = vpop.f32.mrb[0].mxu0
    %v4098 = vadd.f32 0.0, %v4097
    %4099 = vmatprep.mubr.f32.mxu0 %v3887
    %4100 = vmatmul.mubr.f32.gmra.mrb[0].mxu0 %v3886
    %v4101 = vpop.f32.mrb[0].mxu0
    %v4102 = vadd.f32 0.0, %v4101
    %v4103 = vpop.f32.mrb[0].mxu0
    %v4104 = vadd.f32 0.0, %v4103
    %4105 = vmatprep.mubr.f32.mxu0 %v3890
    %4106 = vmatmul.mubr.f32.gmra.mrb[0].mxu0 %v3889
    %v4107 = vpop.f32.mrb[0].mxu0
    %v4108 = vadd.f32 0.0, %v4107
    %v4109 = vpop.f32.mrb[0].mxu0
    %v4110 = vadd.f32 0.0, %v4109
    %4111 = vmatprep.mubr.f32.mxu0 %v3893
    %4112 = vmatmul.mubr.f32.gmra.mrb[0].mxu0 %v3892
    %v4113 = vpop.f32.mrb[0].mxu0
    %v4114 = vadd.f32 0.0, %v4113
    %v4115 = vpop.f32.mrb[0].mxu0
    %v4116 = vadd.f32 0.0, %v4115
    %4117 = vmatprep.mubr.f32.mxu0 %v3896
    %4118 = vmatmul.mubr.f32.gmra.mrb[0].mxu0 %v3895
    %v4119 = vpop.f32.mrb[0].mxu0
    %v4120 = vadd.f32 0.0, %v4119
    %v4121 = vpop.f32.mrb[0].mxu0
    %v4122 = vadd.f32 0.0, %v4121
    %4123 = vmatprep.mubr.f32.mxu0 %v3899
    %4124 = vmatmul.mubr.f32.gmra.mrb[0].mxu0 %v3898
    %v4125 = vpop.f32.mrb[0].mxu0
    %v4126 = vadd.f32 0.0, %v4125
    %v4127 = vpop.f32.mrb[0].mxu0
    %v4128 = vadd.f32 0.0, %v4127
    %4129 = vmatprep.mubr.f32.mxu0 %v3902
    %4130 = vmatmul.mubr.f32.gmra.mrb[0].mxu0 %v3901
    %v4131 = vpop.f32.mrb[0].mxu0
    %v4132 = vadd.f32 0.0, %v4131
    %v4133 = vpop.f32.mrb[0].mxu0
    %v4134 = vadd.f32 0.0, %v4133
    %4135 = vmatprep.mubr.f32.mxu0 %v3905
    %4136 = vmatmul.mubr.f32.gmra.mrb[0].mxu0 %v3904
    %v4137 = vpop.f32.mrb[0].mxu0
    %v4138 = vadd.f32 0.0, %v4137
    %v4139 = vpop.f32.mrb[0].mxu0
    %v4140 = vadd.f32 0.0, %v4139
    %4141 = vmatprep.mubr.f32.mxu0 %v3908
    %4142 = vmatmul.mubr.f32.gmra.mrb[0].mxu0 %v3907
    %v4143 = vpop.f32.mrb[0].mxu0
    %v4144 = vadd.f32 0.0, %v4143
    %v4145 = vpop.f32.mrb[0].mxu0
    %v4146 = vadd.f32 0.0, %v4145
    %4147 = vmatprep.mubr.f32.mxu0 %v3911
    %4148 = vmatmul.mubr.f32.gmra.mrb[0].mxu0 %v3910
    %v4149 = vpop.f32.mrb[0].mxu0
    %v4150 = vadd.f32 0.0, %v4149
    %v4151 = vpop.f32.mrb[0].mxu0
    %v4152 = vadd.f32 0.0, %v4151
    %4153 = vmatprep.mubr.f32.mxu0 %v3914
    %4154 = vmatmul.mubr.f32.gmra.mrb[0].mxu0 %v3913
    %v4155 = vpop.f32.mrb[0].mxu0
    %v4156 = vadd.f32 0.0, %v4155
    %v4157 = vpop.f32.mrb[0].mxu0
    %v4158 = vadd.f32 0.0, %v4157
    %4159 = vmatprep.mubr.f32.mxu0 %v3917
    %4160 = vmatmul.mubr.f32.gmra.mrb[0].mxu0 %v3916
    %v4161 = vpop.f32.mrb[0].mxu0
    %v4162 = vadd.f32 0.0, %v4161
    %v4163 = vpop.f32.mrb[0].mxu0
    %v4164 = vadd.f32 0.0, %v4163
    %4165 = vmatprep.mubr.f32.mxu0 %v3920
    %4166 = vmatmul.mubr.f32.gmra.mrb[0].mxu0 %v3919
    %v4167 = vpop.f32.mrb[0].mxu0
    %v4168 = vadd.f32 0.0, %v4167
    %v4169 = vpop.f32.mrb[0].mxu0
    %v4170 = vadd.f32 0.0, %v4169
    %4171 = vmatprep.mubr.f32.mxu0 %v3923
    %4172 = vmatmul.mubr.f32.gmra.mrb[0].mxu0 %v3922
    %v4173 = vpop.f32.mrb[0].mxu0
    %v4174 = vadd.f32 0.0, %v4173
    %v4175 = vpop.f32.mrb[0].mxu0
    %v4176 = vadd.f32 0.0, %v4175
    %4177 = vmatprep.mubr.f32.mxu0 %v3926
    %4178 = vmatmul.mubr.f32.gmra.mrb[0].mxu0 %v3925
    %v4179 = vpop.f32.mrb[0].mxu0
    %v4180 = vadd.f32 0.0, %v4179
    %v4181 = vpop.f32.mrb[0].mxu0
    %v4182 = vadd.f32 0.0, %v4181
    %4183 = vmatprep.mubr.f32.mxu0 %v3929
    %4184 = vmatmul.mubr.f32.gmra.mrb[0].mxu0 %v3928
    %v4185 = vpop.f32.mrb[0].mxu0
    %v4186 = vadd.f32 0.0, %v4185
    %v4187 = vpop.f32.mrb[0].mxu0
    %v4188 = vadd.f32 0.0, %v4187
    %4189 = vdwg.mxu0
    %4190 = vmatprep.subr.mxu0 %v3998
    %4191 = vmatpush1.msra.mxu0 %v3997
    %4192 = vmatprep.subr.mxu0 %v4000
    %4193 = vmatpush1.msra.mxu0 %v3999
    %4194 = vmatprep.subr.mxu0 %v4002
    %4195 = vmatpush1.msra.mxu0 %v4001
    %4196 = vmatprep.subr.mxu0 %v4004
    %4197 = vmatpush1.msra.mxu0 %v4003
    %4198 = vmatprep.subr.mxu0 %v4006
    %4199 = vmatpush1.msra.mxu0 %v4005
    %4200 = vmatprep.subr.mxu0 %v4008
    %4201 = vmatpush1.msra.mxu0 %v4007
    %4202 = vmatprep.subr.mxu0 %v4010
    %4203 = vmatpush1.msra.mxu0 %v4009
    %4204 = vmatprep.subr.mxu0 %v4012
    %4205 = vmatpush1.msra.mxu0 %v4011
    %4206 = vmatprep.subr.mxu0 %v4014
    %4207 = vmatpush1.msra.mxu0 %v4013
    %4208 = vmatprep.subr.mxu0 %v4016
    %4209 = vmatpush1.msra.mxu0 %v4015
    %4210 = vmatprep.subr.mxu0 %v4018
    %4211 = vmatpush1.msra.mxu0 %v4017
    %4212 = vmatprep.subr.mxu0 %v4020
    %4213 = vmatpush1.msra.mxu0 %v4019
    %4214 = vmatprep.subr.mxu0 %v4022
    %4215 = vmatpush1.msra.mxu0 %v4021
    %4216 = vmatprep.subr.mxu0 %v4024
    %4217 = vmatpush1.msra.mxu0 %v4023
    %4218 = vmatprep.subr.mxu0 %v4026
    %4219 = vmatpush1.msra.mxu0 %v4025
    %4220 = vmatprep.subr.mxu0 %v4028
    %4221 = vmatpush1.msra.mxu0 %v4027
    %4222 = vmatprep.subr.mxu0 0.0
    %4223 = vmatpush1.msra.mxu0 0.0
    %4224 = vmatprep.subr.mxu0 0.0
    %4225 = vmatpush1.msra.mxu0 0.0
    %4226 = vmatprep.subr.mxu0 0.0
    %4227 = vmatpush1.msra.mxu0 0.0
    %4228 = vmatprep.subr.mxu0 0.0
    %4229 = vmatpush1.msra.mxu0 0.0
    %4230 = vmatprep.subr.mxu0 0.0
    %4231 = vmatpush1.msra.mxu0 0.0
    %4232 = vmatprep.subr.mxu0 0.0
    %4233 = vmatpush1.msra.mxu0 0.0
    %4234 = vmatprep.subr.mxu0 0.0
    %4235 = vmatpush1.msra.mxu0 0.0
    %4236 = vmatprep.subr.mxu0 0.0
    %4237 = vmatpush1.msra.mxu0 0.0
    %4238 = vmatprep.subr.mxu0 0.0
    %4239 = vmatpush1.msra.mxu0 0.0
    %4240 = vmatprep.subr.mxu0 0.0
    %4241 = vmatpush1.msra.mxu0 0.0
    %4242 = vmatprep.subr.mxu0 0.0
    %4243 = vmatpush1.msra.mxu0 0.0
    %4244 = vmatprep.subr.mxu0 0.0
    %4245 = vmatpush1.msra.mxu0 0.0
    %4246 = vmatprep.subr.mxu0 0.0
    %4247 = vmatpush1.msra.mxu0 0.0
    %4248 = vmatprep.subr.mxu0 0.0
    %4249 = vmatpush1.msra.mxu0 0.0
    %4250 = vmatprep.subr.mxu0 0.0
    %4251 = vmatpush1.msra.mxu0 0.0
    %4252 = vmatprep.subr.mxu0 0.0
    %4253 = vmatpush1.msra.mxu0 0.0
    %4254 = vmatprep.mubr.f32.mxu0 0.0
    %4255 = vmatmul.mubr.f32.gmra.mrb[0].mxu0 %v3885
    %v4256 = vpop.f32.mrb[0].mxu0
    %v4257 = vadd.f32 %v4096, %v4256
    %v4258 = vpop.f32.mrb[0].mxu0
    %v4259 = vadd.f32 %v4098, %v4258
    %4260 = vmatprep.mubr.f32.mxu0 0.0
    %4261 = vmatmul.mubr.f32.gmra.mrb[0].mxu0 %v3888
    %v4262 = vpop.f32.mrb[0].mxu0
    %v4263 = vadd.f32 %v4102, %v4262
    %v4264 = vpop.f32.mrb[0].mxu0
    %v4265 = vadd.f32 %v4104, %v4264
    %4266 = vmatprep.mubr.f32.mxu0 0.0
    %4267 = vmatmul.mubr.f32.gmra.mrb[0].mxu0 %v3891
    %v4268 = vpop.f32.mrb[0].mxu0
    %v4269 = vadd.f32 %v4108, %v4268
    %v4270 = vpop.f32.mrb[0].mxu0
    %v4271 = vadd.f32 %v4110, %v4270
    %4272 = vmatprep.mubr.f32.mxu0 0.0
    %4273 = vmatmul.mubr.f32.gmra.mrb[0].mxu0 %v3894
    %v4274 = vpop.f32.mrb[0].mxu0
    %v4275 = vadd.f32 %v4114, %v4274
    %v4276 = vpop.f32.mrb[0].mxu0
    %v4277 = vadd.f32 %v4116, %v4276
    %4278 = vmatprep.mubr.f32.mxu0 0.0
    %4279 = vmatmul.mubr.f32.gmra.mrb[0].mxu0 %v3897
    %v4280 = vpop.f32.mrb[0].mxu0
    %v4281 = vadd.f32 %v4120, %v4280
    %v4282 = vpop.f32.mrb[0].mxu0
    %v4283 = vadd.f32 %v4122, %v4282
    %4284 = vmatprep.mubr.f32.mxu0 0.0
    %4285 = vmatmul.mubr.f32.gmra.mrb[0].mxu0 %v3900
    %v4286 = vpop.f32.mrb[0].mxu0
    %v4287 = vadd.f32 %v4126, %v4286
    %v4288 = vpop.f32.mrb[0].mxu0
    %v4289 = vadd.f32 %v4128, %v4288
    %4290 = vmatprep.mubr.f32.mxu0 0.0
    %4291 = vmatmul.mubr.f32.gmra.mrb[0].mxu0 %v3903
    %v4292 = vpop.f32.mrb[0].mxu0
    %v4293 = vadd.f32 %v4132, %v4292
    %v4294 = vpop.f32.mrb[0].mxu0
    %v4295 = vadd.f32 %v4134, %v4294
    %4296 = vmatprep.mubr.f32.mxu0 0.0
    %4297 = vmatmul.mubr.f32.gmra.mrb[0].mxu0 %v3906
    %v4298 = vpop.f32.mrb[0].mxu0
    %v4299 = vadd.f32 %v4138, %v4298
    %v4300 = vpop.f32.mrb[0].mxu0
    %v4301 = vadd.f32 %v4140, %v4300
    %4302 = vmatprep.mubr.f32.mxu0 0.0
    %4303 = vmatmul.mubr.f32.gmra.mrb[0].mxu0 %v3909
    %v4304 = vpop.f32.mrb[0].mxu0
    %v4305 = vadd.f32 %v4144, %v4304
    %v4306 = vpop.f32.mrb[0].mxu0
    %v4307 = vadd.f32 %v4146, %v4306
    %4308 = vmatprep.mubr.f32.mxu0 0.0
    %4309 = vmatmul.mubr.f32.gmra.mrb[0].mxu0 %v3912
    %v4310 = vpop.f32.mrb[0].mxu0
    %v4311 = vadd.f32 %v4150, %v4310
    %v4312 = vpop.f32.mrb[0].mxu0
    %v4313 = vadd.f32 %v4152, %v4312
    %4314 = vmatprep.mubr.f32.mxu0 0.0
    %4315 = vmatmul.mubr.f32.gmra.mrb[0].mxu0 %v3915
    %v4316 = vpop.f32.mrb[0].mxu0
    %v4317 = vadd.f32 %v4156, %v4316
    %v4318 = vpop.f32.mrb[0].mxu0
    %v4319 = vadd.f32 %v4158, %v4318
    %4320 = vmatprep.mubr.f32.mxu0 0.0
    %4321 = vmatmul.mubr.f32.gmra.mrb[0].mxu0 %v3918
    %v4322 = vpop.f32.mrb[0].mxu0
    %v4323 = vadd.f32 %v4162, %v4322
    %v4324 = vpop.f32.mrb[0].mxu0
    %v4325 = vadd.f32 %v4164, %v4324
    %4326 = vmatprep.mubr.f32.mxu0 0.0
    %4327 = vmatmul.mubr.f32.gmra.mrb[0].mxu0 %v3921
    %v4328 = vpop.f32.mrb[0].mxu0
    %v4329 = vadd.f32 %v4168, %v4328
    %v4330 = vpop.f32.mrb[0].mxu0
    %v4331 = vadd.f32 %v4170, %v4330
    %4332 = vmatprep.mubr.f32.mxu0 0.0
    %4333 = vmatmul.mubr.f32.gmra.mrb[0].mxu0 %v3924
    %v4334 = vpop.f32.mrb[0].mxu0
    %v4335 = vadd.f32 %v4174, %v4334
    %v4336 = vpop.f32.mrb[0].mxu0
    %v4337 = vadd.f32 %v4176, %v4336
    %4338 = vmatprep.mubr.f32.mxu0 0.0
    %4339 = vmatmul.mubr.f32.gmra.mrb[0].mxu0 %v3927
    %v4340 = vpop.f32.mrb[0].mxu0
    %v4341 = vadd.f32 %v4180, %v4340
    %v4342 = vpop.f32.mrb[0].mxu0
    %v4343 = vadd.f32 %v4182, %v4342
    %4344 = vmatprep.mubr.f32.mxu0 0.0
    %4345 = vmatmul.mubr.f32.gmra.mrb[0].mxu0 %v3930
    %v4346 = vpop.f32.mrb[0].mxu0
    %v4347 = vadd.f32 %v4186, %v4346
    %v4348 = vpop.f32.mrb[0].mxu0
    %v4349 = vadd.f32 %v4188, %v4348
    %4350 = vdwg.mxu0
    %v4351 = vadd.f32 %v4257, %v4263
    %v4352 = vadd.f32 %v4351, %v4269
    %v4353 = vadd.f32 %v4352, %v4275
    %v4354 = vadd.f32 %v4353, %v4281
    %v4355 = vadd.f32 %v4354, %v4287
    %v4356 = vadd.f32 %v4355, %v4293
    %v4357 = vadd.f32 %v4356, %v4299
    %v4358 = vadd.f32 %v4357, %v4305
    %v4359 = vadd.f32 %v4358, %v4311
    %v4360 = vadd.f32 %v4359, %v4317
    %v4361 = vadd.f32 %v4360, %v4323
    %v4362 = vadd.f32 %v4361, %v4329
    %v4363 = vadd.f32 %v4362, %v4335
    %v4364 = vadd.f32 %v4363, %v4341
    %v4365 = vadd.f32 %v4364, %v4347
    %v4366 = vrot.slane %v4365, 4
    %v4367 = vadd.f32 %v4365, %v4366
    %v4368 = vrot.slane %v4367, 2
    %v4369 = vadd.f32 %v4367, %v4368
    %v4370 = vrot.slane %v4369, 1
    %v4371 = vadd.f32 %v4369, %v4370
    %v4372 = vadd.f32 %v4259, %v4265
    %v4373 = vadd.f32 %v4372, %v4271
    %v4374 = vadd.f32 %v4373, %v4277
    %v4375 = vadd.f32 %v4374, %v4283
    %v4376 = vadd.f32 %v4375, %v4289
    %v4377 = vadd.f32 %v4376, %v4295
    %v4378 = vadd.f32 %v4377, %v4301
    %v4379 = vadd.f32 %v4378, %v4307
    %v4380 = vadd.f32 %v4379, %v4313
    %v4381 = vadd.f32 %v4380, %v4319
    %v4382 = vadd.f32 %v4381, %v4325
    %v4383 = vadd.f32 %v4382, %v4331
    %v4384 = vadd.f32 %v4383, %v4337
    %v4385 = vadd.f32 %v4384, %v4343
    %v4386 = vadd.f32 %v4385, %v4349
    %v4387 = vrot.slane %v4386, 4
    %v4388 = vadd.f32 %v4386, %v4387
    %v4389 = vrot.slane %v4388, 2
    %v4390 = vadd.f32 %v4388, %v4389
    %v4391 = vrot.slane %v4390, 1
    %v4392 = vadd.f32 %v4390, %v4391
    %v4393 = vmul.f32 %v4371, 0.0078125
    %v4394 = vmul.f32 %v4392, 0.0078125
    %v4395 = vsub.f32 %v4257, %v4393
    %v4396 = vsub.f32 %v4259, %v4394
    %v4397 = vsub.f32 %v4263, %v4393
    %v4398 = vsub.f32 %v4265, %v4394
    %v4399 = vsub.f32 %v4269, %v4393
    %v4400 = vsub.f32 %v4271, %v4394
    %v4401 = vsub.f32 %v4275, %v4393
    %v4402 = vsub.f32 %v4277, %v4394
    %v4403 = vsub.f32 %v4281, %v4393
    %v4404 = vsub.f32 %v4283, %v4394
    %v4405 = vsub.f32 %v4287, %v4393
    %v4406 = vsub.f32 %v4289, %v4394
    %v4407 = vsub.f32 %v4293, %v4393
    %v4408 = vsub.f32 %v4295, %v4394
    %v4409 = vsub.f32 %v4299, %v4393
    %v4410 = vsub.f32 %v4301, %v4394
    %v4411 = vsub.f32 %v4305, %v4393
    %v4412 = vsub.f32 %v4307, %v4394
    %v4413 = vsub.f32 %v4311, %v4393
    %v4414 = vsub.f32 %v4313, %v4394
    %v4415 = vsub.f32 %v4317, %v4393
    %v4416 = vsub.f32 %v4319, %v4394
    %v4417 = vsub.f32 %v4323, %v4393
    %v4418 = vsub.f32 %v4325, %v4394
    %v4419 = vsub.f32 %v4329, %v4393
    %v4420 = vsub.f32 %v4331, %v4394
    %v4421 = vsub.f32 %v4335, %v4393
    %v4422 = vsub.f32 %v4337, %v4394
    %v4423 = vsub.f32 %v4341, %v4393
    %v4424 = vsub.f32 %v4343, %v4394
    %v4425 = vsub.f32 %v4347, %v4393
    %v4426 = vsub.f32 %v4349, %v4394
    %v4427 = vmul.f32 %v4395, %v4395
    %v4428 = vmul.f32 %v4396, %v4396
    %v4429 = vmul.f32 %v4397, %v4397
    %v4430 = vmul.f32 %v4398, %v4398
    %v4431 = vmul.f32 %v4399, %v4399
    %v4432 = vmul.f32 %v4400, %v4400
    %v4433 = vmul.f32 %v4401, %v4401
    %v4434 = vmul.f32 %v4402, %v4402
    %v4435 = vmul.f32 %v4403, %v4403
    %v4436 = vmul.f32 %v4404, %v4404
    %v4437 = vmul.f32 %v4405, %v4405
    %v4438 = vmul.f32 %v4406, %v4406
    %v4439 = vmul.f32 %v4407, %v4407
    %v4440 = vmul.f32 %v4408, %v4408
    %v4441 = vmul.f32 %v4409, %v4409
    %v4442 = vmul.f32 %v4410, %v4410
    %v4443 = vmul.f32 %v4411, %v4411
    %v4444 = vmul.f32 %v4412, %v4412
    %v4445 = vmul.f32 %v4413, %v4413
    %v4446 = vmul.f32 %v4414, %v4414
    %v4447 = vmul.f32 %v4415, %v4415
    %v4448 = vmul.f32 %v4416, %v4416
    %v4449 = vmul.f32 %v4417, %v4417
    %v4450 = vmul.f32 %v4418, %v4418
    %v4451 = vmul.f32 %v4419, %v4419
    %v4452 = vmul.f32 %v4420, %v4420
    %v4453 = vmul.f32 %v4421, %v4421
    %v4454 = vmul.f32 %v4422, %v4422
    %v4455 = vmul.f32 %v4423, %v4423
    %v4456 = vmul.f32 %v4424, %v4424
    %v4457 = vmul.f32 %v4425, %v4425
    %v4458 = vmul.f32 %v4426, %v4426
    %v4459 = vadd.f32 %v4427, %v4429
    %v4460 = vadd.f32 %v4459, %v4431
    %v4461 = vadd.f32 %v4460, %v4433
    %v4462 = vadd.f32 %v4461, %v4435
    %v4463 = vadd.f32 %v4462, %v4437
    %v4464 = vadd.f32 %v4463, %v4439
    %v4465 = vadd.f32 %v4464, %v4441
    %v4466 = vadd.f32 %v4465, %v4443
    %v4467 = vadd.f32 %v4466, %v4445
    %v4468 = vadd.f32 %v4467, %v4447
    %v4469 = vadd.f32 %v4468, %v4449
    %v4470 = vadd.f32 %v4469, %v4451
    %v4471 = vadd.f32 %v4470, %v4453
    %v4472 = vadd.f32 %v4471, %v4455
    %v4473 = vadd.f32 %v4472, %v4457
    %v4474 = vrot.slane %v4473, 4
    %v4475 = vadd.f32 %v4473, %v4474
    %v4476 = vrot.slane %v4475, 2
    %v4477 = vadd.f32 %v4475, %v4476
    %v4478 = vrot.slane %v4477, 1
    %v4479 = vadd.f32 %v4477, %v4478
    %v4480 = vadd.f32 %v4428, %v4430
    %v4481 = vadd.f32 %v4480, %v4432
    %v4482 = vadd.f32 %v4481, %v4434
    %v4483 = vadd.f32 %v4482, %v4436
    %v4484 = vadd.f32 %v4483, %v4438
    %v4485 = vadd.f32 %v4484, %v4440
    %v4486 = vadd.f32 %v4485, %v4442
    %v4487 = vadd.f32 %v4486, %v4444
    %v4488 = vadd.f32 %v4487, %v4446
    %v4489 = vadd.f32 %v4488, %v4448
    %v4490 = vadd.f32 %v4489, %v4450
    %v4491 = vadd.f32 %v4490, %v4452
    %v4492 = vadd.f32 %v4491, %v4454
    %v4493 = vadd.f32 %v4492, %v4456
    %v4494 = vadd.f32 %v4493, %v4458
    %v4495 = vrot.slane %v4494, 4
    %v4496 = vadd.f32 %v4494, %v4495
    %v4497 = vrot.slane %v4496, 2
    %v4498 = vadd.f32 %v4496, %v4497
    %v4499 = vrot.slane %v4498, 1
    %v4500 = vadd.f32 %v4498, %v4499
    %v4501 = vmul.f32 %v4479, 0.0078125
    %v4502 = vmul.f32 %v4500, 0.0078125
    %v4503 = vadd.f32 %v4501, 1e-05
    %v4504 = vadd.f32 %v4502, 1e-05
    %v4505 = vrsqrt.pop %v4503
    %v4506 = vrsqrt.pop %v4504
    %v4507 = vmul.f32 %v3931, %v4505
    %v4508 = vmul.f32 %v3932, %v4506
    %v4509 = vlaneseq
    %v4510 = vshrl.u32 %v4509, 7
    %v4511 = vsub.s32 0, %v4510
    %v4512 = vrot.slane %v4507, %v4511
    %v4513 = vlaneseq
    %v4514 = vshrl.u32 %v4513, 7
    %v4515 = vsub.s32 0, %v4514
    %v4516 = vrot.slane %v4508, %v4515
    %v4517 = vmul.f32 %v4395, %v4512
    %v4518 = vmul.f32 %v4396, %v4516
    %v4519 = vmul.f32 %v4397, %v4512
    %v4520 = vmul.f32 %v4398, %v4516
    %v4521 = vmul.f32 %v4399, %v4512
    %v4522 = vmul.f32 %v4400, %v4516
    %v4523 = vmul.f32 %v4401, %v4512
    %v4524 = vmul.f32 %v4402, %v4516
    %v4525 = vmul.f32 %v4403, %v4512
    %v4526 = vmul.f32 %v4404, %v4516
    %v4527 = vmul.f32 %v4405, %v4512
    %v4528 = vmul.f32 %v4406, %v4516
    %v4529 = vmul.f32 %v4407, %v4512
    %v4530 = vmul.f32 %v4408, %v4516
    %v4531 = vmul.f32 %v4409, %v4512
    %v4532 = vmul.f32 %v4410, %v4516
    %v4533 = vmul.f32 %v4411, %v4512
    %v4534 = vmul.f32 %v4412, %v4516
    %v4535 = vmul.f32 %v4413, %v4512
    %v4536 = vmul.f32 %v4414, %v4516
    %v4537 = vmul.f32 %v4415, %v4512
    %v4538 = vmul.f32 %v4416, %v4516
    %v4539 = vmul.f32 %v4417, %v4512
    %v4540 = vmul.f32 %v4418, %v4516
    %v4541 = vmul.f32 %v4419, %v4512
    %v4542 = vmul.f32 %v4420, %v4516
    %v4543 = vmul.f32 %v4421, %v4512
    %v4544 = vmul.f32 %v4422, %v4516
    %v4545 = vmul.f32 %v4423, %v4512
    %v4546 = vmul.f32 %v4424, %v4516
    %v4547 = vmul.f32 %v4425, %v4512
    %v4548 = vmul.f32 %v4426, %v4516
    %v4549 = vlaneseq
    %v4550 = vshrl.u32 %v4549, 7
    %v4551 = vsub.s32 1, %v4550
    %v4552 = vrot.slane %v3931, %v4551
    %v4553 = vlaneseq
    %v4554 = vshrl.u32 %v4553, 7
    %v4555 = vsub.s32 1, %v4554
    %v4556 = vrot.slane %v3932, %v4555
    %v4557 = vadd.f32 %v4517, %v4552
    %v4558 = vadd.f32 %v4518, %v4556
    %v4559 = vadd.f32 %v4519, %v4552
    %v4560 = vadd.f32 %v4520, %v4556
    %v4561 = vadd.f32 %v4521, %v4552
    %v4562 = vadd.f32 %v4522, %v4556
    %v4563 = vadd.f32 %v4523, %v4552
    %v4564 = vadd.f32 %v4524, %v4556
    %v4565 = vadd.f32 %v4525, %v4552
    %v4566 = vadd.f32 %v4526, %v4556
    %v4567 = vadd.f32 %v4527, %v4552
    %v4568 = vadd.f32 %v4528, %v4556
    %v4569 = vadd.f32 %v4529, %v4552
    %v4570 = vadd.f32 %v4530, %v4556
    %v4571 = vadd.f32 %v4531, %v4552
    %v4572 = vadd.f32 %v4532, %v4556
    %v4573 = vadd.f32 %v4533, %v4552
    %v4574 = vadd.f32 %v4534, %v4556
    %v4575 = vadd.f32 %v4535, %v4552
    %v4576 = vadd.f32 %v4536, %v4556
    %v4577 = vadd.f32 %v4537, %v4552
    %v4578 = vadd.f32 %v4538, %v4556
    %v4579 = vadd.f32 %v4539, %v4552
    %v4580 = vadd.f32 %v4540, %v4556
    %v4581 = vadd.f32 %v4541, %v4552
    %v4582 = vadd.f32 %v4542, %v4556
    %v4583 = vadd.f32 %v4543, %v4552
    %v4584 = vadd.f32 %v4544, %v4556
    %v4585 = vadd.f32 %v4545, %v4552
    %v4586 = vadd.f32 %v4546, %v4556
    %v4587 = vadd.f32 %v4547, %v4552
    %v4588 = vadd.f32 %v4548, %v4556
    %vm4589 = vcmp.ge.f32.partialorder %v4557, 0.0
    %vm4590 = vcmp.ge.f32.partialorder %v4558, 0.0
    %vm4591 = vcmp.ge.f32.partialorder %v4559, 0.0
    %vm4592 = vcmp.ge.f32.partialorder %v4560, 0.0
    %vm4593 = vcmp.ge.f32.partialorder %v4561, 0.0
    %vm4594 = vcmp.ge.f32.partialorder %v4562, 0.0
    %vm4595 = vcmp.ge.f32.partialorder %v4563, 0.0
    %vm4596 = vcmp.ge.f32.partialorder %v4564, 0.0
    %vm4597 = vcmp.ge.f32.partialorder %v4565, 0.0
    %vm4598 = vcmp.ge.f32.partialorder %v4566, 0.0
    %vm4599 = vcmp.ge.f32.partialorder %v4567, 0.0
    %vm4600 = vcmp.ge.f32.partialorder %v4568, 0.0
    %vm4601 = vcmp.ge.f32.partialorder %v4569, 0.0
    %vm4602 = vcmp.ge.f32.partialorder %v4570, 0.0
    %vm4603 = vcmp.ge.f32.partialorder %v4571, 0.0
    %vm4604 = vcmp.ge.f32.partialorder %v4572, 0.0
    %vm4605 = vcmp.ge.f32.partialorder %v4573, 0.0
    %vm4606 = vcmp.ge.f32.partialorder %v4574, 0.0
    %vm4607 = vcmp.ge.f32.partialorder %v4575, 0.0
    %vm4608 = vcmp.ge.f32.partialorder %v4576, 0.0
    %vm4609 = vcmp.ge.f32.partialorder %v4577, 0.0
    %vm4610 = vcmp.ge.f32.partialorder %v4578, 0.0
    %vm4611 = vcmp.ge.f32.partialorder %v4579, 0.0
    %vm4612 = vcmp.ge.f32.partialorder %v4580, 0.0
    %vm4613 = vcmp.ge.f32.partialorder %v4581, 0.0
    %vm4614 = vcmp.ge.f32.partialorder %v4582, 0.0
    %vm4615 = vcmp.ge.f32.partialorder %v4583, 0.0
    %vm4616 = vcmp.ge.f32.partialorder %v4584, 0.0
    %vm4617 = vcmp.ge.f32.partialorder %v4585, 0.0
    %vm4618 = vcmp.ge.f32.partialorder %v4586, 0.0
    %vm4619 = vcmp.ge.f32.partialorder %v4587, 0.0
    %vm4620 = vcmp.ge.f32.partialorder %v4588, 0.0
    %v4621 = vmul.f32 %v4557, 0.2
    %v4622 = vmul.f32 %v4558, 0.2
    %v4623 = vmul.f32 %v4559, 0.2
    %v4624 = vmul.f32 %v4560, 0.2
    %v4625 = vmul.f32 %v4561, 0.2
    %v4626 = vmul.f32 %v4562, 0.2
    %v4627 = vmul.f32 %v4563, 0.2
    %v4628 = vmul.f32 %v4564, 0.2
    %v4629 = vmul.f32 %v4565, 0.2
    %v4630 = vmul.f32 %v4566, 0.2
    %v4631 = vmul.f32 %v4567, 0.2
    %v4632 = vmul.f32 %v4568, 0.2
    %v4633 = vmul.f32 %v4569, 0.2
    %v4634 = vmul.f32 %v4570, 0.2
    %v4635 = vmul.f32 %v4571, 0.2
    %v4636 = vmul.f32 %v4572, 0.2
    %v4637 = vmul.f32 %v4573, 0.2
    %v4638 = vmul.f32 %v4574, 0.2
    %v4639 = vmul.f32 %v4575, 0.2
    %v4640 = vmul.f32 %v4576, 0.2
    %v4641 = vmul.f32 %v4577, 0.2
    %v4642 = vmul.f32 %v4578, 0.2
    %v4643 = vmul.f32 %v4579, 0.2
    %v4644 = vmul.f32 %v4580, 0.2
    %v4645 = vmul.f32 %v4581, 0.2
    %v4646 = vmul.f32 %v4582, 0.2
    %v4647 = vmul.f32 %v4583, 0.2
    %v4648 = vmul.f32 %v4584, 0.2
    %v4649 = vmul.f32 %v4585, 0.2
    %v4650 = vmul.f32 %v4586, 0.2
    %v4651 = vmul.f32 %v4587, 0.2
    %v4652 = vmul.f32 %v4588, 0.2
    %v4653 = vsel %vm4589, %v4557, %v4621
    %v4654 = vsel %vm4590, %v4558, %v4622
    %v4655 = vsel %vm4591, %v4559, %v4623
    %v4656 = vsel %vm4592, %v4560, %v4624
    %v4657 = vsel %vm4593, %v4561, %v4625
    %v4658 = vsel %vm4594, %v4562, %v4626
    %v4659 = vsel %vm4595, %v4563, %v4627
    %v4660 = vsel %vm4596, %v4564, %v4628
    %v4661 = vsel %vm4597, %v4565, %v4629
    %v4662 = vsel %vm4598, %v4566, %v4630
    %v4663 = vsel %vm4599, %v4567, %v4631
    %v4664 = vsel %vm4600, %v4568, %v4632
    %v4665 = vsel %vm4601, %v4569, %v4633
    %v4666 = vsel %vm4602, %v4570, %v4634
    %v4667 = vsel %vm4603, %v4571, %v4635
    %v4668 = vsel %vm4604, %v4572, %v4636
    %v4669 = vsel %vm4605, %v4573, %v4637
    %v4670 = vsel %vm4606, %v4574, %v4638
    %v4671 = vsel %vm4607, %v4575, %v4639
    %v4672 = vsel %vm4608, %v4576, %v4640
    %v4673 = vsel %vm4609, %v4577, %v4641
    %v4674 = vsel %vm4610, %v4578, %v4642
    %v4675 = vsel %vm4611, %v4579, %v4643
    %v4676 = vsel %vm4612, %v4580, %v4644
    %v4677 = vsel %vm4613, %v4581, %v4645
    %v4678 = vsel %vm4614, %v4582, %v4646
    %v4679 = vsel %vm4615, %v4583, %v4647
    %v4680 = vsel %vm4616, %v4584, %v4648
    %v4681 = vsel %vm4617, %v4585, %v4649
    %v4682 = vsel %vm4618, %v4586, %v4650
    %v4683 = vsel %vm4619, %v4587, %v4651
    %v4684 = vsel %vm4620, %v4588, %v4652
    %v4685 = vld [vmem:[#allocation14] sm:$0xff]
    %v4686 = vld [vmem:[#allocation14 + $0x8] sm:$0xff]
    %v4687 = vld [vmem:[#allocation14 + $0x10] sm:$0xff]
    %v4688 = vld [vmem:[#allocation14 + $0x18] sm:$0xff]
    %v4689 = vld [vmem:[#allocation14 + $0x20] sm:$0xff]
    %v4690 = vld [vmem:[#allocation14 + $0x28] sm:$0xff]
    %v4691 = vld [vmem:[#allocation14 + $0x30] sm:$0xff]
    %v4692 = vld [vmem:[#allocation14 + $0x38] sm:$0xff]
    %v4693 = vld [vmem:[#allocation14 + $0x40] sm:$0xff]
    %v4694 = vld [vmem:[#allocation14 + $0x48] sm:$0xff]
    %v4695 = vld [vmem:[#allocation14 + $0x50] sm:$0xff]
    %v4696 = vld [vmem:[#allocation14 + $0x58] sm:$0xff]
    %v4697 = vld [vmem:[#allocation14 + $0x60] sm:$0xff]
    %v4698 = vld [vmem:[#allocation14 + $0x68] sm:$0xff]
    %v4699 = vld [vmem:[#allocation14 + $0x70] sm:$0xff]
    %v4700 = vld [vmem:[#allocation14 + $0x78] sm:$0xff]
    %v4701 = vld [vmem:[#allocation14 + $0x80] sm:$0xff]
    %v4702 = vld [vmem:[#allocation14 + $0x88] sm:$0xff]
    %v4703 = vld [vmem:[#allocation14 + $0x90] sm:$0xff]
    %v4704 = vld [vmem:[#allocation14 + $0x98] sm:$0xff]
    %v4705 = vld [vmem:[#allocation14 + $0xa0] sm:$0xff]
    %v4706 = vld [vmem:[#allocation14 + $0xa8] sm:$0xff]
    %v4707 = vld [vmem:[#allocation14 + $0xb0] sm:$0xff]
    %v4708 = vld [vmem:[#allocation14 + $0xb8] sm:$0xff]
    %v4709 = vld [vmem:[#allocation14 + $0xc0] sm:$0xff]
    %v4710 = vld [vmem:[#allocation14 + $0xc8] sm:$0xff]
    %v4711 = vld [vmem:[#allocation14 + $0xd0] sm:$0xff]
    %v4712 = vld [vmem:[#allocation14 + $0xd8] sm:$0xff]
    %v4713 = vld [vmem:[#allocation14 + $0xe0] sm:$0xff]
    %v4714 = vld [vmem:[#allocation14 + $0xe8] sm:$0xff]
    %v4715 = vld [vmem:[#allocation14 + $0xf0] sm:$0xff]
    %v4716 = vld [vmem:[#allocation14 + $0xf8] sm:$0xff]
    %v4717 = vld [vmem:[#allocation14 + $0x100] sm:$0xff]
    %v4718 = vld [vmem:[#allocation14 + $0x108] sm:$0xff]
    %v4719 = vld [vmem:[#allocation14 + $0x110] sm:$0xff]
    %v4720 = vld [vmem:[#allocation14 + $0x118] sm:$0xff]
    %v4721 = vld [vmem:[#allocation14 + $0x120] sm:$0xff]
    %v4722 = vld [vmem:[#allocation14 + $0x128] sm:$0xff]
    %v4723 = vld [vmem:[#allocation14 + $0x130] sm:$0xff]
    %v4724 = vld [vmem:[#allocation14 + $0x138] sm:$0xff]
    %v4725 = vld [vmem:[#allocation14 + $0x140] sm:$0xff]
    %v4726 = vld [vmem:[#allocation14 + $0x148] sm:$0xff]
    %v4727 = vld [vmem:[#allocation14 + $0x150] sm:$0xff]
    %v4728 = vld [vmem:[#allocation14 + $0x158] sm:$0xff]
    %v4729 = vld [vmem:[#allocation14 + $0x160] sm:$0xff]
    %v4730 = vld [vmem:[#allocation14 + $0x168] sm:$0xff]
    %v4731 = vld [vmem:[#allocation14 + $0x170] sm:$0xff]
    %v4732 = vld [vmem:[#allocation14 + $0x178] sm:$0xff]
    %v4733 = vld [vmem:[#allocation14 + $0x180] sm:$0xff]
    %v4734 = vld [vmem:[#allocation14 + $0x188] sm:$0xff]
    %v4735 = vld [vmem:[#allocation14 + $0x190] sm:$0xff]
    %v4736 = vld [vmem:[#allocation14 + $0x198] sm:$0xff]
    %v4737 = vld [vmem:[#allocation14 + $0x1a0] sm:$0xff]
    %v4738 = vld [vmem:[#allocation14 + $0x1a8] sm:$0xff]
    %v4739 = vld [vmem:[#allocation14 + $0x1b0] sm:$0xff]
    %v4740 = vld [vmem:[#allocation14 + $0x1b8] sm:$0xff]
    %v4741 = vld [vmem:[#allocation14 + $0x1c0] sm:$0xff]
    %v4742 = vld [vmem:[#allocation14 + $0x1c8] sm:$0xff]
    %v4743 = vld [vmem:[#allocation14 + $0x1d0] sm:$0xff]
    %v4744 = vld [vmem:[#allocation14 + $0x1d8] sm:$0xff]
    %v4745 = vld [vmem:[#allocation14 + $0x1e0] sm:$0xff]
    %v4746 = vld [vmem:[#allocation14 + $0x1e8] sm:$0xff]
    %v4747 = vld [vmem:[#allocation14 + $0x1f0] sm:$0xff]
    %v4748 = vld [vmem:[#allocation14 + $0x1f8] sm:$0xff]
    %v4749 = vlaneseq
    %v4750 = vshrl.u32 %v4749, 7
    %v4751 = vsub.s32 2, %v4750
    %v4752 = vrot.slane %v3931, %v4751
    %v4753 = vlaneseq
    %v4754 = vshrl.u32 %v4753, 7
    %v4755 = vsub.s32 2, %v4754
    %v4756 = vrot.slane %v3932, %v4755
    %4757 = vmatprep.subr.mxu0 %v4686
    %4758 = vmatpush1.msra.mxu0 %v4685
    %4759 = vmatprep.subr.mxu0 %v4688
    %4760 = vmatpush1.msra.mxu0 %v4687
    %4761 = vmatprep.subr.mxu0 %v4690
    %4762 = vmatpush1.msra.mxu0 %v4689
    %4763 = vmatprep.subr.mxu0 %v4692
    %4764 = vmatpush1.msra.mxu0 %v4691
    %4765 = vmatprep.subr.mxu0 %v4694
    %4766 = vmatpush1.msra.mxu0 %v4693
    %4767 = vmatprep.subr.mxu0 %v4696
    %4768 = vmatpush1.msra.mxu0 %v4695
    %4769 = vmatprep.subr.mxu0 %v4698
    %4770 = vmatpush1.msra.mxu0 %v4697
    %4771 = vmatprep.subr.mxu0 %v4700
    %4772 = vmatpush1.msra.mxu0 %v4699
    %4773 = vmatprep.subr.mxu0 %v4702
    %4774 = vmatpush1.msra.mxu0 %v4701
    %4775 = vmatprep.subr.mxu0 %v4704
    %4776 = vmatpush1.msra.mxu0 %v4703
    %4777 = vmatprep.subr.mxu0 %v4706
    %4778 = vmatpush1.msra.mxu0 %v4705
    %4779 = vmatprep.subr.mxu0 %v4708
    %4780 = vmatpush1.msra.mxu0 %v4707
    %4781 = vmatprep.subr.mxu0 %v4710
    %4782 = vmatpush1.msra.mxu0 %v4709
    %4783 = vmatprep.subr.mxu0 %v4712
    %4784 = vmatpush1.msra.mxu0 %v4711
    %4785 = vmatprep.subr.mxu0 %v4714
    %4786 = vmatpush1.msra.mxu0 %v4713
    %4787 = vmatprep.subr.mxu0 %v4716
    %4788 = vmatpush1.msra.mxu0 %v4715
    %4789 = vmatprep.subr.mxu0 %v4718
    %4790 = vmatpush1.msra.mxu0 %v4717
    %4791 = vmatprep.subr.mxu0 %v4720
    %4792 = vmatpush1.msra.mxu0 %v4719
    %4793 = vmatprep.subr.mxu0 %v4722
    %4794 = vmatpush1.msra.mxu0 %v4721
    %4795 = vmatprep.subr.mxu0 %v4724
    %4796 = vmatpush1.msra.mxu0 %v4723
    %4797 = vmatprep.subr.mxu0 %v4726
    %4798 = vmatpush1.msra.mxu0 %v4725
    %4799 = vmatprep.subr.mxu0 %v4728
    %4800 = vmatpush1.msra.mxu0 %v4727
    %4801 = vmatprep.subr.mxu0 %v4730
    %4802 = vmatpush1.msra.mxu0 %v4729
    %4803 = vmatprep.subr.mxu0 %v4732
    %4804 = vmatpush1.msra.mxu0 %v4731
    %4805 = vmatprep.subr.mxu0 %v4734
    %4806 = vmatpush1.msra.mxu0 %v4733
    %4807 = vmatprep.subr.mxu0 %v4736
    %4808 = vmatpush1.msra.mxu0 %v4735
    %4809 = vmatprep.subr.mxu0 %v4738
    %4810 = vmatpush1.msra.mxu0 %v4737
    %4811 = vmatprep.subr.mxu0 %v4740
    %4812 = vmatpush1.msra.mxu0 %v4739
    %4813 = vmatprep.subr.mxu0 %v4742
    %4814 = vmatpush1.msra.mxu0 %v4741
    %4815 = vmatprep.subr.mxu0 %v4744
    %4816 = vmatpush1.msra.mxu0 %v4743
    %4817 = vmatprep.subr.mxu0 %v4746
    %4818 = vmatpush1.msra.mxu0 %v4745
    %4819 = vmatprep.subr.mxu0 %v4748
    %4820 = vmatpush1.msra.mxu0 %v4747
    %4821 = vmatprep.mubr.f32.mxu0 %v4654
    %4822 = vmatmul.mubr.f32.gmra.mrb[0].mxu0 %v4653
    %v4823 = vpop.f32.mrb[0].mxu0
    %v4824 = vadd.f32 %v4752, %v4823
    %v4825 = vpop.f32.mrb[0].mxu0
    %v4826 = vadd.f32 %v4756, %v4825
    %4827 = vmatprep.mubr.f32.mxu0 %v4656
    %4828 = vmatmul.mubr.f32.gmra.mrb[0].mxu0 %v4655
    %v4829 = vpop.f32.mrb[0].mxu0
    %v4830 = vadd.f32 %v4752, %v4829
    %v4831 = vpop.f32.mrb[0].mxu0
    %v4832 = vadd.f32 %v4756, %v4831
    %4833 = vmatprep.mubr.f32.mxu0 %v4658
    %4834 = vmatmul.mubr.f32.gmra.mrb[0].mxu0 %v4657
    %v4835 = vpop.f32.mrb[0].mxu0
    %v4836 = vadd.f32 %v4752, %v4835
    %v4837 = vpop.f32.mrb[0].mxu0
    %v4838 = vadd.f32 %v4756, %v4837
    %4839 = vmatprep.mubr.f32.mxu0 %v4660
    %4840 = vmatmul.mubr.f32.gmra.mrb[0].mxu0 %v4659
    %v4841 = vpop.f32.mrb[0].mxu0
    %v4842 = vadd.f32 %v4752, %v4841
    %v4843 = vpop.f32.mrb[0].mxu0
    %v4844 = vadd.f32 %v4756, %v4843
    %4845 = vmatprep.mubr.f32.mxu0 %v4662
    %4846 = vmatmul.mubr.f32.gmra.mrb[0].mxu0 %v4661
    %v4847 = vpop.f32.mrb[0].mxu0
    %v4848 = vadd.f32 %v4752, %v4847
    %v4849 = vpop.f32.mrb[0].mxu0
    %v4850 = vadd.f32 %v4756, %v4849
    %4851 = vmatprep.mubr.f32.mxu0 %v4664
    %4852 = vmatmul.mubr.f32.gmra.mrb[0].mxu0 %v4663
    %v4853 = vpop.f32.mrb[0].mxu0
    %v4854 = vadd.f32 %v4752, %v4853
    %v4855 = vpop.f32.mrb[0].mxu0
    %v4856 = vadd.f32 %v4756, %v4855
    %4857 = vmatprep.mubr.f32.mxu0 %v4666
    %4858 = vmatmul.mubr.f32.gmra.mrb[0].mxu0 %v4665
    %v4859 = vpop.f32.mrb[0].mxu0
    %v4860 = vadd.f32 %v4752, %v4859
    %v4861 = vpop.f32.mrb[0].mxu0
    %v4862 = vadd.f32 %v4756, %v4861
    %4863 = vmatprep.mubr.f32.mxu0 %v4668
    %4864 = vmatmul.mubr.f32.gmra.mrb[0].mxu0 %v4667
    %v4865 = vpop.f32.mrb[0].mxu0
    %v4866 = vadd.f32 %v4752, %v4865
    %v4867 = vpop.f32.mrb[0].mxu0
    %v4868 = vadd.f32 %v4756, %v4867
    %4869 = vmatprep.mubr.f32.mxu0 %v4670
    %4870 = vmatmul.mubr.f32.gmra.mrb[0].mxu0 %v4669
    %v4871 = vpop.f32.mrb[0].mxu0
    %v4872 = vadd.f32 %v4752, %v4871
    %v4873 = vpop.f32.mrb[0].mxu0
    %v4874 = vadd.f32 %v4756, %v4873
    %4875 = vmatprep.mubr.f32.mxu0 %v4672
    %4876 = vmatmul.mubr.f32.gmra.mrb[0].mxu0 %v4671
    %v4877 = vpop.f32.mrb[0].mxu0
    %v4878 = vadd.f32 %v4752, %v4877
    %v4879 = vpop.f32.mrb[0].mxu0
    %v4880 = vadd.f32 %v4756, %v4879
    %4881 = vmatprep.mubr.f32.mxu0 %v4674
    %4882 = vmatmul.mubr.f32.gmra.mrb[0].mxu0 %v4673
    %v4883 = vpop.f32.mrb[0].mxu0
    %v4884 = vadd.f32 %v4752, %v4883
    %v4885 = vpop.f32.mrb[0].mxu0
    %v4886 = vadd.f32 %v4756, %v4885
    %4887 = vmatprep.mubr.f32.mxu0 %v4676
    %4888 = vmatmul.mubr.f32.gmra.mrb[0].mxu0 %v4675
    %v4889 = vpop.f32.mrb[0].mxu0
    %v4890 = vadd.f32 %v4752, %v4889
    %v4891 = vpop.f32.mrb[0].mxu0
    %v4892 = vadd.f32 %v4756, %v4891
    %4893 = vmatprep.mubr.f32.mxu0 %v4678
    %4894 = vmatmul.mubr.f32.gmra.mrb[0].mxu0 %v4677
    %v4895 = vpop.f32.mrb[0].mxu0
    %v4896 = vadd.f32 %v4752, %v4895
    %v4897 = vpop.f32.mrb[0].mxu0
    %v4898 = vadd.f32 %v4756, %v4897
    %4899 = vmatprep.mubr.f32.mxu0 %v4680
    %4900 = vmatmul.mubr.f32.gmra.mrb[0].mxu0 %v4679
    %v4901 = vpop.f32.mrb[0].mxu0
    %v4902 = vadd.f32 %v4752, %v4901
    %v4903 = vpop.f32.mrb[0].mxu0
    %v4904 = vadd.f32 %v4756, %v4903
    %4905 = vmatprep.mubr.f32.mxu0 %v4682
    %4906 = vmatmul.mubr.f32.gmra.mrb[0].mxu0 %v4681
    %v4907 = vpop.f32.mrb[0].mxu0
    %v4908 = vadd.f32 %v4752, %v4907
    %v4909 = vpop.f32.mrb[0].mxu0
    %v4910 = vadd.f32 %v4756, %v4909
    %4911 = vmatprep.mubr.f32.mxu0 %v4684
    %4912 = vmatmul.mubr.f32.gmra.mrb[0].mxu0 %v4683
    %v4913 = vpop.f32.mrb[0].mxu0
    %v4914 = vadd.f32 %v4752, %v4913
    %v4915 = vpop.f32.mrb[0].mxu0
    %v4916 = vadd.f32 %v4756, %v4915
    %4917 = vdwg.mxu0
    %v4918 = vadd.f32 %v4824, %v4830
    %v4919 = vadd.f32 %v4918, %v4836
    %v4920 = vadd.f32 %v4919, %v4842
    %v4921 = vadd.f32 %v4920, %v4848
    %v4922 = vadd.f32 %v4921, %v4854
    %v4923 = vadd.f32 %v4922, %v4860
    %v4924 = vadd.f32 %v4923, %v4866
    %v4925 = vadd.f32 %v4924, %v4872
    %v4926 = vadd.f32 %v4925, %v4878
    %v4927 = vadd.f32 %v4926, %v4884
    %v4928 = vadd.f32 %v4927, %v4890
    %v4929 = vadd.f32 %v4928, %v4896
    %v4930 = vadd.f32 %v4929, %v4902
    %v4931 = vadd.f32 %v4930, %v4908
    %v4932 = vadd.f32 %v4931, %v4914
    %v4933 = vrot.slane %v4932, 4
    %v4934 = vadd.f32 %v4932, %v4933
    %v4935 = vrot.slane %v4934, 2
    %v4936 = vadd.f32 %v4934, %v4935
    %v4937 = vrot.slane %v4936, 1
    %v4938 = vadd.f32 %v4936, %v4937
    %v4939 = vadd.f32 %v4826, %v4832
    %v4940 = vadd.f32 %v4939, %v4838
    %v4941 = vadd.f32 %v4940, %v4844
    %v4942 = vadd.f32 %v4941, %v4850
    %v4943 = vadd.f32 %v4942, %v4856
    %v4944 = vadd.f32 %v4943, %v4862
    %v4945 = vadd.f32 %v4944, %v4868
    %v4946 = vadd.f32 %v4945, %v4874
    %v4947 = vadd.f32 %v4946, %v4880
    %v4948 = vadd.f32 %v4947, %v4886
    %v4949 = vadd.f32 %v4948, %v4892
    %v4950 = vadd.f32 %v4949, %v4898
    %v4951 = vadd.f32 %v4950, %v4904
    %v4952 = vadd.f32 %v4951, %v4910
    %v4953 = vadd.f32 %v4952, %v4916
    %v4954 = vrot.slane %v4953, 4
    %v4955 = vadd.f32 %v4953, %v4954
    %v4956 = vrot.slane %v4955, 2
    %v4957 = vadd.f32 %v4955, %v4956
    %v4958 = vrot.slane %v4957, 1
    %v4959 = vadd.f32 %v4957, %v4958
    %v4960 = vmul.f32 %v4938, 0.0078125
    %v4961 = vmul.f32 %v4959, 0.0078125
    %v4962 = vsub.f32 %v4824, %v4960
    %v4963 = vsub.f32 %v4826, %v4961
    %v4964 = vsub.f32 %v4830, %v4960
    %v4965 = vsub.f32 %v4832, %v4961
    %v4966 = vsub.f32 %v4836, %v4960
    %v4967 = vsub.f32 %v4838, %v4961
    %v4968 = vsub.f32 %v4842, %v4960
    %v4969 = vsub.f32 %v4844, %v4961
    %v4970 = vsub.f32 %v4848, %v4960
    %v4971 = vsub.f32 %v4850, %v4961
    %v4972 = vsub.f32 %v4854, %v4960
    %v4973 = vsub.f32 %v4856, %v4961
    %v4974 = vsub.f32 %v4860, %v4960
    %v4975 = vsub.f32 %v4862, %v4961
    %v4976 = vsub.f32 %v4866, %v4960
    %v4977 = vsub.f32 %v4868, %v4961
    %v4978 = vsub.f32 %v4872, %v4960
    %v4979 = vsub.f32 %v4874, %v4961
    %v4980 = vsub.f32 %v4878, %v4960
    %v4981 = vsub.f32 %v4880, %v4961
    %v4982 = vsub.f32 %v4884, %v4960
    %v4983 = vsub.f32 %v4886, %v4961
    %v4984 = vsub.f32 %v4890, %v4960
    %v4985 = vsub.f32 %v4892, %v4961
    %v4986 = vsub.f32 %v4896, %v4960
    %v4987 = vsub.f32 %v4898, %v4961
    %v4988 = vsub.f32 %v4902, %v4960
    %v4989 = vsub.f32 %v4904, %v4961
    %v4990 = vsub.f32 %v4908, %v4960
    %v4991 = vsub.f32 %v4910, %v4961
    %v4992 = vsub.f32 %v4914, %v4960
    %v4993 = vsub.f32 %v4916, %v4961
    %v4994 = vmul.f32 %v4962, %v4962
    %v4995 = vmul.f32 %v4963, %v4963
    %v4996 = vmul.f32 %v4964, %v4964
    %v4997 = vmul.f32 %v4965, %v4965
    %v4998 = vmul.f32 %v4966, %v4966
    %v4999 = vmul.f32 %v4967, %v4967
    %v5000 = vmul.f32 %v4968, %v4968
    %v5001 = vmul.f32 %v4969, %v4969
    %v5002 = vmul.f32 %v4970, %v4970
    %v5003 = vmul.f32 %v4971, %v4971
    %v5004 = vmul.f32 %v4972, %v4972
    %v5005 = vmul.f32 %v4973, %v4973
    %v5006 = vmul.f32 %v4974, %v4974
    %v5007 = vmul.f32 %v4975, %v4975
    %v5008 = vmul.f32 %v4976, %v4976
    %v5009 = vmul.f32 %v4977, %v4977
    %v5010 = vmul.f32 %v4978, %v4978
    %v5011 = vmul.f32 %v4979, %v4979
    %v5012 = vmul.f32 %v4980, %v4980
    %v5013 = vmul.f32 %v4981, %v4981
    %v5014 = vmul.f32 %v4982, %v4982
    %v5015 = vmul.f32 %v4983, %v4983
    %v5016 = vmul.f32 %v4984, %v4984
    %v5017 = vmul.f32 %v4985, %v4985
    %v5018 = vmul.f32 %v4986, %v4986
    %v5019 = vmul.f32 %v4987, %v4987
    %v5020 = vmul.f32 %v4988, %v4988
    %v5021 = vmul.f32 %v4989, %v4989
    %v5022 = vmul.f32 %v4990, %v4990
    %v5023 = vmul.f32 %v4991, %v4991
    %v5024 = vmul.f32 %v4992, %v4992
    %v5025 = vmul.f32 %v4993, %v4993
    %v5026 = vadd.f32 %v4994, %v4996
    %v5027 = vadd.f32 %v5026, %v4998
    %v5028 = vadd.f32 %v5027, %v5000
    %v5029 = vadd.f32 %v5028, %v5002
    %v5030 = vadd.f32 %v5029, %v5004
    %v5031 = vadd.f32 %v5030, %v5006
    %v5032 = vadd.f32 %v5031, %v5008
    %v5033 = vadd.f32 %v5032, %v5010
    %v5034 = vadd.f32 %v5033, %v5012
    %v5035 = vadd.f32 %v5034, %v5014
    %v5036 = vadd.f32 %v5035, %v5016
    %v5037 = vadd.f32 %v5036, %v5018
    %v5038 = vadd.f32 %v5037, %v5020
    %v5039 = vadd.f32 %v5038, %v5022
    %v5040 = vadd.f32 %v5039, %v5024
    %v5041 = vrot.slane %v5040, 4
    %v5042 = vadd.f32 %v5040, %v5041
    %v5043 = vrot.slane %v5042, 2
    %v5044 = vadd.f32 %v5042, %v5043
    %v5045 = vrot.slane %v5044, 1
    %v5046 = vadd.f32 %v5044, %v5045
    %v5047 = vadd.f32 %v4995, %v4997
    %v5048 = vadd.f32 %v5047, %v4999
    %v5049 = vadd.f32 %v5048, %v5001
    %v5050 = vadd.f32 %v5049, %v5003
    %v5051 = vadd.f32 %v5050, %v5005
    %v5052 = vadd.f32 %v5051, %v5007
    %v5053 = vadd.f32 %v5052, %v5009
    %v5054 = vadd.f32 %v5053, %v5011
    %v5055 = vadd.f32 %v5054, %v5013
    %v5056 = vadd.f32 %v5055, %v5015
    %v5057 = vadd.f32 %v5056, %v5017
    %v5058 = vadd.f32 %v5057, %v5019
    %v5059 = vadd.f32 %v5058, %v5021
    %v5060 = vadd.f32 %v5059, %v5023
    %v5061 = vadd.f32 %v5060, %v5025
    %v5062 = vrot.slane %v5061, 4
    %v5063 = vadd.f32 %v5061, %v5062
    %v5064 = vrot.slane %v5063, 2
    %v5065 = vadd.f32 %v5063, %v5064
    %v5066 = vrot.slane %v5065, 1
    %v5067 = vadd.f32 %v5065, %v5066
    %v5068 = vmul.f32 %v5046, 0.0078125
    %v5069 = vmul.f32 %v5067, 0.0078125
    %v5070 = vadd.f32 %v5068, 1e-05
    %v5071 = vadd.f32 %v5069, 1e-05
    %v5072 = vrsqrt.pop %v5070
    %v5073 = vrsqrt.pop %v5071
    %v5074 = vmul.f32 %v3931, %v5072
    %v5075 = vmul.f32 %v3932, %v5073
    %v5076 = vlaneseq
    %v5077 = vshrl.u32 %v5076, 7
    %v5078 = vsub.s32 3, %v5077
    %v5079 = vrot.slane %v5074, %v5078
    %v5080 = vlaneseq
    %v5081 = vshrl.u32 %v5080, 7
    %v5082 = vsub.s32 3, %v5081
    %v5083 = vrot.slane %v5075, %v5082
    %v5084 = vmul.f32 %v4962, %v5079
    %v5085 = vmul.f32 %v4963, %v5083
    %v5086 = vmul.f32 %v4964, %v5079
    %v5087 = vmul.f32 %v4965, %v5083
    %v5088 = vmul.f32 %v4966, %v5079
    %v5089 = vmul.f32 %v4967, %v5083
    %v5090 = vmul.f32 %v4968, %v5079
    %v5091 = vmul.f32 %v4969, %v5083
    %v5092 = vmul.f32 %v4970, %v5079
    %v5093 = vmul.f32 %v4971, %v5083
    %v5094 = vmul.f32 %v4972, %v5079
    %v5095 = vmul.f32 %v4973, %v5083
    %v5096 = vmul.f32 %v4974, %v5079
    %v5097 = vmul.f32 %v4975, %v5083
    %v5098 = vmul.f32 %v4976, %v5079
    %v5099 = vmul.f32 %v4977, %v5083
    %v5100 = vmul.f32 %v4978, %v5079
    %v5101 = vmul.f32 %v4979, %v5083
    %v5102 = vmul.f32 %v4980, %v5079
    %v5103 = vmul.f32 %v4981, %v5083
    %v5104 = vmul.f32 %v4982, %v5079
    %v5105 = vmul.f32 %v4983, %v5083
    %v5106 = vmul.f32 %v4984, %v5079
    %v5107 = vmul.f32 %v4985, %v5083
    %v5108 = vmul.f32 %v4986, %v5079
    %v5109 = vmul.f32 %v4987, %v5083
    %v5110 = vmul.f32 %v4988, %v5079
    %v5111 = vmul.f32 %v4989, %v5083
    %v5112 = vmul.f32 %v4990, %v5079
    %v5113 = vmul.f32 %v4991, %v5083
    %v5114 = vmul.f32 %v4992, %v5079
    %v5115 = vmul.f32 %v4993, %v5083
    %v5116 = vlaneseq
    %v5117 = vshrl.u32 %v5116, 7
    %v5118 = vsub.s32 4, %v5117
    %v5119 = vrot.slane %v3931, %v5118
    %v5120 = vlaneseq
    %v5121 = vshrl.u32 %v5120, 7
    %v5122 = vsub.s32 4, %v5121
    %v5123 = vrot.slane %v3932, %v5122
    %v5124 = vadd.f32 %v5084, %v5119
    %v5125 = vadd.f32 %v5085, %v5123
    %v5126 = vadd.f32 %v5086, %v5119
    %v5127 = vadd.f32 %v5087, %v5123
    %v5128 = vadd.f32 %v5088, %v5119
    %v5129 = vadd.f32 %v5089, %v5123
    %v5130 = vadd.f32 %v5090, %v5119
    %v5131 = vadd.f32 %v5091, %v5123
    %v5132 = vadd.f32 %v5092, %v5119
    %v5133 = vadd.f32 %v5093, %v5123
    %v5134 = vadd.f32 %v5094, %v5119
    %v5135 = vadd.f32 %v5095, %v5123
    %v5136 = vadd.f32 %v5096, %v5119
    %v5137 = vadd.f32 %v5097, %v5123
    %v5138 = vadd.f32 %v5098, %v5119
    %v5139 = vadd.f32 %v5099, %v5123
    %v5140 = vadd.f32 %v5100, %v5119
    %v5141 = vadd.f32 %v5101, %v5123
    %v5142 = vadd.f32 %v5102, %v5119
    %v5143 = vadd.f32 %v5103, %v5123
    %v5144 = vadd.f32 %v5104, %v5119
    %v5145 = vadd.f32 %v5105, %v5123
    %v5146 = vadd.f32 %v5106, %v5119
    %v5147 = vadd.f32 %v5107, %v5123
    %v5148 = vadd.f32 %v5108, %v5119
    %v5149 = vadd.f32 %v5109, %v5123
    %v5150 = vadd.f32 %v5110, %v5119
    %v5151 = vadd.f32 %v5111, %v5123
    %v5152 = vadd.f32 %v5112, %v5119
    %v5153 = vadd.f32 %v5113, %v5123
    %v5154 = vadd.f32 %v5114, %v5119
    %v5155 = vadd.f32 %v5115, %v5123
    %vm5156 = vcmp.ge.f32.partialorder %v5124, 0.0
    %vm5157 = vcmp.ge.f32.partialorder %v5125, 0.0
    %vm5158 = vcmp.ge.f32.partialorder %v5126, 0.0
    %vm5159 = vcmp.ge.f32.partialorder %v5127, 0.0
    %vm5160 = vcmp.ge.f32.partialorder %v5128, 0.0
    %vm5161 = vcmp.ge.f32.partialorder %v5129, 0.0
    %vm5162 = vcmp.ge.f32.partialorder %v5130, 0.0
    %vm5163 = vcmp.ge.f32.partialorder %v5131, 0.0
    %vm5164 = vcmp.ge.f32.partialorder %v5132, 0.0
    %vm5165 = vcmp.ge.f32.partialorder %v5133, 0.0
    %vm5166 = vcmp.ge.f32.partialorder %v5134, 0.0
    %vm5167 = vcmp.ge.f32.partialorder %v5135, 0.0
    %vm5168 = vcmp.ge.f32.partialorder %v5136, 0.0
    %vm5169 = vcmp.ge.f32.partialorder %v5137, 0.0
    %vm5170 = vcmp.ge.f32.partialorder %v5138, 0.0
    %vm5171 = vcmp.ge.f32.partialorder %v5139, 0.0
    %vm5172 = vcmp.ge.f32.partialorder %v5140, 0.0
    %vm5173 = vcmp.ge.f32.partialorder %v5141, 0.0
    %vm5174 = vcmp.ge.f32.partialorder %v5142, 0.0
    %vm5175 = vcmp.ge.f32.partialorder %v5143, 0.0
    %vm5176 = vcmp.ge.f32.partialorder %v5144, 0.0
    %vm5177 = vcmp.ge.f32.partialorder %v5145, 0.0
    %vm5178 = vcmp.ge.f32.partialorder %v5146, 0.0
    %vm5179 = vcmp.ge.f32.partialorder %v5147, 0.0
    %vm5180 = vcmp.ge.f32.partialorder %v5148, 0.0
    %vm5181 = vcmp.ge.f32.partialorder %v5149, 0.0
    %vm5182 = vcmp.ge.f32.partialorder %v5150, 0.0
    %vm5183 = vcmp.ge.f32.partialorder %v5151, 0.0
    %vm5184 = vcmp.ge.f32.partialorder %v5152, 0.0
    %vm5185 = vcmp.ge.f32.partialorder %v5153, 0.0
    %vm5186 = vcmp.ge.f32.partialorder %v5154, 0.0
    %vm5187 = vcmp.ge.f32.partialorder %v5155, 0.0
    %v5188 = vmul.f32 %v5124, 0.2
    %v5189 = vmul.f32 %v5125, 0.2
    %v5190 = vmul.f32 %v5126, 0.2
    %v5191 = vmul.f32 %v5127, 0.2
    %v5192 = vmul.f32 %v5128, 0.2
    %v5193 = vmul.f32 %v5129, 0.2
    %v5194 = vmul.f32 %v5130, 0.2
    %v5195 = vmul.f32 %v5131, 0.2
    %v5196 = vmul.f32 %v5132, 0.2
    %v5197 = vmul.f32 %v5133, 0.2
    %v5198 = vmul.f32 %v5134, 0.2
    %v5199 = vmul.f32 %v5135, 0.2
    %v5200 = vmul.f32 %v5136, 0.2
    %v5201 = vmul.f32 %v5137, 0.2
    %v5202 = vmul.f32 %v5138, 0.2
    %v5203 = vmul.f32 %v5139, 0.2
    %v5204 = vmul.f32 %v5140, 0.2
    %v5205 = vmul.f32 %v5141, 0.2
    %v5206 = vmul.f32 %v5142, 0.2
    %v5207 = vmul.f32 %v5143, 0.2
    %v5208 = vmul.f32 %v5144, 0.2
    %v5209 = vmul.f32 %v5145, 0.2
    %v5210 = vmul.f32 %v5146, 0.2
    %v5211 = vmul.f32 %v5147, 0.2
    %v5212 = vmul.f32 %v5148, 0.2
    %v5213 = vmul.f32 %v5149, 0.2
    %v5214 = vmul.f32 %v5150, 0.2
    %v5215 = vmul.f32 %v5151, 0.2
    %v5216 = vmul.f32 %v5152, 0.2
    %v5217 = vmul.f32 %v5153, 0.2
    %v5218 = vmul.f32 %v5154, 0.2
    %v5219 = vmul.f32 %v5155, 0.2
    %v5220 = vsel %vm5156, %v5124, %v5188
    %v5221 = vsel %vm5157, %v5125, %v5189
    %v5222 = vsel %vm5158, %v5126, %v5190
    %v5223 = vsel %vm5159, %v5127, %v5191
    %v5224 = vsel %vm5160, %v5128, %v5192
    %v5225 = vsel %vm5161, %v5129, %v5193
    %v5226 = vsel %vm5162, %v5130, %v5194
    %v5227 = vsel %vm5163, %v5131, %v5195
    %v5228 = vsel %vm5164, %v5132, %v5196
    %v5229 = vsel %vm5165, %v5133, %v5197
    %v5230 = vsel %vm5166, %v5134, %v5198
    %v5231 = vsel %vm5167, %v5135, %v5199
    %v5232 = vsel %vm5168, %v5136, %v5200
    %v5233 = vsel %vm5169, %v5137, %v5201
    %v5234 = vsel %vm5170, %v5138, %v5202
    %v5235 = vsel %vm5171, %v5139, %v5203
    %v5236 = vsel %vm5172, %v5140, %v5204
    %v5237 = vsel %vm5173, %v5141, %v5205
    %v5238 = vsel %vm5174, %v5142, %v5206
    %v5239 = vsel %vm5175, %v5143, %v5207
    %v5240 = vsel %vm5176, %v5144, %v5208
    %v5241 = vsel %vm5177, %v5145, %v5209
    %v5242 = vsel %vm5178, %v5146, %v5210
    %v5243 = vsel %vm5179, %v5147, %v5211
    %v5244 = vsel %vm5180, %v5148, %v5212
    %v5245 = vsel %vm5181, %v5149, %v5213
    %v5246 = vsel %vm5182, %v5150, %v5214
    %v5247 = vsel %vm5183, %v5151, %v5215
    %v5248 = vsel %vm5184, %v5152, %v5216
    %v5249 = vsel %vm5185, %v5153, %v5217
    %v5250 = vsel %vm5186, %v5154, %v5218
    %v5251 = vsel %vm5187, %v5155, %v5219
    %v5252 = vld [vmem:[#allocation16] sm:$0xff]
    %v5253 = vld [vmem:[#allocation16 + $0x8] sm:$0xff]
    %v5254 = vld [vmem:[#allocation16 + $0x10] sm:$0xff]
    %v5255 = vld [vmem:[#allocation16 + $0x18] sm:$0xff]
    %v5256 = vld [vmem:[#allocation16 + $0x20] sm:$0xff]
    %v5257 = vld [vmem:[#allocation16 + $0x28] sm:$0xff]
    %v5258 = vld [vmem:[#allocation16 + $0x30] sm:$0xff]
    %v5259 = vld [vmem:[#allocation16 + $0x38] sm:$0xff]
    %v5260 = vld [vmem:[#allocation16 + $0x40] sm:$0xff]
    %v5261 = vld [vmem:[#allocation16 + $0x48] sm:$0xff]
    %v5262 = vld [vmem:[#allocation16 + $0x50] sm:$0xff]
    %v5263 = vld [vmem:[#allocation16 + $0x58] sm:$0xff]
    %v5264 = vld [vmem:[#allocation16 + $0x60] sm:$0xff]
    %v5265 = vld [vmem:[#allocation16 + $0x68] sm:$0xff]
    %v5266 = vld [vmem:[#allocation16 + $0x70] sm:$0xff]
    %v5267 = vld [vmem:[#allocation16 + $0x78] sm:$0xff]
    %v5268 = vld [vmem:[#allocation16 + $0x80] sm:$0xff]
    %v5269 = vld [vmem:[#allocation16 + $0x88] sm:$0xff]
    %v5270 = vld [vmem:[#allocation16 + $0x90] sm:$0xff]
    %v5271 = vld [vmem:[#allocation16 + $0x98] sm:$0xff]
    %v5272 = vld [vmem:[#allocation16 + $0xa0] sm:$0xff]
    %v5273 = vld [vmem:[#allocation16 + $0xa8] sm:$0xff]
    %v5274 = vld [vmem:[#allocation16 + $0xb0] sm:$0xff]
    %v5275 = vld [vmem:[#allocation16 + $0xb8] sm:$0xff]
    %v5276 = vld [vmem:[#allocation16 + $0xc0] sm:$0xff]
    %v5277 = vld [vmem:[#allocation16 + $0xc8] sm:$0xff]
    %v5278 = vld [vmem:[#allocation16 + $0xd0] sm:$0xff]
    %v5279 = vld [vmem:[#allocation16 + $0xd8] sm:$0xff]
    %v5280 = vld [vmem:[#allocation16 + $0xe0] sm:$0xff]
    %v5281 = vld [vmem:[#allocation16 + $0xe8] sm:$0xff]
    %v5282 = vld [vmem:[#allocation16 + $0xf0] sm:$0xff]
    %v5283 = vld [vmem:[#allocation16 + $0xf8] sm:$0xff]
    %v5284 = vld [vmem:[#allocation16 + $0x100] sm:$0xff]
    %v5285 = vld [vmem:[#allocation16 + $0x108] sm:$0xff]
    %v5286 = vld [vmem:[#allocation16 + $0x110] sm:$0xff]
    %v5287 = vld [vmem:[#allocation16 + $0x118] sm:$0xff]
    %v5288 = vld [vmem:[#allocation16 + $0x120] sm:$0xff]
    %v5289 = vld [vmem:[#allocation16 + $0x128] sm:$0xff]
    %v5290 = vld [vmem:[#allocation16 + $0x130] sm:$0xff]
    %v5291 = vld [vmem:[#allocation16 + $0x138] sm:$0xff]
    %v5292 = vld [vmem:[#allocation16 + $0x140] sm:$0xff]
    %v5293 = vld [vmem:[#allocation16 + $0x148] sm:$0xff]
    %v5294 = vld [vmem:[#allocation16 + $0x150] sm:$0xff]
    %v5295 = vld [vmem:[#allocation16 + $0x158] sm:$0xff]
    %v5296 = vld [vmem:[#allocation16 + $0x160] sm:$0xff]
    %v5297 = vld [vmem:[#allocation16 + $0x168] sm:$0xff]
    %v5298 = vld [vmem:[#allocation16 + $0x170] sm:$0xff]
    %v5299 = vld [vmem:[#allocation16 + $0x178] sm:$0xff]
    %v5300 = vld [vmem:[#allocation16 + $0x180] sm:$0xff]
    %v5301 = vld [vmem:[#allocation16 + $0x188] sm:$0xff]
    %v5302 = vld [vmem:[#allocation16 + $0x190] sm:$0xff]
    %v5303 = vld [vmem:[#allocation16 + $0x198] sm:$0xff]
    %v5304 = vld [vmem:[#allocation16 + $0x1a0] sm:$0xff]
    %v5305 = vld [vmem:[#allocation16 + $0x1a8] sm:$0xff]
    %v5306 = vld [vmem:[#allocation16 + $0x1b0] sm:$0xff]
    %v5307 = vld [vmem:[#allocation16 + $0x1b8] sm:$0xff]
    %v5308 = vld [vmem:[#allocation16 + $0x1c0] sm:$0xff]
    %v5309 = vld [vmem:[#allocation16 + $0x1c8] sm:$0xff]
    %v5310 = vld [vmem:[#allocation16 + $0x1d0] sm:$0xff]
    %v5311 = vld [vmem:[#allocation16 + $0x1d8] sm:$0xff]
    %v5312 = vld [vmem:[#allocation16 + $0x1e0] sm:$0xff]
    %v5313 = vld [vmem:[#allocation16 + $0x1e8] sm:$0xff]
    %v5314 = vld [vmem:[#allocation16 + $0x1f0] sm:$0xff]
    %v5315 = vld [vmem:[#allocation16 + $0x1f8] sm:$0xff]
    %v5316 = vlaneseq
    %v5317 = vshrl.u32 %v5316, 7
    %v5318 = vsub.s32 5, %v5317
    %v5319 = vrot.slane %v3931, %v5318
    %v5320 = vlaneseq
    %v5321 = vshrl.u32 %v5320, 7
    %v5322 = vsub.s32 5, %v5321
    %v5323 = vrot.slane %v3932, %v5322
    %5324 = vmatprep.subr.mxu0 %v5253
    %5325 = vmatpush1.msra.mxu0 %v5252
    %5326 = vmatprep.subr.mxu0 %v5255
    %5327 = vmatpush1.msra.mxu0 %v5254
    %5328 = vmatprep.subr.mxu0 %v5257
    %5329 = vmatpush1.msra.mxu0 %v5256
    %5330 = vmatprep.subr.mxu0 %v5259
    %5331 = vmatpush1.msra.mxu0 %v5258
    %5332 = vmatprep.subr.mxu0 %v5261
    %5333 = vmatpush1.msra.mxu0 %v5260
    %5334 = vmatprep.subr.mxu0 %v5263
    %5335 = vmatpush1.msra.mxu0 %v5262
    %5336 = vmatprep.subr.mxu0 %v5265
    %5337 = vmatpush1.msra.mxu0 %v5264
    %5338 = vmatprep.subr.mxu0 %v5267
    %5339 = vmatpush1.msra.mxu0 %v5266
    %5340 = vmatprep.subr.mxu0 %v5269
    %5341 = vmatpush1.msra.mxu0 %v5268
    %5342 = vmatprep.subr.mxu0 %v5271
    %5343 = vmatpush1.msra.mxu0 %v5270
    %5344 = vmatprep.subr.mxu0 %v5273
    %5345 = vmatpush1.msra.mxu0 %v5272
    %5346 = vmatprep.subr.mxu0 %v5275
    %5347 = vmatpush1.msra.mxu0 %v5274
    %5348 = vmatprep.subr.mxu0 %v5277
    %5349 = vmatpush1.msra.mxu0 %v5276
    %5350 = vmatprep.subr.mxu0 %v5279
    %5351 = vmatpush1.msra.mxu0 %v5278
    %5352 = vmatprep.subr.mxu0 %v5281
    %5353 = vmatpush1.msra.mxu0 %v5280
    %5354 = vmatprep.subr.mxu0 %v5283
    %5355 = vmatpush1.msra.mxu0 %v5282
    %5356 = vmatprep.subr.mxu0 %v5285
    %5357 = vmatpush1.msra.mxu0 %v5284
    %5358 = vmatprep.subr.mxu0 %v5287
    %5359 = vmatpush1.msra.mxu0 %v5286
    %5360 = vmatprep.subr.mxu0 %v5289
    %5361 = vmatpush1.msra.mxu0 %v5288
    %5362 = vmatprep.subr.mxu0 %v5291
    %5363 = vmatpush1.msra.mxu0 %v5290
    %5364 = vmatprep.subr.mxu0 %v5293
    %5365 = vmatpush1.msra.mxu0 %v5292
    %5366 = vmatprep.subr.mxu0 %v5295
    %5367 = vmatpush1.msra.mxu0 %v5294
    %5368 = vmatprep.subr.mxu0 %v5297
    %5369 = vmatpush1.msra.mxu0 %v5296
    %5370 = vmatprep.subr.mxu0 %v5299
    %5371 = vmatpush1.msra.mxu0 %v5298
    %5372 = vmatprep.subr.mxu0 %v5301
    %5373 = vmatpush1.msra.mxu0 %v5300
    %5374 = vmatprep.subr.mxu0 %v5303
    %5375 = vmatpush1.msra.mxu0 %v5302
    %5376 = vmatprep.subr.mxu0 %v5305
    %5377 = vmatpush1.msra.mxu0 %v5304
    %5378 = vmatprep.subr.mxu0 %v5307
    %5379 = vmatpush1.msra.mxu0 %v5306
    %5380 = vmatprep.subr.mxu0 %v5309
    %5381 = vmatpush1.msra.mxu0 %v5308
    %5382 = vmatprep.subr.mxu0 %v5311
    %5383 = vmatpush1.msra.mxu0 %v5310
    %5384 = vmatprep.subr.mxu0 %v5313
    %5385 = vmatpush1.msra.mxu0 %v5312
    %5386 = vmatprep.subr.mxu0 %v5315
    %5387 = vmatpush1.msra.mxu0 %v5314
    %5388 = vmatprep.mubr.f32.mxu0 %v5221
    %5389 = vmatmul.mubr.f32.gmra.mrb[0].mxu0 %v5220
    %v5390 = vpop.f32.mrb[0].mxu0
    %v5391 = vadd.f32 %v5319, %v5390
    %v5392 = vpop.f32.mrb[0].mxu0
    %v5393 = vadd.f32 %v5323, %v5392
    %5394 = vmatprep.mubr.f32.mxu0 %v5223
    %5395 = vmatmul.mubr.f32.gmra.mrb[0].mxu0 %v5222
    %v5396 = vpop.f32.mrb[0].mxu0
    %v5397 = vadd.f32 %v5319, %v5396
    %v5398 = vpop.f32.mrb[0].mxu0
    %v5399 = vadd.f32 %v5323, %v5398
    %5400 = vmatprep.mubr.f32.mxu0 %v5225
    %5401 = vmatmul.mubr.f32.gmra.mrb[0].mxu0 %v5224
    %v5402 = vpop.f32.mrb[0].mxu0
    %v5403 = vadd.f32 %v5319, %v5402
    %v5404 = vpop.f32.mrb[0].mxu0
    %v5405 = vadd.f32 %v5323, %v5404
    %5406 = vmatprep.mubr.f32.mxu0 %v5227
    %5407 = vmatmul.mubr.f32.gmra.mrb[0].mxu0 %v5226
    %v5408 = vpop.f32.mrb[0].mxu0
    %v5409 = vadd.f32 %v5319, %v5408
    %v5410 = vpop.f32.mrb[0].mxu0
    %v5411 = vadd.f32 %v5323, %v5410
    %5412 = vmatprep.mubr.f32.mxu0 %v5229
    %5413 = vmatmul.mubr.f32.gmra.mrb[0].mxu0 %v5228
    %v5414 = vpop.f32.mrb[0].mxu0
    %v5415 = vadd.f32 %v5319, %v5414
    %v5416 = vpop.f32.mrb[0].mxu0
    %v5417 = vadd.f32 %v5323, %v5416
    %5418 = vmatprep.mubr.f32.mxu0 %v5231
    %5419 = vmatmul.mubr.f32.gmra.mrb[0].mxu0 %v5230
    %v5420 = vpop.f32.mrb[0].mxu0
    %v5421 = vadd.f32 %v5319, %v5420
    %v5422 = vpop.f32.mrb[0].mxu0
    %v5423 = vadd.f32 %v5323, %v5422
    %5424 = vmatprep.mubr.f32.mxu0 %v5233
    %5425 = vmatmul.mubr.f32.gmra.mrb[0].mxu0 %v5232
    %v5426 = vpop.f32.mrb[0].mxu0
    %v5427 = vadd.f32 %v5319, %v5426
    %v5428 = vpop.f32.mrb[0].mxu0
    %v5429 = vadd.f32 %v5323, %v5428
    %5430 = vmatprep.mubr.f32.mxu0 %v5235
    %5431 = vmatmul.mubr.f32.gmra.mrb[0].mxu0 %v5234
    %v5432 = vpop.f32.mrb[0].mxu0
    %v5433 = vadd.f32 %v5319, %v5432
    %v5434 = vpop.f32.mrb[0].mxu0
    %v5435 = vadd.f32 %v5323, %v5434
    %5436 = vmatprep.mubr.f32.mxu0 %v5237
    %5437 = vmatmul.mubr.f32.gmra.mrb[0].mxu0 %v5236
    %v5438 = vpop.f32.mrb[0].mxu0
    %v5439 = vadd.f32 %v5319, %v5438
    %v5440 = vpop.f32.mrb[0].mxu0
    %v5441 = vadd.f32 %v5323, %v5440
    %5442 = vmatprep.mubr.f32.mxu0 %v5239
    %5443 = vmatmul.mubr.f32.gmra.mrb[0].mxu0 %v5238
    %v5444 = vpop.f32.mrb[0].mxu0
    %v5445 = vadd.f32 %v5319, %v5444
    %v5446 = vpop.f32.mrb[0].mxu0
    %v5447 = vadd.f32 %v5323, %v5446
    %5448 = vmatprep.mubr.f32.mxu0 %v5241
    %5449 = vmatmul.mubr.f32.gmra.mrb[0].mxu0 %v5240
    %v5450 = vpop.f32.mrb[0].mxu0
    %v5451 = vadd.f32 %v5319, %v5450
    %v5452 = vpop.f32.mrb[0].mxu0
    %v5453 = vadd.f32 %v5323, %v5452
    %5454 = vmatprep.mubr.f32.mxu0 %v5243
    %5455 = vmatmul.mubr.f32.gmra.mrb[0].mxu0 %v5242
    %v5456 = vpop.f32.mrb[0].mxu0
    %v5457 = vadd.f32 %v5319, %v5456
    %v5458 = vpop.f32.mrb[0].mxu0
    %v5459 = vadd.f32 %v5323, %v5458
    %5460 = vmatprep.mubr.f32.mxu0 %v5245
    %5461 = vmatmul.mubr.f32.gmra.mrb[0].mxu0 %v5244
    %v5462 = vpop.f32.mrb[0].mxu0
    %v5463 = vadd.f32 %v5319, %v5462
    %v5464 = vpop.f32.mrb[0].mxu0
    %v5465 = vadd.f32 %v5323, %v5464
    %5466 = vmatprep.mubr.f32.mxu0 %v5247
    %5467 = vmatmul.mubr.f32.gmra.mrb[0].mxu0 %v5246
    %v5468 = vpop.f32.mrb[0].mxu0
    %v5469 = vadd.f32 %v5319, %v5468
    %v5470 = vpop.f32.mrb[0].mxu0
    %v5471 = vadd.f32 %v5323, %v5470
    %5472 = vmatprep.mubr.f32.mxu0 %v5249
    %5473 = vmatmul.mubr.f32.gmra.mrb[0].mxu0 %v5248
    %v5474 = vpop.f32.mrb[0].mxu0
    %v5475 = vadd.f32 %v5319, %v5474
    %v5476 = vpop.f32.mrb[0].mxu0
    %v5477 = vadd.f32 %v5323, %v5476
    %5478 = vmatprep.mubr.f32.mxu0 %v5251
    %5479 = vmatmul.mubr.f32.gmra.mrb[0].mxu0 %v5250
    %v5480 = vpop.f32.mrb[0].mxu0
    %v5481 = vadd.f32 %v5319, %v5480
    %v5482 = vpop.f32.mrb[0].mxu0
    %v5483 = vadd.f32 %v5323, %v5482
    %5484 = vdwg.mxu0
    %v5485 = vadd.f32 %v5391, %v5397
    %v5486 = vadd.f32 %v5485, %v5403
    %v5487 = vadd.f32 %v5486, %v5409
    %v5488 = vadd.f32 %v5487, %v5415
    %v5489 = vadd.f32 %v5488, %v5421
    %v5490 = vadd.f32 %v5489, %v5427
    %v5491 = vadd.f32 %v5490, %v5433
    %v5492 = vadd.f32 %v5491, %v5439
    %v5493 = vadd.f32 %v5492, %v5445
    %v5494 = vadd.f32 %v5493, %v5451
    %v5495 = vadd.f32 %v5494, %v5457
    %v5496 = vadd.f32 %v5495, %v5463
    %v5497 = vadd.f32 %v5496, %v5469
    %v5498 = vadd.f32 %v5497, %v5475
    %v5499 = vadd.f32 %v5498, %v5481
    %v5500 = vrot.slane %v5499, 4
    %v5501 = vadd.f32 %v5499, %v5500
    %v5502 = vrot.slane %v5501, 2
    %v5503 = vadd.f32 %v5501, %v5502
    %v5504 = vrot.slane %v5503, 1
    %v5505 = vadd.f32 %v5503, %v5504
    %v5506 = vadd.f32 %v5393, %v5399
    %v5507 = vadd.f32 %v5506, %v5405
    %v5508 = vadd.f32 %v5507, %v5411
    %v5509 = vadd.f32 %v5508, %v5417
    %v5510 = vadd.f32 %v5509, %v5423
    %v5511 = vadd.f32 %v5510, %v5429
    %v5512 = vadd.f32 %v5511, %v5435
    %v5513 = vadd.f32 %v5512, %v5441
    %v5514 = vadd.f32 %v5513, %v5447
    %v5515 = vadd.f32 %v5514, %v5453
    %v5516 = vadd.f32 %v5515, %v5459
    %v5517 = vadd.f32 %v5516, %v5465
    %v5518 = vadd.f32 %v5517, %v5471
    %v5519 = vadd.f32 %v5518, %v5477
    %v5520 = vadd.f32 %v5519, %v5483
    %v5521 = vrot.slane %v5520, 4
    %v5522 = vadd.f32 %v5520, %v5521
    %v5523 = vrot.slane %v5522, 2
    %v5524 = vadd.f32 %v5522, %v5523
    %v5525 = vrot.slane %v5524, 1
    %v5526 = vadd.f32 %v5524, %v5525
    %v5527 = vmul.f32 %v5505, 0.0078125
    %v5528 = vmul.f32 %v5526, 0.0078125
    %v5529 = vsub.f32 %v5391, %v5527
    %v5530 = vsub.f32 %v5393, %v5528
    %v5531 = vsub.f32 %v5397, %v5527
    %v5532 = vsub.f32 %v5399, %v5528
    %v5533 = vsub.f32 %v5403, %v5527
    %v5534 = vsub.f32 %v5405, %v5528
    %v5535 = vsub.f32 %v5409, %v5527
    %v5536 = vsub.f32 %v5411, %v5528
    %v5537 = vsub.f32 %v5415, %v5527
    %v5538 = vsub.f32 %v5417, %v5528
    %v5539 = vsub.f32 %v5421, %v5527
    %v5540 = vsub.f32 %v5423, %v5528
    %v5541 = vsub.f32 %v5427, %v5527
    %v5542 = vsub.f32 %v5429, %v5528
    %v5543 = vsub.f32 %v5433, %v5527
    %v5544 = vsub.f32 %v5435, %v5528
    %v5545 = vsub.f32 %v5439, %v5527
    %v5546 = vsub.f32 %v5441, %v5528
    %v5547 = vsub.f32 %v5445, %v5527
    %v5548 = vsub.f32 %v5447, %v5528
    %v5549 = vsub.f32 %v5451, %v5527
    %v5550 = vsub.f32 %v5453, %v5528
    %v5551 = vsub.f32 %v5457, %v5527
    %v5552 = vsub.f32 %v5459, %v5528
    %v5553 = vsub.f32 %v5463, %v5527
    %v5554 = vsub.f32 %v5465, %v5528
    %v5555 = vsub.f32 %v5469, %v5527
    %v5556 = vsub.f32 %v5471, %v5528
    %v5557 = vsub.f32 %v5475, %v5527
    %v5558 = vsub.f32 %v5477, %v5528
    %v5559 = vsub.f32 %v5481, %v5527
    %v5560 = vsub.f32 %v5483, %v5528
    %v5561 = vmul.f32 %v5529, %v5529
    %v5562 = vmul.f32 %v5530, %v5530
    %v5563 = vmul.f32 %v5531, %v5531
    %v5564 = vmul.f32 %v5532, %v5532
    %v5565 = vmul.f32 %v5533, %v5533
    %v5566 = vmul.f32 %v5534, %v5534
    %v5567 = vmul.f32 %v5535, %v5535
    %v5568 = vmul.f32 %v5536, %v5536
    %v5569 = vmul.f32 %v5537, %v5537
    %v5570 = vmul.f32 %v5538, %v5538
    %v5571 = vmul.f32 %v5539, %v5539
    %v5572 = vmul.f32 %v5540, %v5540
    %v5573 = vmul.f32 %v5541, %v5541
    %v5574 = vmul.f32 %v5542, %v5542
    %v5575 = vmul.f32 %v5543, %v5543
    %v5576 = vmul.f32 %v5544, %v5544
    %v5577 = vmul.f32 %v5545, %v5545
    %v5578 = vmul.f32 %v5546, %v5546
    %v5579 = vmul.f32 %v5547, %v5547
    %v5580 = vmul.f32 %v5548, %v5548
    %v5581 = vmul.f32 %v5549, %v5549
    %v5582 = vmul.f32 %v5550, %v5550
    %v5583 = vmul.f32 %v5551, %v5551
    %v5584 = vmul.f32 %v5552, %v5552
    %v5585 = vmul.f32 %v5553, %v5553
    %v5586 = vmul.f32 %v5554, %v5554
    %v5587 = vmul.f32 %v5555, %v5555
    %v5588 = vmul.f32 %v5556, %v5556
    %v5589 = vmul.f32 %v5557, %v5557
    %v5590 = vmul.f32 %v5558, %v5558
    %v5591 = vmul.f32 %v5559, %v5559
    %v5592 = vmul.f32 %v5560, %v5560
    %v5593 = vadd.f32 %v5561, %v5563
    %v5594 = vadd.f32 %v5593, %v5565
    %v5595 = vadd.f32 %v5594, %v5567
    %v5596 = vadd.f32 %v5595, %v5569
    %v5597 = vadd.f32 %v5596, %v5571
    %v5598 = vadd.f32 %v5597, %v5573
    %v5599 = vadd.f32 %v5598, %v5575
    %v5600 = vadd.f32 %v5599, %v5577
    %v5601 = vadd.f32 %v5600, %v5579
    %v5602 = vadd.f32 %v5601, %v5581
    %v5603 = vadd.f32 %v5602, %v5583
    %v5604 = vadd.f32 %v5603, %v5585
    %v5605 = vadd.f32 %v5604, %v5587
    %v5606 = vadd.f32 %v5605, %v5589
    %v5607 = vadd.f32 %v5606, %v5591
    %v5608 = vrot.slane %v5607, 4
    %v5609 = vadd.f32 %v5607, %v5608
    %v5610 = vrot.slane %v5609, 2
    %v5611 = vadd.f32 %v5609, %v5610
    %v5612 = vrot.slane %v5611, 1
    %v5613 = vadd.f32 %v5611, %v5612
    %v5614 = vadd.f32 %v5562, %v5564
    %v5615 = vadd.f32 %v5614, %v5566
    %v5616 = vadd.f32 %v5615, %v5568
    %v5617 = vadd.f32 %v5616, %v5570
    %v5618 = vadd.f32 %v5617, %v5572
    %v5619 = vadd.f32 %v5618, %v5574
    %v5620 = vadd.f32 %v5619, %v5576
    %v5621 = vadd.f32 %v5620, %v5578
    %v5622 = vadd.f32 %v5621, %v5580
    %v5623 = vadd.f32 %v5622, %v5582
    %v5624 = vadd.f32 %v5623, %v5584
    %v5625 = vadd.f32 %v5624, %v5586
    %v5626 = vadd.f32 %v5625, %v5588
    %v5627 = vadd.f32 %v5626, %v5590
    %v5628 = vadd.f32 %v5627, %v5592
    %v5629 = vrot.slane %v5628, 4
    %v5630 = vadd.f32 %v5628, %v5629
    %v5631 = vrot.slane %v5630, 2
    %v5632 = vadd.f32 %v5630, %v5631
    %v5633 = vrot.slane %v5632, 1
    %v5634 = vadd.f32 %v5632, %v5633
    %v5635 = vmul.f32 %v5613, 0.0078125
    %v5636 = vmul.f32 %v5634, 0.0078125
    %v5637 = vadd.f32 %v5635, 1e-05
    %v5638 = vadd.f32 %v5636, 1e-05
    %v5639 = vrsqrt.pop %v5637
    %v5640 = vrsqrt.pop %v5638
    %v5641 = vmul.f32 %v3931, %v5639
    %v5642 = vmul.f32 %v3932, %v5640
    %v5643 = vlaneseq
    %v5644 = vshrl.u32 %v5643, 7
    %v5645 = vsub.s32 6, %v5644
    %v5646 = vrot.slane %v5641, %v5645
    %v5647 = vlaneseq
    %v5648 = vshrl.u32 %v5647, 7
    %v5649 = vsub.s32 6, %v5648
    %v5650 = vrot.slane %v5642, %v5649
    %v5651 = vmul.f32 %v5529, %v5646
    %v5652 = vmul.f32 %v5530, %v5650
    %v5653 = vmul.f32 %v5531, %v5646
    %v5654 = vmul.f32 %v5532, %v5650
    %v5655 = vmul.f32 %v5533, %v5646
    %v5656 = vmul.f32 %v5534, %v5650
    %v5657 = vmul.f32 %v5535, %v5646
    %v5658 = vmul.f32 %v5536, %v5650
    %v5659 = vmul.f32 %v5537, %v5646
    %v5660 = vmul.f32 %v5538, %v5650
    %v5661 = vmul.f32 %v5539, %v5646
    %v5662 = vmul.f32 %v5540, %v5650
    %v5663 = vmul.f32 %v5541, %v5646
    %v5664 = vmul.f32 %v5542, %v5650
    %v5665 = vmul.f32 %v5543, %v5646
    %v5666 = vmul.f32 %v5544, %v5650
    %v5667 = vmul.f32 %v5545, %v5646
    %v5668 = vmul.f32 %v5546, %v5650
    %v5669 = vmul.f32 %v5547, %v5646
    %v5670 = vmul.f32 %v5548, %v5650
    %v5671 = vmul.f32 %v5549, %v5646
    %v5672 = vmul.f32 %v5550, %v5650
    %v5673 = vmul.f32 %v5551, %v5646
    %v5674 = vmul.f32 %v5552, %v5650
    %v5675 = vmul.f32 %v5553, %v5646
    %v5676 = vmul.f32 %v5554, %v5650
    %v5677 = vmul.f32 %v5555, %v5646
    %v5678 = vmul.f32 %v5556, %v5650
    %v5679 = vmul.f32 %v5557, %v5646
    %v5680 = vmul.f32 %v5558, %v5650
    %v5681 = vmul.f32 %v5559, %v5646
    %v5682 = vmul.f32 %v5560, %v5650
    %v5683 = vlaneseq
    %v5684 = vshrl.u32 %v5683, 7
    %v5685 = vsub.s32 7, %v5684
    %v5686 = vrot.slane %v3931, %v5685
    %v5687 = vlaneseq
    %v5688 = vshrl.u32 %v5687, 7
    %v5689 = vsub.s32 7, %v5688
    %v5690 = vrot.slane %v3932, %v5689
    %v5691 = vadd.f32 %v5651, %v5686
    %v5692 = vadd.f32 %v5652, %v5690
    %v5693 = vadd.f32 %v5653, %v5686
    %v5694 = vadd.f32 %v5654, %v5690
    %v5695 = vadd.f32 %v5655, %v5686
    %v5696 = vadd.f32 %v5656, %v5690
    %v5697 = vadd.f32 %v5657, %v5686
    %v5698 = vadd.f32 %v5658, %v5690
    %v5699 = vadd.f32 %v5659, %v5686
    %v5700 = vadd.f32 %v5660, %v5690
    %v5701 = vadd.f32 %v5661, %v5686
    %v5702 = vadd.f32 %v5662, %v5690
    %v5703 = vadd.f32 %v5663, %v5686
    %v5704 = vadd.f32 %v5664, %v5690
    %v5705 = vadd.f32 %v5665, %v5686
    %v5706 = vadd.f32 %v5666, %v5690
    %v5707 = vadd.f32 %v5667, %v5686
    %v5708 = vadd.f32 %v5668, %v5690
    %v5709 = vadd.f32 %v5669, %v5686
    %v5710 = vadd.f32 %v5670, %v5690
    %v5711 = vadd.f32 %v5671, %v5686
    %v5712 = vadd.f32 %v5672, %v5690
    %v5713 = vadd.f32 %v5673, %v5686
    %v5714 = vadd.f32 %v5674, %v5690
    %v5715 = vadd.f32 %v5675, %v5686
    %v5716 = vadd.f32 %v5676, %v5690
    %v5717 = vadd.f32 %v5677, %v5686
    %v5718 = vadd.f32 %v5678, %v5690
    %v5719 = vadd.f32 %v5679, %v5686
    %v5720 = vadd.f32 %v5680, %v5690
    %v5721 = vadd.f32 %v5681, %v5686
    %v5722 = vadd.f32 %v5682, %v5690
    %v5723 = vld [vmem:[#allocation17] sm:$0xff]
    %v5724 = vld [vmem:[#allocation17 + $0x8] sm:$0xff]
    %v5725 = vld [vmem:[#allocation17 + $0x10] sm:$0xff]
    %v5726 = vld [vmem:[#allocation17 + $0x18] sm:$0xff]
    %v5727 = vld [vmem:[#allocation17 + $0x20] sm:$0xff]
    %v5728 = vld [vmem:[#allocation17 + $0x28] sm:$0xff]
    %v5729 = vld [vmem:[#allocation17 + $0x30] sm:$0xff]
    %v5730 = vld [vmem:[#allocation17 + $0x38] sm:$0xff]
    %v5731 = vld [vmem:[#allocation17 + $0x40] sm:$0xff]
    %v5732 = vld [vmem:[#allocation17 + $0x48] sm:$0xff]
    %v5733 = vld [vmem:[#allocation17 + $0x50] sm:$0xff]
    %v5734 = vld [vmem:[#allocation17 + $0x58] sm:$0xff]
    %v5735 = vld [vmem:[#allocation17 + $0x60] sm:$0xff]
    %v5736 = vld [vmem:[#allocation17 + $0x68] sm:$0xff]
    %v5737 = vld [vmem:[#allocation17 + $0x70] sm:$0xff]
    %v5738 = vld [vmem:[#allocation17 + $0x78] sm:$0xff]
    %v5739 = vld [vmem:[#allocation17 + $0x80] sm:$0xff]
    %v5740 = vld [vmem:[#allocation17 + $0x88] sm:$0xff]
    %v5741 = vld [vmem:[#allocation17 + $0x90] sm:$0xff]
    %v5742 = vld [vmem:[#allocation17 + $0x98] sm:$0xff]
    %v5743 = vld [vmem:[#allocation17 + $0xa0] sm:$0xff]
    %v5744 = vld [vmem:[#allocation17 + $0xa8] sm:$0xff]
    %v5745 = vld [vmem:[#allocation17 + $0xb0] sm:$0xff]
    %v5746 = vld [vmem:[#allocation17 + $0xb8] sm:$0xff]
    %v5747 = vld [vmem:[#allocation17 + $0xc0] sm:$0xff]
    %v5748 = vld [vmem:[#allocation17 + $0xc8] sm:$0xff]
    %v5749 = vld [vmem:[#allocation17 + $0xd0] sm:$0xff]
    %v5750 = vld [vmem:[#allocation17 + $0xd8] sm:$0xff]
    %v5751 = vld [vmem:[#allocation17 + $0xe0] sm:$0xff]
    %v5752 = vld [vmem:[#allocation17 + $0xe8] sm:$0xff]
    %v5753 = vld [vmem:[#allocation17 + $0xf0] sm:$0xff]
    %v5754 = vld [vmem:[#allocation17 + $0xf8] sm:$0xff]
    %v5755 = vld [vmem:[#allocation17 + $0x100] sm:$0xff]
    %v5756 = vld [vmem:[#allocation17 + $0x108] sm:$0xff]
    %v5757 = vld [vmem:[#allocation17 + $0x110] sm:$0xff]
    %v5758 = vld [vmem:[#allocation17 + $0x118] sm:$0xff]
    %v5759 = vld [vmem:[#allocation17 + $0x120] sm:$0xff]
    %v5760 = vld [vmem:[#allocation17 + $0x128] sm:$0xff]
    %v5761 = vld [vmem:[#allocation17 + $0x130] sm:$0xff]
    %v5762 = vld [vmem:[#allocation17 + $0x138] sm:$0xff]
    %v5763 = vld [vmem:[#allocation17 + $0x140] sm:$0xff]
    %v5764 = vld [vmem:[#allocation17 + $0x148] sm:$0xff]
    %v5765 = vld [vmem:[#allocation17 + $0x150] sm:$0xff]
    %v5766 = vld [vmem:[#allocation17 + $0x158] sm:$0xff]
    %v5767 = vld [vmem:[#allocation17 + $0x160] sm:$0xff]
    %v5768 = vld [vmem:[#allocation17 + $0x168] sm:$0xff]
    %v5769 = vld [vmem:[#allocation17 + $0x170] sm:$0xff]
    %v5770 = vld [vmem:[#allocation17 + $0x178] sm:$0xff]
    %v5771 = vld [vmem:[#allocation17 + $0x180] sm:$0xff]
    %v5772 = vld [vmem:[#allocation17 + $0x188] sm:$0xff]
    %v5773 = vld [vmem:[#allocation17 + $0x190] sm:$0xff]
    %v5774 = vld [vmem:[#allocation17 + $0x198] sm:$0xff]
    %v5775 = vld [vmem:[#allocation17 + $0x1a0] sm:$0xff]
    %v5776 = vld [vmem:[#allocation17 + $0x1a8] sm:$0xff]
    %v5777 = vld [vmem:[#allocation17 + $0x1b0] sm:$0xff]
    %v5778 = vld [vmem:[#allocation17 + $0x1b8] sm:$0xff]
    %v5779 = vld [vmem:[#allocation17 + $0x1c0] sm:$0xff]
    %v5780 = vld [vmem:[#allocation17 + $0x1c8] sm:$0xff]
    %v5781 = vld [vmem:[#allocation17 + $0x1d0] sm:$0xff]
    %v5782 = vld [vmem:[#allocation17 + $0x1d8] sm:$0xff]
    %v5783 = vld [vmem:[#allocation17 + $0x1e0] sm:$0xff]
    %v5784 = vld [vmem:[#allocation17 + $0x1e8] sm:$0xff]
    %v5785 = vld [vmem:[#allocation17 + $0x1f0] sm:$0xff]
    %v5786 = vld [vmem:[#allocation17 + $0x1f8] sm:$0xff]
    %v5787 = vld [vmem:[#allocation17 + $0x200] sm:$0xff]
    %v5788 = vld [vmem:[#allocation17 + $0x208] sm:$0xff]
    %v5789 = vld [vmem:[#allocation17 + $0x210] sm:$0xff]
    %v5790 = vld [vmem:[#allocation17 + $0x218] sm:$0xff]
    %v5791 = vld [vmem:[#allocation17 + $0x220] sm:$0xff]
    %v5792 = vld [vmem:[#allocation17 + $0x228] sm:$0xff]
    %v5793 = vld [vmem:[#allocation17 + $0x230] sm:$0xff]
    %v5794 = vld [vmem:[#allocation17 + $0x238] sm:$0xff]
    %v5795 = vld [vmem:[#allocation17 + $0x240] sm:$0xff]
    %v5796 = vld [vmem:[#allocation17 + $0x248] sm:$0xff]
    %v5797 = vld [vmem:[#allocation17 + $0x250] sm:$0xff]
    %v5798 = vld [vmem:[#allocation17 + $0x258] sm:$0xff]
    %v5799 = vld [vmem:[#allocation17 + $0x260] sm:$0xff]
    %v5800 = vld [vmem:[#allocation17 + $0x268] sm:$0xff]
    %v5801 = vld [vmem:[#allocation17 + $0x270] sm:$0xff]
    %v5802 = vld [vmem:[#allocation17 + $0x278] sm:$0xff]
    %v5803 = vld [vmem:[#allocation17 + $0x280] sm:$0xff]
    %v5804 = vld [vmem:[#allocation17 + $0x288] sm:$0xff]
    %v5805 = vld [vmem:[#allocation17 + $0x290] sm:$0xff]
    %v5806 = vld [vmem:[#allocation17 + $0x298] sm:$0xff]
    %v5807 = vld [vmem:[#allocation17 + $0x2a0] sm:$0xff]
    %v5808 = vld [vmem:[#allocation17 + $0x2a8] sm:$0xff]
    %v5809 = vld [vmem:[#allocation17 + $0x2b0] sm:$0xff]
    %v5810 = vld [vmem:[#allocation17 + $0x2b8] sm:$0xff]
    %v5811 = vld [vmem:[#allocation17 + $0x2c0] sm:$0xff]
    %v5812 = vld [vmem:[#allocation17 + $0x2c8] sm:$0xff]
    %v5813 = vld [vmem:[#allocation17 + $0x2d0] sm:$0xff]
    %v5814 = vld [vmem:[#allocation17 + $0x2d8] sm:$0xff]
    %v5815 = vld [vmem:[#allocation17 + $0x2e0] sm:$0xff]
    %v5816 = vld [vmem:[#allocation17 + $0x2e8] sm:$0xff]
    %v5817 = vld [vmem:[#allocation17 + $0x2f0] sm:$0xff]
    %v5818 = vld [vmem:[#allocation17 + $0x2f8] sm:$0xff]
    %5819 = vmatprep.subr.mxu0 %v5724
    %5820 = vmatpush1.msra.mxu0 %v5723
    %5821 = vmatprep.subr.mxu0 %v5726
    %5822 = vmatpush1.msra.mxu0 %v5725
    %5823 = vmatprep.subr.mxu0 %v5728
    %5824 = vmatpush1.msra.mxu0 %v5727
    %5825 = vmatprep.subr.mxu0 %v5730
    %5826 = vmatpush1.msra.mxu0 %v5729
    %5827 = vmatprep.subr.mxu0 %v5732
    %5828 = vmatpush1.msra.mxu0 %v5731
    %5829 = vmatprep.subr.mxu0 %v5734
    %5830 = vmatpush1.msra.mxu0 %v5733
    %5831 = vmatprep.subr.mxu0 %v5736
    %5832 = vmatpush1.msra.mxu0 %v5735
    %5833 = vmatprep.subr.mxu0 %v5738
    %5834 = vmatpush1.msra.mxu0 %v5737
    %5835 = vmatprep.subr.mxu0 %v5740
    %5836 = vmatpush1.msra.mxu0 %v5739
    %5837 = vmatprep.subr.mxu0 %v5742
    %5838 = vmatpush1.msra.mxu0 %v5741
    %5839 = vmatprep.subr.mxu0 %v5744
    %5840 = vmatpush1.msra.mxu0 %v5743
    %5841 = vmatprep.subr.mxu0 %v5746
    %5842 = vmatpush1.msra.mxu0 %v5745
    %5843 = vmatprep.subr.mxu0 %v5748
    %5844 = vmatpush1.msra.mxu0 %v5747
    %5845 = vmatprep.subr.mxu0 %v5750
    %5846 = vmatpush1.msra.mxu0 %v5749
    %5847 = vmatprep.subr.mxu0 %v5752
    %5848 = vmatpush1.msra.mxu0 %v5751
    %5849 = vmatprep.subr.mxu0 %v5754
    %5850 = vmatpush1.msra.mxu0 %v5753
    %5851 = vmatprep.subr.mxu0 %v5756
    %5852 = vmatpush1.msra.mxu0 %v5755
    %5853 = vmatprep.subr.mxu0 %v5758
    %5854 = vmatpush1.msra.mxu0 %v5757
    %5855 = vmatprep.subr.mxu0 %v5760
    %5856 = vmatpush1.msra.mxu0 %v5759
    %5857 = vmatprep.subr.mxu0 %v5762
    %5858 = vmatpush1.msra.mxu0 %v5761
    %5859 = vmatprep.subr.mxu0 %v5764
    %5860 = vmatpush1.msra.mxu0 %v5763
    %5861 = vmatprep.subr.mxu0 %v5766
    %5862 = vmatpush1.msra.mxu0 %v5765
    %5863 = vmatprep.subr.mxu0 %v5768
    %5864 = vmatpush1.msra.mxu0 %v5767
    %5865 = vmatprep.subr.mxu0 %v5770
    %5866 = vmatpush1.msra.mxu0 %v5769
    %5867 = vmatprep.subr.mxu0 %v5772
    %5868 = vmatpush1.msra.mxu0 %v5771
    %5869 = vmatprep.subr.mxu0 %v5774
    %5870 = vmatpush1.msra.mxu0 %v5773
    %5871 = vmatprep.subr.mxu0 %v5776
    %5872 = vmatpush1.msra.mxu0 %v5775
    %5873 = vmatprep.subr.mxu0 %v5778
    %5874 = vmatpush1.msra.mxu0 %v5777
    %5875 = vmatprep.subr.mxu0 %v5780
    %5876 = vmatpush1.msra.mxu0 %v5779
    %5877 = vmatprep.subr.mxu0 %v5782
    %5878 = vmatpush1.msra.mxu0 %v5781
    %5879 = vmatprep.subr.mxu0 %v5784
    %5880 = vmatpush1.msra.mxu0 %v5783
    %5881 = vmatprep.subr.mxu0 %v5786
    %5882 = vmatpush1.msra.mxu0 %v5785
    %5883 = vmatprep.mubr.f32.mxu0 %v3884
    %5884 = vmatmul.mubr.f32.gmra.mrb[0].mxu0 %v3883
    %v5885 = vpop.f32.mrb[0].mxu0
    %v5886 = vadd.f32 0.0, %v5885
    %v5887 = vpop.f32.mrb[0].mxu0
    %v5888 = vadd.f32 0.0, %v5887
    %5889 = vmatprep.mubr.f32.mxu0 %v3887
    %5890 = vmatmul.mubr.f32.gmra.mrb[0].mxu0 %v3886
    %v5891 = vpop.f32.mrb[0].mxu0
    %v5892 = vadd.f32 0.0, %v5891
    %v5893 = vpop.f32.mrb[0].mxu0
    %v5894 = vadd.f32 0.0, %v5893
    %5895 = vmatprep.mubr.f32.mxu0 %v3890
    %5896 = vmatmul.mubr.f32.gmra.mrb[0].mxu0 %v3889
    %v5897 = vpop.f32.mrb[0].mxu0
    %v5898 = vadd.f32 0.0, %v5897
    %v5899 = vpop.f32.mrb[0].mxu0
    %v5900 = vadd.f32 0.0, %v5899
    %5901 = vmatprep.mubr.f32.mxu0 %v3893
    %5902 = vmatmul.mubr.f32.gmra.mrb[0].mxu0 %v3892
    %v5903 = vpop.f32.mrb[0].mxu0
    %v5904 = vadd.f32 0.0, %v5903
    %v5905 = vpop.f32.mrb[0].mxu0
    %v5906 = vadd.f32 0.0, %v5905
    %5907 = vmatprep.mubr.f32.mxu0 %v3896
    %5908 = vmatmul.mubr.f32.gmra.mrb[0].mxu0 %v3895
    %v5909 = vpop.f32.mrb[0].mxu0
    %v5910 = vadd.f32 0.0, %v5909
    %v5911 = vpop.f32.mrb[0].mxu0
    %v5912 = vadd.f32 0.0, %v5911
    %5913 = vmatprep.mubr.f32.mxu0 %v3899
    %5914 = vmatmul.mubr.f32.gmra.mrb[0].mxu0 %v3898
    %v5915 = vpop.f32.mrb[0].mxu0
    %v5916 = vadd.f32 0.0, %v5915
    %v5917 = vpop.f32.mrb[0].mxu0
    %v5918 = vadd.f32 0.0, %v5917
    %5919 = vmatprep.mubr.f32.mxu0 %v3902
    %5920 = vmatmul.mubr.f32.gmra.mrb[0].mxu0 %v3901
    %v5921 = vpop.f32.mrb[0].mxu0
    %v5922 = vadd.f32 0.0, %v5921
    %v5923 = vpop.f32.mrb[0].mxu0
    %v5924 = vadd.f32 0.0, %v5923
    %5925 = vmatprep.mubr.f32.mxu0 %v3905
    %5926 = vmatmul.mubr.f32.gmra.mrb[0].mxu0 %v3904
    %v5927 = vpop.f32.mrb[0].mxu0
    %v5928 = vadd.f32 0.0, %v5927
    %v5929 = vpop.f32.mrb[0].mxu0
    %v5930 = vadd.f32 0.0, %v5929
    %5931 = vmatprep.mubr.f32.mxu0 %v3908
    %5932 = vmatmul.mubr.f32.gmra.mrb[0].mxu0 %v3907
    %v5933 = vpop.f32.mrb[0].mxu0
    %v5934 = vadd.f32 0.0, %v5933
    %v5935 = vpop.f32.mrb[0].mxu0
    %v5936 = vadd.f32 0.0, %v5935
    %5937 = vmatprep.mubr.f32.mxu0 %v3911
    %5938 = vmatmul.mubr.f32.gmra.mrb[0].mxu0 %v3910
    %v5939 = vpop.f32.mrb[0].mxu0
    %v5940 = vadd.f32 0.0, %v5939
    %v5941 = vpop.f32.mrb[0].mxu0
    %v5942 = vadd.f32 0.0, %v5941
    %5943 = vmatprep.mubr.f32.mxu0 %v3914
    %5944 = vmatmul.mubr.f32.gmra.mrb[0].mxu0 %v3913
    %v5945 = vpop.f32.mrb[0].mxu0
    %v5946 = vadd.f32 0.0, %v5945
    %v5947 = vpop.f32.mrb[0].mxu0
    %v5948 = vadd.f32 0.0, %v5947
    %5949 = vmatprep.mubr.f32.mxu0 %v3917
    %5950 = vmatmul.mubr.f32.gmra.mrb[0].mxu0 %v3916
    %v5951 = vpop.f32.mrb[0].mxu0
    %v5952 = vadd.f32 0.0, %v5951
    %v5953 = vpop.f32.mrb[0].mxu0
    %v5954 = vadd.f32 0.0, %v5953
    %5955 = vmatprep.mubr.f32.mxu0 %v3920
    %5956 = vmatmul.mubr.f32.gmra.mrb[0].mxu0 %v3919
    %v5957 = vpop.f32.mrb[0].mxu0
    %v5958 = vadd.f32 0.0, %v5957
    %v5959 = vpop.f32.mrb[0].mxu0
    %v5960 = vadd.f32 0.0, %v5959
    %5961 = vmatprep.mubr.f32.mxu0 %v3923
    %5962 = vmatmul.mubr.f32.gmra.mrb[0].mxu0 %v3922
    %v5963 = vpop.f32.mrb[0].mxu0
    %v5964 = vadd.f32 0.0, %v5963
    %v5965 = vpop.f32.mrb[0].mxu0
    %v5966 = vadd.f32 0.0, %v5965
    %5967 = vmatprep.mubr.f32.mxu0 %v3926
    %5968 = vmatmul.mubr.f32.gmra.mrb[0].mxu0 %v3925
    %v5969 = vpop.f32.mrb[0].mxu0
    %v5970 = vadd.f32 0.0, %v5969
    %v5971 = vpop.f32.mrb[0].mxu0
    %v5972 = vadd.f32 0.0, %v5971
    %5973 = vmatprep.mubr.f32.mxu0 %v3929
    %5974 = vmatmul.mubr.f32.gmra.mrb[0].mxu0 %v3928
    %v5975 = vpop.f32.mrb[0].mxu0
    %v5976 = vadd.f32 0.0, %v5975
    %v5977 = vpop.f32.mrb[0].mxu0
    %v5978 = vadd.f32 0.0, %v5977
    %5979 = vdwg.mxu0
    %5980 = vmatprep.subr.mxu0 %v5788
    %5981 = vmatpush1.msra.mxu0 %v5787
    %5982 = vmatprep.subr.mxu0 %v5790
    %5983 = vmatpush1.msra.mxu0 %v5789
    %5984 = vmatprep.subr.mxu0 %v5792
    %5985 = vmatpush1.msra.mxu0 %v5791
    %5986 = vmatprep.subr.mxu0 %v5794
    %5987 = vmatpush1.msra.mxu0 %v5793
    %5988 = vmatprep.subr.mxu0 %v5796
    %5989 = vmatpush1.msra.mxu0 %v5795
    %5990 = vmatprep.subr.mxu0 %v5798
    %5991 = vmatpush1.msra.mxu0 %v5797
    %5992 = vmatprep.subr.mxu0 %v5800
    %5993 = vmatpush1.msra.mxu0 %v5799
    %5994 = vmatprep.subr.mxu0 %v5802
    %5995 = vmatpush1.msra.mxu0 %v5801
    %5996 = vmatprep.subr.mxu0 %v5804
    %5997 = vmatpush1.msra.mxu0 %v5803
    %5998 = vmatprep.subr.mxu0 %v5806
    %5999 = vmatpush1.msra.mxu0 %v5805
    %6000 = vmatprep.subr.mxu0 %v5808
    %6001 = vmatpush1.msra.mxu0 %v5807
    %6002 = vmatprep.subr.mxu0 %v5810
    %6003 = vmatpush1.msra.mxu0 %v5809
    %6004 = vmatprep.subr.mxu0 %v5812
    %6005 = vmatpush1.msra.mxu0 %v5811
    %6006 = vmatprep.subr.mxu0 %v5814
    %6007 = vmatpush1.msra.mxu0 %v5813
    %6008 = vmatprep.subr.mxu0 %v5816
    %6009 = vmatpush1.msra.mxu0 %v5815
    %6010 = vmatprep.subr.mxu0 %v5818
    %6011 = vmatpush1.msra.mxu0 %v5817
    %6012 = vmatprep.subr.mxu0 0.0
    %6013 = vmatpush1.msra.mxu0 0.0
    %6014 = vmatprep.subr.mxu0 0.0
    %6015 = vmatpush1.msra.mxu0 0.0
    %6016 = vmatprep.subr.mxu0 0.0
    %6017 = vmatpush1.msra.mxu0 0.0
    %6018 = vmatprep.subr.mxu0 0.0
    %6019 = vmatpush1.msra.mxu0 0.0
    %6020 = vmatprep.subr.mxu0 0.0
    %6021 = vmatpush1.msra.mxu0 0.0
    %6022 = vmatprep.subr.mxu0 0.0
    %6023 = vmatpush1.msra.mxu0 0.0
    %6024 = vmatprep.subr.mxu0 0.0
    %6025 = vmatpush1.msra.mxu0 0.0
    %6026 = vmatprep.subr.mxu0 0.0
    %6027 = vmatpush1.msra.mxu0 0.0
    %6028 = vmatprep.subr.mxu0 0.0
    %6029 = vmatpush1.msra.mxu0 0.0
    %6030 = vmatprep.subr.mxu0 0.0
    %6031 = vmatpush1.msra.mxu0 0.0
    %6032 = vmatprep.subr.mxu0 0.0
    %6033 = vmatpush1.msra.mxu0 0.0
    %6034 = vmatprep.subr.mxu0 0.0
    %6035 = vmatpush1.msra.mxu0 0.0
    %6036 = vmatprep.subr.mxu0 0.0
    %6037 = vmatpush1.msra.mxu0 0.0
    %6038 = vmatprep.subr.mxu0 0.0
    %6039 = vmatpush1.msra.mxu0 0.0
    %6040 = vmatprep.subr.mxu0 0.0
    %6041 = vmatpush1.msra.mxu0 0.0
    %6042 = vmatprep.subr.mxu0 0.0
    %6043 = vmatpush1.msra.mxu0 0.0
    %6044 = vmatprep.mubr.f32.mxu0 0.0
    %6045 = vmatmul.mubr.f32.gmra.mrb[0].mxu0 %v3885
    %v6046 = vpop.f32.mrb[0].mxu0
    %v6047 = vadd.f32 %v5886, %v6046
    %v6048 = vpop.f32.mrb[0].mxu0
    %v6049 = vadd.f32 %v5888, %v6048
    %6050 = vmatprep.mubr.f32.mxu0 0.0
    %6051 = vmatmul.mubr.f32.gmra.mrb[0].mxu0 %v3888
    %v6052 = vpop.f32.mrb[0].mxu0
    %v6053 = vadd.f32 %v5892, %v6052
    %v6054 = vpop.f32.mrb[0].mxu0
    %v6055 = vadd.f32 %v5894, %v6054
    %6056 = vmatprep.mubr.f32.mxu0 0.0
    %6057 = vmatmul.mubr.f32.gmra.mrb[0].mxu0 %v3891
    %v6058 = vpop.f32.mrb[0].mxu0
    %v6059 = vadd.f32 %v5898, %v6058
    %v6060 = vpop.f32.mrb[0].mxu0
    %v6061 = vadd.f32 %v5900, %v6060
    %6062 = vmatprep.mubr.f32.mxu0 0.0
    %6063 = vmatmul.mubr.f32.gmra.mrb[0].mxu0 %v3894
    %v6064 = vpop.f32.mrb[0].mxu0
    %v6065 = vadd.f32 %v5904, %v6064
    %v6066 = vpop.f32.mrb[0].mxu0
    %v6067 = vadd.f32 %v5906, %v6066
    %6068 = vmatprep.mubr.f32.mxu0 0.0
    %6069 = vmatmul.mubr.f32.gmra.mrb[0].mxu0 %v3897
    %v6070 = vpop.f32.mrb[0].mxu0
    %v6071 = vadd.f32 %v5910, %v6070
    %v6072 = vpop.f32.mrb[0].mxu0
    %v6073 = vadd.f32 %v5912, %v6072
    %6074 = vmatprep.mubr.f32.mxu0 0.0
    %6075 = vmatmul.mubr.f32.gmra.mrb[0].mxu0 %v3900
    %v6076 = vpop.f32.mrb[0].mxu0
    %v6077 = vadd.f32 %v5916, %v6076
    %v6078 = vpop.f32.mrb[0].mxu0
    %v6079 = vadd.f32 %v5918, %v6078
    %6080 = vmatprep.mubr.f32.mxu0 0.0
    %6081 = vmatmul.mubr.f32.gmra.mrb[0].mxu0 %v3903
    %v6082 = vpop.f32.mrb[0].mxu0
    %v6083 = vadd.f32 %v5922, %v6082
    %v6084 = vpop.f32.mrb[0].mxu0
    %v6085 = vadd.f32 %v5924, %v6084
    %6086 = vmatprep.mubr.f32.mxu0 0.0
    %6087 = vmatmul.mubr.f32.gmra.mrb[0].mxu0 %v3906
    %v6088 = vpop.f32.mrb[0].mxu0
    %v6089 = vadd.f32 %v5928, %v6088
    %v6090 = vpop.f32.mrb[0].mxu0
    %v6091 = vadd.f32 %v5930, %v6090
    %6092 = vmatprep.mubr.f32.mxu0 0.0
    %6093 = vmatmul.mubr.f32.gmra.mrb[0].mxu0 %v3909
    %v6094 = vpop.f32.mrb[0].mxu0
    %v6095 = vadd.f32 %v5934, %v6094
    %v6096 = vpop.f32.mrb[0].mxu0
    %v6097 = vadd.f32 %v5936, %v6096
    %6098 = vmatprep.mubr.f32.mxu0 0.0
    %6099 = vmatmul.mubr.f32.gmra.mrb[0].mxu0 %v3912
    %v6100 = vpop.f32.mrb[0].mxu0
    %v6101 = vadd.f32 %v5940, %v6100
    %v6102 = vpop.f32.mrb[0].mxu0
    %v6103 = vadd.f32 %v5942, %v6102
    %6104 = vmatprep.mubr.f32.mxu0 0.0
    %6105 = vmatmul.mubr.f32.gmra.mrb[0].mxu0 %v3915
    %v6106 = vpop.f32.mrb[0].mxu0
    %v6107 = vadd.f32 %v5946, %v6106
    %v6108 = vpop.f32.mrb[0].mxu0
    %v6109 = vadd.f32 %v5948, %v6108
    %6110 = vmatprep.mubr.f32.mxu0 0.0
    %6111 = vmatmul.mubr.f32.gmra.mrb[0].mxu0 %v3918
    %v6112 = vpop.f32.mrb[0].mxu0
    %v6113 = vadd.f32 %v5952, %v6112
    %v6114 = vpop.f32.mrb[0].mxu0
    %v6115 = vadd.f32 %v5954, %v6114
    %6116 = vmatprep.mubr.f32.mxu0 0.0
    %6117 = vmatmul.mubr.f32.gmra.mrb[0].mxu0 %v3921
    %v6118 = vpop.f32.mrb[0].mxu0
    %v6119 = vadd.f32 %v5958, %v6118
    %v6120 = vpop.f32.mrb[0].mxu0
    %v6121 = vadd.f32 %v5960, %v6120
    %6122 = vmatprep.mubr.f32.mxu0 0.0
    %6123 = vmatmul.mubr.f32.gmra.mrb[0].mxu0 %v3924
    %v6124 = vpop.f32.mrb[0].mxu0
    %v6125 = vadd.f32 %v5964, %v6124
    %v6126 = vpop.f32.mrb[0].mxu0
    %v6127 = vadd.f32 %v5966, %v6126
    %6128 = vmatprep.mubr.f32.mxu0 0.0
    %6129 = vmatmul.mubr.f32.gmra.mrb[0].mxu0 %v3927
    %v6130 = vpop.f32.mrb[0].mxu0
    %v6131 = vadd.f32 %v5970, %v6130
    %v6132 = vpop.f32.mrb[0].mxu0
    %v6133 = vadd.f32 %v5972, %v6132
    %6134 = vmatprep.mubr.f32.mxu0 0.0
    %6135 = vmatmul.mubr.f32.gmra.mrb[0].mxu0 %v3930
    %v6136 = vpop.f32.mrb[0].mxu0
    %v6137 = vadd.f32 %v5976, %v6136
    %v6138 = vpop.f32.mrb[0].mxu0
    %v6139 = vadd.f32 %v5978, %v6138
    %6140 = vdwg.mxu0
    %v6141 = vadd.f32 %v5691, %v6047
    %v6142 = vadd.f32 %v5692, %v6049
    %v6143 = vadd.f32 %v5693, %v6053
    %v6144 = vadd.f32 %v5694, %v6055
    %v6145 = vadd.f32 %v5695, %v6059
    %v6146 = vadd.f32 %v5696, %v6061
    %v6147 = vadd.f32 %v5697, %v6065
    %v6148 = vadd.f32 %v5698, %v6067
    %v6149 = vadd.f32 %v5699, %v6071
    %v6150 = vadd.f32 %v5700, %v6073
    %v6151 = vadd.f32 %v5701, %v6077
    %v6152 = vadd.f32 %v5702, %v6079
    %v6153 = vadd.f32 %v5703, %v6083
    %v6154 = vadd.f32 %v5704, %v6085
    %v6155 = vadd.f32 %v5705, %v6089
    %v6156 = vadd.f32 %v5706, %v6091
    %v6157 = vadd.f32 %v5707, %v6095
    %v6158 = vadd.f32 %v5708, %v6097
    %v6159 = vadd.f32 %v5709, %v6101
    %v6160 = vadd.f32 %v5710, %v6103
    %v6161 = vadd.f32 %v5711, %v6107
    %v6162 = vadd.f32 %v5712, %v6109
    %v6163 = vadd.f32 %v5713, %v6113
    %v6164 = vadd.f32 %v5714, %v6115
    %v6165 = vadd.f32 %v5715, %v6119
    %v6166 = vadd.f32 %v5716, %v6121
    %v6167 = vadd.f32 %v5717, %v6125
    %v6168 = vadd.f32 %v5718, %v6127
    %v6169 = vadd.f32 %v5719, %v6131
    %v6170 = vadd.f32 %v5720, %v6133
    %v6171 = vadd.f32 %v5721, %v6137
    %v6172 = vadd.f32 %v5722, %v6139
    %v6173 = vld [vmem:[%s14] sm:$0xff]
    %v6174 = vld [vmem:[#allocation19] sm:$0xff]
    %v6175 = vld [vmem:[#allocation19 + $0x8] sm:$0xff]
    %v6176 = vld [vmem:[#allocation19 + $0x10] sm:$0xff]
    %v6177 = vld [vmem:[#allocation19 + $0x18] sm:$0xff]
    %v6178 = vld [vmem:[#allocation19 + $0x20] sm:$0xff]
    %v6179 = vld [vmem:[#allocation19 + $0x28] sm:$0xff]
    %v6180 = vld [vmem:[#allocation19 + $0x30] sm:$0xff]
    %v6181 = vld [vmem:[#allocation19 + $0x38] sm:$0xff]
    %v6182 = vld [vmem:[#allocation19 + $0x40] sm:$0xff]
    %v6183 = vld [vmem:[#allocation19 + $0x48] sm:$0xff]
    %v6184 = vld [vmem:[#allocation19 + $0x50] sm:$0xff]
    %v6185 = vld [vmem:[#allocation19 + $0x58] sm:$0xff]
    %v6186 = vld [vmem:[#allocation19 + $0x60] sm:$0xff]
    %v6187 = vld [vmem:[#allocation19 + $0x68] sm:$0xff]
    %v6188 = vld [vmem:[#allocation19 + $0x70] sm:$0xff]
    %v6189 = vld [vmem:[#allocation19 + $0x78] sm:$0xff]
    %v6190 = vld [vmem:[#allocation19 + $0x80] sm:$0xff]
    %v6191 = vld [vmem:[#allocation19 + $0x88] sm:$0xff]
    %v6192 = vld [vmem:[#allocation19 + $0x90] sm:$0xff]
    %v6193 = vld [vmem:[#allocation19 + $0x98] sm:$0xff]
    %v6194 = vld [vmem:[#allocation19 + $0xa0] sm:$0xff]
    %v6195 = vld [vmem:[#allocation19 + $0xa8] sm:$0xff]
    %v6196 = vld [vmem:[#allocation19 + $0xb0] sm:$0xff]
    %v6197 = vld [vmem:[#allocation19 + $0xb8] sm:$0xff]
    %v6198 = vld [vmem:[#allocation19 + $0xc0] sm:$0xff]
    %v6199 = vld [vmem:[#allocation19 + $0xc8] sm:$0xff]
    %v6200 = vld [vmem:[#allocation19 + $0xd0] sm:$0xff]
    %v6201 = vld [vmem:[#allocation19 + $0xd8] sm:$0xff]
    %v6202 = vld [vmem:[#allocation19 + $0xe0] sm:$0xff]
    %v6203 = vld [vmem:[#allocation19 + $0xe8] sm:$0xff]
    %v6204 = vld [vmem:[#allocation19 + $0xf0] sm:$0xff]
    %v6205 = vld [vmem:[#allocation19 + $0xf8] sm:$0xff]
    %6206 = vmatprep.subr.mxu0 0.0
    %6207 = vmatpush1.msra.mxu0 %v6174
    %6208 = vmatprep.subr.mxu0 0.0
    %6209 = vmatpush1.msra.mxu0 %v6175
    %6210 = vmatprep.subr.mxu0 0.0
    %6211 = vmatpush1.msra.mxu0 %v6176
    %6212 = vmatprep.subr.mxu0 0.0
    %6213 = vmatpush1.msra.mxu0 %v6177
    %6214 = vmatprep.subr.mxu0 0.0
    %6215 = vmatpush1.msra.mxu0 %v6178
    %6216 = vmatprep.subr.mxu0 0.0
    %6217 = vmatpush1.msra.mxu0 %v6179
    %6218 = vmatprep.subr.mxu0 0.0
    %6219 = vmatpush1.msra.mxu0 %v6180
    %6220 = vmatprep.subr.mxu0 0.0
    %6221 = vmatpush1.msra.mxu0 %v6181
    %6222 = vmatprep.subr.mxu0 0.0
    %6223 = vmatpush1.msra.mxu0 %v6182
    %6224 = vmatprep.subr.mxu0 0.0
    %6225 = vmatpush1.msra.mxu0 %v6183
    %6226 = vmatprep.subr.mxu0 0.0
    %6227 = vmatpush1.msra.mxu0 %v6184
    %6228 = vmatprep.subr.mxu0 0.0
    %6229 = vmatpush1.msra.mxu0 %v6185
    %6230 = vmatprep.subr.mxu0 0.0
    %6231 = vmatpush1.msra.mxu0 %v6186
    %6232 = vmatprep.subr.mxu0 0.0
    %6233 = vmatpush1.msra.mxu0 %v6187
    %6234 = vmatprep.subr.mxu0 0.0
    %6235 = vmatpush1.msra.mxu0 %v6188
    %6236 = vmatprep.subr.mxu0 0.0
    %6237 = vmatpush1.msra.mxu0 %v6189
    %6238 = vmatprep.subr.mxu0 0.0
    %6239 = vmatpush1.msra.mxu0 %v6190
    %6240 = vmatprep.subr.mxu0 0.0
    %6241 = vmatpush1.msra.mxu0 %v6191
    %6242 = vmatprep.subr.mxu0 0.0
    %6243 = vmatpush1.msra.mxu0 %v6192
    %6244 = vmatprep.subr.mxu0 0.0
    %6245 = vmatpush1.msra.mxu0 %v6193
    %6246 = vmatprep.subr.mxu0 0.0
    %6247 = vmatpush1.msra.mxu0 %v6194
    %6248 = vmatprep.subr.mxu0 0.0
    %6249 = vmatpush1.msra.mxu0 %v6195
    %6250 = vmatprep.subr.mxu0 0.0
    %6251 = vmatpush1.msra.mxu0 %v6196
    %6252 = vmatprep.subr.mxu0 0.0
    %6253 = vmatpush1.msra.mxu0 %v6197
    %6254 = vmatprep.subr.mxu0 0.0
    %6255 = vmatpush1.msra.mxu0 %v6198
    %6256 = vmatprep.subr.mxu0 0.0
    %6257 = vmatpush1.msra.mxu0 %v6199
    %6258 = vmatprep.subr.mxu0 0.0
    %6259 = vmatpush1.msra.mxu0 %v6200
    %6260 = vmatprep.subr.mxu0 0.0
    %6261 = vmatpush1.msra.mxu0 %v6201
    %6262 = vmatprep.subr.mxu0 0.0
    %6263 = vmatpush1.msra.mxu0 %v6202
    %6264 = vmatprep.subr.mxu0 0.0
    %6265 = vmatpush1.msra.mxu0 %v6203
    %6266 = vmatprep.subr.mxu0 0.0
    %6267 = vmatpush1.msra.mxu0 %v6204
    %6268 = vmatprep.subr.mxu0 0.0
    %6269 = vmatpush1.msra.mxu0 %v6205
    %6270 = vmatprep.mubr.f32.mxu0 %v6142
    %6271 = vmatmul.mubr.f32.gmra.mrb[0].mxu0 %v6141
    %v6272 = vpop.f32.mrb[0].mxu0
    %v6273 = vadd.f32 0.0, %v6272
    %v6274 = vpop.f32.mrb[0].mxu0
    %6275 = vmatprep.mubr.f32.mxu0 %v6144
    %6276 = vmatmul.mubr.f32.gmra.mrb[0].mxu0 %v6143
    %v6277 = vpop.f32.mrb[0].mxu0
    %v6278 = vadd.f32 0.0, %v6277
    %v6279 = vpop.f32.mrb[0].mxu0
    %6280 = vmatprep.mubr.f32.mxu0 %v6146
    %6281 = vmatmul.mubr.f32.gmra.mrb[0].mxu0 %v6145
    %v6282 = vpop.f32.mrb[0].mxu0
    %v6283 = vadd.f32 0.0, %v6282
    %v6284 = vpop.f32.mrb[0].mxu0
    %6285 = vmatprep.mubr.f32.mxu0 %v6148
    %6286 = vmatmul.mubr.f32.gmra.mrb[0].mxu0 %v6147
    %v6287 = vpop.f32.mrb[0].mxu0
    %v6288 = vadd.f32 0.0, %v6287
    %v6289 = vpop.f32.mrb[0].mxu0
    %6290 = vmatprep.mubr.f32.mxu0 %v6150
    %6291 = vmatmul.mubr.f32.gmra.mrb[0].mxu0 %v6149
    %v6292 = vpop.f32.mrb[0].mxu0
    %v6293 = vadd.f32 0.0, %v6292
    %v6294 = vpop.f32.mrb[0].mxu0
    %6295 = vmatprep.mubr.f32.mxu0 %v6152
    %6296 = vmatmul.mubr.f32.gmra.mrb[0].mxu0 %v6151
    %v6297 = vpop.f32.mrb[0].mxu0
    %v6298 = vadd.f32 0.0, %v6297
    %v6299 = vpop.f32.mrb[0].mxu0
    %6300 = vmatprep.mubr.f32.mxu0 %v6154
    %6301 = vmatmul.mubr.f32.gmra.mrb[0].mxu0 %v6153
    %v6302 = vpop.f32.mrb[0].mxu0
    %v6303 = vadd.f32 0.0, %v6302
    %v6304 = vpop.f32.mrb[0].mxu0
    %6305 = vmatprep.mubr.f32.mxu0 %v6156
    %6306 = vmatmul.mubr.f32.gmra.mrb[0].mxu0 %v6155
    %v6307 = vpop.f32.mrb[0].mxu0
    %v6308 = vadd.f32 0.0, %v6307
    %v6309 = vpop.f32.mrb[0].mxu0
    %6310 = vmatprep.mubr.f32.mxu0 %v6158
    %6311 = vmatmul.mubr.f32.gmra.mrb[0].mxu0 %v6157
    %v6312 = vpop.f32.mrb[0].mxu0
    %v6313 = vadd.f32 0.0, %v6312
    %v6314 = vpop.f32.mrb[0].mxu0
    %6315 = vmatprep.mubr.f32.mxu0 %v6160
    %6316 = vmatmul.mubr.f32.gmra.mrb[0].mxu0 %v6159
    %v6317 = vpop.f32.mrb[0].mxu0
    %v6318 = vadd.f32 0.0, %v6317
    %v6319 = vpop.f32.mrb[0].mxu0
    %6320 = vmatprep.mubr.f32.mxu0 %v6162
    %6321 = vmatmul.mubr.f32.gmra.mrb[0].mxu0 %v6161
    %v6322 = vpop.f32.mrb[0].mxu0
    %v6323 = vadd.f32 0.0, %v6322
    %v6324 = vpop.f32.mrb[0].mxu0
    %6325 = vmatprep.mubr.f32.mxu0 %v6164
    %6326 = vmatmul.mubr.f32.gmra.mrb[0].mxu0 %v6163
    %v6327 = vpop.f32.mrb[0].mxu0
    %v6328 = vadd.f32 0.0, %v6327
    %v6329 = vpop.f32.mrb[0].mxu0
    %6330 = vmatprep.mubr.f32.mxu0 %v6166
    %6331 = vmatmul.mubr.f32.gmra.mrb[0].mxu0 %v6165
    %v6332 = vpop.f32.mrb[0].mxu0
    %v6333 = vadd.f32 0.0, %v6332
    %v6334 = vpop.f32.mrb[0].mxu0
    %6335 = vmatprep.mubr.f32.mxu0 %v6168
    %6336 = vmatmul.mubr.f32.gmra.mrb[0].mxu0 %v6167
    %v6337 = vpop.f32.mrb[0].mxu0
    %v6338 = vadd.f32 0.0, %v6337
    %v6339 = vpop.f32.mrb[0].mxu0
    %6340 = vmatprep.mubr.f32.mxu0 %v6170
    %6341 = vmatmul.mubr.f32.gmra.mrb[0].mxu0 %v6169
    %v6342 = vpop.f32.mrb[0].mxu0
    %v6343 = vadd.f32 0.0, %v6342
    %v6344 = vpop.f32.mrb[0].mxu0
    %6345 = vmatprep.mubr.f32.mxu0 %v6172
    %6346 = vmatmul.mubr.f32.gmra.mrb[0].mxu0 %v6171
    %v6347 = vpop.f32.mrb[0].mxu0
    %v6348 = vadd.f32 0.0, %v6347
    %v6349 = vpop.f32.mrb[0].mxu0
    %6350 = vdwg.mxu0
    %v6351 = vadd.f32 %v6273, %v6278
    %v6352 = vadd.f32 %v6351, %v6283
    %v6353 = vadd.f32 %v6352, %v6288
    %v6354 = vadd.f32 %v6353, %v6293
    %v6355 = vadd.f32 %v6354, %v6298
    %v6356 = vadd.f32 %v6355, %v6303
    %v6357 = vadd.f32 %v6356, %v6308
    %v6358 = vadd.f32 %v6357, %v6313
    %v6359 = vadd.f32 %v6358, %v6318
    %v6360 = vadd.f32 %v6359, %v6323
    %v6361 = vadd.f32 %v6360, %v6328
    %v6362 = vadd.f32 %v6361, %v6333
    %v6363 = vadd.f32 %v6362, %v6338
    %v6364 = vadd.f32 %v6363, %v6343
    %v6365 = vadd.f32 %v6364, %v6348
    %v6366 = vrot.slane %v6365, 4
    %v6367 = vadd.f32 %v6365, %v6366
    %v6368 = vrot.slane %v6367, 2
    %v6369 = vadd.f32 %v6367, %v6368
    %v6370 = vrot.slane %v6369, 1
    %v6371 = vadd.f32 %v6369, %v6370
    %v6372 = vmul.f32 %v6371, 0.0078125
    %v6373 = vsub.f32 %v6273, %v6372
    %v6374 = vsub.f32 %v6278, %v6372
    %v6375 = vsub.f32 %v6283, %v6372
    %v6376 = vsub.f32 %v6288, %v6372
    %v6377 = vsub.f32 %v6293, %v6372
    %v6378 = vsub.f32 %v6298, %v6372
    %v6379 = vsub.f32 %v6303, %v6372
    %v6380 = vsub.f32 %v6308, %v6372
    %v6381 = vsub.f32 %v6313, %v6372
    %v6382 = vsub.f32 %v6318, %v6372
    %v6383 = vsub.f32 %v6323, %v6372
    %v6384 = vsub.f32 %v6328, %v6372
    %v6385 = vsub.f32 %v6333, %v6372
    %v6386 = vsub.f32 %v6338, %v6372
    %v6387 = vsub.f32 %v6343, %v6372
    %v6388 = vsub.f32 %v6348, %v6372
    %v6389 = vmul.f32 %v6373, %v6373
    %v6390 = vmul.f32 %v6374, %v6374
    %v6391 = vmul.f32 %v6375, %v6375
    %v6392 = vmul.f32 %v6376, %v6376
    %v6393 = vmul.f32 %v6377, %v6377
    %v6394 = vmul.f32 %v6378, %v6378
    %v6395 = vmul.f32 %v6379, %v6379
    %v6396 = vmul.f32 %v6380, %v6380
    %v6397 = vmul.f32 %v6381, %v6381
    %v6398 = vmul.f32 %v6382, %v6382
    %v6399 = vmul.f32 %v6383, %v6383
    %v6400 = vmul.f32 %v6384, %v6384
    %v6401 = vmul.f32 %v6385, %v6385
    %v6402 = vmul.f32 %v6386, %v6386
    %v6403 = vmul.f32 %v6387, %v6387
    %v6404 = vmul.f32 %v6388, %v6388
    %v6405 = vadd.f32 %v6389, %v6390
    %v6406 = vadd.f32 %v6405, %v6391
    %v6407 = vadd.f32 %v6406, %v6392
    %v6408 = vadd.f32 %v6407, %v6393
    %v6409 = vadd.f32 %v6408, %v6394
    %v6410 = vadd.f32 %v6409, %v6395
    %v6411 = vadd.f32 %v6410, %v6396
    %v6412 = vadd.f32 %v6411, %v6397
    %v6413 = vadd.f32 %v6412, %v6398
    %v6414 = vadd.f32 %v6413, %v6399
    %v6415 = vadd.f32 %v6414, %v6400
    %v6416 = vadd.f32 %v6415, %v6401
    %v6417 = vadd.f32 %v6416, %v6402
    %v6418 = vadd.f32 %v6417, %v6403
    %v6419 = vadd.f32 %v6418, %v6404
    %v6420 = vrot.slane %v6419, 4
    %v6421 = vadd.f32 %v6419, %v6420
    %v6422 = vrot.slane %v6421, 2
    %v6423 = vadd.f32 %v6421, %v6422
    %v6424 = vrot.slane %v6423, 1
    %v6425 = vadd.f32 %v6423, %v6424
    %v6426 = vmul.f32 %v6425, 0.0078125
    %v6427 = vadd.f32 %v6426, 1e-05
    %v6428 = vrsqrt.pop %v6427
    %v6429 = vmul.f32 %v6173, %v6428
    %v6430 = vlaneseq
    %v6431 = vshrl.u32 %v6430, 7
    %v6432 = vsub.s32 0, %v6431
    %v6433 = vrot.slane %v6429, %v6432
    %v6434 = vmul.f32 %v6373, %v6433
    %v6435 = vmul.f32 %v6374, %v6433
    %v6436 = vmul.f32 %v6375, %v6433
    %v6437 = vmul.f32 %v6376, %v6433
    %v6438 = vmul.f32 %v6377, %v6433
    %v6439 = vmul.f32 %v6378, %v6433
    %v6440 = vmul.f32 %v6379, %v6433
    %v6441 = vmul.f32 %v6380, %v6433
    %v6442 = vmul.f32 %v6381, %v6433
    %v6443 = vmul.f32 %v6382, %v6433
    %v6444 = vmul.f32 %v6383, %v6433
    %v6445 = vmul.f32 %v6384, %v6433
    %v6446 = vmul.f32 %v6385, %v6433
    %v6447 = vmul.f32 %v6386, %v6433
    %v6448 = vmul.f32 %v6387, %v6433
    %v6449 = vmul.f32 %v6388, %v6433
    %v6450 = vlaneseq
    %v6451 = vshrl.u32 %v6450, 7
    %v6452 = vsub.s32 1, %v6451
    %v6453 = vrot.slane %v6173, %v6452
    %v6454 = vadd.f32 %v6434, %v6453
    %v6455 = vadd.f32 %v6435, %v6453
    %v6456 = vadd.f32 %v6436, %v6453
    %v6457 = vadd.f32 %v6437, %v6453
    %v6458 = vadd.f32 %v6438, %v6453
    %v6459 = vadd.f32 %v6439, %v6453
    %v6460 = vadd.f32 %v6440, %v6453
    %v6461 = vadd.f32 %v6441, %v6453
    %v6462 = vadd.f32 %v6442, %v6453
    %v6463 = vadd.f32 %v6443, %v6453
    %v6464 = vadd.f32 %v6444, %v6453
    %v6465 = vadd.f32 %v6445, %v6453
    %v6466 = vadd.f32 %v6446, %v6453
    %v6467 = vadd.f32 %v6447, %v6453
    %v6468 = vadd.f32 %v6448, %v6453
    %v6469 = vadd.f32 %v6449, %v6453
    %vm6470 = vcmp.ge.f32.partialorder %v6454, 0.0
    %vm6471 = vcmp.ge.f32.partialorder %v6455, 0.0
    %vm6472 = vcmp.ge.f32.partialorder %v6456, 0.0
    %vm6473 = vcmp.ge.f32.partialorder %v6457, 0.0
    %vm6474 = vcmp.ge.f32.partialorder %v6458, 0.0
    %vm6475 = vcmp.ge.f32.partialorder %v6459, 0.0
    %vm6476 = vcmp.ge.f32.partialorder %v6460, 0.0
    %vm6477 = vcmp.ge.f32.partialorder %v6461, 0.0
    %vm6478 = vcmp.ge.f32.partialorder %v6462, 0.0
    %vm6479 = vcmp.ge.f32.partialorder %v6463, 0.0
    %vm6480 = vcmp.ge.f32.partialorder %v6464, 0.0
    %vm6481 = vcmp.ge.f32.partialorder %v6465, 0.0
    %vm6482 = vcmp.ge.f32.partialorder %v6466, 0.0
    %vm6483 = vcmp.ge.f32.partialorder %v6467, 0.0
    %vm6484 = vcmp.ge.f32.partialorder %v6468, 0.0
    %vm6485 = vcmp.ge.f32.partialorder %v6469, 0.0
    %v6486 = vmul.f32 %v6454, 0.2
    %v6487 = vmul.f32 %v6455, 0.2
    %v6488 = vmul.f32 %v6456, 0.2
    %v6489 = vmul.f32 %v6457, 0.2
    %v6490 = vmul.f32 %v6458, 0.2
    %v6491 = vmul.f32 %v6459, 0.2
    %v6492 = vmul.f32 %v6460, 0.2
    %v6493 = vmul.f32 %v6461, 0.2
    %v6494 = vmul.f32 %v6462, 0.2
    %v6495 = vmul.f32 %v6463, 0.2
    %v6496 = vmul.f32 %v6464, 0.2
    %v6497 = vmul.f32 %v6465, 0.2
    %v6498 = vmul.f32 %v6466, 0.2
    %v6499 = vmul.f32 %v6467, 0.2
    %v6500 = vmul.f32 %v6468, 0.2
    %v6501 = vmul.f32 %v6469, 0.2
    %v6502 = vsel %vm6470, %v6454, %v6486
    %v6503 = vsel %vm6471, %v6455, %v6487
    %v6504 = vsel %vm6472, %v6456, %v6488
    %v6505 = vsel %vm6473, %v6457, %v6489
    %v6506 = vsel %vm6474, %v6458, %v6490
    %v6507 = vsel %vm6475, %v6459, %v6491
    %v6508 = vsel %vm6476, %v6460, %v6492
    %v6509 = vsel %vm6477, %v6461, %v6493
    %v6510 = vsel %vm6478, %v6462, %v6494
    %v6511 = vsel %vm6479, %v6463, %v6495
    %v6512 = vsel %vm6480, %v6464, %v6496
    %v6513 = vsel %vm6481, %v6465, %v6497
    %v6514 = vsel %vm6482, %v6466, %v6498
    %v6515 = vsel %vm6483, %v6467, %v6499
    %v6516 = vsel %vm6484, %v6468, %v6500
    %v6517 = vsel %vm6485, %v6469, %v6501
    %v6518 = vld [vmem:[#allocation20] sm:$0xff]
    %v6519 = vld [vmem:[#allocation20 + $0x8] sm:$0xff]
    %v6520 = vld [vmem:[#allocation20 + $0x10] sm:$0xff]
    %v6521 = vld [vmem:[#allocation20 + $0x18] sm:$0xff]
    %v6522 = vld [vmem:[#allocation20 + $0x20] sm:$0xff]
    %v6523 = vld [vmem:[#allocation20 + $0x28] sm:$0xff]
    %v6524 = vld [vmem:[#allocation20 + $0x30] sm:$0xff]
    %v6525 = vld [vmem:[#allocation20 + $0x38] sm:$0xff]
    %v6526 = vld [vmem:[#allocation20 + $0x40] sm:$0xff]
    %v6527 = vld [vmem:[#allocation20 + $0x48] sm:$0xff]
    %v6528 = vld [vmem:[#allocation20 + $0x50] sm:$0xff]
    %v6529 = vld [vmem:[#allocation20 + $0x58] sm:$0xff]
    %v6530 = vld [vmem:[#allocation20 + $0x60] sm:$0xff]
    %v6531 = vld [vmem:[#allocation20 + $0x68] sm:$0xff]
    %v6532 = vld [vmem:[#allocation20 + $0x70] sm:$0xff]
    %v6533 = vld [vmem:[#allocation20 + $0x78] sm:$0xff]
    %v6534 = vlaneseq
    %v6535 = vshrl.u32 %v6534, 7
    %v6536 = vsub.s32 2, %v6535
    %v6537 = vrot.slane %v6173, %v6536
    %6538 = vmatprep.subr.mxu0 0.0
    %6539 = vmatpush1.msra.mxu0 %v6518
    %6540 = vmatprep.subr.mxu0 0.0
    %6541 = vmatpush1.msra.mxu0 %v6519
    %6542 = vmatprep.subr.mxu0 0.0
    %6543 = vmatpush1.msra.mxu0 %v6520
    %6544 = vmatprep.subr.mxu0 0.0
    %6545 = vmatpush1.msra.mxu0 %v6521
    %6546 = vmatprep.subr.mxu0 0.0
    %6547 = vmatpush1.msra.mxu0 %v6522
    %6548 = vmatprep.subr.mxu0 0.0
    %6549 = vmatpush1.msra.mxu0 %v6523
    %6550 = vmatprep.subr.mxu0 0.0
    %6551 = vmatpush1.msra.mxu0 %v6524
    %6552 = vmatprep.subr.mxu0 0.0
    %6553 = vmatpush1.msra.mxu0 %v6525
    %6554 = vmatprep.subr.mxu0 0.0
    %6555 = vmatpush1.msra.mxu0 %v6526
    %6556 = vmatprep.subr.mxu0 0.0
    %6557 = vmatpush1.msra.mxu0 %v6527
    %6558 = vmatprep.subr.mxu0 0.0
    %6559 = vmatpush1.msra.mxu0 %v6528
    %6560 = vmatprep.subr.mxu0 0.0
    %6561 = vmatpush1.msra.mxu0 %v6529
    %6562 = vmatprep.subr.mxu0 0.0
    %6563 = vmatpush1.msra.mxu0 %v6530
    %6564 = vmatprep.subr.mxu0 0.0
    %6565 = vmatpush1.msra.mxu0 %v6531
    %6566 = vmatprep.subr.mxu0 0.0
    %6567 = vmatpush1.msra.mxu0 %v6532
    %6568 = vmatprep.subr.mxu0 0.0
    %6569 = vmatpush1.msra.mxu0 %v6533
    %6570 = vmatprep.subr.mxu0 0.0
    %6571 = vmatpush1.msra.mxu0 0.0
    %6572 = vmatprep.subr.mxu0 0.0
    %6573 = vmatpush1.msra.mxu0 0.0
    %6574 = vmatprep.subr.mxu0 0.0
    %6575 = vmatpush1.msra.mxu0 0.0
    %6576 = vmatprep.subr.mxu0 0.0
    %6577 = vmatpush1.msra.mxu0 0.0
    %6578 = vmatprep.subr.mxu0 0.0
    %6579 = vmatpush1.msra.mxu0 0.0
    %6580 = vmatprep.subr.mxu0 0.0
    %6581 = vmatpush1.msra.mxu0 0.0
    %6582 = vmatprep.subr.mxu0 0.0
    %6583 = vmatpush1.msra.mxu0 0.0
    %6584 = vmatprep.subr.mxu0 0.0
    %6585 = vmatpush1.msra.mxu0 0.0
    %6586 = vmatprep.subr.mxu0 0.0
    %6587 = vmatpush1.msra.mxu0 0.0
    %6588 = vmatprep.subr.mxu0 0.0
    %6589 = vmatpush1.msra.mxu0 0.0
    %6590 = vmatprep.subr.mxu0 0.0
    %6591 = vmatpush1.msra.mxu0 0.0
    %6592 = vmatprep.subr.mxu0 0.0
    %6593 = vmatpush1.msra.mxu0 0.0
    %6594 = vmatprep.subr.mxu0 0.0
    %6595 = vmatpush1.msra.mxu0 0.0
    %6596 = vmatprep.subr.mxu0 0.0
    %6597 = vmatpush1.msra.mxu0 0.0
    %6598 = vmatprep.subr.mxu0 0.0
    %6599 = vmatpush1.msra.mxu0 0.0
    %6600 = vmatprep.subr.mxu0 0.0
    %6601 = vmatpush1.msra.mxu0 0.0
    %6602 = vmatprep.mubr.f32.mxu0 0.0
    %6603 = vmatmul.mubr.f32.gmra.mrb[0].mxu0 %v6502
    %v6604 = vpop.f32.mrb[0].mxu0
    %v6605 = vadd.f32 %v6537, %v6604
    %v6606 = vpop.f32.mrb[0].mxu0
    %6607 = vmatprep.mubr.f32.mxu0 0.0
    %6608 = vmatmul.mubr.f32.gmra.mrb[0].mxu0 %v6503
    %v6609 = vpop.f32.mrb[0].mxu0
    %v6610 = vadd.f32 %v6537, %v6609
    %v6611 = vpop.f32.mrb[0].mxu0
    %6612 = vmatprep.mubr.f32.mxu0 0.0
    %6613 = vmatmul.mubr.f32.gmra.mrb[0].mxu0 %v6504
    %v6614 = vpop.f32.mrb[0].mxu0
    %v6615 = vadd.f32 %v6537, %v6614
    %v6616 = vpop.f32.mrb[0].mxu0
    %6617 = vmatprep.mubr.f32.mxu0 0.0
    %6618 = vmatmul.mubr.f32.gmra.mrb[0].mxu0 %v6505
    %v6619 = vpop.f32.mrb[0].mxu0
    %v6620 = vadd.f32 %v6537, %v6619
    %v6621 = vpop.f32.mrb[0].mxu0
    %6622 = vmatprep.mubr.f32.mxu0 0.0
    %6623 = vmatmul.mubr.f32.gmra.mrb[0].mxu0 %v6506
    %v6624 = vpop.f32.mrb[0].mxu0
    %v6625 = vadd.f32 %v6537, %v6624
    %v6626 = vpop.f32.mrb[0].mxu0
    %6627 = vmatprep.mubr.f32.mxu0 0.0
    %6628 = vmatmul.mubr.f32.gmra.mrb[0].mxu0 %v6507
    %v6629 = vpop.f32.mrb[0].mxu0
    %v6630 = vadd.f32 %v6537, %v6629
    %v6631 = vpop.f32.mrb[0].mxu0
    %6632 = vmatprep.mubr.f32.mxu0 0.0
    %6633 = vmatmul.mubr.f32.gmra.mrb[0].mxu0 %v6508
    %v6634 = vpop.f32.mrb[0].mxu0
    %v6635 = vadd.f32 %v6537, %v6634
    %v6636 = vpop.f32.mrb[0].mxu0
    %6637 = vmatprep.mubr.f32.mxu0 0.0
    %6638 = vmatmul.mubr.f32.gmra.mrb[0].mxu0 %v6509
    %v6639 = vpop.f32.mrb[0].mxu0
    %v6640 = vadd.f32 %v6537, %v6639
    %v6641 = vpop.f32.mrb[0].mxu0
    %6642 = vmatprep.mubr.f32.mxu0 0.0
    %6643 = vmatmul.mubr.f32.gmra.mrb[0].mxu0 %v6510
    %v6644 = vpop.f32.mrb[0].mxu0
    %v6645 = vadd.f32 %v6537, %v6644
    %v6646 = vpop.f32.mrb[0].mxu0
    %6647 = vmatprep.mubr.f32.mxu0 0.0
    %6648 = vmatmul.mubr.f32.gmra.mrb[0].mxu0 %v6511
    %v6649 = vpop.f32.mrb[0].mxu0
    %v6650 = vadd.f32 %v6537, %v6649
    %v6651 = vpop.f32.mrb[0].mxu0
    %6652 = vmatprep.mubr.f32.mxu0 0.0
    %6653 = vmatmul.mubr.f32.gmra.mrb[0].mxu0 %v6512
    %v6654 = vpop.f32.mrb[0].mxu0
    %v6655 = vadd.f32 %v6537, %v6654
    %v6656 = vpop.f32.mrb[0].mxu0
    %6657 = vmatprep.mubr.f32.mxu0 0.0
    %6658 = vmatmul.mubr.f32.gmra.mrb[0].mxu0 %v6513
    %v6659 = vpop.f32.mrb[0].mxu0
    %v6660 = vadd.f32 %v6537, %v6659
    %v6661 = vpop.f32.mrb[0].mxu0
    %6662 = vmatprep.mubr.f32.mxu0 0.0
    %6663 = vmatmul.mubr.f32.gmra.mrb[0].mxu0 %v6514
    %v6664 = vpop.f32.mrb[0].mxu0
    %v6665 = vadd.f32 %v6537, %v6664
    %v6666 = vpop.f32.mrb[0].mxu0
    %6667 = vmatprep.mubr.f32.mxu0 0.0
    %6668 = vmatmul.mubr.f32.gmra.mrb[0].mxu0 %v6515
    %v6669 = vpop.f32.mrb[0].mxu0
    %v6670 = vadd.f32 %v6537, %v6669
    %v6671 = vpop.f32.mrb[0].mxu0
    %6672 = vmatprep.mubr.f32.mxu0 0.0
    %6673 = vmatmul.mubr.f32.gmra.mrb[0].mxu0 %v6516
    %v6674 = vpop.f32.mrb[0].mxu0
    %v6675 = vadd.f32 %v6537, %v6674
    %v6676 = vpop.f32.mrb[0].mxu0
    %6677 = vmatprep.mubr.f32.mxu0 0.0
    %6678 = vmatmul.mubr.f32.gmra.mrb[0].mxu0 %v6517
    %v6679 = vpop.f32.mrb[0].mxu0
    %v6680 = vadd.f32 %v6537, %v6679
    %v6681 = vpop.f32.mrb[0].mxu0
    %6682 = vdwg.mxu0
    %v6683 = vadd.f32 %v6605, %v6610
    %v6684 = vadd.f32 %v6683, %v6615
    %v6685 = vadd.f32 %v6684, %v6620
    %v6686 = vadd.f32 %v6685, %v6625
    %v6687 = vadd.f32 %v6686, %v6630
    %v6688 = vadd.f32 %v6687, %v6635
    %v6689 = vadd.f32 %v6688, %v6640
    %v6690 = vadd.f32 %v6689, %v6645
    %v6691 = vadd.f32 %v6690, %v6650
    %v6692 = vadd.f32 %v6691, %v6655
    %v6693 = vadd.f32 %v6692, %v6660
    %v6694 = vadd.f32 %v6693, %v6665
    %v6695 = vadd.f32 %v6694, %v6670
    %v6696 = vadd.f32 %v6695, %v6675
    %v6697 = vadd.f32 %v6696, %v6680
    %v6698 = vrot.slane %v6697, 4
    %v6699 = vadd.f32 %v6697, %v6698
    %v6700 = vrot.slane %v6699, 2
    %v6701 = vadd.f32 %v6699, %v6700
    %v6702 = vrot.slane %v6701, 1
    %v6703 = vadd.f32 %v6701, %v6702
    %v6704 = vmul.f32 %v6703, 0.0078125
    %v6705 = vsub.f32 %v6605, %v6704
    %v6706 = vsub.f32 %v6610, %v6704
    %v6707 = vsub.f32 %v6615, %v6704
    %v6708 = vsub.f32 %v6620, %v6704
    %v6709 = vsub.f32 %v6625, %v6704
    %v6710 = vsub.f32 %v6630, %v6704
    %v6711 = vsub.f32 %v6635, %v6704
    %v6712 = vsub.f32 %v6640, %v6704
    %v6713 = vsub.f32 %v6645, %v6704
    %v6714 = vsub.f32 %v6650, %v6704
    %v6715 = vsub.f32 %v6655, %v6704
    %v6716 = vsub.f32 %v6660, %v6704
    %v6717 = vsub.f32 %v6665, %v6704
    %v6718 = vsub.f32 %v6670, %v6704
    %v6719 = vsub.f32 %v6675, %v6704
    %v6720 = vsub.f32 %v6680, %v6704
    %v6721 = vmul.f32 %v6705, %v6705
    %v6722 = vmul.f32 %v6706, %v6706
    %v6723 = vmul.f32 %v6707, %v6707
    %v6724 = vmul.f32 %v6708, %v6708
    %v6725 = vmul.f32 %v6709, %v6709
    %v6726 = vmul.f32 %v6710, %v6710
    %v6727 = vmul.f32 %v6711, %v6711
    %v6728 = vmul.f32 %v6712, %v6712
    %v6729 = vmul.f32 %v6713, %v6713
    %v6730 = vmul.f32 %v6714, %v6714
    %v6731 = vmul.f32 %v6715, %v6715
    %v6732 = vmul.f32 %v6716, %v6716
    %v6733 = vmul.f32 %v6717, %v6717
    %v6734 = vmul.f32 %v6718, %v6718
    %v6735 = vmul.f32 %v6719, %v6719
    %v6736 = vmul.f32 %v6720, %v6720
    %v6737 = vadd.f32 %v6721, %v6722
    %v6738 = vadd.f32 %v6737, %v6723
    %v6739 = vadd.f32 %v6738, %v6724
    %v6740 = vadd.f32 %v6739, %v6725
    %v6741 = vadd.f32 %v6740, %v6726
    %v6742 = vadd.f32 %v6741, %v6727
    %v6743 = vadd.f32 %v6742, %v6728
    %v6744 = vadd.f32 %v6743, %v6729
    %v6745 = vadd.f32 %v6744, %v6730
    %v6746 = vadd.f32 %v6745, %v6731
    %v6747 = vadd.f32 %v6746, %v6732
    %v6748 = vadd.f32 %v6747, %v6733
    %v6749 = vadd.f32 %v6748, %v6734
    %v6750 = vadd.f32 %v6749, %v6735
    %v6751 = vadd.f32 %v6750, %v6736
    %v6752 = vrot.slane %v6751, 4
    %v6753 = vadd.f32 %v6751, %v6752
    %v6754 = vrot.slane %v6753, 2
    %v6755 = vadd.f32 %v6753, %v6754
    %v6756 = vrot.slane %v6755, 1
    %v6757 = vadd.f32 %v6755, %v6756
    %v6758 = vmul.f32 %v6757, 0.0078125
    %v6759 = vadd.f32 %v6758, 1e-05
    %v6760 = vrsqrt.pop %v6759
    %v6761 = vmul.f32 %v6173, %v6760
    %v6762 = vlaneseq
    %v6763 = vshrl.u32 %v6762, 7
    %v6764 = vsub.s32 3, %v6763
    %v6765 = vrot.slane %v6761, %v6764
    %v6766 = vmul.f32 %v6705, %v6765
    %v6767 = vmul.f32 %v6706, %v6765
    %v6768 = vmul.f32 %v6707, %v6765
    %v6769 = vmul.f32 %v6708, %v6765
    %v6770 = vmul.f32 %v6709, %v6765
    %v6771 = vmul.f32 %v6710, %v6765
    %v6772 = vmul.f32 %v6711, %v6765
    %v6773 = vmul.f32 %v6712, %v6765
    %v6774 = vmul.f32 %v6713, %v6765
    %v6775 = vmul.f32 %v6714, %v6765
    %v6776 = vmul.f32 %v6715, %v6765
    %v6777 = vmul.f32 %v6716, %v6765
    %v6778 = vmul.f32 %v6717, %v6765
    %v6779 = vmul.f32 %v6718, %v6765
    %v6780 = vmul.f32 %v6719, %v6765
    %v6781 = vmul.f32 %v6720, %v6765
    %v6782 = vlaneseq
    %v6783 = vshrl.u32 %v6782, 7
    %v6784 = vsub.s32 4, %v6783
    %v6785 = vrot.slane %v6173, %v6784
    %v6786 = vadd.f32 %v6766, %v6785
    %v6787 = vadd.f32 %v6767, %v6785
    %v6788 = vadd.f32 %v6768, %v6785
    %v6789 = vadd.f32 %v6769, %v6785
    %v6790 = vadd.f32 %v6770, %v6785
    %v6791 = vadd.f32 %v6771, %v6785
    %v6792 = vadd.f32 %v6772, %v6785
    %v6793 = vadd.f32 %v6773, %v6785
    %v6794 = vadd.f32 %v6774, %v6785
    %v6795 = vadd.f32 %v6775, %v6785
    %v6796 = vadd.f32 %v6776, %v6785
    %v6797 = vadd.f32 %v6777, %v6785
    %v6798 = vadd.f32 %v6778, %v6785
    %v6799 = vadd.f32 %v6779, %v6785
    %v6800 = vadd.f32 %v6780, %v6785
    %v6801 = vadd.f32 %v6781, %v6785
    %vm6802 = vcmp.ge.f32.partialorder %v6786, 0.0
    %vm6803 = vcmp.ge.f32.partialorder %v6787, 0.0
    %vm6804 = vcmp.ge.f32.partialorder %v6788, 0.0
    %vm6805 = vcmp.ge.f32.partialorder %v6789, 0.0
    %vm6806 = vcmp.ge.f32.partialorder %v6790, 0.0
    %vm6807 = vcmp.ge.f32.partialorder %v6791, 0.0
    %vm6808 = vcmp.ge.f32.partialorder %v6792, 0.0
    %vm6809 = vcmp.ge.f32.partialorder %v6793, 0.0
    %vm6810 = vcmp.ge.f32.partialorder %v6794, 0.0
    %vm6811 = vcmp.ge.f32.partialorder %v6795, 0.0
    %vm6812 = vcmp.ge.f32.partialorder %v6796, 0.0
    %vm6813 = vcmp.ge.f32.partialorder %v6797, 0.0
    %vm6814 = vcmp.ge.f32.partialorder %v6798, 0.0
    %vm6815 = vcmp.ge.f32.partialorder %v6799, 0.0
    %vm6816 = vcmp.ge.f32.partialorder %v6800, 0.0
    %vm6817 = vcmp.ge.f32.partialorder %v6801, 0.0
    %v6818 = vmul.f32 %v6786, 0.2
    %v6819 = vmul.f32 %v6787, 0.2
    %v6820 = vmul.f32 %v6788, 0.2
    %v6821 = vmul.f32 %v6789, 0.2
    %v6822 = vmul.f32 %v6790, 0.2
    %v6823 = vmul.f32 %v6791, 0.2
    %v6824 = vmul.f32 %v6792, 0.2
    %v6825 = vmul.f32 %v6793, 0.2
    %v6826 = vmul.f32 %v6794, 0.2
    %v6827 = vmul.f32 %v6795, 0.2
    %v6828 = vmul.f32 %v6796, 0.2
    %v6829 = vmul.f32 %v6797, 0.2
    %v6830 = vmul.f32 %v6798, 0.2
    %v6831 = vmul.f32 %v6799, 0.2
    %v6832 = vmul.f32 %v6800, 0.2
    %v6833 = vmul.f32 %v6801, 0.2
    %v6834 = vsel %vm6802, %v6786, %v6818
    %v6835 = vsel %vm6803, %v6787, %v6819
    %v6836 = vsel %vm6804, %v6788, %v6820
    %v6837 = vsel %vm6805, %v6789, %v6821
    %v6838 = vsel %vm6806, %v6790, %v6822
    %v6839 = vsel %vm6807, %v6791, %v6823
    %v6840 = vsel %vm6808, %v6792, %v6824
    %v6841 = vsel %vm6809, %v6793, %v6825
    %v6842 = vsel %vm6810, %v6794, %v6826
    %v6843 = vsel %vm6811, %v6795, %v6827
    %v6844 = vsel %vm6812, %v6796, %v6828
    %v6845 = vsel %vm6813, %v6797, %v6829
    %v6846 = vsel %vm6814, %v6798, %v6830
    %v6847 = vsel %vm6815, %v6799, %v6831
    %v6848 = vsel %vm6816, %v6800, %v6832
    %v6849 = vsel %vm6817, %v6801, %v6833
    %v6850 = vld [vmem:[#allocation22] sm:$0xff]
    %v6851 = vld [vmem:[#allocation22 + $0x8] sm:$0xff]
    %v6852 = vld [vmem:[#allocation22 + $0x10] sm:$0xff]
    %v6853 = vld [vmem:[#allocation22 + $0x18] sm:$0xff]
    %v6854 = vld [vmem:[#allocation22 + $0x20] sm:$0xff]
    %v6855 = vld [vmem:[#allocation22 + $0x28] sm:$0xff]
    %v6856 = vld [vmem:[#allocation22 + $0x30] sm:$0xff]
    %v6857 = vld [vmem:[#allocation22 + $0x38] sm:$0xff]
    %v6858 = vld [vmem:[#allocation22 + $0x40] sm:$0xff]
    %v6859 = vld [vmem:[#allocation22 + $0x48] sm:$0xff]
    %v6860 = vld [vmem:[#allocation22 + $0x50] sm:$0xff]
    %v6861 = vld [vmem:[#allocation22 + $0x58] sm:$0xff]
    %v6862 = vld [vmem:[#allocation22 + $0x60] sm:$0xff]
    %v6863 = vld [vmem:[#allocation22 + $0x68] sm:$0xff]
    %v6864 = vld [vmem:[#allocation22 + $0x70] sm:$0xff]
    %v6865 = vld [vmem:[#allocation22 + $0x78] sm:$0xff]
    %v6866 = vlaneseq
    %v6867 = vshrl.u32 %v6866, 7
    %v6868 = vsub.s32 5, %v6867
    %v6869 = vrot.slane %v6173, %v6868
    %6870 = vmatprep.subr.mxu0 0.0
    %6871 = vmatpush1.msra.mxu0 %v6850
    %6872 = vmatprep.subr.mxu0 0.0
    %6873 = vmatpush1.msra.mxu0 %v6851
    %6874 = vmatprep.subr.mxu0 0.0
    %6875 = vmatpush1.msra.mxu0 %v6852
    %6876 = vmatprep.subr.mxu0 0.0
    %6877 = vmatpush1.msra.mxu0 %v6853
    %6878 = vmatprep.subr.mxu0 0.0
    %6879 = vmatpush1.msra.mxu0 %v6854
    %6880 = vmatprep.subr.mxu0 0.0
    %6881 = vmatpush1.msra.mxu0 %v6855
    %6882 = vmatprep.subr.mxu0 0.0
    %6883 = vmatpush1.msra.mxu0 %v6856
    %6884 = vmatprep.subr.mxu0 0.0
    %6885 = vmatpush1.msra.mxu0 %v6857
    %6886 = vmatprep.subr.mxu0 0.0
    %6887 = vmatpush1.msra.mxu0 %v6858
    %6888 = vmatprep.subr.mxu0 0.0
    %6889 = vmatpush1.msra.mxu0 %v6859
    %6890 = vmatprep.subr.mxu0 0.0
    %6891 = vmatpush1.msra.mxu0 %v6860
    %6892 = vmatprep.subr.mxu0 0.0
    %6893 = vmatpush1.msra.mxu0 %v6861
    %6894 = vmatprep.subr.mxu0 0.0
    %6895 = vmatpush1.msra.mxu0 %v6862
    %6896 = vmatprep.subr.mxu0 0.0
    %6897 = vmatpush1.msra.mxu0 %v6863
    %6898 = vmatprep.subr.mxu0 0.0
    %6899 = vmatpush1.msra.mxu0 %v6864
    %6900 = vmatprep.subr.mxu0 0.0
    %6901 = vmatpush1.msra.mxu0 %v6865
    %6902 = vmatprep.subr.mxu0 0.0
    %6903 = vmatpush1.msra.mxu0 0.0
    %6904 = vmatprep.subr.mxu0 0.0
    %6905 = vmatpush1.msra.mxu0 0.0
    %6906 = vmatprep.subr.mxu0 0.0
    %6907 = vmatpush1.msra.mxu0 0.0
    %6908 = vmatprep.subr.mxu0 0.0
    %6909 = vmatpush1.msra.mxu0 0.0
    %6910 = vmatprep.subr.mxu0 0.0
    %6911 = vmatpush1.msra.mxu0 0.0
    %6912 = vmatprep.subr.mxu0 0.0
    %6913 = vmatpush1.msra.mxu0 0.0
    %6914 = vmatprep.subr.mxu0 0.0
    %6915 = vmatpush1.msra.mxu0 0.0
    %6916 = vmatprep.subr.mxu0 0.0
    %6917 = vmatpush1.msra.mxu0 0.0
    %6918 = vmatprep.subr.mxu0 0.0
    %6919 = vmatpush1.msra.mxu0 0.0
    %6920 = vmatprep.subr.mxu0 0.0
    %6921 = vmatpush1.msra.mxu0 0.0
    %6922 = vmatprep.subr.mxu0 0.0
    %6923 = vmatpush1.msra.mxu0 0.0
    %6924 = vmatprep.subr.mxu0 0.0
    %6925 = vmatpush1.msra.mxu0 0.0
    %6926 = vmatprep.subr.mxu0 0.0
    %6927 = vmatpush1.msra.mxu0 0.0
    %6928 = vmatprep.subr.mxu0 0.0
    %6929 = vmatpush1.msra.mxu0 0.0
    %6930 = vmatprep.subr.mxu0 0.0
    %6931 = vmatpush1.msra.mxu0 0.0
    %6932 = vmatprep.subr.mxu0 0.0
    %6933 = vmatpush1.msra.mxu0 0.0
    %6934 = vmatprep.mubr.f32.mxu0 0.0
    %6935 = vmatmul.mubr.f32.gmra.mrb[0].mxu0 %v6834
    %v6936 = vpop.f32.mrb[0].mxu0
    %v6937 = vadd.f32 %v6869, %v6936
    %v6938 = vpop.f32.mrb[0].mxu0
    %6939 = vmatprep.mubr.f32.mxu0 0.0
    %6940 = vmatmul.mubr.f32.gmra.mrb[0].mxu0 %v6835
    %v6941 = vpop.f32.mrb[0].mxu0
    %v6942 = vadd.f32 %v6869, %v6941
    %v6943 = vpop.f32.mrb[0].mxu0
    %6944 = vmatprep.mubr.f32.mxu0 0.0
    %6945 = vmatmul.mubr.f32.gmra.mrb[0].mxu0 %v6836
    %v6946 = vpop.f32.mrb[0].mxu0
    %v6947 = vadd.f32 %v6869, %v6946
    %v6948 = vpop.f32.mrb[0].mxu0
    %6949 = vmatprep.mubr.f32.mxu0 0.0
    %6950 = vmatmul.mubr.f32.gmra.mrb[0].mxu0 %v6837
    %v6951 = vpop.f32.mrb[0].mxu0
    %v6952 = vadd.f32 %v6869, %v6951
    %v6953 = vpop.f32.mrb[0].mxu0
    %6954 = vmatprep.mubr.f32.mxu0 0.0
    %6955 = vmatmul.mubr.f32.gmra.mrb[0].mxu0 %v6838
    %v6956 = vpop.f32.mrb[0].mxu0
    %v6957 = vadd.f32 %v6869, %v6956
    %v6958 = vpop.f32.mrb[0].mxu0
    %6959 = vmatprep.mubr.f32.mxu0 0.0
    %6960 = vmatmul.mubr.f32.gmra.mrb[0].mxu0 %v6839
    %v6961 = vpop.f32.mrb[0].mxu0
    %v6962 = vadd.f32 %v6869, %v6961
    %v6963 = vpop.f32.mrb[0].mxu0
    %6964 = vmatprep.mubr.f32.mxu0 0.0
    %6965 = vmatmul.mubr.f32.gmra.mrb[0].mxu0 %v6840
    %v6966 = vpop.f32.mrb[0].mxu0
    %v6967 = vadd.f32 %v6869, %v6966
    %v6968 = vpop.f32.mrb[0].mxu0
    %6969 = vmatprep.mubr.f32.mxu0 0.0
    %6970 = vmatmul.mubr.f32.gmra.mrb[0].mxu0 %v6841
    %v6971 = vpop.f32.mrb[0].mxu0
    %v6972 = vadd.f32 %v6869, %v6971
    %v6973 = vpop.f32.mrb[0].mxu0
    %6974 = vmatprep.mubr.f32.mxu0 0.0
    %6975 = vmatmul.mubr.f32.gmra.mrb[0].mxu0 %v6842
    %v6976 = vpop.f32.mrb[0].mxu0
    %v6977 = vadd.f32 %v6869, %v6976
    %v6978 = vpop.f32.mrb[0].mxu0
    %6979 = vmatprep.mubr.f32.mxu0 0.0
    %6980 = vmatmul.mubr.f32.gmra.mrb[0].mxu0 %v6843
    %v6981 = vpop.f32.mrb[0].mxu0
    %v6982 = vadd.f32 %v6869, %v6981
    %v6983 = vpop.f32.mrb[0].mxu0
    %6984 = vmatprep.mubr.f32.mxu0 0.0
    %6985 = vmatmul.mubr.f32.gmra.mrb[0].mxu0 %v6844
    %v6986 = vpop.f32.mrb[0].mxu0
    %v6987 = vadd.f32 %v6869, %v6986
    %v6988 = vpop.f32.mrb[0].mxu0
    %6989 = vmatprep.mubr.f32.mxu0 0.0
    %6990 = vmatmul.mubr.f32.gmra.mrb[0].mxu0 %v6845
    %v6991 = vpop.f32.mrb[0].mxu0
    %v6992 = vadd.f32 %v6869, %v6991
    %v6993 = vpop.f32.mrb[0].mxu0
    %6994 = vmatprep.mubr.f32.mxu0 0.0
    %6995 = vmatmul.mubr.f32.gmra.mrb[0].mxu0 %v6846
    %v6996 = vpop.f32.mrb[0].mxu0
    %v6997 = vadd.f32 %v6869, %v6996
    %v6998 = vpop.f32.mrb[0].mxu0
    %6999 = vmatprep.mubr.f32.mxu0 0.0
    %7000 = vmatmul.mubr.f32.gmra.mrb[0].mxu0 %v6847
    %v7001 = vpop.f32.mrb[0].mxu0
    %v7002 = vadd.f32 %v6869, %v7001
    %v7003 = vpop.f32.mrb[0].mxu0
    %7004 = vmatprep.mubr.f32.mxu0 0.0
    %7005 = vmatmul.mubr.f32.gmra.mrb[0].mxu0 %v6848
    %v7006 = vpop.f32.mrb[0].mxu0
    %v7007 = vadd.f32 %v6869, %v7006
    %v7008 = vpop.f32.mrb[0].mxu0
    %7009 = vmatprep.mubr.f32.mxu0 0.0
    %7010 = vmatmul.mubr.f32.gmra.mrb[0].mxu0 %v6849
    %v7011 = vpop.f32.mrb[0].mxu0
    %v7012 = vadd.f32 %v6869, %v7011
    %v7013 = vpop.f32.mrb[0].mxu0
    %7014 = vdwg.mxu0
    %v7015 = vadd.f32 %v6937, %v6942
    %v7016 = vadd.f32 %v7015, %v6947
    %v7017 = vadd.f32 %v7016, %v6952
    %v7018 = vadd.f32 %v7017, %v6957
    %v7019 = vadd.f32 %v7018, %v6962
    %v7020 = vadd.f32 %v7019, %v6967
    %v7021 = vadd.f32 %v7020, %v6972
    %v7022 = vadd.f32 %v7021, %v6977
    %v7023 = vadd.f32 %v7022, %v6982
    %v7024 = vadd.f32 %v7023, %v6987
    %v7025 = vadd.f32 %v7024, %v6992
    %v7026 = vadd.f32 %v7025, %v6997
    %v7027 = vadd.f32 %v7026, %v7002
    %v7028 = vadd.f32 %v7027, %v7007
    %v7029 = vadd.f32 %v7028, %v7012
    %v7030 = vrot.slane %v7029, 4
    %v7031 = vadd.f32 %v7029, %v7030
    %v7032 = vrot.slane %v7031, 2
    %v7033 = vadd.f32 %v7031, %v7032
    %v7034 = vrot.slane %v7033, 1
    %v7035 = vadd.f32 %v7033, %v7034
    %v7036 = vmul.f32 %v7035, 0.0078125
    %v7037 = vsub.f32 %v6937, %v7036
    %v7038 = vsub.f32 %v6942, %v7036
    %v7039 = vsub.f32 %v6947, %v7036
    %v7040 = vsub.f32 %v6952, %v7036
    %v7041 = vsub.f32 %v6957, %v7036
    %v7042 = vsub.f32 %v6962, %v7036
    %v7043 = vsub.f32 %v6967, %v7036
    %v7044 = vsub.f32 %v6972, %v7036
    %v7045 = vsub.f32 %v6977, %v7036
    %v7046 = vsub.f32 %v6982, %v7036
    %v7047 = vsub.f32 %v6987, %v7036
    %v7048 = vsub.f32 %v6992, %v7036
    %v7049 = vsub.f32 %v6997, %v7036
    %v7050 = vsub.f32 %v7002, %v7036
    %v7051 = vsub.f32 %v7007, %v7036
    %v7052 = vsub.f32 %v7012, %v7036
    %v7053 = vmul.f32 %v7037, %v7037
    %v7054 = vmul.f32 %v7038, %v7038
    %v7055 = vmul.f32 %v7039, %v7039
    %v7056 = vmul.f32 %v7040, %v7040
    %v7057 = vmul.f32 %v7041, %v7041
    %v7058 = vmul.f32 %v7042, %v7042
    %v7059 = vmul.f32 %v7043, %v7043
    %v7060 = vmul.f32 %v7044, %v7044
    %v7061 = vmul.f32 %v7045, %v7045
    %v7062 = vmul.f32 %v7046, %v7046
    %v7063 = vmul.f32 %v7047, %v7047
    %v7064 = vmul.f32 %v7048, %v7048
    %v7065 = vmul.f32 %v7049, %v7049
    %v7066 = vmul.f32 %v7050, %v7050
    %v7067 = vmul.f32 %v7051, %v7051
    %v7068 = vmul.f32 %v7052, %v7052
    %v7069 = vadd.f32 %v7053, %v7054
    %v7070 = vadd.f32 %v7069, %v7055
    %v7071 = vadd.f32 %v7070, %v7056
    %v7072 = vadd.f32 %v7071, %v7057
    %v7073 = vadd.f32 %v7072, %v7058
    %v7074 = vadd.f32 %v7073, %v7059
    %v7075 = vadd.f32 %v7074, %v7060
    %v7076 = vadd.f32 %v7075, %v7061
    %v7077 = vadd.f32 %v7076, %v7062
    %v7078 = vadd.f32 %v7077, %v7063
    %v7079 = vadd.f32 %v7078, %v7064
    %v7080 = vadd.f32 %v7079, %v7065
    %v7081 = vadd.f32 %v7080, %v7066
    %v7082 = vadd.f32 %v7081, %v7067
    %v7083 = vadd.f32 %v7082, %v7068
    %v7084 = vrot.slane %v7083, 4
    %v7085 = vadd.f32 %v7083, %v7084
    %v7086 = vrot.slane %v7085, 2
    %v7087 = vadd.f32 %v7085, %v7086
    %v7088 = vrot.slane %v7087, 1
    %v7089 = vadd.f32 %v7087, %v7088
    %v7090 = vmul.f32 %v7089, 0.0078125
    %v7091 = vadd.f32 %v7090, 1e-05
    %v7092 = vrsqrt.pop %v7091
    %v7093 = vmul.f32 %v6173, %v7092
    %v7094 = vlaneseq
    %v7095 = vshrl.u32 %v7094, 7
    %v7096 = vsub.s32 6, %v7095
    %v7097 = vrot.slane %v7093, %v7096
    %v7098 = vmul.f32 %v7037, %v7097
    %v7099 = vmul.f32 %v7038, %v7097
    %v7100 = vmul.f32 %v7039, %v7097
    %v7101 = vmul.f32 %v7040, %v7097
    %v7102 = vmul.f32 %v7041, %v7097
    %v7103 = vmul.f32 %v7042, %v7097
    %v7104 = vmul.f32 %v7043, %v7097
    %v7105 = vmul.f32 %v7044, %v7097
    %v7106 = vmul.f32 %v7045, %v7097
    %v7107 = vmul.f32 %v7046, %v7097
    %v7108 = vmul.f32 %v7047, %v7097
    %v7109 = vmul.f32 %v7048, %v7097
    %v7110 = vmul.f32 %v7049, %v7097
    %v7111 = vmul.f32 %v7050, %v7097
    %v7112 = vmul.f32 %v7051, %v7097
    %v7113 = vmul.f32 %v7052, %v7097
    %v7114 = vlaneseq
    %v7115 = vshrl.u32 %v7114, 7
    %v7116 = vsub.s32 7, %v7115
    %v7117 = vrot.slane %v6173, %v7116
    %v7118 = vadd.f32 %v7098, %v7117
    %v7119 = vadd.f32 %v7099, %v7117
    %v7120 = vadd.f32 %v7100, %v7117
    %v7121 = vadd.f32 %v7101, %v7117
    %v7122 = vadd.f32 %v7102, %v7117
    %v7123 = vadd.f32 %v7103, %v7117
    %v7124 = vadd.f32 %v7104, %v7117
    %v7125 = vadd.f32 %v7105, %v7117
    %v7126 = vadd.f32 %v7106, %v7117
    %v7127 = vadd.f32 %v7107, %v7117
    %v7128 = vadd.f32 %v7108, %v7117
    %v7129 = vadd.f32 %v7109, %v7117
    %v7130 = vadd.f32 %v7110, %v7117
    %v7131 = vadd.f32 %v7111, %v7117
    %v7132 = vadd.f32 %v7112, %v7117
    %v7133 = vadd.f32 %v7113, %v7117
    %v7134 = vld [vmem:[#allocation23] sm:$0xff]
    %v7135 = vld [vmem:[#allocation23 + $0x8] sm:$0xff]
    %v7136 = vld [vmem:[#allocation23 + $0x10] sm:$0xff]
    %v7137 = vld [vmem:[#allocation23 + $0x18] sm:$0xff]
    %v7138 = vld [vmem:[#allocation23 + $0x20] sm:$0xff]
    %v7139 = vld [vmem:[#allocation23 + $0x28] sm:$0xff]
    %v7140 = vld [vmem:[#allocation23 + $0x30] sm:$0xff]
    %v7141 = vld [vmem:[#allocation23 + $0x38] sm:$0xff]
    %v7142 = vld [vmem:[#allocation23 + $0x40] sm:$0xff]
    %v7143 = vld [vmem:[#allocation23 + $0x48] sm:$0xff]
    %v7144 = vld [vmem:[#allocation23 + $0x50] sm:$0xff]
    %v7145 = vld [vmem:[#allocation23 + $0x58] sm:$0xff]
    %v7146 = vld [vmem:[#allocation23 + $0x60] sm:$0xff]
    %v7147 = vld [vmem:[#allocation23 + $0x68] sm:$0xff]
    %v7148 = vld [vmem:[#allocation23 + $0x70] sm:$0xff]
    %v7149 = vld [vmem:[#allocation23 + $0x78] sm:$0xff]
    %v7150 = vld [vmem:[#allocation23 + $0x80] sm:$0xff]
    %v7151 = vld [vmem:[#allocation23 + $0x88] sm:$0xff]
    %v7152 = vld [vmem:[#allocation23 + $0x90] sm:$0xff]
    %v7153 = vld [vmem:[#allocation23 + $0x98] sm:$0xff]
    %v7154 = vld [vmem:[#allocation23 + $0xa0] sm:$0xff]
    %v7155 = vld [vmem:[#allocation23 + $0xa8] sm:$0xff]
    %v7156 = vld [vmem:[#allocation23 + $0xb0] sm:$0xff]
    %v7157 = vld [vmem:[#allocation23 + $0xb8] sm:$0xff]
    %v7158 = vld [vmem:[#allocation23 + $0xc0] sm:$0xff]
    %v7159 = vld [vmem:[#allocation23 + $0xc8] sm:$0xff]
    %v7160 = vld [vmem:[#allocation23 + $0xd0] sm:$0xff]
    %v7161 = vld [vmem:[#allocation23 + $0xd8] sm:$0xff]
    %v7162 = vld [vmem:[#allocation23 + $0xe0] sm:$0xff]
    %v7163 = vld [vmem:[#allocation23 + $0xe8] sm:$0xff]
    %v7164 = vld [vmem:[#allocation23 + $0xf0] sm:$0xff]
    %v7165 = vld [vmem:[#allocation23 + $0xf8] sm:$0xff]
    %7166 = vmatprep.subr.mxu0 0.0
    %7167 = vmatpush1.msra.mxu0 %v7134
    %7168 = vmatprep.subr.mxu0 0.0
    %7169 = vmatpush1.msra.mxu0 %v7135
    %7170 = vmatprep.subr.mxu0 0.0
    %7171 = vmatpush1.msra.mxu0 %v7136
    %7172 = vmatprep.subr.mxu0 0.0
    %7173 = vmatpush1.msra.mxu0 %v7137
    %7174 = vmatprep.subr.mxu0 0.0
    %7175 = vmatpush1.msra.mxu0 %v7138
    %7176 = vmatprep.subr.mxu0 0.0
    %7177 = vmatpush1.msra.mxu0 %v7139
    %7178 = vmatprep.subr.mxu0 0.0
    %7179 = vmatpush1.msra.mxu0 %v7140
    %7180 = vmatprep.subr.mxu0 0.0
    %7181 = vmatpush1.msra.mxu0 %v7141
    %7182 = vmatprep.subr.mxu0 0.0
    %7183 = vmatpush1.msra.mxu0 %v7142
    %7184 = vmatprep.subr.mxu0 0.0
    %7185 = vmatpush1.msra.mxu0 %v7143
    %7186 = vmatprep.subr.mxu0 0.0
    %7187 = vmatpush1.msra.mxu0 %v7144
    %7188 = vmatprep.subr.mxu0 0.0
    %7189 = vmatpush1.msra.mxu0 %v7145
    %7190 = vmatprep.subr.mxu0 0.0
    %7191 = vmatpush1.msra.mxu0 %v7146
    %7192 = vmatprep.subr.mxu0 0.0
    %7193 = vmatpush1.msra.mxu0 %v7147
    %7194 = vmatprep.subr.mxu0 0.0
    %7195 = vmatpush1.msra.mxu0 %v7148
    %7196 = vmatprep.subr.mxu0 0.0
    %7197 = vmatpush1.msra.mxu0 %v7149
    %7198 = vmatprep.subr.mxu0 0.0
    %7199 = vmatpush1.msra.mxu0 %v7150
    %7200 = vmatprep.subr.mxu0 0.0
    %7201 = vmatpush1.msra.mxu0 %v7151
    %7202 = vmatprep.subr.mxu0 0.0
    %7203 = vmatpush1.msra.mxu0 %v7152
    %7204 = vmatprep.subr.mxu0 0.0
    %7205 = vmatpush1.msra.mxu0 %v7153
    %7206 = vmatprep.subr.mxu0 0.0
    %7207 = vmatpush1.msra.mxu0 %v7154
    %7208 = vmatprep.subr.mxu0 0.0
    %7209 = vmatpush1.msra.mxu0 %v7155
    %7210 = vmatprep.subr.mxu0 0.0
    %7211 = vmatpush1.msra.mxu0 %v7156
    %7212 = vmatprep.subr.mxu0 0.0
    %7213 = vmatpush1.msra.mxu0 %v7157
    %7214 = vmatprep.subr.mxu0 0.0
    %7215 = vmatpush1.msra.mxu0 %v7158
    %7216 = vmatprep.subr.mxu0 0.0
    %7217 = vmatpush1.msra.mxu0 %v7159
    %7218 = vmatprep.subr.mxu0 0.0
    %7219 = vmatpush1.msra.mxu0 %v7160
    %7220 = vmatprep.subr.mxu0 0.0
    %7221 = vmatpush1.msra.mxu0 %v7161
    %7222 = vmatprep.subr.mxu0 0.0
    %7223 = vmatpush1.msra.mxu0 %v7162
    %7224 = vmatprep.subr.mxu0 0.0
    %7225 = vmatpush1.msra.mxu0 %v7163
    %7226 = vmatprep.subr.mxu0 0.0
    %7227 = vmatpush1.msra.mxu0 %v7164
    %7228 = vmatprep.subr.mxu0 0.0
    %7229 = vmatpush1.msra.mxu0 %v7165
    %7230 = vmatprep.mubr.f32.mxu0 %v6142
    %7231 = vmatmul.mubr.f32.gmra.mrb[0].mxu0 %v6141
    %v7232 = vpop.f32.mrb[0].mxu0
    %v7233 = vadd.f32 0.0, %v7232
    %v7234 = vpop.f32.mrb[0].mxu0
    %7235 = vmatprep.mubr.f32.mxu0 %v6144
    %7236 = vmatmul.mubr.f32.gmra.mrb[0].mxu0 %v6143
    %v7237 = vpop.f32.mrb[0].mxu0
    %v7238 = vadd.f32 0.0, %v7237
    %v7239 = vpop.f32.mrb[0].mxu0
    %7240 = vmatprep.mubr.f32.mxu0 %v6146
    %7241 = vmatmul.mubr.f32.gmra.mrb[0].mxu0 %v6145
    %v7242 = vpop.f32.mrb[0].mxu0
    %v7243 = vadd.f32 0.0, %v7242
    %v7244 = vpop.f32.mrb[0].mxu0
    %7245 = vmatprep.mubr.f32.mxu0 %v6148
    %7246 = vmatmul.mubr.f32.gmra.mrb[0].mxu0 %v6147
    %v7247 = vpop.f32.mrb[0].mxu0
    %v7248 = vadd.f32 0.0, %v7247
    %v7249 = vpop.f32.mrb[0].mxu0
    %7250 = vmatprep.mubr.f32.mxu0 %v6150
    %7251 = vmatmul.mubr.f32.gmra.mrb[0].mxu0 %v6149
    %v7252 = vpop.f32.mrb[0].mxu0
    %v7253 = vadd.f32 0.0, %v7252
    %v7254 = vpop.f32.mrb[0].mxu0
    %7255 = vmatprep.mubr.f32.mxu0 %v6152
    %7256 = vmatmul.mubr.f32.gmra.mrb[0].mxu0 %v6151
    %v7257 = vpop.f32.mrb[0].mxu0
    %v7258 = vadd.f32 0.0, %v7257
    %v7259 = vpop.f32.mrb[0].mxu0
    %7260 = vmatprep.mubr.f32.mxu0 %v6154
    %7261 = vmatmul.mubr.f32.gmra.mrb[0].mxu0 %v6153
    %v7262 = vpop.f32.mrb[0].mxu0
    %v7263 = vadd.f32 0.0, %v7262
    %v7264 = vpop.f32.mrb[0].mxu0
    %7265 = vmatprep.mubr.f32.mxu0 %v6156
    %7266 = vmatmul.mubr.f32.gmra.mrb[0].mxu0 %v6155
    %v7267 = vpop.f32.mrb[0].mxu0
    %v7268 = vadd.f32 0.0, %v7267
    %v7269 = vpop.f32.mrb[0].mxu0
    %7270 = vmatprep.mubr.f32.mxu0 %v6158
    %7271 = vmatmul.mubr.f32.gmra.mrb[0].mxu0 %v6157
    %v7272 = vpop.f32.mrb[0].mxu0
    %v7273 = vadd.f32 0.0, %v7272
    %v7274 = vpop.f32.mrb[0].mxu0
    %7275 = vmatprep.mubr.f32.mxu0 %v6160
    %7276 = vmatmul.mubr.f32.gmra.mrb[0].mxu0 %v6159
    %v7277 = vpop.f32.mrb[0].mxu0
    %v7278 = vadd.f32 0.0, %v7277
    %v7279 = vpop.f32.mrb[0].mxu0
    %7280 = vmatprep.mubr.f32.mxu0 %v6162
    %7281 = vmatmul.mubr.f32.gmra.mrb[0].mxu0 %v6161
    %v7282 = vpop.f32.mrb[0].mxu0
    %v7283 = vadd.f32 0.0, %v7282
    %v7284 = vpop.f32.mrb[0].mxu0
    %7285 = vmatprep.mubr.f32.mxu0 %v6164
    %7286 = vmatmul.mubr.f32.gmra.mrb[0].mxu0 %v6163
    %v7287 = vpop.f32.mrb[0].mxu0
    %v7288 = vadd.f32 0.0, %v7287
    %v7289 = vpop.f32.mrb[0].mxu0
    %7290 = vmatprep.mubr.f32.mxu0 %v6166
    %7291 = vmatmul.mubr.f32.gmra.mrb[0].mxu0 %v6165
    %v7292 = vpop.f32.mrb[0].mxu0
    %v7293 = vadd.f32 0.0, %v7292
    %v7294 = vpop.f32.mrb[0].mxu0
    %7295 = vmatprep.mubr.f32.mxu0 %v6168
    %7296 = vmatmul.mubr.f32.gmra.mrb[0].mxu0 %v6167
    %v7297 = vpop.f32.mrb[0].mxu0
    %v7298 = vadd.f32 0.0, %v7297
    %v7299 = vpop.f32.mrb[0].mxu0
    %7300 = vmatprep.mubr.f32.mxu0 %v6170
    %7301 = vmatmul.mubr.f32.gmra.mrb[0].mxu0 %v6169
    %v7302 = vpop.f32.mrb[0].mxu0
    %v7303 = vadd.f32 0.0, %v7302
    %v7304 = vpop.f32.mrb[0].mxu0
    %7305 = vmatprep.mubr.f32.mxu0 %v6172
    %7306 = vmatmul.mubr.f32.gmra.mrb[0].mxu0 %v6171
    %v7307 = vpop.f32.mrb[0].mxu0
    %v7308 = vadd.f32 0.0, %v7307
    %v7309 = vpop.f32.mrb[0].mxu0
    %7310 = vdwg.mxu0
    %v7311 = vadd.f32 %v7118, %v7233
    %v7312 = vadd.f32 %v7119, %v7238
    %v7313 = vadd.f32 %v7120, %v7243
    %v7314 = vadd.f32 %v7121, %v7248
    %v7315 = vadd.f32 %v7122, %v7253
    %v7316 = vadd.f32 %v7123, %v7258
    %v7317 = vadd.f32 %v7124, %v7263
    %v7318 = vadd.f32 %v7125, %v7268
    %v7319 = vadd.f32 %v7126, %v7273
    %v7320 = vadd.f32 %v7127, %v7278
    %v7321 = vadd.f32 %v7128, %v7283
    %v7322 = vadd.f32 %v7129, %v7288
    %v7323 = vadd.f32 %v7130, %v7293
    %v7324 = vadd.f32 %v7131, %v7298
    %v7325 = vadd.f32 %v7132, %v7303
    %v7326 = vadd.f32 %v7133, %v7308
    %v7327 = vld [vmem:[#allocation25] sm:$0xff]
    %v7328 = vld [vmem:[#allocation25 + $0x8] sm:$0xff]
    %v7329 = vld [vmem:[#allocation25 + $0x10] sm:$0xff]
    %v7330 = vld [vmem:[#allocation25 + $0x18] sm:$0xff]
    %v7331 = vld [vmem:[#allocation25 + $0x20] sm:$0xff]
    %v7332 = vld [vmem:[#allocation25 + $0x28] sm:$0xff]
    %v7333 = vld [vmem:[#allocation25 + $0x30] sm:$0xff]
    %v7334 = vld [vmem:[#allocation25 + $0x38] sm:$0xff]
    %v7335 = vld [vmem:[#allocation25 + $0x40] sm:$0xff]
    %v7336 = vld [vmem:[#allocation25 + $0x48] sm:$0xff]
    %v7337 = vld [vmem:[#allocation25 + $0x50] sm:$0xff]
    %v7338 = vld [vmem:[#allocation25 + $0x58] sm:$0xff]
    %v7339 = vld [vmem:[#allocation25 + $0x60] sm:$0xff]
    %v7340 = vld [vmem:[#allocation25 + $0x68] sm:$0xff]
    %v7341 = vld [vmem:[#allocation25 + $0x70] sm:$0xff]
    %v7342 = vld [vmem:[#allocation25 + $0x78] sm:$0xff]
    %v7343 = vld [vmem:[%s17] sm:$0x1]
    %v7345 = vlaneseq
    %v7346 = vshrl.u32 %v7345, 7
    %v7347 = vsub.s32 0, %v7346
    %v7348 = vrot.slane %v7343, %v7347
    %7350 = vmatprep.subr.mxu0 0.0
    %7351 = vmatpush1.msra.mxu0 %v7327
    %7352 = vmatprep.subr.mxu0 0.0
    %7353 = vmatpush1.msra.mxu0 %v7328
    %7354 = vmatprep.subr.mxu0 0.0
    %7355 = vmatpush1.msra.mxu0 %v7329
    %7356 = vmatprep.subr.mxu0 0.0
    %7357 = vmatpush1.msra.mxu0 %v7330
    %7358 = vmatprep.subr.mxu0 0.0
    %7359 = vmatpush1.msra.mxu0 %v7331
    %7360 = vmatprep.subr.mxu0 0.0
    %7361 = vmatpush1.msra.mxu0 %v7332
    %7362 = vmatprep.subr.mxu0 0.0
    %7363 = vmatpush1.msra.mxu0 %v7333
    %7364 = vmatprep.subr.mxu0 0.0
    %7365 = vmatpush1.msra.mxu0 %v7334
    %7366 = vmatprep.subr.mxu0 0.0
    %7367 = vmatpush1.msra.mxu0 %v7335
    %7368 = vmatprep.subr.mxu0 0.0
    %7369 = vmatpush1.msra.mxu0 %v7336
    %7370 = vmatprep.subr.mxu0 0.0
    %7371 = vmatpush1.msra.mxu0 %v7337
    %7372 = vmatprep.subr.mxu0 0.0
    %7373 = vmatpush1.msra.mxu0 %v7338
    %7374 = vmatprep.subr.mxu0 0.0
    %7375 = vmatpush1.msra.mxu0 %v7339
    %7376 = vmatprep.subr.mxu0 0.0
    %7377 = vmatpush1.msra.mxu0 %v7340
    %7378 = vmatprep.subr.mxu0 0.0
    %7379 = vmatpush1.msra.mxu0 %v7341
    %7380 = vmatprep.subr.mxu0 0.0
    %7381 = vmatpush1.msra.mxu0 %v7342
    %7382 = vmatprep.subr.mxu0 0.0
    %7383 = vmatpush1.msra.mxu0 0.0
    %7384 = vmatprep.subr.mxu0 0.0
    %7385 = vmatpush1.msra.mxu0 0.0
    %7386 = vmatprep.subr.mxu0 0.0
    %7387 = vmatpush1.msra.mxu0 0.0
    %7388 = vmatprep.subr.mxu0 0.0
    %7389 = vmatpush1.msra.mxu0 0.0
    %7390 = vmatprep.subr.mxu0 0.0
    %7391 = vmatpush1.msra.mxu0 0.0
    %7392 = vmatprep.subr.mxu0 0.0
    %7393 = vmatpush1.msra.mxu0 0.0
    %7394 = vmatprep.subr.mxu0 0.0
    %7395 = vmatpush1.msra.mxu0 0.0
    %7396 = vmatprep.subr.mxu0 0.0
    %7397 = vmatpush1.msra.mxu0 0.0
    %7398 = vmatprep.subr.mxu0 0.0
    %7399 = vmatpush1.msra.mxu0 0.0
    %7400 = vmatprep.subr.mxu0 0.0
    %7401 = vmatpush1.msra.mxu0 0.0
    %7402 = vmatprep.subr.mxu0 0.0
    %7403 = vmatpush1.msra.mxu0 0.0
    %7404 = vmatprep.subr.mxu0 0.0
    %7405 = vmatpush1.msra.mxu0 0.0
    %7406 = vmatprep.subr.mxu0 0.0
    %7407 = vmatpush1.msra.mxu0 0.0
    %7408 = vmatprep.subr.mxu0 0.0
    %7409 = vmatpush1.msra.mxu0 0.0
    %7410 = vmatprep.subr.mxu0 0.0
    %7411 = vmatpush1.msra.mxu0 0.0
    %7412 = vmatprep.subr.mxu0 0.0
    %7413 = vmatpush1.msra.mxu0 0.0
    %7414 = vmatprep.mubr.f32.mxu0 0.0
    %7415 = vmatmul.mubr.f32.gmra.mrb[0].mxu0 %v7311
    %v7416 = vpop.f32.mrb[0].mxu0
    %v7417 = vadd.f32 %v7348, %v7416
    %v7418 = vpop.f32.mrb[0].mxu0
    %7419 = vmatprep.mubr.f32.mxu0 0.0
    %7420 = vmatmul.mubr.f32.gmra.mrb[0].mxu0 %v7312
    %v7421 = vpop.f32.mrb[0].mxu0
    %v7422 = vadd.f32 %v7348, %v7421
    %v7423 = vpop.f32.mrb[0].mxu0
    %7424 = vmatprep.mubr.f32.mxu0 0.0
    %7425 = vmatmul.mubr.f32.gmra.mrb[0].mxu0 %v7313
    %v7426 = vpop.f32.mrb[0].mxu0
    %v7427 = vadd.f32 %v7348, %v7426
    %v7428 = vpop.f32.mrb[0].mxu0
    %7429 = vmatprep.mubr.f32.mxu0 0.0
    %7430 = vmatmul.mubr.f32.gmra.mrb[0].mxu0 %v7314
    %v7431 = vpop.f32.mrb[0].mxu0
    %v7432 = vadd.f32 %v7348, %v7431
    %v7433 = vpop.f32.mrb[0].mxu0
    %7434 = vmatprep.mubr.f32.mxu0 0.0
    %7435 = vmatmul.mubr.f32.gmra.mrb[0].mxu0 %v7315
    %v7436 = vpop.f32.mrb[0].mxu0
    %v7437 = vadd.f32 %v7348, %v7436
    %v7438 = vpop.f32.mrb[0].mxu0
    %7439 = vmatprep.mubr.f32.mxu0 0.0
    %7440 = vmatmul.mubr.f32.gmra.mrb[0].mxu0 %v7316
    %v7441 = vpop.f32.mrb[0].mxu0
    %v7442 = vadd.f32 %v7348, %v7441
    %v7443 = vpop.f32.mrb[0].mxu0
    %7444 = vmatprep.mubr.f32.mxu0 0.0
    %7445 = vmatmul.mubr.f32.gmra.mrb[0].mxu0 %v7317
    %v7446 = vpop.f32.mrb[0].mxu0
    %v7447 = vadd.f32 %v7348, %v7446
    %v7448 = vpop.f32.mrb[0].mxu0
    %7449 = vmatprep.mubr.f32.mxu0 0.0
    %7450 = vmatmul.mubr.f32.gmra.mrb[0].mxu0 %v7318
    %v7451 = vpop.f32.mrb[0].mxu0
    %v7452 = vadd.f32 %v7348, %v7451
    %v7453 = vpop.f32.mrb[0].mxu0
    %7454 = vmatprep.mubr.f32.mxu0 0.0
    %7455 = vmatmul.mubr.f32.gmra.mrb[0].mxu0 %v7319
    %v7456 = vpop.f32.mrb[0].mxu0
    %v7457 = vadd.f32 %v7348, %v7456
    %v7458 = vpop.f32.mrb[0].mxu0
    %7459 = vmatprep.mubr.f32.mxu0 0.0
    %7460 = vmatmul.mubr.f32.gmra.mrb[0].mxu0 %v7320
    %v7461 = vpop.f32.mrb[0].mxu0
    %v7462 = vadd.f32 %v7348, %v7461
    %v7463 = vpop.f32.mrb[0].mxu0
    %7464 = vmatprep.mubr.f32.mxu0 0.0
    %7465 = vmatmul.mubr.f32.gmra.mrb[0].mxu0 %v7321
    %v7466 = vpop.f32.mrb[0].mxu0
    %v7467 = vadd.f32 %v7348, %v7466
    %v7468 = vpop.f32.mrb[0].mxu0
    %7469 = vmatprep.mubr.f32.mxu0 0.0
    %7470 = vmatmul.mubr.f32.gmra.mrb[0].mxu0 %v7322
    %v7471 = vpop.f32.mrb[0].mxu0
    %v7472 = vadd.f32 %v7348, %v7471
    %v7473 = vpop.f32.mrb[0].mxu0
    %7474 = vmatprep.mubr.f32.mxu0 0.0
    %7475 = vmatmul.mubr.f32.gmra.mrb[0].mxu0 %v7323
    %v7476 = vpop.f32.mrb[0].mxu0
    %v7477 = vadd.f32 %v7348, %v7476
    %v7478 = vpop.f32.mrb[0].mxu0
    %7479 = vmatprep.mubr.f32.mxu0 0.0
    %7480 = vmatmul.mubr.f32.gmra.mrb[0].mxu0 %v7324
    %v7481 = vpop.f32.mrb[0].mxu0
    %v7482 = vadd.f32 %v7348, %v7481
    %v7483 = vpop.f32.mrb[0].mxu0
    %7484 = vmatprep.mubr.f32.mxu0 0.0
    %7485 = vmatmul.mubr.f32.gmra.mrb[0].mxu0 %v7325
    %v7486 = vpop.f32.mrb[0].mxu0
    %v7487 = vadd.f32 %v7348, %v7486
    %v7488 = vpop.f32.mrb[0].mxu0
    %7489 = vmatprep.mubr.f32.mxu0 0.0
    %7490 = vmatmul.mubr.f32.gmra.mrb[0].mxu0 %v7326
    %v7491 = vpop.f32.mrb[0].mxu0
    %v7492 = vadd.f32 %v7348, %v7491
    %v7493 = vpop.f32.mrb[0].mxu0
    %7494 = vdwg.mxu0
    %7495 = vst [vmem:[#allocation26] sm:$0xff] %v7417
    %7496 = vst [vmem:[#allocation26 + $0x8] sm:$0xff] %v7422
    %7497 = vst [vmem:[#allocation26 + $0x10] sm:$0xff] %v7427
    %7498 = vst [vmem:[#allocation26 + $0x18] sm:$0xff] %v7432
    %7499 = vst [vmem:[#allocation26 + $0x20] sm:$0xff] %v7437
    %7500 = vst [vmem:[#allocation26 + $0x28] sm:$0xff] %v7442
    %7501 = vst [vmem:[#allocation26 + $0x30] sm:$0xff] %v7447
    %7502 = vst [vmem:[#allocation26 + $0x38] sm:$0xff] %v7452
    %7503 = vst [vmem:[#allocation26 + $0x40] sm:$0xff] %v7457
    %7504 = vst [vmem:[#allocation26 + $0x48] sm:$0xff] %v7462
    %7505 = vst [vmem:[#allocation26 + $0x50] sm:$0xff] %v7467
    %7506 = vst [vmem:[#allocation26 + $0x58] sm:$0xff] %v7472
    %7507 = vst [vmem:[#allocation26 + $0x60] sm:$0xff] %v7477
    %7508 = vst [vmem:[#allocation26 + $0x68] sm:$0xff] %v7482
    %7509 = vst [vmem:[#allocation26 + $0x70] sm:$0xff] %v7487
    %7510 = vst [vmem:[#allocation26 + $0x78] sm:$0xff] %v7492
    // Predicated region
    $region134: #{fc_res_decoder.1} parent=1 // pred_check
      _
    $region135: #{fc_res_decoder.1} parent=1 // pred_check_branch
      %7512 = sbr.rel (0) target = $region137
    $region136: #{fc_res_decoder.1} parent=1 // pred_region
      %s7514 = ssub.s32 2048, 2048
      %7515 = vsyncadd [#allocation4], %s7514
      %s7516 = sshll.u32 [#allocation26], 4
      %s7517 = int_to_ptr.vmem [resolvable:$true] %s7516
      %7522 = dma.vmem_to_hbm [thread:$0]  %s7517, 2048, %s18, [#allocation4], 128, 128, 8
    $region137: #{fc_res_decoder.1} parent=1 // pred_fallthru
      _
    // Predicated region
    $region138: #{fc_res_decoder.1} parent=1 // pred_check
      _
    $region139: #{fc_res_decoder.1} parent=1 // pred_check_branch
      %7524 = sbr.rel (0) target = $region141
    $region140: #{fc_res_decoder.1} parent=1 // pred_region
      %7525 = dma.done [#allocation4], 2048
    $region141: #{fc_res_decoder.1} parent=1 // pred_fallthru
      _
    %7526 = vsyncpa [#allocation3], 1
    %7527 = vsyncpa [#allocation6], 1
    %7528 = vsyncpa [#allocation9], 1
    %7529 = vsyncpa [#allocation12], 1
    %7530 = vsyncpa [#allocation15], 1
    %7531 = vsyncpa [#allocation18], 1
    %7532 = vsyncpa [#allocation21], 1
    %7533 = vsyncpa [#allocation24], 1
    %7534 = vsyncpa [#allocation4], 1

</llo_original>
